<compile_context>
chip_gen: v7x
topology: tpu7x:2x2x1
jax: 0.10.0
libtpu: 0.0.40
codegen_flags: <defaults>
</compile_context>

<pallas_src>
import jax
import jax.numpy as jnp
from jax.experimental import pallas as pl
from jax.experimental.pallas import tpu as pltpu

_MXU_DTYPE = jnp.bfloat16   # MXU operand dtype; accumulation is always f32.


# ----------------------------------------------------------------------------
# In-kernel building blocks (one batch element, NHWC values / VMEM refs)
# ----------------------------------------------------------------------------
def _conv_block(cur, p, w_ref, b_ref, pad_ref):
    """Stride-1 Conv2d (+bias, optional ReLU) on a (H, W, Cin) f32 value.

    The (optionally zero-padded) input is staged into a bf16 VMEM scratch and
    the conv is computed as K*K shifted (Ho*Wo, Cin) x (Cin, Cout) MXU matmuls
    accumulated in f32.
    """
    k, pad = p["k"], p["pad"]
    cin, cout, ho, wo = p["cin"], p["cout"], p["ho"], p["wo"]
    if pad_ref is not None:
        if pad > 0:
            pad_ref[...] = jnp.zeros(pad_ref.shape, pad_ref.dtype)
        pad_ref[pl.ds(pad, p["h"]), pl.ds(pad, p["w"]), :] = cur.astype(pad_ref.dtype)
        acc = jnp.zeros((ho * wo, cout), jnp.float32)
        for kh in range(k):
            for kw in range(k):
                patch = pad_ref[pl.ds(kh, ho), pl.ds(kw, wo), :]      # (Ho,Wo,Cin) bf16
                acc = acc + jnp.dot(
                    patch.reshape(ho * wo, cin),
                    w_ref[kh * k + kw],
                    preferred_element_type=jnp.float32,
                )
    else:
        # 1x1 conv, no padding: a single matmul, no staging scratch needed.
        acc = jnp.dot(cur.reshape(ho * wo, cin).astype(_MXU_DTYPE), w_ref[0],
                      preferred_element_type=jnp.float32)
    out = acc + b_ref[...]                                            # (1, Cout) broadcast
    if p["relu"]:
        out = jnp.maximum(out, 0.0)
    return out.reshape(ho, wo, cout)


def _pool_block(cur, p, pool_ref):
    """MaxPool2d(kernel=2, stride=2, pad=0) on a (H, W, C) value.

    No strided Ref indexing: H-pairs via a leading-dim split (layout safe),
    W-pairs via contiguous width-1 column slices written into VMEM scratch.
    """
    ho, wo, c = p["ho"], p["wo"], p["c"]
    v4 = cur.reshape(ho, 2, p["w"], c)            # split leading dim; (W, C) untouched
    vh = jnp.maximum(v4[:, 0], v4[:, 1])          # (Ho, W, C)
    for ow in range(wo):
        a = vh[:, 2 * ow: 2 * ow + 1, :]
        b = vh[:, 2 * ow + 1: 2 * ow + 2, :]
        pool_ref[:, pl.ds(ow, 1), :] = jnp.maximum(a, b)
    return pool_ref[...]


# ----------------------------------------------------------------------------
# Fused-sequential kernel: one pallas_call per nn.Sequential (or fused branch)
# ----------------------------------------------------------------------------
def _make_plan(layers, h, w, cin):
    """Static per-layer shapes + VMEM scratch requirements for the fused kernel."""
    plan = []
    for lyr in layers:
        if lyr["type"] == "pool":
            assert h % 2 == 0 and w % 2 == 0, "2x2/s2/p0 pool needs even H, W"
            ho, wo = h // 2, w // 2
            plan.append(dict(type="pool", h=h, w=w, c=cin, ho=ho, wo=wo,
                             scratch=pltpu.VMEM((ho, wo, cin), jnp.float32)))
            h, w = ho, wo
        else:
            k, pad = lyr["k"], lyr["pad"]
            kk, wcin, cout = lyr["w"].shape
            assert kk == k * k and wcin == cin
            hp, wp = h + 2 * pad, w + 2 * pad
            ho, wo = hp - k + 1, wp - k + 1
            needs_scratch = (k > 1) or (pad > 0)
            plan.append(dict(type="conv", k=k, pad=pad, relu=lyr["relu"],
                             cin=cin, cout=cout, h=h, w=w, hp=hp, wp=wp,
                             ho=ho, wo=wo,
                             scratch=(pltpu.VMEM((hp, wp, cin), _MXU_DTYPE)
                                      if needs_scratch else None)))
            h, w, cin = ho, wo, cout
    return plan, (h, w, cin)


def _build_seq_kernel(plan, n_conv, with_mask):
    def kernel(*refs):
        pos = 0
        x_ref = refs[pos]; pos += 1
        mask_ref = None
        if with_mask:
            mask_ref = refs[pos]; pos += 1
        wb_refs = refs[pos: pos + 2 * n_conv]; pos += 2 * n_conv
        if with_mask:
            o_ref, om_ref = refs[pos], refs[pos + 1]; pos += 2
        else:
            o_ref, om_ref = refs[pos], None; pos += 1
        scratch_refs = refs[pos:]

        cur = x_ref[0]                      # (H, W, Cin) f32, resident in VMEM
        ci = si = 0
        for p in plan:
            sc = None
            if p["scratch"] is not None:
                sc = scratch_refs[si]; si += 1
            if p["type"] == "pool":
                cur = _pool_block(cur, p, sc)
            else:
                cur = _conv_block(cur, p, wb_refs[2 * ci], wb_refs[2 * ci + 1], sc)
                ci += 1
        o_ref[0] = cur.astype(o_ref.dtype)
        if with_mask:                       # fused mask epilogue (channel broadcast)
            om_ref[0] = (cur * mask_ref[0]).astype(om_ref.dtype)
    return kernel


def fused_sequential_call(layers, x, mask=None):
    """Run a whole conv/pool sequence as one pallas_call, grid over batch.

    Returns the sequence output; if `mask` is given, also returns output*mask.
    """
    n, h, w, cin = x.shape
    plan, (ho, wo, cout) = _make_plan(layers, h, w, cin)
    n_conv = sum(1 for p in plan if p["type"] == "conv")
    with_mask = mask is not None

    in_specs = [pl.BlockSpec((1, h, w, cin), lambda i: (i, 0, 0, 0))]
    args = [x]
    if with_mask:
        assert mask.shape == (n, ho, wo, 1)
        in_specs.append(pl.BlockSpec((1, ho, wo, 1), lambda i: (i, 0, 0, 0)))
        args.append(mask)
    for lyr in layers:
        if lyr["type"] != "conv":
            continue
        in_specs.append(pl.BlockSpec(lyr["w"].shape, lambda i: (0, 0, 0)))
        in_specs.append(pl.BlockSpec(lyr["b"].shape, lambda i: (0, 0)))
        args.extend([lyr["w"], lyr["b"]])

    out_block = pl.BlockSpec((1, ho, wo, cout), lambda i: (i, 0, 0, 0))
    if with_mask:
        out_shape = (jax.ShapeDtypeStruct((n, ho, wo, cout), jnp.float32),
                     jax.ShapeDtypeStruct((n, ho, wo, cout), jnp.float32))
        out_specs = (out_block, out_block)
    else:
        out_shape = jax.ShapeDtypeStruct((n, ho, wo, cout), jnp.float32)
        out_specs = out_block

    scratch_shapes = [p["scratch"] for p in plan if p["scratch"] is not None]
    kernel = _build_seq_kernel(plan, n_conv, with_mask)

    return pl.pallas_call(
        kernel,
        out_shape=out_shape,
        grid=(n,),
        in_specs=in_specs,
        out_specs=out_specs,
        scratch_shapes=scratch_shapes,
        compiler_params=pltpu.CompilerParams(dimension_semantics=("parallel",)),
    )(*args)


# ----------------------------------------------------------------------------
# Model construction (mirrors OpenPose.make_layer1 / forward, bn=False)
# ----------------------------------------------------------------------------
def _init_conv(key, cin, cout, k):
    # PyTorch: weight.normal_(0, 0.01), bias.zero_().  Weight layout here is
    # (K*K, Cin, Cout); a torch checkpoint (Cout, Cin, KH, KW) would need
    # w.permute(2, 3, 1, 0).reshape(K*K, Cin, Cout) before use.
    w = 0.01 * jax.random.normal(key, (k * k, cin, cout), jnp.float32)
    b = jnp.zeros((1, cout), jnp.float32)
    return w, b


def build_sequential(net_spec, key, last_act=False):
    layers = []
    for i, layer_dict in enumerate(net_spec):
        name = list(layer_dict.keys())[0]
        v = layer_dict[name]
        if "pool" in name:
            assert v[0] == 2 and v[1] == 2 and v[2] == 0, "only 2x2/s2/p0 pool supported"
            layers.append({"type": "pool"})
        else:
            cin, cout, ksz, stride, pad = v
            assert stride == 1, "only stride-1 convs supported in this kernel"
            key, sub = jax.random.split(key)
            w, b = _init_conv(sub, cin, cout, ksz)
            relu = (i < len(net_spec) - 1) or last_act
            layers.append({"type": "conv", "w": w, "b": b, "k": ksz,
                           "pad": pad, "relu": relu})
    return layers, key


def _fuse_branches(vec_layers, heat_layers):
    """Fuse the (architecturally identical) vec & heat branches of one stage.

    Layer 0: weights concatenated along Cout (both read the same `pre`).
    Layer j>0: block-diagonal over (Cin, Cout) so vec/heat stay independent.
    The fused output channel order is [vec_out, heat_out] -- exactly the order
    torch.cat([out1, out2, ...], dim=1) expects.  Zero off-diagonal blocks add
    MXU FLOPs but halve DMA/kernel count at these small channel widths.
    """
    assert len(vec_layers) == len(heat_layers)
    fused = []
    for j, (lv, lh) in enumerate(zip(vec_layers, heat_layers)):
        # TODO(synk): fall back to two separate branch kernels if the branch
        # structures ever differ (they never do in OpenPose).
        assert lv["type"] == "conv" and lh["type"] == "conv"
        assert (lv["k"], lv["pad"], lv["relu"]) == (lh["k"], lh["pad"], lh["relu"])
        wv, wh = lv["w"], lh["w"]
        if j == 0:
            assert wv.shape[1] == wh.shape[1]
            w = jnp.concatenate([wv, wh], axis=2)
        else:
            kk, civ, cov = wv.shape
            _, cih, coh = wh.shape
            w = jnp.zeros((kk, civ + cih, cov + coh), jnp.float32)
            w = w.at[:, :civ, :cov].set(wv)
            w = w.at[:, civ:, cov:].set(wh)
        b = jnp.concatenate([lv["b"], lh["b"]], axis=1)
        fused.append({"type": "conv", "w": w, "b": b,
                      "k": lv["k"], "pad": lv["pad"], "relu": lv["relu"]})
    vec_c = vec_layers[-1]["w"].shape[2]
    heat_c = heat_layers[-1]["w"].shape[2]
    return fused, vec_c, heat_c


def _cast_weights(layers):
    out = []
    for lyr in layers:
        if lyr["type"] == "conv":
            lyr = dict(lyr, w=lyr["w"].astype(_MXU_DTYPE))
        out.append(lyr)
    return out


def build_openpose(net_dict, key):
    layer0, key = build_sequential(net_dict[0], key, last_act=True)
    stages = []
    for i in range(1, len(net_dict)):
        vec, key = build_sequential(net_dict[i][0], key, last_act=False)
        heat, key = build_sequential(net_dict[i][1], key, last_act=False)
        fused, vec_c, heat_c = _fuse_branches(vec, heat)
        stages.append({"layers": _cast_weights(fused),
                       "vec_c": vec_c, "heat_c": heat_c})
    return {"layer0": _cast_weights(layer0), "stages": stages}


def openpose_forward(params, x_nhwc, mask_nhwc):
    out0 = fused_sequential_call(params["layer0"], x_nhwc)
    pre = out0
    vec_out, heat_out = [], []
    for st in params["stages"]:
        both, both_masked = fused_sequential_call(st["layers"], pre, mask=mask_nhwc)
        vec_c = st["vec_c"]
        vec_out.append(both_masked[..., :vec_c])     # out1 * mask
        heat_out.append(both_masked[..., vec_c:])    # out2 * mask
        pre = jnp.concatenate([both, out0], axis=-1)  # torch.cat([out1,out2,out0], dim=1)
    return vec_out, heat_out


# ----------------------------------------------------------------------------
if __name__ == "__main__":
    # Small synthetic net_dict with the same structure the PyTorch module expects:
    # layer0: conv3x3 -> pool2x2 -> conv3x3, two refinement stages with (vec, heat)
    # branches whose outputs are re-concatenated with out0.
    C_IN, C0, VEC_C, HEAT_C, HID = 4, 16, 6, 4, 32
    net_dict = [
        [  # layer0 (last_act=True)
            {"conv1_1": [C_IN, 8, 3, 1, 1]},
            {"pool1_stage1": [2, 2, 0]},
            {"conv1_2": [8, C0, 3, 1, 1]},
        ],
        [  # stage 1: [vec branch, heat branch]
            [{"conv_v1": [C0, HID, 3, 1, 1]}, {"conv_v2": [HID, VEC_C, 1, 1, 0]}],
            [{"conv_h1": [C0, HID, 3, 1, 1]}, {"conv_h2": [HID, HEAT_C, 1, 1, 0]}],
        ],
        [  # stage 2: input channels = VEC_C + HEAT_C + C0
            [{"conv_v1": [VEC_C + HEAT_C + C0, HID, 3, 1, 1]},
             {"conv_v2": [HID, VEC_C, 1, 1, 0]}],
            [{"conv_h1": [VEC_C + HEAT_C + C0, HID, 3, 1, 1]},
             {"conv_h2": [HID, HEAT_C, 1, 1, 0]}],
        ],
    ]

    N, H, W = 2, 16, 16
    key = jax.random.PRNGKey(0)
    k_x, k_m, k_p = jax.random.split(key, 3)

    # Inputs in PyTorch NCHW convention, converted to NHWC for the kernels.
    x_nchw = jax.random.normal(k_x, (N, C_IN, H, W), jnp.float32)
    mask_nchw = (jax.random.uniform(k_m, (N, 1, H // 2, W // 2)) > 0.3).astype(jnp.float32)
    x_nhwc = jnp.transpose(x_nchw, (0, 2, 3, 1))
    mask_nhwc = jnp.transpose(mask_nchw, (0, 2, 3, 1))

    params = build_openpose(net_dict, k_p)

    fwd = jax.jit(lambda x, m: openpose_forward(params, x, m))
    vec_out, heat_out = fwd(x_nhwc, mask_nhwc)
    jax.block_until_ready((vec_out, heat_out))

    assert len(vec_out) == 2 and len(heat_out) == 2
    assert vec_out[0].shape == (N, H // 2, W // 2, VEC_C)
    assert heat_out[0].shape == (N, H // 2, W // 2, HEAT_C)
    assert all(jnp.isfinite(v).all() for v in vec_out + heat_out)
    print("KERNEL_OK")
</pallas_src>

<mosaic_0001>
module attributes {stable_mosaic.version = 11 : i64} {
  func.func @kernel(%arg0: i32, %arg1: memref<1x16x16x4xf32, #tpu.memory_space<vmem>>, %arg2: memref<9x4x8xbf16, #tpu.memory_space<vmem>>, %arg3: memref<1x8xf32, #tpu.memory_space<vmem>>, %arg4: memref<9x8x16xbf16, #tpu.memory_space<vmem>>, %arg5: memref<1x16xf32, #tpu.memory_space<vmem>>, %arg6: memref<1x8x8x16xf32, #tpu.memory_space<vmem>>, %arg7: memref<18x18x4xbf16, #tpu.memory_space<vmem>>, %arg8: memref<8x8x8xf32, #tpu.memory_space<vmem>>, %arg9: memref<10x10x8xbf16, #tpu.memory_space<vmem>>) attributes {dimension_semantics = [#tpu.dimension_semantics<parallel>], iteration_bounds = array<i64: 2>, scalar_prefetch = 0 : i64, scratch_operands = 3 : i64, tpu.core_type = #tpu.core_type<tc>, window_params = [{transform_indices = @transform_0, window_bounds = array<i64: 1, 16, 16, 4>}, {pipeline_mode = #tpu.pipeline_mode<synchronous>, transform_indices = @transform_1, window_bounds = array<i64: 9, 4, 8>}, {pipeline_mode = #tpu.pipeline_mode<synchronous>, transform_indices = @transform_2, window_bounds = array<i64: 1, 8>}, {pipeline_mode = #tpu.pipeline_mode<synchronous>, transform_indices = @transform_3, window_bounds = array<i64: 9, 8, 16>}, {pipeline_mode = #tpu.pipeline_mode<synchronous>, transform_indices = @transform_4, window_bounds = array<i64: 1, 16>}, {transform_indices = @transform_5, window_bounds = array<i64: 1, 8, 8, 16>}]} {
    %c0 = arith.constant 0 : index
    %c0_0 = arith.constant 0 : index
    %c0_1 = arith.constant 0 : index
    %c0_2 = arith.constant 0 : index
    %0 = vector.load %arg1[%c0, %c0_0, %c0_1, %c0_2] : memref<1x16x16x4xf32, #tpu.memory_space<vmem>>, vector<1x16x16x4xf32>
    %1 = vector.shape_cast %0 : vector<1x16x16x4xf32> to vector<16x16x4xf32>
    %cst = arith.constant 0.000000e+00 : bf16
    %2 = vector.broadcast %cst : bf16 to vector<18x18x4xbf16>
    %c0_3 = arith.constant 0 : index
    %c0_4 = arith.constant 0 : index
    %c0_5 = arith.constant 0 : index
    %3 = vector.load %arg7[%c0_3, %c0_4, %c0_5] : memref<18x18x4xbf16, #tpu.memory_space<vmem>>, vector<18x18x4xbf16>
    tpu.vector_store %arg7[%c0_3, %c0_4, %c0_5], %2 {strides = array<i32>} : memref<18x18x4xbf16, #tpu.memory_space<vmem>>, vector<18x18x4xbf16>,
    %4 = arith.truncf %1 : vector<16x16x4xf32> to vector<16x16x4xbf16>
    %c1 = arith.constant 1 : index
    %c1_6 = arith.constant 1 : index
    %c0_7 = arith.constant 0 : index
    %5 = vector.load %arg7[%c1, %c1_6, %c0_7] : memref<18x18x4xbf16, #tpu.memory_space<vmem>>, vector<16x16x4xbf16>
    tpu.vector_store %arg7[%c1, %c1_6, %c0_7], %4 {strides = array<i32>} : memref<18x18x4xbf16, #tpu.memory_space<vmem>>, vector<16x16x4xbf16>,
    %cst_8 = arith.constant 0.000000e+00 : f32
    %6 = vector.broadcast %cst_8 : f32 to vector<256x8xf32>
    %c0_9 = arith.constant 0 : index
    %c0_10 = arith.constant 0 : index
    %c0_11 = arith.constant 0 : index
    %7 = vector.load %arg7[%c0_9, %c0_10, %c0_11] : memref<18x18x4xbf16, #tpu.memory_space<vmem>>, vector<16x16x4xbf16>
    %8 = vector.shape_cast %7 : vector<16x16x4xbf16> to vector<256x4xbf16>
    %c0_12 = arith.constant 0 : index
    %c0_13 = arith.constant 0 : index
    %c0_14 = arith.constant 0 : index
    %9 = vector.load %arg2[%c0_12, %c0_13, %c0_14] : memref<9x4x8xbf16, #tpu.memory_space<vmem>>, vector<1x4x8xbf16>
    %10 = vector.shape_cast %9 : vector<1x4x8xbf16> to vector<4x8xbf16>
    %cst_15 = arith.constant dense<0.000000e+00> : vector<256x8xf32>
    %11 = tpu.matmul %8, %10, %cst_15 {dimension_numbers = #tpu.dot_dimension_numbers<[1], [0], [0], [1], [0, 0, 1, 1], [], []>} : vector<256x4xbf16>, vector<4x8xbf16>, vector<256x8xf32> -> vector<256x8xf32>
    %12 = arith.addf %6, %11 : vector<256x8xf32>
    %c0_16 = arith.constant 0 : index
    %c1_17 = arith.constant 1 : index
    %c0_18 = arith.constant 0 : index
    %13 = vector.load %arg7[%c0_16, %c1_17, %c0_18] : memref<18x18x4xbf16, #tpu.memory_space<vmem>>, vector<16x16x4xbf16>
    %14 = vector.shape_cast %13 : vector<16x16x4xbf16> to vector<256x4xbf16>
    %c1_19 = arith.constant 1 : index
    %c0_20 = arith.constant 0 : index
    %c0_21 = arith.constant 0 : index
    %15 = vector.load %arg2[%c1_19, %c0_20, %c0_21] : memref<9x4x8xbf16, #tpu.memory_space<vmem>>, vector<1x4x8xbf16>
    %16 = vector.shape_cast %15 : vector<1x4x8xbf16> to vector<4x8xbf16>
    %cst_22 = arith.constant dense<0.000000e+00> : vector<256x8xf32>
    %17 = tpu.matmul %14, %16, %cst_22 {dimension_numbers = #tpu.dot_dimension_numbers<[1], [0], [0], [1], [0, 0, 1, 1], [], []>} : vector<256x4xbf16>, vector<4x8xbf16>, vector<256x8xf32> -> vector<256x8xf32>
    %18 = arith.addf %12, %17 : vector<256x8xf32>
    %c0_23 = arith.constant 0 : index
    %c2 = arith.constant 2 : index
    %c0_24 = arith.constant 0 : index
    %19 = vector.load %arg7[%c0_23, %c2, %c0_24] : memref<18x18x4xbf16, #tpu.memory_space<vmem>>, vector<16x16x4xbf16>
    %20 = vector.shape_cast %19 : vector<16x16x4xbf16> to vector<256x4xbf16>
    %c2_25 = arith.constant 2 : index
    %c0_26 = arith.constant 0 : index
    %c0_27 = arith.constant 0 : index
    %21 = vector.load %arg2[%c2_25, %c0_26, %c0_27] : memref<9x4x8xbf16, #tpu.memory_space<vmem>>, vector<1x4x8xbf16>
    %22 = vector.shape_cast %21 : vector<1x4x8xbf16> to vector<4x8xbf16>
    %cst_28 = arith.constant dense<0.000000e+00> : vector<256x8xf32>
    %23 = tpu.matmul %20, %22, %cst_28 {dimension_numbers = #tpu.dot_dimension_numbers<[1], [0], [0], [1], [0, 0, 1, 1], [], []>} : vector<256x4xbf16>, vector<4x8xbf16>, vector<256x8xf32> -> vector<256x8xf32>
    %24 = arith.addf %18, %23 : vector<256x8xf32>
    %c1_29 = arith.constant 1 : index
    %c0_30 = arith.constant 0 : index
    %c0_31 = arith.constant 0 : index
    %25 = vector.load %arg7[%c1_29, %c0_30, %c0_31] : memref<18x18x4xbf16, #tpu.memory_space<vmem>>, vector<16x16x4xbf16>
    %26 = vector.shape_cast %25 : vector<16x16x4xbf16> to vector<256x4xbf16>
    %c3 = arith.constant 3 : index
    %c0_32 = arith.constant 0 : index
    %c0_33 = arith.constant 0 : index
    %27 = vector.load %arg2[%c3, %c0_32, %c0_33] : memref<9x4x8xbf16, #tpu.memory_space<vmem>>, vector<1x4x8xbf16>
    %28 = vector.shape_cast %27 : vector<1x4x8xbf16> to vector<4x8xbf16>
    %cst_34 = arith.constant dense<0.000000e+00> : vector<256x8xf32>
    %29 = tpu.matmul %26, %28, %cst_34 {dimension_numbers = #tpu.dot_dimension_numbers<[1], [0], [0], [1], [0, 0, 1, 1], [], []>} : vector<256x4xbf16>, vector<4x8xbf16>, vector<256x8xf32> -> vector<256x8xf32>
    %30 = arith.addf %24, %29 : vector<256x8xf32>
    %c1_35 = arith.constant 1 : index
    %c1_36 = arith.constant 1 : index
    %c0_37 = arith.constant 0 : index
    %31 = vector.load %arg7[%c1_35, %c1_36, %c0_37] : memref<18x18x4xbf16, #tpu.memory_space<vmem>>, vector<16x16x4xbf16>
    %32 = vector.shape_cast %31 : vector<16x16x4xbf16> to vector<256x4xbf16>
    %c4 = arith.constant 4 : index
    %c0_38 = arith.constant 0 : index
    %c0_39 = arith.constant 0 : index
    %33 = vector.load %arg2[%c4, %c0_38, %c0_39] : memref<9x4x8xbf16, #tpu.memory_space<vmem>>, vector<1x4x8xbf16>
    %34 = vector.shape_cast %33 : vector<1x4x8xbf16> to vector<4x8xbf16>
    %cst_40 = arith.constant dense<0.000000e+00> : vector<256x8xf32>
    %35 = tpu.matmul %32, %34, %cst_40 {dimension_numbers = #tpu.dot_dimension_numbers<[1], [0], [0], [1], [0, 0, 1, 1], [], []>} : vector<256x4xbf16>, vector<4x8xbf16>, vector<256x8xf32> -> vector<256x8xf32>
    %36 = arith.addf %30, %35 : vector<256x8xf32>
    %c1_41 = arith.constant 1 : index
    %c2_42 = arith.constant 2 : index
    %c0_43 = arith.constant 0 : index
    %37 = vector.load %arg7[%c1_41, %c2_42, %c0_43] : memref<18x18x4xbf16, #tpu.memory_space<vmem>>, vector<16x16x4xbf16>
    %38 = vector.shape_cast %37 : vector<16x16x4xbf16> to vector<256x4xbf16>
    %c5 = arith.constant 5 : index
    %c0_44 = arith.constant 0 : index
    %c0_45 = arith.constant 0 : index
    %39 = vector.load %arg2[%c5, %c0_44, %c0_45] : memref<9x4x8xbf16, #tpu.memory_space<vmem>>, vector<1x4x8xbf16>
    %40 = vector.shape_cast %39 : vector<1x4x8xbf16> to vector<4x8xbf16>
    %cst_46 = arith.constant dense<0.000000e+00> : vector<256x8xf32>
    %41 = tpu.matmul %38, %40, %cst_46 {dimension_numbers = #tpu.dot_dimension_numbers<[1], [0], [0], [1], [0, 0, 1, 1], [], []>} : vector<256x4xbf16>, vector<4x8xbf16>, vector<256x8xf32> -> vector<256x8xf32>
    %42 = arith.addf %36, %41 : vector<256x8xf32>
    %c2_47 = arith.constant 2 : index
    %c0_48 = arith.constant 0 : index
    %c0_49 = arith.constant 0 : index
    %43 = vector.load %arg7[%c2_47, %c0_48, %c0_49] : memref<18x18x4xbf16, #tpu.memory_space<vmem>>, vector<16x16x4xbf16>
    %44 = vector.shape_cast %43 : vector<16x16x4xbf16> to vector<256x4xbf16>
    %c6 = arith.constant 6 : index
    %c0_50 = arith.constant 0 : index
    %c0_51 = arith.constant 0 : index
    %45 = vector.load %arg2[%c6, %c0_50, %c0_51] : memref<9x4x8xbf16, #tpu.memory_space<vmem>>, vector<1x4x8xbf16>
    %46 = vector.shape_cast %45 : vector<1x4x8xbf16> to vector<4x8xbf16>
    %cst_52 = arith.constant dense<0.000000e+00> : vector<256x8xf32>
    %47 = tpu.matmul %44, %46, %cst_52 {dimension_numbers = #tpu.dot_dimension_numbers<[1], [0], [0], [1], [0, 0, 1, 1], [], []>} : vector<256x4xbf16>, vector<4x8xbf16>, vector<256x8xf32> -> vector<256x8xf32>
    %48 = arith.addf %42, %47 : vector<256x8xf32>
    %c2_53 = arith.constant 2 : index
    %c1_54 = arith.constant 1 : index
    %c0_55 = arith.constant 0 : index
    %49 = vector.load %arg7[%c2_53, %c1_54, %c0_55] : memref<18x18x4xbf16, #tpu.memory_space<vmem>>, vector<16x16x4xbf16>
    %50 = vector.shape_cast %49 : vector<16x16x4xbf16> to vector<256x4xbf16>
    %c7 = arith.constant 7 : index
    %c0_56 = arith.constant 0 : index
    %c0_57 = arith.constant 0 : index
    %51 = vector.load %arg2[%c7, %c0_56, %c0_57] : memref<9x4x8xbf16, #tpu.memory_space<vmem>>, vector<1x4x8xbf16>
    %52 = vector.shape_cast %51 : vector<1x4x8xbf16> to vector<4x8xbf16>
    %cst_58 = arith.constant dense<0.000000e+00> : vector<256x8xf32>
    %53 = tpu.matmul %50, %52, %cst_58 {dimension_numbers = #tpu.dot_dimension_numbers<[1], [0], [0], [1], [0, 0, 1, 1], [], []>} : vector<256x4xbf16>, vector<4x8xbf16>, vector<256x8xf32> -> vector<256x8xf32>
    %54 = arith.addf %48, %53 : vector<256x8xf32>
    %c2_59 = arith.constant 2 : index
    %c2_60 = arith.constant 2 : index
    %c0_61 = arith.constant 0 : index
    %55 = vector.load %arg7[%c2_59, %c2_60, %c0_61] : memref<18x18x4xbf16, #tpu.memory_space<vmem>>, vector<16x16x4xbf16>
    %56 = vector.shape_cast %55 : vector<16x16x4xbf16> to vector<256x4xbf16>
    %c8 = arith.constant 8 : index
    %c0_62 = arith.constant 0 : index
    %c0_63 = arith.constant 0 : index
    %57 = vector.load %arg2[%c8, %c0_62, %c0_63] : memref<9x4x8xbf16, #tpu.memory_space<vmem>>, vector<1x4x8xbf16>
    %58 = vector.shape_cast %57 : vector<1x4x8xbf16> to vector<4x8xbf16>
    %cst_64 = arith.constant dense<0.000000e+00> : vector<256x8xf32>
    %59 = tpu.matmul %56, %58, %cst_64 {dimension_numbers = #tpu.dot_dimension_numbers<[1], [0], [0], [1], [0, 0, 1, 1], [], []>} : vector<256x4xbf16>, vector<4x8xbf16>, vector<256x8xf32> -> vector<256x8xf32>
    %60 = arith.addf %54, %59 : vector<256x8xf32>
    %c0_65 = arith.constant 0 : index
    %c0_66 = arith.constant 0 : index
    %61 = vector.load %arg3[%c0_65, %c0_66] : memref<1x8xf32, #tpu.memory_space<vmem>>, vector<1x8xf32>
    %62 = vector.broadcast %61 : vector<1x8xf32> to vector<256x8xf32>
    %63 = arith.addf %60, %62 : vector<256x8xf32>
    %cst_67 = arith.constant 0.000000e+00 : f32
    %64 = vector.broadcast %cst_67 : f32 to vector<256x8xf32>
    %65 = arith.maximumf %63, %64 : vector<256x8xf32>
    %66 = vector.shape_cast %65 : vector<256x8xf32> to vector<16x16x8xf32>
    %67 = vector.shape_cast %66 : vector<16x16x8xf32> to vector<8x2x16x8xf32>
    %68 = vector.extract_strided_slice %67 {offsets = [0, 0, 0, 0], sizes = [8, 1, 16, 8], strides = [1, 1, 1, 1]} : vector<8x2x16x8xf32> to vector<8x1x16x8xf32>
    %69 = vector.shape_cast %68 : vector<8x1x16x8xf32> to vector<8x16x8xf32>
    %70 = vector.extract_strided_slice %67 {offsets = [0, 1, 0, 0], sizes = [8, 1, 16, 8], strides = [1, 1, 1, 1]} : vector<8x2x16x8xf32> to vector<8x1x16x8xf32>
    %71 = vector.shape_cast %70 : vector<8x1x16x8xf32> to vector<8x16x8xf32>
    %72 = arith.maximumf %69, %71 : vector<8x16x8xf32>
    %73 = vector.extract_strided_slice %72 {offsets = [0, 0, 0], sizes = [8, 1, 8], strides = [1, 1, 1]} : vector<8x16x8xf32> to vector<8x1x8xf32>
    %74 = vector.extract_strided_slice %72 {offsets = [0, 1, 0], sizes = [8, 1, 8], strides = [1, 1, 1]} : vector<8x16x8xf32> to vector<8x1x8xf32>
    %75 = arith.maximumf %73, %74 : vector<8x1x8xf32>
    %c0_68 = arith.constant 0 : index
    %c0_69 = arith.constant 0 : index
    %c0_70 = arith.constant 0 : index
    %76 = vector.load %arg8[%c0_68, %c0_69, %c0_70] : memref<8x8x8xf32, #tpu.memory_space<vmem>>, vector<8x1x8xf32>
    tpu.vector_store %arg8[%c0_68, %c0_69, %c0_70], %75 {strides = array<i32>} : memref<8x8x8xf32, #tpu.memory_space<vmem>>, vector<8x1x8xf32>,
    %77 = vector.extract_strided_slice %72 {offsets = [0, 2, 0], sizes = [8, 1, 8], strides = [1, 1, 1]} : vector<8x16x8xf32> to vector<8x1x8xf32>
    %78 = vector.extract_strided_slice %72 {offsets = [0, 3, 0], sizes = [8, 1, 8], strides = [1, 1, 1]} : vector<8x16x8xf32> to vector<8x1x8xf32>
    %79 = arith.maximumf %77, %78 : vector<8x1x8xf32>
    %c0_71 = arith.constant 0 : index
    %c1_72 = arith.constant 1 : index
    %c0_73 = arith.constant 0 : index
    %80 = vector.load %arg8[%c0_71, %c1_72, %c0_73] : memref<8x8x8xf32, #tpu.memory_space<vmem>>, vector<8x1x8xf32>
    tpu.vector_store %arg8[%c0_71, %c1_72, %c0_73], %79 {strides = array<i32>} : memref<8x8x8xf32, #tpu.memory_space<vmem>>, vector<8x1x8xf32>,
    %81 = vector.extract_strided_slice %72 {offsets = [0, 4, 0], sizes = [8, 1, 8], strides = [1, 1, 1]} : vector<8x16x8xf32> to vector<8x1x8xf32>
    %82 = vector.extract_strided_slice %72 {offsets = [0, 5, 0], sizes = [8, 1, 8], strides = [1, 1, 1]} : vector<8x16x8xf32> to vector<8x1x8xf32>
    %83 = arith.maximumf %81, %82 : vector<8x1x8xf32>
    %c0_74 = arith.constant 0 : index
    %c2_75 = arith.constant 2 : index
    %c0_76 = arith.constant 0 : index
    %84 = vector.load %arg8[%c0_74, %c2_75, %c0_76] : memref<8x8x8xf32, #tpu.memory_space<vmem>>, vector<8x1x8xf32>
    tpu.vector_store %arg8[%c0_74, %c2_75, %c0_76], %83 {strides = array<i32>} : memref<8x8x8xf32, #tpu.memory_space<vmem>>, vector<8x1x8xf32>,
    %85 = vector.extract_strided_slice %72 {offsets = [0, 6, 0], sizes = [8, 1, 8], strides = [1, 1, 1]} : vector<8x16x8xf32> to vector<8x1x8xf32>
    %86 = vector.extract_strided_slice %72 {offsets = [0, 7, 0], sizes = [8, 1, 8], strides = [1, 1, 1]} : vector<8x16x8xf32> to vector<8x1x8xf32>
    %87 = arith.maximumf %85, %86 : vector<8x1x8xf32>
    %c0_77 = arith.constant 0 : index
    %c3_78 = arith.constant 3 : index
    %c0_79 = arith.constant 0 : index
    %88 = vector.load %arg8[%c0_77, %c3_78, %c0_79] : memref<8x8x8xf32, #tpu.memory_space<vmem>>, vector<8x1x8xf32>
    tpu.vector_store %arg8[%c0_77, %c3_78, %c0_79], %87 {strides = array<i32>} : memref<8x8x8xf32, #tpu.memory_space<vmem>>, vector<8x1x8xf32>,
    %89 = vector.extract_strided_slice %72 {offsets = [0, 8, 0], sizes = [8, 1, 8], strides = [1, 1, 1]} : vector<8x16x8xf32> to vector<8x1x8xf32>
    %90 = vector.extract_strided_slice %72 {offsets = [0, 9, 0], sizes = [8, 1, 8], strides = [1, 1, 1]} : vector<8x16x8xf32> to vector<8x1x8xf32>
    %91 = arith.maximumf %89, %90 : vector<8x1x8xf32>
    %c0_80 = arith.constant 0 : index
    %c4_81 = arith.constant 4 : index
    %c0_82 = arith.constant 0 : index
    %92 = vector.load %arg8[%c0_80, %c4_81, %c0_82] : memref<8x8x8xf32, #tpu.memory_space<vmem>>, vector<8x1x8xf32>
    tpu.vector_store %arg8[%c0_80, %c4_81, %c0_82], %91 {strides = array<i32>} : memref<8x8x8xf32, #tpu.memory_space<vmem>>, vector<8x1x8xf32>,
    %93 = vector.extract_strided_slice %72 {offsets = [0, 10, 0], sizes = [8, 1, 8], strides = [1, 1, 1]} : vector<8x16x8xf32> to vector<8x1x8xf32>
    %94 = vector.extract_strided_slice %72 {offsets = [0, 11, 0], sizes = [8, 1, 8], strides = [1, 1, 1]} : vector<8x16x8xf32> to vector<8x1x8xf32>
    %95 = arith.maximumf %93, %94 : vector<8x1x8xf32>
    %c0_83 = arith.constant 0 : index
    %c5_84 = arith.constant 5 : index
    %c0_85 = arith.constant 0 : index
    %96 = vector.load %arg8[%c0_83, %c5_84, %c0_85] : memref<8x8x8xf32, #tpu.memory_space<vmem>>, vector<8x1x8xf32>
    tpu.vector_store %arg8[%c0_83, %c5_84, %c0_85], %95 {strides = array<i32>} : memref<8x8x8xf32, #tpu.memory_space<vmem>>, vector<8x1x8xf32>,
    %97 = vector.extract_strided_slice %72 {offsets = [0, 12, 0], sizes = [8, 1, 8], strides = [1, 1, 1]} : vector<8x16x8xf32> to vector<8x1x8xf32>
    %98 = vector.extract_strided_slice %72 {offsets = [0, 13, 0], sizes = [8, 1, 8], strides = [1, 1, 1]} : vector<8x16x8xf32> to vector<8x1x8xf32>
    %99 = arith.maximumf %97, %98 : vector<8x1x8xf32>
    %c0_86 = arith.constant 0 : index
    %c6_87 = arith.constant 6 : index
    %c0_88 = arith.constant 0 : index
    %100 = vector.load %arg8[%c0_86, %c6_87, %c0_88] : memref<8x8x8xf32, #tpu.memory_space<vmem>>, vector<8x1x8xf32>
    tpu.vector_store %arg8[%c0_86, %c6_87, %c0_88], %99 {strides = array<i32>} : memref<8x8x8xf32, #tpu.memory_space<vmem>>, vector<8x1x8xf32>,
    %101 = vector.extract_strided_slice %72 {offsets = [0, 14, 0], sizes = [8, 1, 8], strides = [1, 1, 1]} : vector<8x16x8xf32> to vector<8x1x8xf32>
    %102 = vector.extract_strided_slice %72 {offsets = [0, 15, 0], sizes = [8, 1, 8], strides = [1, 1, 1]} : vector<8x16x8xf32> to vector<8x1x8xf32>
    %103 = arith.maximumf %101, %102 : vector<8x1x8xf32>
    %c0_89 = arith.constant 0 : index
    %c7_90 = arith.constant 7 : index
    %c0_91 = arith.constant 0 : index
    %104 = vector.load %arg8[%c0_89, %c7_90, %c0_91] : memref<8x8x8xf32, #tpu.memory_space<vmem>>, vector<8x1x8xf32>
    tpu.vector_store %arg8[%c0_89, %c7_90, %c0_91], %103 {strides = array<i32>} : memref<8x8x8xf32, #tpu.memory_space<vmem>>, vector<8x1x8xf32>,
    %c0_92 = arith.constant 0 : index
    %c0_93 = arith.constant 0 : index
    %c0_94 = arith.constant 0 : index
    %105 = vector.load %arg8[%c0_92, %c0_93, %c0_94] : memref<8x8x8xf32, #tpu.memory_space<vmem>>, vector<8x8x8xf32>
    %cst_95 = arith.constant 0.000000e+00 : bf16
    %106 = vector.broadcast %cst_95 : bf16 to vector<10x10x8xbf16>
    %c0_96 = arith.constant 0 : index
    %c0_97 = arith.constant 0 : index
    %c0_98 = arith.constant 0 : index
    %107 = vector.load %arg9[%c0_96, %c0_97, %c0_98] : memref<10x10x8xbf16, #tpu.memory_space<vmem>>, vector<10x10x8xbf16>
    tpu.vector_store %arg9[%c0_96, %c0_97, %c0_98], %106 {strides = array<i32>} : memref<10x10x8xbf16, #tpu.memory_space<vmem>>, vector<10x10x8xbf16>,
    %108 = arith.truncf %105 : vector<8x8x8xf32> to vector<8x8x8xbf16>
    %c1_99 = arith.constant 1 : index
    %c1_100 = arith.constant 1 : index
    %c0_101 = arith.constant 0 : index
    %109 = vector.load %arg9[%c1_99, %c1_100, %c0_101] : memref<10x10x8xbf16, #tpu.memory_space<vmem>>, vector<8x8x8xbf16>
    tpu.vector_store %arg9[%c1_99, %c1_100, %c0_101], %108 {strides = array<i32>} : memref<10x10x8xbf16, #tpu.memory_space<vmem>>, vector<8x8x8xbf16>,
    %cst_102 = arith.constant 0.000000e+00 : f32
    %110 = vector.broadcast %cst_102 : f32 to vector<64x16xf32>
    %c0_103 = arith.constant 0 : index
    %c0_104 = arith.constant 0 : index
    %c0_105 = arith.constant 0 : index
    %111 = vector.load %arg9[%c0_103, %c0_104, %c0_105] : memref<10x10x8xbf16, #tpu.memory_space<vmem>>, vector<8x8x8xbf16>
    %112 = vector.shape_cast %111 : vector<8x8x8xbf16> to vector<64x8xbf16>
    %c0_106 = arith.constant 0 : index
    %c0_107 = arith.constant 0 : index
    %c0_108 = arith.constant 0 : index
    %113 = vector.load %arg4[%c0_106, %c0_107, %c0_108] : memref<9x8x16xbf16, #tpu.memory_space<vmem>>, vector<1x8x16xbf16>
    %114 = vector.shape_cast %113 : vector<1x8x16xbf16> to vector<8x16xbf16>
    %cst_109 = arith.constant dense<0.000000e+00> : vector<64x16xf32>
    %115 = tpu.matmul %112, %114, %cst_109 {dimension_numbers = #tpu.dot_dimension_numbers<[1], [0], [0], [1], [0, 0, 1, 1], [], []>} : vector<64x8xbf16>, vector<8x16xbf16>, vector<64x16xf32> -> vector<64x16xf32>
    %116 = arith.addf %110, %115 : vector<64x16xf32>
    %c0_110 = arith.constant 0 : index
    %c1_111 = arith.constant 1 : index
    %c0_112 = arith.constant 0 : index
    %117 = vector.load %arg9[%c0_110, %c1_111, %c0_112] : memref<10x10x8xbf16, #tpu.memory_space<vmem>>, vector<8x8x8xbf16>
    %118 = vector.shape_cast %117 : vector<8x8x8xbf16> to vector<64x8xbf16>
    %c1_113 = arith.constant 1 : index
    %c0_114 = arith.constant 0 : index
    %c0_115 = arith.constant 0 : index
    %119 = vector.load %arg4[%c1_113, %c0_114, %c0_115] : memref<9x8x16xbf16, #tpu.memory_space<vmem>>, vector<1x8x16xbf16>
    %120 = vector.shape_cast %119 : vector<1x8x16xbf16> to vector<8x16xbf16>
    %cst_116 = arith.constant dense<0.000000e+00> : vector<64x16xf32>
    %121 = tpu.matmul %118, %120, %cst_116 {dimension_numbers = #tpu.dot_dimension_numbers<[1], [0], [0], [1], [0, 0, 1, 1], [], []>} : vector<64x8xbf16>, vector<8x16xbf16>, vector<64x16xf32> -> vector<64x16xf32>
    %122 = arith.addf %116, %121 : vector<64x16xf32>
    %c0_117 = arith.constant 0 : index
    %c2_118 = arith.constant 2 : index
    %c0_119 = arith.constant 0 : index
    %123 = vector.load %arg9[%c0_117, %c2_118, %c0_119] : memref<10x10x8xbf16, #tpu.memory_space<vmem>>, vector<8x8x8xbf16>
    %124 = vector.shape_cast %123 : vector<8x8x8xbf16> to vector<64x8xbf16>
    %c2_120 = arith.constant 2 : index
    %c0_121 = arith.constant 0 : index
    %c0_122 = arith.constant 0 : index
    %125 = vector.load %arg4[%c2_120, %c0_121, %c0_122] : memref<9x8x16xbf16, #tpu.memory_space<vmem>>, vector<1x8x16xbf16>
    %126 = vector.shape_cast %125 : vector<1x8x16xbf16> to vector<8x16xbf16>
    %cst_123 = arith.constant dense<0.000000e+00> : vector<64x16xf32>
    %127 = tpu.matmul %124, %126, %cst_123 {dimension_numbers = #tpu.dot_dimension_numbers<[1], [0], [0], [1], [0, 0, 1, 1], [], []>} : vector<64x8xbf16>, vector<8x16xbf16>, vector<64x16xf32> -> vector<64x16xf32>
    %128 = arith.addf %122, %127 : vector<64x16xf32>
    %c1_124 = arith.constant 1 : index
    %c0_125 = arith.constant 0 : index
    %c0_126 = arith.constant 0 : index
    %129 = vector.load %arg9[%c1_124, %c0_125, %c0_126] : memref<10x10x8xbf16, #tpu.memory_space<vmem>>, vector<8x8x8xbf16>
    %130 = vector.shape_cast %129 : vector<8x8x8xbf16> to vector<64x8xbf16>
    %c3_127 = arith.constant 3 : index
    %c0_128 = arith.constant 0 : index
    %c0_129 = arith.constant 0 : index
    %131 = vector.load %arg4[%c3_127, %c0_128, %c0_129] : memref<9x8x16xbf16, #tpu.memory_space<vmem>>, vector<1x8x16xbf16>
    %132 = vector.shape_cast %131 : vector<1x8x16xbf16> to vector<8x16xbf16>
    %cst_130 = arith.constant dense<0.000000e+00> : vector<64x16xf32>
    %133 = tpu.matmul %130, %132, %cst_130 {dimension_numbers = #tpu.dot_dimension_numbers<[1], [0], [0], [1], [0, 0, 1, 1], [], []>} : vector<64x8xbf16>, vector<8x16xbf16>, vector<64x16xf32> -> vector<64x16xf32>
    %134 = arith.addf %128, %133 : vector<64x16xf32>
    %c1_131 = arith.constant 1 : index
    %c1_132 = arith.constant 1 : index
    %c0_133 = arith.constant 0 : index
    %135 = vector.load %arg9[%c1_131, %c1_132, %c0_133] : memref<10x10x8xbf16, #tpu.memory_space<vmem>>, vector<8x8x8xbf16>
    %136 = vector.shape_cast %135 : vector<8x8x8xbf16> to vector<64x8xbf16>
    %c4_134 = arith.constant 4 : index
    %c0_135 = arith.constant 0 : index
    %c0_136 = arith.constant 0 : index
    %137 = vector.load %arg4[%c4_134, %c0_135, %c0_136] : memref<9x8x16xbf16, #tpu.memory_space<vmem>>, vector<1x8x16xbf16>
    %138 = vector.shape_cast %137 : vector<1x8x16xbf16> to vector<8x16xbf16>
    %cst_137 = arith.constant dense<0.000000e+00> : vector<64x16xf32>
    %139 = tpu.matmul %136, %138, %cst_137 {dimension_numbers = #tpu.dot_dimension_numbers<[1], [0], [0], [1], [0, 0, 1, 1], [], []>} : vector<64x8xbf16>, vector<8x16xbf16>, vector<64x16xf32> -> vector<64x16xf32>
    %140 = arith.addf %134, %139 : vector<64x16xf32>
    %c1_138 = arith.constant 1 : index
    %c2_139 = arith.constant 2 : index
    %c0_140 = arith.constant 0 : index
    %141 = vector.load %arg9[%c1_138, %c2_139, %c0_140] : memref<10x10x8xbf16, #tpu.memory_space<vmem>>, vector<8x8x8xbf16>
    %142 = vector.shape_cast %141 : vector<8x8x8xbf16> to vector<64x8xbf16>
    %c5_141 = arith.constant 5 : index
    %c0_142 = arith.constant 0 : index
    %c0_143 = arith.constant 0 : index
    %143 = vector.load %arg4[%c5_141, %c0_142, %c0_143] : memref<9x8x16xbf16, #tpu.memory_space<vmem>>, vector<1x8x16xbf16>
    %144 = vector.shape_cast %143 : vector<1x8x16xbf16> to vector<8x16xbf16>
    %cst_144 = arith.constant dense<0.000000e+00> : vector<64x16xf32>
    %145 = tpu.matmul %142, %144, %cst_144 {dimension_numbers = #tpu.dot_dimension_numbers<[1], [0], [0], [1], [0, 0, 1, 1], [], []>} : vector<64x8xbf16>, vector<8x16xbf16>, vector<64x16xf32> -> vector<64x16xf32>
    %146 = arith.addf %140, %145 : vector<64x16xf32>
    %c2_145 = arith.constant 2 : index
    %c0_146 = arith.constant 0 : index
    %c0_147 = arith.constant 0 : index
    %147 = vector.load %arg9[%c2_145, %c0_146, %c0_147] : memref<10x10x8xbf16, #tpu.memory_space<vmem>>, vector<8x8x8xbf16>
    %148 = vector.shape_cast %147 : vector<8x8x8xbf16> to vector<64x8xbf16>
    %c6_148 = arith.constant 6 : index
    %c0_149 = arith.constant 0 : index
    %c0_150 = arith.constant 0 : index
    %149 = vector.load %arg4[%c6_148, %c0_149, %c0_150] : memref<9x8x16xbf16, #tpu.memory_space<vmem>>, vector<1x8x16xbf16>
    %150 = vector.shape_cast %149 : vector<1x8x16xbf16> to vector<8x16xbf16>
    %cst_151 = arith.constant dense<0.000000e+00> : vector<64x16xf32>
    %151 = tpu.matmul %148, %150, %cst_151 {dimension_numbers = #tpu.dot_dimension_numbers<[1], [0], [0], [1], [0, 0, 1, 1], [], []>} : vector<64x8xbf16>, vector<8x16xbf16>, vector<64x16xf32> -> vector<64x16xf32>
    %152 = arith.addf %146, %151 : vector<64x16xf32>
    %c2_152 = arith.constant 2 : index
    %c1_153 = arith.constant 1 : index
    %c0_154 = arith.constant 0 : index
    %153 = vector.load %arg9[%c2_152, %c1_153, %c0_154] : memref<10x10x8xbf16, #tpu.memory_space<vmem>>, vector<8x8x8xbf16>
    %154 = vector.shape_cast %153 : vector<8x8x8xbf16> to vector<64x8xbf16>
    %c7_155 = arith.constant 7 : index
    %c0_156 = arith.constant 0 : index
    %c0_157 = arith.constant 0 : index
    %155 = vector.load %arg4[%c7_155, %c0_156, %c0_157] : memref<9x8x16xbf16, #tpu.memory_space<vmem>>, vector<1x8x16xbf16>
    %156 = vector.shape_cast %155 : vector<1x8x16xbf16> to vector<8x16xbf16>
    %cst_158 = arith.constant dense<0.000000e+00> : vector<64x16xf32>
    %157 = tpu.matmul %154, %156, %cst_158 {dimension_numbers = #tpu.dot_dimension_numbers<[1], [0], [0], [1], [0, 0, 1, 1], [], []>} : vector<64x8xbf16>, vector<8x16xbf16>, vector<64x16xf32> -> vector<64x16xf32>
    %158 = arith.addf %152, %157 : vector<64x16xf32>
    %c2_159 = arith.constant 2 : index
    %c2_160 = arith.constant 2 : index
    %c0_161 = arith.constant 0 : index
    %159 = vector.load %arg9[%c2_159, %c2_160, %c0_161] : memref<10x10x8xbf16, #tpu.memory_space<vmem>>, vector<8x8x8xbf16>
    %160 = vector.shape_cast %159 : vector<8x8x8xbf16> to vector<64x8xbf16>
    %c8_162 = arith.constant 8 : index
    %c0_163 = arith.constant 0 : index
    %c0_164 = arith.constant 0 : index
    %161 = vector.load %arg4[%c8_162, %c0_163, %c0_164] : memref<9x8x16xbf16, #tpu.memory_space<vmem>>, vector<1x8x16xbf16>
    %162 = vector.shape_cast %161 : vector<1x8x16xbf16> to vector<8x16xbf16>
    %cst_165 = arith.constant dense<0.000000e+00> : vector<64x16xf32>
    %163 = tpu.matmul %160, %162, %cst_165 {dimension_numbers = #tpu.dot_dimension_numbers<[1], [0], [0], [1], [0, 0, 1, 1], [], []>} : vector<64x8xbf16>, vector<8x16xbf16>, vector<64x16xf32> -> vector<64x16xf32>
    %164 = arith.addf %158, %163 : vector<64x16xf32>
    %c0_166 = arith.constant 0 : index
    %c0_167 = arith.constant 0 : index
    %165 = vector.load %arg5[%c0_166, %c0_167] : memref<1x16xf32, #tpu.memory_space<vmem>>, vector<1x16xf32>
    %166 = vector.broadcast %165 : vector<1x16xf32> to vector<64x16xf32>
    %167 = arith.addf %164, %166 : vector<64x16xf32>
    %cst_168 = arith.constant 0.000000e+00 : f32
    %168 = vector.broadcast %cst_168 : f32 to vector<64x16xf32>
    %169 = arith.maximumf %167, %168 : vector<64x16xf32>
    %170 = vector.shape_cast %169 : vector<64x16xf32> to vector<8x8x16xf32>
    %c0_169 = arith.constant 0 : index
    %c0_170 = arith.constant 0 : index
    %c0_171 = arith.constant 0 : index
    %c0_172 = arith.constant 0 : index
    %171 = vector.load %arg6[%c0_169, %c0_170, %c0_171, %c0_172] : memref<1x8x8x16xf32, #tpu.memory_space<vmem>>, vector<1x8x8x16xf32>
    %172 = vector.shape_cast %171 : vector<1x8x8x16xf32> to vector<8x8x16xf32>
    %173 = vector.shape_cast %170 : vector<8x8x16xf32> to vector<1x8x8x16xf32>
    tpu.vector_store %arg6[%c0_169, %c0_170, %c0_171, %c0_172], %173 {strides = array<i32>} : memref<1x8x8x16xf32, #tpu.memory_space<vmem>>, vector<1x8x8x16xf32>,
    return
  }
  func.func @transform_0(%arg0: i32) -> (i32, i32, i32, i32) {
    %c0_i32 = arith.constant 0 : i32
    %c0_i32_0 = arith.constant 0 : i32
    %c0_i32_1 = arith.constant 0 : i32
    %c0_i32_2 = arith.constant 0 : i32
    return %arg0, %c0_i32, %c0_i32_0, %c0_i32_1 : i32, i32, i32, i32
  }
  func.func @transform_1(%arg0: i32) -> (i32, i32, i32) {
    %c0_i32 = arith.constant 0 : i32
    %c0_i32_0 = arith.constant 0 : i32
    %c0_i32_1 = arith.constant 0 : i32
    %c0_i32_2 = arith.constant 0 : i32
    return %c0_i32, %c0_i32_0, %c0_i32_1 : i32, i32, i32
  }
  func.func @transform_2(%arg0: i32) -> (i32, i32) {
    %c0_i32 = arith.constant 0 : i32
    %c0_i32_0 = arith.constant 0 : i32
    %c0_i32_1 = arith.constant 0 : i32
    return %c0_i32, %c0_i32_0 : i32, i32
  }
  func.func @transform_3(%arg0: i32) -> (i32, i32, i32) {
    %c0_i32 = arith.constant 0 : i32
    %c0_i32_0 = arith.constant 0 : i32
    %c0_i32_1 = arith.constant 0 : i32
    %c0_i32_2 = arith.constant 0 : i32
    return %c0_i32, %c0_i32_0, %c0_i32_1 : i32, i32, i32
  }
  func.func @transform_4(%arg0: i32) -> (i32, i32) {
    %c0_i32 = arith.constant 0 : i32
    %c0_i32_0 = arith.constant 0 : i32
    %c0_i32_1 = arith.constant 0 : i32
    return %c0_i32, %c0_i32_0 : i32, i32
  }
  func.func @transform_5(%arg0: i32) -> (i32, i32, i32, i32) {
    %c0_i32 = arith.constant 0 : i32
    %c0_i32_0 = arith.constant 0 : i32
    %c0_i32_1 = arith.constant 0 : i32
    %c0_i32_2 = arith.constant 0 : i32
    return %arg0, %c0_i32, %c0_i32_0, %c0_i32_1 : i32, i32, i32, i32
  }
}

module attributes {stable_mosaic.version = 11 : i64} {
  func.func @kernel(%arg0: i32, %arg1: memref<1x8x8x16xf32, #tpu.memory_space<vmem>>, %arg2: memref<1x8x8x1xf32, #tpu.memory_space<vmem>>, %arg3: memref<9x16x64xbf16, #tpu.memory_space<vmem>>, %arg4: memref<1x64xf32, #tpu.memory_space<vmem>>, %arg5: memref<1x64x10xbf16, #tpu.memory_space<vmem>>, %arg6: memref<1x10xf32, #tpu.memory_space<vmem>>, %arg7: memref<1x8x8x10xf32, #tpu.memory_space<vmem>>, %arg8: memref<1x8x8x10xf32, #tpu.memory_space<vmem>>, %arg9: memref<10x10x16xbf16, #tpu.memory_space<vmem>>) attributes {dimension_semantics = [#tpu.dimension_semantics<parallel>], iteration_bounds = array<i64: 2>, scalar_prefetch = 0 : i64, scratch_operands = 1 : i64, tpu.core_type = #tpu.core_type<tc>, window_params = [{transform_indices = @transform_0, window_bounds = array<i64: 1, 8, 8, 16>}, {transform_indices = @transform_1, window_bounds = array<i64: 1, 8, 8, 1>}, {pipeline_mode = #tpu.pipeline_mode<synchronous>, transform_indices = @transform_2, window_bounds = array<i64: 9, 16, 64>}, {pipeline_mode = #tpu.pipeline_mode<synchronous>, transform_indices = @transform_3, window_bounds = array<i64: 1, 64>}, {pipeline_mode = #tpu.pipeline_mode<synchronous>, transform_indices = @transform_4, window_bounds = array<i64: 1, 64, 10>}, {pipeline_mode = #tpu.pipeline_mode<synchronous>, transform_indices = @transform_5, window_bounds = array<i64: 1, 10>}, {transform_indices = @transform_6, window_bounds = array<i64: 1, 8, 8, 10>}, {transform_indices = @transform_7, window_bounds = array<i64: 1, 8, 8, 10>}]} {
    %c0 = arith.constant 0 : index
    %c0_0 = arith.constant 0 : index
    %c0_1 = arith.constant 0 : index
    %c0_2 = arith.constant 0 : index
    %0 = vector.load %arg1[%c0, %c0_0, %c0_1, %c0_2] : memref<1x8x8x16xf32, #tpu.memory_space<vmem>>, vector<1x8x8x16xf32>
    %1 = vector.shape_cast %0 : vector<1x8x8x16xf32> to vector<8x8x16xf32>
    %cst = arith.constant 0.000000e+00 : bf16
    %2 = vector.broadcast %cst : bf16 to vector<10x10x16xbf16>
    %c0_3 = arith.constant 0 : index
    %c0_4 = arith.constant 0 : index
    %c0_5 = arith.constant 0 : index
    %3 = vector.load %arg9[%c0_3, %c0_4, %c0_5] : memref<10x10x16xbf16, #tpu.memory_space<vmem>>, vector<10x10x16xbf16>
    tpu.vector_store %arg9[%c0_3, %c0_4, %c0_5], %2 {strides = array<i32>} : memref<10x10x16xbf16, #tpu.memory_space<vmem>>, vector<10x10x16xbf16>,
    %4 = arith.truncf %1 : vector<8x8x16xf32> to vector<8x8x16xbf16>
    %c1 = arith.constant 1 : index
    %c1_6 = arith.constant 1 : index
    %c0_7 = arith.constant 0 : index
    %5 = vector.load %arg9[%c1, %c1_6, %c0_7] : memref<10x10x16xbf16, #tpu.memory_space<vmem>>, vector<8x8x16xbf16>
    tpu.vector_store %arg9[%c1, %c1_6, %c0_7], %4 {strides = array<i32>} : memref<10x10x16xbf16, #tpu.memory_space<vmem>>, vector<8x8x16xbf16>,
    %cst_8 = arith.constant 0.000000e+00 : f32
    %6 = vector.broadcast %cst_8 : f32 to vector<64x64xf32>
    %c0_9 = arith.constant 0 : index
    %c0_10 = arith.constant 0 : index
    %c0_11 = arith.constant 0 : index
    %7 = vector.load %arg9[%c0_9, %c0_10, %c0_11] : memref<10x10x16xbf16, #tpu.memory_space<vmem>>, vector<8x8x16xbf16>
    %8 = vector.shape_cast %7 : vector<8x8x16xbf16> to vector<64x16xbf16>
    %c0_12 = arith.constant 0 : index
    %c0_13 = arith.constant 0 : index
    %c0_14 = arith.constant 0 : index
    %9 = vector.load %arg3[%c0_12, %c0_13, %c0_14] : memref<9x16x64xbf16, #tpu.memory_space<vmem>>, vector<1x16x64xbf16>
    %10 = vector.shape_cast %9 : vector<1x16x64xbf16> to vector<16x64xbf16>
    %cst_15 = arith.constant dense<0.000000e+00> : vector<64x64xf32>
    %11 = tpu.matmul %8, %10, %cst_15 {dimension_numbers = #tpu.dot_dimension_numbers<[1], [0], [0], [1], [0, 0, 1, 1], [], []>} : vector<64x16xbf16>, vector<16x64xbf16>, vector<64x64xf32> -> vector<64x64xf32>
    %12 = arith.addf %6, %11 : vector<64x64xf32>
    %c0_16 = arith.constant 0 : index
    %c1_17 = arith.constant 1 : index
    %c0_18 = arith.constant 0 : index
    %13 = vector.load %arg9[%c0_16, %c1_17, %c0_18] : memref<10x10x16xbf16, #tpu.memory_space<vmem>>, vector<8x8x16xbf16>
    %14 = vector.shape_cast %13 : vector<8x8x16xbf16> to vector<64x16xbf16>
    %c1_19 = arith.constant 1 : index
    %c0_20 = arith.constant 0 : index
    %c0_21 = arith.constant 0 : index
    %15 = vector.load %arg3[%c1_19, %c0_20, %c0_21] : memref<9x16x64xbf16, #tpu.memory_space<vmem>>, vector<1x16x64xbf16>
    %16 = vector.shape_cast %15 : vector<1x16x64xbf16> to vector<16x64xbf16>
    %cst_22 = arith.constant dense<0.000000e+00> : vector<64x64xf32>
    %17 = tpu.matmul %14, %16, %cst_22 {dimension_numbers = #tpu.dot_dimension_numbers<[1], [0], [0], [1], [0, 0, 1, 1], [], []>} : vector<64x16xbf16>, vector<16x64xbf16>, vector<64x64xf32> -> vector<64x64xf32>
    %18 = arith.addf %12, %17 : vector<64x64xf32>
    %c0_23 = arith.constant 0 : index
    %c2 = arith.constant 2 : index
    %c0_24 = arith.constant 0 : index
    %19 = vector.load %arg9[%c0_23, %c2, %c0_24] : memref<10x10x16xbf16, #tpu.memory_space<vmem>>, vector<8x8x16xbf16>
    %20 = vector.shape_cast %19 : vector<8x8x16xbf16> to vector<64x16xbf16>
    %c2_25 = arith.constant 2 : index
    %c0_26 = arith.constant 0 : index
    %c0_27 = arith.constant 0 : index
    %21 = vector.load %arg3[%c2_25, %c0_26, %c0_27] : memref<9x16x64xbf16, #tpu.memory_space<vmem>>, vector<1x16x64xbf16>
    %22 = vector.shape_cast %21 : vector<1x16x64xbf16> to vector<16x64xbf16>
    %cst_28 = arith.constant dense<0.000000e+00> : vector<64x64xf32>
    %23 = tpu.matmul %20, %22, %cst_28 {dimension_numbers = #tpu.dot_dimension_numbers<[1], [0], [0], [1], [0, 0, 1, 1], [], []>} : vector<64x16xbf16>, vector<16x64xbf16>, vector<64x64xf32> -> vector<64x64xf32>
    %24 = arith.addf %18, %23 : vector<64x64xf32>
    %c1_29 = arith.constant 1 : index
    %c0_30 = arith.constant 0 : index
    %c0_31 = arith.constant 0 : index
    %25 = vector.load %arg9[%c1_29, %c0_30, %c0_31] : memref<10x10x16xbf16, #tpu.memory_space<vmem>>, vector<8x8x16xbf16>
    %26 = vector.shape_cast %25 : vector<8x8x16xbf16> to vector<64x16xbf16>
    %c3 = arith.constant 3 : index
    %c0_32 = arith.constant 0 : index
    %c0_33 = arith.constant 0 : index
    %27 = vector.load %arg3[%c3, %c0_32, %c0_33] : memref<9x16x64xbf16, #tpu.memory_space<vmem>>, vector<1x16x64xbf16>
    %28 = vector.shape_cast %27 : vector<1x16x64xbf16> to vector<16x64xbf16>
    %cst_34 = arith.constant dense<0.000000e+00> : vector<64x64xf32>
    %29 = tpu.matmul %26, %28, %cst_34 {dimension_numbers = #tpu.dot_dimension_numbers<[1], [0], [0], [1], [0, 0, 1, 1], [], []>} : vector<64x16xbf16>, vector<16x64xbf16>, vector<64x64xf32> -> vector<64x64xf32>
    %30 = arith.addf %24, %29 : vector<64x64xf32>
    %c1_35 = arith.constant 1 : index
    %c1_36 = arith.constant 1 : index
    %c0_37 = arith.constant 0 : index
    %31 = vector.load %arg9[%c1_35, %c1_36, %c0_37] : memref<10x10x16xbf16, #tpu.memory_space<vmem>>, vector<8x8x16xbf16>
    %32 = vector.shape_cast %31 : vector<8x8x16xbf16> to vector<64x16xbf16>
    %c4 = arith.constant 4 : index
    %c0_38 = arith.constant 0 : index
    %c0_39 = arith.constant 0 : index
    %33 = vector.load %arg3[%c4, %c0_38, %c0_39] : memref<9x16x64xbf16, #tpu.memory_space<vmem>>, vector<1x16x64xbf16>
    %34 = vector.shape_cast %33 : vector<1x16x64xbf16> to vector<16x64xbf16>
    %cst_40 = arith.constant dense<0.000000e+00> : vector<64x64xf32>
    %35 = tpu.matmul %32, %34, %cst_40 {dimension_numbers = #tpu.dot_dimension_numbers<[1], [0], [0], [1], [0, 0, 1, 1], [], []>} : vector<64x16xbf16>, vector<16x64xbf16>, vector<64x64xf32> -> vector<64x64xf32>
    %36 = arith.addf %30, %35 : vector<64x64xf32>
    %c1_41 = arith.constant 1 : index
    %c2_42 = arith.constant 2 : index
    %c0_43 = arith.constant 0 : index
    %37 = vector.load %arg9[%c1_41, %c2_42, %c0_43] : memref<10x10x16xbf16, #tpu.memory_space<vmem>>, vector<8x8x16xbf16>
    %38 = vector.shape_cast %37 : vector<8x8x16xbf16> to vector<64x16xbf16>
    %c5 = arith.constant 5 : index
    %c0_44 = arith.constant 0 : index
    %c0_45 = arith.constant 0 : index
    %39 = vector.load %arg3[%c5, %c0_44, %c0_45] : memref<9x16x64xbf16, #tpu.memory_space<vmem>>, vector<1x16x64xbf16>
    %40 = vector.shape_cast %39 : vector<1x16x64xbf16> to vector<16x64xbf16>
    %cst_46 = arith.constant dense<0.000000e+00> : vector<64x64xf32>
    %41 = tpu.matmul %38, %40, %cst_46 {dimension_numbers = #tpu.dot_dimension_numbers<[1], [0], [0], [1], [0, 0, 1, 1], [], []>} : vector<64x16xbf16>, vector<16x64xbf16>, vector<64x64xf32> -> vector<64x64xf32>
    %42 = arith.addf %36, %41 : vector<64x64xf32>
    %c2_47 = arith.constant 2 : index
    %c0_48 = arith.constant 0 : index
    %c0_49 = arith.constant 0 : index
    %43 = vector.load %arg9[%c2_47, %c0_48, %c0_49] : memref<10x10x16xbf16, #tpu.memory_space<vmem>>, vector<8x8x16xbf16>
    %44 = vector.shape_cast %43 : vector<8x8x16xbf16> to vector<64x16xbf16>
    %c6 = arith.constant 6 : index
    %c0_50 = arith.constant 0 : index
    %c0_51 = arith.constant 0 : index
    %45 = vector.load %arg3[%c6, %c0_50, %c0_51] : memref<9x16x64xbf16, #tpu.memory_space<vmem>>, vector<1x16x64xbf16>
    %46 = vector.shape_cast %45 : vector<1x16x64xbf16> to vector<16x64xbf16>
    %cst_52 = arith.constant dense<0.000000e+00> : vector<64x64xf32>
    %47 = tpu.matmul %44, %46, %cst_52 {dimension_numbers = #tpu.dot_dimension_numbers<[1], [0], [0], [1], [0, 0, 1, 1], [], []>} : vector<64x16xbf16>, vector<16x64xbf16>, vector<64x64xf32> -> vector<64x64xf32>
    %48 = arith.addf %42, %47 : vector<64x64xf32>
    %c2_53 = arith.constant 2 : index
    %c1_54 = arith.constant 1 : index
    %c0_55 = arith.constant 0 : index
    %49 = vector.load %arg9[%c2_53, %c1_54, %c0_55] : memref<10x10x16xbf16, #tpu.memory_space<vmem>>, vector<8x8x16xbf16>
    %50 = vector.shape_cast %49 : vector<8x8x16xbf16> to vector<64x16xbf16>
    %c7 = arith.constant 7 : index
    %c0_56 = arith.constant 0 : index
    %c0_57 = arith.constant 0 : index
    %51 = vector.load %arg3[%c7, %c0_56, %c0_57] : memref<9x16x64xbf16, #tpu.memory_space<vmem>>, vector<1x16x64xbf16>
    %52 = vector.shape_cast %51 : vector<1x16x64xbf16> to vector<16x64xbf16>
    %cst_58 = arith.constant dense<0.000000e+00> : vector<64x64xf32>
    %53 = tpu.matmul %50, %52, %cst_58 {dimension_numbers = #tpu.dot_dimension_numbers<[1], [0], [0], [1], [0, 0, 1, 1], [], []>} : vector<64x16xbf16>, vector<16x64xbf16>, vector<64x64xf32> -> vector<64x64xf32>
    %54 = arith.addf %48, %53 : vector<64x64xf32>
    %c2_59 = arith.constant 2 : index
    %c2_60 = arith.constant 2 : index
    %c0_61 = arith.constant 0 : index
    %55 = vector.load %arg9[%c2_59, %c2_60, %c0_61] : memref<10x10x16xbf16, #tpu.memory_space<vmem>>, vector<8x8x16xbf16>
    %56 = vector.shape_cast %55 : vector<8x8x16xbf16> to vector<64x16xbf16>
    %c8 = arith.constant 8 : index
    %c0_62 = arith.constant 0 : index
    %c0_63 = arith.constant 0 : index
    %57 = vector.load %arg3[%c8, %c0_62, %c0_63] : memref<9x16x64xbf16, #tpu.memory_space<vmem>>, vector<1x16x64xbf16>
    %58 = vector.shape_cast %57 : vector<1x16x64xbf16> to vector<16x64xbf16>
    %cst_64 = arith.constant dense<0.000000e+00> : vector<64x64xf32>
    %59 = tpu.matmul %56, %58, %cst_64 {dimension_numbers = #tpu.dot_dimension_numbers<[1], [0], [0], [1], [0, 0, 1, 1], [], []>} : vector<64x16xbf16>, vector<16x64xbf16>, vector<64x64xf32> -> vector<64x64xf32>
    %60 = arith.addf %54, %59 : vector<64x64xf32>
    %c0_65 = arith.constant 0 : index
    %c0_66 = arith.constant 0 : index
    %61 = vector.load %arg4[%c0_65, %c0_66] : memref<1x64xf32, #tpu.memory_space<vmem>>, vector<1x64xf32>
    %62 = vector.broadcast %61 : vector<1x64xf32> to vector<64x64xf32>
    %63 = arith.addf %60, %62 : vector<64x64xf32>
    %cst_67 = arith.constant 0.000000e+00 : f32
    %64 = vector.broadcast %cst_67 : f32 to vector<64x64xf32>
    %65 = arith.maximumf %63, %64 : vector<64x64xf32>
    %66 = vector.shape_cast %65 : vector<64x64xf32> to vector<8x8x64xf32>
    %67 = vector.shape_cast %66 : vector<8x8x64xf32> to vector<64x64xf32>
    %68 = arith.truncf %67 : vector<64x64xf32> to vector<64x64xbf16>
    %c0_68 = arith.constant 0 : index
    %c0_69 = arith.constant 0 : index
    %c0_70 = arith.constant 0 : index
    %69 = vector.load %arg5[%c0_68, %c0_69, %c0_70] : memref<1x64x10xbf16, #tpu.memory_space<vmem>>, vector<1x64x10xbf16>
    %70 = vector.shape_cast %69 : vector<1x64x10xbf16> to vector<64x10xbf16>
    %cst_71 = arith.constant dense<0.000000e+00> : vector<64x10xf32>
    %71 = tpu.matmul %68, %70, %cst_71 {dimension_numbers = #tpu.dot_dimension_numbers<[1], [0], [0], [1], [0, 0, 1, 1], [], []>} : vector<64x64xbf16>, vector<64x10xbf16>, vector<64x10xf32> -> vector<64x10xf32>
    %c0_72 = arith.constant 0 : index
    %c0_73 = arith.constant 0 : index
    %72 = vector.load %arg6[%c0_72, %c0_73] : memref<1x10xf32, #tpu.memory_space<vmem>>, vector<1x10xf32>
    %73 = vector.broadcast %72 : vector<1x10xf32> to vector<64x10xf32>
    %74 = arith.addf %71, %73 : vector<64x10xf32>
    %75 = vector.shape_cast %74 : vector<64x10xf32> to vector<8x8x10xf32>
    %c0_74 = arith.constant 0 : index
    %c0_75 = arith.constant 0 : index
    %c0_76 = arith.constant 0 : index
    %c0_77 = arith.constant 0 : index
    %76 = vector.load %arg7[%c0_74, %c0_75, %c0_76, %c0_77] : memref<1x8x8x10xf32, #tpu.memory_space<vmem>>, vector<1x8x8x10xf32>
    %77 = vector.shape_cast %76 : vector<1x8x8x10xf32> to vector<8x8x10xf32>
    %78 = vector.shape_cast %75 : vector<8x8x10xf32> to vector<1x8x8x10xf32>
    tpu.vector_store %arg7[%c0_74, %c0_75, %c0_76, %c0_77], %78 {strides = array<i32>} : memref<1x8x8x10xf32, #tpu.memory_space<vmem>>, vector<1x8x8x10xf32>,
    %c0_78 = arith.constant 0 : index
    %c0_79 = arith.constant 0 : index
    %c0_80 = arith.constant 0 : index
    %c0_81 = arith.constant 0 : index
    %79 = vector.load %arg2[%c0_78, %c0_79, %c0_80, %c0_81] : memref<1x8x8x1xf32, #tpu.memory_space<vmem>>, vector<1x8x8x1xf32>
    %80 = vector.shape_cast %79 : vector<1x8x8x1xf32> to vector<8x8x1xf32>
    %81 = vector.broadcast %80 : vector<8x8x1xf32> to vector<8x8x10xf32>
    %82 = arith.mulf %75, %81 : vector<8x8x10xf32>
    %c0_82 = arith.constant 0 : index
    %c0_83 = arith.constant 0 : index
    %c0_84 = arith.constant 0 : index
    %c0_85 = arith.constant 0 : index
    %83 = vector.load %arg8[%c0_82, %c0_83, %c0_84, %c0_85] : memref<1x8x8x10xf32, #tpu.memory_space<vmem>>, vector<1x8x8x10xf32>
    %84 = vector.shape_cast %83 : vector<1x8x8x10xf32> to vector<8x8x10xf32>
    %85 = vector.shape_cast %82 : vector<8x8x10xf32> to vector<1x8x8x10xf32>
    tpu.vector_store %arg8[%c0_82, %c0_83, %c0_84, %c0_85], %85 {strides = array<i32>} : memref<1x8x8x10xf32, #tpu.memory_space<vmem>>, vector<1x8x8x10xf32>,
    return
  }
  func.func @transform_0(%arg0: i32) -> (i32, i32, i32, i32) {
    %c0_i32 = arith.constant 0 : i32
    %c0_i32_0 = arith.constant 0 : i32
    %c0_i32_1 = arith.constant 0 : i32
    %c0_i32_2 = arith.constant 0 : i32
    return %arg0, %c0_i32, %c0_i32_0, %c0_i32_1 : i32, i32, i32, i32
  }
  func.func @transform_1(%arg0: i32) -> (i32, i32, i32, i32) {
    %c0_i32 = arith.constant 0 : i32
    %c0_i32_0 = arith.constant 0 : i32
    %c0_i32_1 = arith.constant 0 : i32
    %c0_i32_2 = arith.constant 0 : i32
    return %arg0, %c0_i32, %c0_i32_0, %c0_i32_1 : i32, i32, i32, i32
  }
  func.func @transform_2(%arg0: i32) -> (i32, i32, i32) {
    %c0_i32 = arith.constant 0 : i32
    %c0_i32_0 = arith.constant 0 : i32
    %c0_i32_1 = arith.constant 0 : i32
    %c0_i32_2 = arith.constant 0 : i32
    return %c0_i32, %c0_i32_0, %c0_i32_1 : i32, i32, i32
  }
  func.func @transform_3(%arg0: i32) -> (i32, i32) {
    %c0_i32 = arith.constant 0 : i32
    %c0_i32_0 = arith.constant 0 : i32
    %c0_i32_1 = arith.constant 0 : i32
    return %c0_i32, %c0_i32_0 : i32, i32
  }
  func.func @transform_4(%arg0: i32) -> (i32, i32, i32) {
    %c0_i32 = arith.constant 0 : i32
    %c0_i32_0 = arith.constant 0 : i32
    %c0_i32_1 = arith.constant 0 : i32
    %c0_i32_2 = arith.constant 0 : i32
    return %c0_i32, %c0_i32_0, %c0_i32_1 : i32, i32, i32
  }
  func.func @transform_5(%arg0: i32) -> (i32, i32) {
    %c0_i32 = arith.constant 0 : i32
    %c0_i32_0 = arith.constant 0 : i32
    %c0_i32_1 = arith.constant 0 : i32
    return %c0_i32, %c0_i32_0 : i32, i32
  }
  func.func @transform_6(%arg0: i32) -> (i32, i32, i32, i32) {
    %c0_i32 = arith.constant 0 : i32
    %c0_i32_0 = arith.constant 0 : i32
    %c0_i32_1 = arith.constant 0 : i32
    %c0_i32_2 = arith.constant 0 : i32
    return %arg0, %c0_i32, %c0_i32_0, %c0_i32_1 : i32, i32, i32, i32
  }
  func.func @transform_7(%arg0: i32) -> (i32, i32, i32, i32) {
    %c0_i32 = arith.constant 0 : i32
    %c0_i32_0 = arith.constant 0 : i32
    %c0_i32_1 = arith.constant 0 : i32
    %c0_i32_2 = arith.constant 0 : i32
    return %arg0, %c0_i32, %c0_i32_0, %c0_i32_1 : i32, i32, i32, i32
  }
}

module attributes {stable_mosaic.version = 11 : i64} {
  func.func @kernel(%arg0: i32, %arg1: memref<1x8x8x26xf32, #tpu.memory_space<vmem>>, %arg2: memref<1x8x8x1xf32, #tpu.memory_space<vmem>>, %arg3: memref<9x26x64xbf16, #tpu.memory_space<vmem>>, %arg4: memref<1x64xf32, #tpu.memory_space<vmem>>, %arg5: memref<1x64x10xbf16, #tpu.memory_space<vmem>>, %arg6: memref<1x10xf32, #tpu.memory_space<vmem>>, %arg7: memref<1x8x8x10xf32, #tpu.memory_space<vmem>>, %arg8: memref<1x8x8x10xf32, #tpu.memory_space<vmem>>, %arg9: memref<10x10x26xbf16, #tpu.memory_space<vmem>>) attributes {dimension_semantics = [#tpu.dimension_semantics<parallel>], iteration_bounds = array<i64: 2>, scalar_prefetch = 0 : i64, scratch_operands = 1 : i64, tpu.core_type = #tpu.core_type<tc>, window_params = [{transform_indices = @transform_0, window_bounds = array<i64: 1, 8, 8, 26>}, {transform_indices = @transform_1, window_bounds = array<i64: 1, 8, 8, 1>}, {pipeline_mode = #tpu.pipeline_mode<synchronous>, transform_indices = @transform_2, window_bounds = array<i64: 9, 26, 64>}, {pipeline_mode = #tpu.pipeline_mode<synchronous>, transform_indices = @transform_3, window_bounds = array<i64: 1, 64>}, {pipeline_mode = #tpu.pipeline_mode<synchronous>, transform_indices = @transform_4, window_bounds = array<i64: 1, 64, 10>}, {pipeline_mode = #tpu.pipeline_mode<synchronous>, transform_indices = @transform_5, window_bounds = array<i64: 1, 10>}, {transform_indices = @transform_6, window_bounds = array<i64: 1, 8, 8, 10>}, {transform_indices = @transform_7, window_bounds = array<i64: 1, 8, 8, 10>}]} {
    %c0 = arith.constant 0 : index
    %c0_0 = arith.constant 0 : index
    %c0_1 = arith.constant 0 : index
    %c0_2 = arith.constant 0 : index
    %0 = vector.load %arg1[%c0, %c0_0, %c0_1, %c0_2] : memref<1x8x8x26xf32, #tpu.memory_space<vmem>>, vector<1x8x8x26xf32>
    %1 = vector.shape_cast %0 : vector<1x8x8x26xf32> to vector<8x8x26xf32>
    %cst = arith.constant 0.000000e+00 : bf16
    %2 = vector.broadcast %cst : bf16 to vector<10x10x26xbf16>
    %c0_3 = arith.constant 0 : index
    %c0_4 = arith.constant 0 : index
    %c0_5 = arith.constant 0 : index
    %3 = vector.load %arg9[%c0_3, %c0_4, %c0_5] : memref<10x10x26xbf16, #tpu.memory_space<vmem>>, vector<10x10x26xbf16>
    tpu.vector_store %arg9[%c0_3, %c0_4, %c0_5], %2 {strides = array<i32>} : memref<10x10x26xbf16, #tpu.memory_space<vmem>>, vector<10x10x26xbf16>,
    %4 = arith.truncf %1 : vector<8x8x26xf32> to vector<8x8x26xbf16>
    %c1 = arith.constant 1 : index
    %c1_6 = arith.constant 1 : index
    %c0_7 = arith.constant 0 : index
    %5 = vector.load %arg9[%c1, %c1_6, %c0_7] : memref<10x10x26xbf16, #tpu.memory_space<vmem>>, vector<8x8x26xbf16>
    tpu.vector_store %arg9[%c1, %c1_6, %c0_7], %4 {strides = array<i32>} : memref<10x10x26xbf16, #tpu.memory_space<vmem>>, vector<8x8x26xbf16>,
    %cst_8 = arith.constant 0.000000e+00 : f32
    %6 = vector.broadcast %cst_8 : f32 to vector<64x64xf32>
    %c0_9 = arith.constant 0 : index
    %c0_10 = arith.constant 0 : index
    %c0_11 = arith.constant 0 : index
    %7 = vector.load %arg9[%c0_9, %c0_10, %c0_11] : memref<10x10x26xbf16, #tpu.memory_space<vmem>>, vector<8x8x26xbf16>
    %8 = vector.shape_cast %7 : vector<8x8x26xbf16> to vector<64x26xbf16>
    %c0_12 = arith.constant 0 : index
    %c0_13 = arith.constant 0 : index
    %c0_14 = arith.constant 0 : index
    %9 = vector.load %arg3[%c0_12, %c0_13, %c0_14] : memref<9x26x64xbf16, #tpu.memory_space<vmem>>, vector<1x26x64xbf16>
    %10 = vector.shape_cast %9 : vector<1x26x64xbf16> to vector<26x64xbf16>
    %cst_15 = arith.constant dense<0.000000e+00> : vector<64x64xf32>
    %11 = tpu.matmul %8, %10, %cst_15 {dimension_numbers = #tpu.dot_dimension_numbers<[1], [0], [0], [1], [0, 0, 1, 1], [], []>} : vector<64x26xbf16>, vector<26x64xbf16>, vector<64x64xf32> -> vector<64x64xf32>
    %12 = arith.addf %6, %11 : vector<64x64xf32>
    %c0_16 = arith.constant 0 : index
    %c1_17 = arith.constant 1 : index
    %c0_18 = arith.constant 0 : index
    %13 = vector.load %arg9[%c0_16, %c1_17, %c0_18] : memref<10x10x26xbf16, #tpu.memory_space<vmem>>, vector<8x8x26xbf16>
    %14 = vector.shape_cast %13 : vector<8x8x26xbf16> to vector<64x26xbf16>
    %c1_19 = arith.constant 1 : index
    %c0_20 = arith.constant 0 : index
    %c0_21 = arith.constant 0 : index
    %15 = vector.load %arg3[%c1_19, %c0_20, %c0_21] : memref<9x26x64xbf16, #tpu.memory_space<vmem>>, vector<1x26x64xbf16>
    %16 = vector.shape_cast %15 : vector<1x26x64xbf16> to vector<26x64xbf16>
    %cst_22 = arith.constant dense<0.000000e+00> : vector<64x64xf32>
    %17 = tpu.matmul %14, %16, %cst_22 {dimension_numbers = #tpu.dot_dimension_numbers<[1], [0], [0], [1], [0, 0, 1, 1], [], []>} : vector<64x26xbf16>, vector<26x64xbf16>, vector<64x64xf32> -> vector<64x64xf32>
    %18 = arith.addf %12, %17 : vector<64x64xf32>
    %c0_23 = arith.constant 0 : index
    %c2 = arith.constant 2 : index
    %c0_24 = arith.constant 0 : index
    %19 = vector.load %arg9[%c0_23, %c2, %c0_24] : memref<10x10x26xbf16, #tpu.memory_space<vmem>>, vector<8x8x26xbf16>
    %20 = vector.shape_cast %19 : vector<8x8x26xbf16> to vector<64x26xbf16>
    %c2_25 = arith.constant 2 : index
    %c0_26 = arith.constant 0 : index
    %c0_27 = arith.constant 0 : index
    %21 = vector.load %arg3[%c2_25, %c0_26, %c0_27] : memref<9x26x64xbf16, #tpu.memory_space<vmem>>, vector<1x26x64xbf16>
    %22 = vector.shape_cast %21 : vector<1x26x64xbf16> to vector<26x64xbf16>
    %cst_28 = arith.constant dense<0.000000e+00> : vector<64x64xf32>
    %23 = tpu.matmul %20, %22, %cst_28 {dimension_numbers = #tpu.dot_dimension_numbers<[1], [0], [0], [1], [0, 0, 1, 1], [], []>} : vector<64x26xbf16>, vector<26x64xbf16>, vector<64x64xf32> -> vector<64x64xf32>
    %24 = arith.addf %18, %23 : vector<64x64xf32>
    %c1_29 = arith.constant 1 : index
    %c0_30 = arith.constant 0 : index
    %c0_31 = arith.constant 0 : index
    %25 = vector.load %arg9[%c1_29, %c0_30, %c0_31] : memref<10x10x26xbf16, #tpu.memory_space<vmem>>, vector<8x8x26xbf16>
    %26 = vector.shape_cast %25 : vector<8x8x26xbf16> to vector<64x26xbf16>
    %c3 = arith.constant 3 : index
    %c0_32 = arith.constant 0 : index
    %c0_33 = arith.constant 0 : index
    %27 = vector.load %arg3[%c3, %c0_32, %c0_33] : memref<9x26x64xbf16, #tpu.memory_space<vmem>>, vector<1x26x64xbf16>
    %28 = vector.shape_cast %27 : vector<1x26x64xbf16> to vector<26x64xbf16>
    %cst_34 = arith.constant dense<0.000000e+00> : vector<64x64xf32>
    %29 = tpu.matmul %26, %28, %cst_34 {dimension_numbers = #tpu.dot_dimension_numbers<[1], [0], [0], [1], [0, 0, 1, 1], [], []>} : vector<64x26xbf16>, vector<26x64xbf16>, vector<64x64xf32> -> vector<64x64xf32>
    %30 = arith.addf %24, %29 : vector<64x64xf32>
    %c1_35 = arith.constant 1 : index
    %c1_36 = arith.constant 1 : index
    %c0_37 = arith.constant 0 : index
    %31 = vector.load %arg9[%c1_35, %c1_36, %c0_37] : memref<10x10x26xbf16, #tpu.memory_space<vmem>>, vector<8x8x26xbf16>
    %32 = vector.shape_cast %31 : vector<8x8x26xbf16> to vector<64x26xbf16>
    %c4 = arith.constant 4 : index
    %c0_38 = arith.constant 0 : index
    %c0_39 = arith.constant 0 : index
    %33 = vector.load %arg3[%c4, %c0_38, %c0_39] : memref<9x26x64xbf16, #tpu.memory_space<vmem>>, vector<1x26x64xbf16>
    %34 = vector.shape_cast %33 : vector<1x26x64xbf16> to vector<26x64xbf16>
    %cst_40 = arith.constant dense<0.000000e+00> : vector<64x64xf32>
    %35 = tpu.matmul %32, %34, %cst_40 {dimension_numbers = #tpu.dot_dimension_numbers<[1], [0], [0], [1], [0, 0, 1, 1], [], []>} : vector<64x26xbf16>, vector<26x64xbf16>, vector<64x64xf32> -> vector<64x64xf32>
    %36 = arith.addf %30, %35 : vector<64x64xf32>
    %c1_41 = arith.constant 1 : index
    %c2_42 = arith.constant 2 : index
    %c0_43 = arith.constant 0 : index
    %37 = vector.load %arg9[%c1_41, %c2_42, %c0_43] : memref<10x10x26xbf16, #tpu.memory_space<vmem>>, vector<8x8x26xbf16>
    %38 = vector.shape_cast %37 : vector<8x8x26xbf16> to vector<64x26xbf16>
    %c5 = arith.constant 5 : index
    %c0_44 = arith.constant 0 : index
    %c0_45 = arith.constant 0 : index
    %39 = vector.load %arg3[%c5, %c0_44, %c0_45] : memref<9x26x64xbf16, #tpu.memory_space<vmem>>, vector<1x26x64xbf16>
    %40 = vector.shape_cast %39 : vector<1x26x64xbf16> to vector<26x64xbf16>
    %cst_46 = arith.constant dense<0.000000e+00> : vector<64x64xf32>
    %41 = tpu.matmul %38, %40, %cst_46 {dimension_numbers = #tpu.dot_dimension_numbers<[1], [0], [0], [1], [0, 0, 1, 1], [], []>} : vector<64x26xbf16>, vector<26x64xbf16>, vector<64x64xf32> -> vector<64x64xf32>
    %42 = arith.addf %36, %41 : vector<64x64xf32>
    %c2_47 = arith.constant 2 : index
    %c0_48 = arith.constant 0 : index
    %c0_49 = arith.constant 0 : index
    %43 = vector.load %arg9[%c2_47, %c0_48, %c0_49] : memref<10x10x26xbf16, #tpu.memory_space<vmem>>, vector<8x8x26xbf16>
    %44 = vector.shape_cast %43 : vector<8x8x26xbf16> to vector<64x26xbf16>
    %c6 = arith.constant 6 : index
    %c0_50 = arith.constant 0 : index
    %c0_51 = arith.constant 0 : index
    %45 = vector.load %arg3[%c6, %c0_50, %c0_51] : memref<9x26x64xbf16, #tpu.memory_space<vmem>>, vector<1x26x64xbf16>
    %46 = vector.shape_cast %45 : vector<1x26x64xbf16> to vector<26x64xbf16>
    %cst_52 = arith.constant dense<0.000000e+00> : vector<64x64xf32>
    %47 = tpu.matmul %44, %46, %cst_52 {dimension_numbers = #tpu.dot_dimension_numbers<[1], [0], [0], [1], [0, 0, 1, 1], [], []>} : vector<64x26xbf16>, vector<26x64xbf16>, vector<64x64xf32> -> vector<64x64xf32>
    %48 = arith.addf %42, %47 : vector<64x64xf32>
    %c2_53 = arith.constant 2 : index
    %c1_54 = arith.constant 1 : index
    %c0_55 = arith.constant 0 : index
    %49 = vector.load %arg9[%c2_53, %c1_54, %c0_55] : memref<10x10x26xbf16, #tpu.memory_space<vmem>>, vector<8x8x26xbf16>
    %50 = vector.shape_cast %49 : vector<8x8x26xbf16> to vector<64x26xbf16>
    %c7 = arith.constant 7 : index
    %c0_56 = arith.constant 0 : index
    %c0_57 = arith.constant 0 : index
    %51 = vector.load %arg3[%c7, %c0_56, %c0_57] : memref<9x26x64xbf16, #tpu.memory_space<vmem>>, vector<1x26x64xbf16>
    %52 = vector.shape_cast %51 : vector<1x26x64xbf16> to vector<26x64xbf16>
    %cst_58 = arith.constant dense<0.000000e+00> : vector<64x64xf32>
    %53 = tpu.matmul %50, %52, %cst_58 {dimension_numbers = #tpu.dot_dimension_numbers<[1], [0], [0], [1], [0, 0, 1, 1], [], []>} : vector<64x26xbf16>, vector<26x64xbf16>, vector<64x64xf32> -> vector<64x64xf32>
    %54 = arith.addf %48, %53 : vector<64x64xf32>
    %c2_59 = arith.constant 2 : index
    %c2_60 = arith.constant 2 : index
    %c0_61 = arith.constant 0 : index
    %55 = vector.load %arg9[%c2_59, %c2_60, %c0_61] : memref<10x10x26xbf16, #tpu.memory_space<vmem>>, vector<8x8x26xbf16>
    %56 = vector.shape_cast %55 : vector<8x8x26xbf16> to vector<64x26xbf16>
    %c8 = arith.constant 8 : index
    %c0_62 = arith.constant 0 : index
    %c0_63 = arith.constant 0 : index
    %57 = vector.load %arg3[%c8, %c0_62, %c0_63] : memref<9x26x64xbf16, #tpu.memory_space<vmem>>, vector<1x26x64xbf16>
    %58 = vector.shape_cast %57 : vector<1x26x64xbf16> to vector<26x64xbf16>
    %cst_64 = arith.constant dense<0.000000e+00> : vector<64x64xf32>
    %59 = tpu.matmul %56, %58, %cst_64 {dimension_numbers = #tpu.dot_dimension_numbers<[1], [0], [0], [1], [0, 0, 1, 1], [], []>} : vector<64x26xbf16>, vector<26x64xbf16>, vector<64x64xf32> -> vector<64x64xf32>
    %60 = arith.addf %54, %59 : vector<64x64xf32>
    %c0_65 = arith.constant 0 : index
    %c0_66 = arith.constant 0 : index
    %61 = vector.load %arg4[%c0_65, %c0_66] : memref<1x64xf32, #tpu.memory_space<vmem>>, vector<1x64xf32>
    %62 = vector.broadcast %61 : vector<1x64xf32> to vector<64x64xf32>
    %63 = arith.addf %60, %62 : vector<64x64xf32>
    %cst_67 = arith.constant 0.000000e+00 : f32
    %64 = vector.broadcast %cst_67 : f32 to vector<64x64xf32>
    %65 = arith.maximumf %63, %64 : vector<64x64xf32>
    %66 = vector.shape_cast %65 : vector<64x64xf32> to vector<8x8x64xf32>
    %67 = vector.shape_cast %66 : vector<8x8x64xf32> to vector<64x64xf32>
    %68 = arith.truncf %67 : vector<64x64xf32> to vector<64x64xbf16>
    %c0_68 = arith.constant 0 : index
    %c0_69 = arith.constant 0 : index
    %c0_70 = arith.constant 0 : index
    %69 = vector.load %arg5[%c0_68, %c0_69, %c0_70] : memref<1x64x10xbf16, #tpu.memory_space<vmem>>, vector<1x64x10xbf16>
    %70 = vector.shape_cast %69 : vector<1x64x10xbf16> to vector<64x10xbf16>
    %cst_71 = arith.constant dense<0.000000e+00> : vector<64x10xf32>
    %71 = tpu.matmul %68, %70, %cst_71 {dimension_numbers = #tpu.dot_dimension_numbers<[1], [0], [0], [1], [0, 0, 1, 1], [], []>} : vector<64x64xbf16>, vector<64x10xbf16>, vector<64x10xf32> -> vector<64x10xf32>
    %c0_72 = arith.constant 0 : index
    %c0_73 = arith.constant 0 : index
    %72 = vector.load %arg6[%c0_72, %c0_73] : memref<1x10xf32, #tpu.memory_space<vmem>>, vector<1x10xf32>
    %73 = vector.broadcast %72 : vector<1x10xf32> to vector<64x10xf32>
    %74 = arith.addf %71, %73 : vector<64x10xf32>
    %75 = vector.shape_cast %74 : vector<64x10xf32> to vector<8x8x10xf32>
    %c0_74 = arith.constant 0 : index
    %c0_75 = arith.constant 0 : index
    %c0_76 = arith.constant 0 : index
    %c0_77 = arith.constant 0 : index
    %76 = vector.load %arg7[%c0_74, %c0_75, %c0_76, %c0_77] : memref<1x8x8x10xf32, #tpu.memory_space<vmem>>, vector<1x8x8x10xf32>
    %77 = vector.shape_cast %76 : vector<1x8x8x10xf32> to vector<8x8x10xf32>
    %78 = vector.shape_cast %75 : vector<8x8x10xf32> to vector<1x8x8x10xf32>
    tpu.vector_store %arg7[%c0_74, %c0_75, %c0_76, %c0_77], %78 {strides = array<i32>} : memref<1x8x8x10xf32, #tpu.memory_space<vmem>>, vector<1x8x8x10xf32>,
    %c0_78 = arith.constant 0 : index
    %c0_79 = arith.constant 0 : index
    %c0_80 = arith.constant 0 : index
    %c0_81 = arith.constant 0 : index
    %79 = vector.load %arg2[%c0_78, %c0_79, %c0_80, %c0_81] : memref<1x8x8x1xf32, #tpu.memory_space<vmem>>, vector<1x8x8x1xf32>
    %80 = vector.shape_cast %79 : vector<1x8x8x1xf32> to vector<8x8x1xf32>
    %81 = vector.broadcast %80 : vector<8x8x1xf32> to vector<8x8x10xf32>
    %82 = arith.mulf %75, %81 : vector<8x8x10xf32>
    %c0_82 = arith.constant 0 : index
    %c0_83 = arith.constant 0 : index
    %c0_84 = arith.constant 0 : index
    %c0_85 = arith.constant 0 : index
    %83 = vector.load %arg8[%c0_82, %c0_83, %c0_84, %c0_85] : memref<1x8x8x10xf32, #tpu.memory_space<vmem>>, vector<1x8x8x10xf32>
    %84 = vector.shape_cast %83 : vector<1x8x8x10xf32> to vector<8x8x10xf32>
    %85 = vector.shape_cast %82 : vector<8x8x10xf32> to vector<1x8x8x10xf32>
    tpu.vector_store %arg8[%c0_82, %c0_83, %c0_84, %c0_85], %85 {strides = array<i32>} : memref<1x8x8x10xf32, #tpu.memory_space<vmem>>, vector<1x8x8x10xf32>,
    return
  }
  func.func @transform_0(%arg0: i32) -> (i32, i32, i32, i32) {
    %c0_i32 = arith.constant 0 : i32
    %c0_i32_0 = arith.constant 0 : i32
    %c0_i32_1 = arith.constant 0 : i32
    %c0_i32_2 = arith.constant 0 : i32
    return %arg0, %c0_i32, %c0_i32_0, %c0_i32_1 : i32, i32, i32, i32
  }
  func.func @transform_1(%arg0: i32) -> (i32, i32, i32, i32) {
    %c0_i32 = arith.constant 0 : i32
    %c0_i32_0 = arith.constant 0 : i32
    %c0_i32_1 = arith.constant 0 : i32
    %c0_i32_2 = arith.constant 0 : i32
    return %arg0, %c0_i32, %c0_i32_0, %c0_i32_1 : i32, i32, i32, i32
  }
  func.func @transform_2(%arg0: i32) -> (i32, i32, i32) {
    %c0_i32 = arith.constant 0 : i32
    %c0_i32_0 = arith.constant 0 : i32
    %c0_i32_1 = arith.constant 0 : i32
    %c0_i32_2 = arith.constant 0 : i32
    return %c0_i32, %c0_i32_0, %c0_i32_1 : i32, i32, i32
  }
  func.func @transform_3(%arg0: i32) -> (i32, i32) {
    %c0_i32 = arith.constant 0 : i32
    %c0_i32_0 = arith.constant 0 : i32
    %c0_i32_1 = arith.constant 0 : i32
    return %c0_i32, %c0_i32_0 : i32, i32
  }
  func.func @transform_4(%arg0: i32) -> (i32, i32, i32) {
    %c0_i32 = arith.constant 0 : i32
    %c0_i32_0 = arith.constant 0 : i32
    %c0_i32_1 = arith.constant 0 : i32
    %c0_i32_2 = arith.constant 0 : i32
    return %c0_i32, %c0_i32_0, %c0_i32_1 : i32, i32, i32
  }
  func.func @transform_5(%arg0: i32) -> (i32, i32) {
    %c0_i32 = arith.constant 0 : i32
    %c0_i32_0 = arith.constant 0 : i32
    %c0_i32_1 = arith.constant 0 : i32
    return %c0_i32, %c0_i32_0 : i32, i32
  }
  func.func @transform_6(%arg0: i32) -> (i32, i32, i32, i32) {
    %c0_i32 = arith.constant 0 : i32
    %c0_i32_0 = arith.constant 0 : i32
    %c0_i32_1 = arith.constant 0 : i32
    %c0_i32_2 = arith.constant 0 : i32
    return %arg0, %c0_i32, %c0_i32_0, %c0_i32_1 : i32, i32, i32, i32
  }
  func.func @transform_7(%arg0: i32) -> (i32, i32, i32, i32) {
    %c0_i32 = arith.constant 0 : i32
    %c0_i32_0 = arith.constant 0 : i32
    %c0_i32_1 = arith.constant 0 : i32
    %c0_i32_2 = arith.constant 0 : i32
    return %arg0, %c0_i32, %c0_i32_0, %c0_i32_1 : i32, i32, i32, i32
  }
}

</mosaic_0001>

<llo_original>
// kernel: _lambda_.5
$region0: #{_lambda_.5}
  #allocation0 [shape = 'u32[]', space=smem, size = 0x4, offset = 0x4, fixed_abs, tag = 'smem constant byte address 0x4 - core index']
  #allocation1 [shape = 'u32[144,128]{1,0:T(1,128)}', space=vmem, size = 0x12000, scoped, tag = 'internal scratch']
  #allocation2 [shape = 'bf16[10,10,26]{2,1,0:T(8,128)(2,1)}', space=vmem, size = 0xa000, scoped, tag = 'scratch operand']
  %s0 = inlined_call_operand.vmem [shape: f32[2,8,8,26], index: 0, kind: input, shape index: {}]
  %s1 = inlined_call_operand.vmem [shape: f32[2,8,8,1], index: 1, kind: input, shape index: {}]
  %s2 = inlined_call_operand.vmem [shape: bf16[9,26,64], index: 2, kind: input, shape index: {}]
  %s3 = inlined_call_operand.vmem [shape: f32[1,64], index: 3, kind: input, shape index: {}]
  %s4 = inlined_call_operand.vmem [shape: bf16[1,64,10], index: 4, kind: input, shape index: {}]
  %s5 = inlined_call_operand.vmem [shape: f32[1,10], index: 5, kind: input, shape index: {}]
  %s6 = inlined_call_operand.hbm [shape: f32[2,8,8,10], index: 6, kind: output, shape index: {0}]
  %s7 = inlined_call_operand.vmem [shape: f32[2,8,8,10], index: 7, kind: output, shape index: {1}]
  %8 = xla_tuple %s6, %s7
  %s9 = sld [smem:[#allocation0]]
  $region65: #{_lambda_.5} parent=0
    _
  %s11 = ssub.s32 1, %s9
  %s12 = scalar_select 0, %s11, %s9
  $region1: #{_lambda_.5} parent=0
    #allocation3 [shape = 'u8[65536]{0}', space=vmem, size = 0x10000, scoped, tag = 'output window, operand 0']
    #allocation4 [shape = 's32[2]{0}', space=sflag, size = 0x8, scoped, tag = 'scoped memory for _lambda_.5']
    %13 = vsyncpa [#allocation4], 0
    %s14 = scalar_lea.sflag [#allocation4], 1
    %15 = vsyncpa %s14, 0
    loop: start=0, step=1, limit=4
    $region2: #{_lambda_.5} parent=1 // loop_pre_header
      _
    $region3: #{_lambda_.5} parent=1 // loop_header
      %s17 = sphi 0, %s21
      %p18 = scmp.ge.s32.totalorder %s17, 4
      %s27 = sphi 0, %s29
      %s30 = sphi 0, %s27
      %s31 = sphi 0, %s30
      %s47 = sphi 0, %s31
      %s53 = sphi 0, %s55
      %s56 = sphi 0, %s53
      %s57 = sphi 0, %s56
      %s73 = sphi 0, %s57
      %s77 = sphi 0, %s77
      %s79 = sphi 0, %s77
      %s80 = sphi 0, %s79
      %s94 = sphi 0, %s80
      %s98 = sphi 0, %s98
      %s100 = sphi 0, %s98
      %s101 = sphi 0, %s100
      %s115 = sphi 0, %s101
      %s119 = sphi 0, %s119
      %s121 = sphi 0, %s119
      %s122 = sphi 0, %s121
      %s136 = sphi 0, %s122
      %s140 = sphi 0, %s140
      %s142 = sphi 0, %s140
      %s143 = sphi 0, %s142
      %s157 = sphi 0, %s143
      %s163 = sphi 0, %s165
      %s166 = sphi 0, %s163
      %s167 = sphi 0, %s166
      %s183 = sphi 0, %s167
      %s189 = sphi 0, %s191
      %s192 = sphi 0, %s189
      %s193 = sphi 0, %s192
      %s209 = sphi 0, %s193
    $region4: #{_lambda_.5} parent=1 // loop_header_branch
      %20 = sbr.rel (%p18) target = $region8
    $region5: #{_lambda_.5} parent=1 // loop_body
      %s22 = ssub.s32 %s17, 1
      %s23 = ssub.s32 %s17, 2
      %s24 = sadd.s32 %s17, 1
      %s25 = ssub.s32 %s17, %s24
      %p26 = scmp.eq.s32.totalorder %s25, 0
      %s28 = sadd.s32 %s27, 1
      %s29 = scalar_select %p26, %s27, %s28
      %p32 = pneg %p26
      %p33 = scmp.eq.s32.totalorder %s17, 1
      %p34 = por %p32, %p33
      %p35 = scmp.ne.s32.totalorder %s27, %s30
      %p36 = scmp.eq.s32.totalorder %s17, 0
      %p37 = por %p35, %p36
      %p38 = scmp.ne.s32.totalorder %s27, %s30
      %p39 = scmp.eq.s32.totalorder %s22, 1
      %p40 = por %p38, %p39
      %p41 = scmp.ne.s32.totalorder %s30, %s31
      %p42 = scmp.eq.s32.totalorder %s22, 0
      %p43 = por %p41, %p42
      %p44 = scmp.ne.s32.totalorder %s30, %s31
      %p45 = scmp.eq.s32.totalorder %s23, 1
      %p46 = por %p44, %p45
      %p48 = scmp.ne.s32.totalorder %s31, %s47
      %p49 = scmp.eq.s32.totalorder %s23, 0
      %p50 = por %p48, %p49
      %s51 = ssub.s32 %s17, %s24
      %p52 = scmp.eq.s32.totalorder %s51, 0
      %s54 = sadd.s32 %s53, 1
      %s55 = scalar_select %p52, %s53, %s54
      %p58 = pneg %p52
      %p59 = scmp.eq.s32.totalorder %s17, 1
      %p60 = por %p58, %p59
      %p61 = scmp.ne.s32.totalorder %s53, %s56
      %p62 = scmp.eq.s32.totalorder %s17, 0
      %p63 = por %p61, %p62
      %p64 = scmp.ne.s32.totalorder %s53, %s56
      %p65 = scmp.eq.s32.totalorder %s22, 1
      %p66 = por %p64, %p65
      %p67 = scmp.ne.s32.totalorder %s56, %s57
      %p68 = scmp.eq.s32.totalorder %s22, 0
      %p69 = por %p67, %p68
      %p70 = scmp.ne.s32.totalorder %s56, %s57
      %p71 = scmp.eq.s32.totalorder %s23, 1
      %p72 = por %p70, %p71
      %p74 = scmp.ne.s32.totalorder %s57, %s73
      %p75 = scmp.eq.s32.totalorder %s23, 0
      %p76 = por %p74, %p75
      %s78 = sadd.s32 %s77, 1
      %p81 = scmp.eq.s32.totalorder %s17, 1
      %p82 = scmp.ne.s32.totalorder %s77, %s79
      %p83 = scmp.eq.s32.totalorder %s17, 0
      %p84 = por %p82, %p83
      %p85 = scmp.ne.s32.totalorder %s77, %s79
      %p86 = scmp.eq.s32.totalorder %s22, 1
      %p87 = por %p85, %p86
      %p88 = scmp.ne.s32.totalorder %s79, %s80
      %p89 = scmp.eq.s32.totalorder %s22, 0
      %p90 = por %p88, %p89
      %p91 = scmp.ne.s32.totalorder %s79, %s80
      %p92 = scmp.eq.s32.totalorder %s23, 1
      %p93 = por %p91, %p92
      %p95 = scmp.ne.s32.totalorder %s80, %s94
      %p96 = scmp.eq.s32.totalorder %s23, 0
      %p97 = por %p95, %p96
      %s99 = sadd.s32 %s98, 1
      %p102 = scmp.eq.s32.totalorder %s17, 1
      %p103 = scmp.ne.s32.totalorder %s98, %s100
      %p104 = scmp.eq.s32.totalorder %s17, 0
      %p105 = por %p103, %p104
      %p106 = scmp.ne.s32.totalorder %s98, %s100
      %p107 = scmp.eq.s32.totalorder %s22, 1
      %p108 = por %p106, %p107
      %p109 = scmp.ne.s32.totalorder %s100, %s101
      %p110 = scmp.eq.s32.totalorder %s22, 0
      %p111 = por %p109, %p110
      %p112 = scmp.ne.s32.totalorder %s100, %s101
      %p113 = scmp.eq.s32.totalorder %s23, 1
      %p114 = por %p112, %p113
      %p116 = scmp.ne.s32.totalorder %s101, %s115
      %p117 = scmp.eq.s32.totalorder %s23, 0
      %p118 = por %p116, %p117
      %s120 = sadd.s32 %s119, 1
      %p123 = scmp.eq.s32.totalorder %s17, 1
      %p124 = scmp.ne.s32.totalorder %s119, %s121
      %p125 = scmp.eq.s32.totalorder %s17, 0
      %p126 = por %p124, %p125
      %p127 = scmp.ne.s32.totalorder %s119, %s121
      %p128 = scmp.eq.s32.totalorder %s22, 1
      %p129 = por %p127, %p128
      %p130 = scmp.ne.s32.totalorder %s121, %s122
      %p131 = scmp.eq.s32.totalorder %s22, 0
      %p132 = por %p130, %p131
      %p133 = scmp.ne.s32.totalorder %s121, %s122
      %p134 = scmp.eq.s32.totalorder %s23, 1
      %p135 = por %p133, %p134
      %p137 = scmp.ne.s32.totalorder %s122, %s136
      %p138 = scmp.eq.s32.totalorder %s23, 0
      %p139 = por %p137, %p138
      %s141 = sadd.s32 %s140, 1
      %p144 = scmp.eq.s32.totalorder %s17, 1
      %p145 = scmp.ne.s32.totalorder %s140, %s142
      %p146 = scmp.eq.s32.totalorder %s17, 0
      %p147 = por %p145, %p146
      %p148 = scmp.ne.s32.totalorder %s140, %s142
      %p149 = scmp.eq.s32.totalorder %s22, 1
      %p150 = por %p148, %p149
      %p151 = scmp.ne.s32.totalorder %s142, %s143
      %p152 = scmp.eq.s32.totalorder %s22, 0
      %p153 = por %p151, %p152
      %p154 = scmp.ne.s32.totalorder %s142, %s143
      %p155 = scmp.eq.s32.totalorder %s23, 1
      %p156 = por %p154, %p155
      %p158 = scmp.ne.s32.totalorder %s143, %s157
      %p159 = scmp.eq.s32.totalorder %s23, 0
      %p160 = por %p158, %p159
      %s161 = ssub.s32 %s17, %s24
      %p162 = scmp.eq.s32.totalorder %s161, 0
      %s164 = sadd.s32 %s163, 1
      %s165 = scalar_select %p162, %s163, %s164
      %p168 = pneg %p162
      %p169 = scmp.eq.s32.totalorder %s17, 1
      %p170 = por %p168, %p169
      %p171 = scmp.ne.s32.totalorder %s163, %s166
      %p172 = scmp.eq.s32.totalorder %s17, 0
      %p173 = por %p171, %p172
      %p174 = scmp.ne.s32.totalorder %s163, %s166
      %p175 = scmp.eq.s32.totalorder %s22, 1
      %p176 = por %p174, %p175
      %p177 = scmp.ne.s32.totalorder %s166, %s167
      %p178 = scmp.eq.s32.totalorder %s22, 0
      %p179 = por %p177, %p178
      %p180 = scmp.ne.s32.totalorder %s166, %s167
      %p181 = scmp.eq.s32.totalorder %s23, 1
      %p182 = por %p180, %p181
      %p184 = scmp.ne.s32.totalorder %s167, %s183
      %p185 = scmp.eq.s32.totalorder %s23, 0
      %p186 = por %p184, %p185
      %s187 = ssub.s32 %s17, %s24
      %p188 = scmp.eq.s32.totalorder %s187, 0
      %s190 = sadd.s32 %s189, 1
      %s191 = scalar_select %p188, %s189, %s190
      %p194 = pneg %p188
      %p195 = scmp.eq.s32.totalorder %s17, 1
      %p196 = por %p194, %p195
      %p197 = scmp.ne.s32.totalorder %s189, %s192
      %p198 = scmp.eq.s32.totalorder %s17, 0
      %p199 = por %p197, %p198
      %p200 = scmp.ne.s32.totalorder %s189, %s192
      %p201 = scmp.eq.s32.totalorder %s22, 1
      %p202 = por %p200, %p201
      %p203 = scmp.ne.s32.totalorder %s192, %s193
      %p204 = scmp.eq.s32.totalorder %s22, 0
      %p205 = por %p203, %p204
      %p206 = scmp.ne.s32.totalorder %s192, %s193
      %p207 = scmp.eq.s32.totalorder %s23, 1
      %p208 = por %p206, %p207
      %p210 = scmp.ne.s32.totalorder %s193, %s209
      %p211 = scmp.eq.s32.totalorder %s23, 0
      %p212 = por %p210, %p211
      %p213 = scmp.le.s32.totalorder 1, %s17
      %p214 = scmp.lt.s32.totalorder %s17, 3
      %p215 = pnand %p213, %p214
      %p216 = pneg %p215
      // Predicated region
      $region9: #{_lambda_.5} parent=5 // pred_check
        _
      $region10: #{_lambda_.5} parent=5 // pred_check_branch
        %218 = sbr.rel (%p215) target = $region12
      $region11: #{_lambda_.5} parent=5 // pred_region
        %s219 = ssub.s32 %s17, 1
        // Predicated region
        $region13: #{_lambda_.5} parent=11 // pred_check
          %p220 = pneg %p90
        $region14: #{_lambda_.5} parent=11 // pred_check_branch
          %222 = sbr.rel (%p220) target = $region16
        $region15: #{_lambda_.5} parent=11 // pred_region
          _
        $region16: #{_lambda_.5} parent=11 // pred_fallthru
          _
        // Predicated region
        $region17: #{_lambda_.5} parent=11 // pred_check
          %p223 = pneg %p111
        $region18: #{_lambda_.5} parent=11 // pred_check_branch
          %225 = sbr.rel (%p223) target = $region20
        $region19: #{_lambda_.5} parent=11 // pred_region
          _
        $region20: #{_lambda_.5} parent=11 // pred_fallthru
          _
        // Predicated region
        $region21: #{_lambda_.5} parent=11 // pred_check
          %p226 = pneg %p132
        $region22: #{_lambda_.5} parent=11 // pred_check_branch
          %228 = sbr.rel (%p226) target = $region24
        $region23: #{_lambda_.5} parent=11 // pred_region
          _
        $region24: #{_lambda_.5} parent=11 // pred_fallthru
          _
        // Predicated region
        $region25: #{_lambda_.5} parent=11 // pred_check
          %p229 = pneg %p153
        $region26: #{_lambda_.5} parent=11 // pred_check_branch
          %231 = sbr.rel (%p229) target = $region28
        $region27: #{_lambda_.5} parent=11 // pred_region
          _
        $region28: #{_lambda_.5} parent=11 // pred_fallthru
          _
      $region12: #{_lambda_.5} parent=5 // pred_fallthru
        _
      %p232 = scmp.lt.s32.totalorder %s17, 2
      // Predicated region
      $region29: #{_lambda_.5} parent=5 // pred_check
        %p233 = pneg %p232
      $region30: #{_lambda_.5} parent=5 // pred_check_branch
        %235 = sbr.rel (%p233) target = $region32
      $region31: #{_lambda_.5} parent=5 // pred_region
        // Predicated region
        $region33: #{_lambda_.5} parent=31 // pred_check
          %p236 = pneg %p37
        $region34: #{_lambda_.5} parent=31 // pred_check_branch
          %238 = sbr.rel (%p236) target = $region36
        $region35: #{_lambda_.5} parent=31 // pred_region
          %p239 = scmp.lt.s32.totalorder %s17, 1
          %s240 = scalar_select %p239, %s17, 1
          %s241 = smul.addr %s240, 8
          %s242 = smul.addr %s241, 8
          %s243 = scalar_lea.vmem %s0, %s242
        $region36: #{_lambda_.5} parent=31 // pred_fallthru
          _
        // Predicated region
        $region37: #{_lambda_.5} parent=31 // pred_check
          %p244 = pneg %p63
        $region38: #{_lambda_.5} parent=31 // pred_check_branch
          %246 = sbr.rel (%p244) target = $region40
        $region39: #{_lambda_.5} parent=31 // pred_region
          %p247 = scmp.lt.s32.totalorder %s17, 1
          %s248 = scalar_select %p247, %s17, 1
          %s249 = smul.addr %s248, 8
          %s250 = smul.addr %s249, 8
          %s251 = scalar_lea.vmem %s1, %s250
        $region40: #{_lambda_.5} parent=31 // pred_fallthru
          _
      $region32: #{_lambda_.5} parent=5 // pred_fallthru
        _
      %p252 = scmp.le.s32.totalorder 1, %s17
      %p253 = scmp.lt.s32.totalorder %s17, 3
      %p254 = pnand %p252, %p253
      %p255 = pneg %p254
      // Predicated region
      $region41: #{_lambda_.5} parent=5 // pred_check
        _
      $region42: #{_lambda_.5} parent=5 // pred_check_branch
        %257 = sbr.rel (%p254) target = $region44
      $region43: #{_lambda_.5} parent=5 // pred_region
        %s258 = ssub.s32 %s17, 1
        %p259 = scmp.lt.s32.totalorder %s22, 1
        %s260 = scalar_select %p259, %s22, 1
        %s261 = smul.addr %s260, 8
        %s262 = smul.addr %s261, 8
        %s263 = scalar_lea.vmem %s0, %s262
        %p264 = pneg %p43
        %p265 = pneg %p40
        %p266 = scmp.lt.s32.totalorder %s22, 1
        %s267 = scalar_select %p266, %s22, 1
        %s268 = smul.addr %s267, 8
        %s269 = smul.addr %s268, 8
        %s270 = scalar_lea.vmem %s1, %s269
        %p271 = pneg %p69
        %p272 = pneg %p66
        %p273 = pneg %p90
        %p274 = pneg %p87
        %p275 = pneg %p111
        %p276 = pneg %p108
        %p277 = pneg %p132
        %p278 = pneg %p129
        %p279 = pneg %p153
        %p280 = pneg %p150
        %p281 = pneg %p179
        %p282 = pneg %p176
        %s283 = sand.u32 %s166, 1
        %s284 = scalar_lea.sflag [#allocation4], %s283
        %s285 = sand.u32 %s166, 1
        %s286 = smul.addr %s285, 64
        %s287 = scalar_lea.vmem [#allocation3], %s286
        %p288 = pneg %p205
        %p289 = pneg %p202
        %p290 = scmp.lt.s32.totalorder %s22, 1
        %s291 = scalar_select %p290, %s22, 1
        %s292 = smul.addr %s291, 8
        %s293 = smul.addr %s292, 8
        %s294 = scalar_lea.vmem %s7, %s293
        %p295 = scmp.lt.s32.totalorder %s22, 1
        %s296 = scalar_select %p295, %s22, 1
        %s297 = smul.addr %s296, 8
        %s298 = smul.addr %s297, 8
        %s299 = scalar_lea.vmem %s0, %s298
        %p300 = scmp.lt.s32.totalorder %s22, 1
        %s301 = scalar_select %p300, %s22, 1
        %s302 = smul.addr %s301, 8
        %s303 = smul.addr %s302, 8
        %s304 = scalar_lea.vmem %s1, %s303
        %p305 = scmp.lt.s32.totalorder %s22, 1
        %s306 = scalar_select %p305, %s22, 1
        %s307 = smul.addr %s306, 8
        %s308 = smul.addr %s307, 8
        %s309 = scalar_lea.vmem %s7, %s308
        %v311 = vld [vmem:[%s299] sm:$0xff]
        %v312 = vld [vmem:[%s299 + $0x8] sm:$0xff]
        %v313 = vld [vmem:[%s299 + $0x10] sm:$0xff]
        %v314 = vld [vmem:[%s299 + $0x18] sm:$0xff]
        %v315 = vld [vmem:[%s299 + $0x20] sm:$0xff]
        %v316 = vld [vmem:[%s299 + $0x28] sm:$0xff]
        %v317 = vld [vmem:[%s299 + $0x30] sm:$0xff]
        %v318 = vld [vmem:[%s299 + $0x38] sm:$0xff]
        %vm319 = vcmask 207872
        %320 = vst.msk [vmem:[#allocation2] sm:$0xf] %vm319, 0
        %vm321 = vcmask 204800
        %322 = vst.msk [vmem:[#allocation2 + $0x4] sm:$0x1] %vm321, 0
        %323 = vst.msk [vmem:[#allocation2 + $0x8] sm:$0xf] %vm319, 0
        %324 = vst.msk [vmem:[#allocation2 + $0xc] sm:$0x1] %vm321, 0
        %325 = vst.msk [vmem:[#allocation2 + $0x10] sm:$0xf] %vm319, 0
        %326 = vst.msk [vmem:[#allocation2 + $0x14] sm:$0x1] %vm321, 0
        %327 = vst.msk [vmem:[#allocation2 + $0x18] sm:$0xf] %vm319, 0
        %328 = vst.msk [vmem:[#allocation2 + $0x1c] sm:$0x1] %vm321, 0
        %329 = vst.msk [vmem:[#allocation2 + $0x20] sm:$0xf] %vm319, 0
        %330 = vst.msk [vmem:[#allocation2 + $0x24] sm:$0x1] %vm321, 0
        %331 = vst.msk [vmem:[#allocation2 + $0x28] sm:$0xf] %vm319, 0
        %332 = vst.msk [vmem:[#allocation2 + $0x2c] sm:$0x1] %vm321, 0
        %333 = vst.msk [vmem:[#allocation2 + $0x30] sm:$0xf] %vm319, 0
        %334 = vst.msk [vmem:[#allocation2 + $0x34] sm:$0x1] %vm321, 0
        %335 = vst.msk [vmem:[#allocation2 + $0x38] sm:$0xf] %vm319, 0
        %336 = vst.msk [vmem:[#allocation2 + $0x3c] sm:$0x1] %vm321, 0
        %337 = vst.msk [vmem:[#allocation2 + $0x40] sm:$0xf] %vm319, 0
        %338 = vst.msk [vmem:[#allocation2 + $0x44] sm:$0x1] %vm321, 0
        %339 = vst.msk [vmem:[#allocation2 + $0x48] sm:$0xf] %vm319, 0
        %340 = vst.msk [vmem:[#allocation2 + $0x4c] sm:$0x1] %vm321, 0
        %v341 = vpack.c.bf16 %v311, %v311
        %v342 = vpack.c.bf16 %v312, %v312
        %v343 = vpack.c.bf16 %v313, %v313
        %v344 = vpack.c.bf16 %v314, %v314
        %v345 = vpack.c.bf16 %v315, %v315
        %v346 = vpack.c.bf16 %v316, %v316
        %v347 = vpack.c.bf16 %v317, %v317
        %v348 = vpack.c.bf16 %v318, %v318
        %v357 = vunpack.c.l.b16 %v341
        %v358 = vunpack.c.l.b16 %v342
        %v359 = vunpack.c.l.b16 %v343
        %v360 = vunpack.c.l.b16 %v344
        %v361 = vunpack.c.l.b16 %v345
        %v362 = vunpack.c.l.b16 %v346
        %v363 = vunpack.c.l.b16 %v347
        %v364 = vunpack.c.l.b16 %v348
        %v365 = vpack.c.b16 %v357, %v357
        %v366 = vpack.c.b16 %v358, %v358
        %v367 = vpack.c.b16 %v359, %v359
        %v368 = vpack.c.b16 %v360, %v360
        %v369 = vpack.c.b16 %v361, %v361
        %v370 = vpack.c.b16 %v362, %v362
        %v371 = vpack.c.b16 %v363, %v363
        %v372 = vpack.c.b16 %v364, %v364
        %v374 = vshrl.u32 %v365, 16
        %v376 = vrot.slane %v374, 7
        %v377 = vshll.u32 %v365, 16
        %v379 = vor.u32 %v376, %v377
        %v380 = vrot.slane %v376, 4
        %v382 = vshrl.u32 %v366, 16
        %v384 = vrot.slane %v382, 7
        %v385 = vshll.u32 %v366, 16
        %v387 = vor.u32 %v384, %v385
        %v388 = vrot.slane %v384, 4
        %v390 = vshrl.u32 %v367, 16
        %v392 = vrot.slane %v390, 7
        %v393 = vshll.u32 %v367, 16
        %v395 = vor.u32 %v392, %v393
        %v396 = vrot.slane %v392, 4
        %v398 = vshrl.u32 %v368, 16
        %v400 = vrot.slane %v398, 7
        %v401 = vshll.u32 %v368, 16
        %v403 = vor.u32 %v400, %v401
        %v404 = vrot.slane %v400, 4
        %v406 = vshrl.u32 %v369, 16
        %v408 = vrot.slane %v406, 7
        %v409 = vshll.u32 %v369, 16
        %v411 = vor.u32 %v408, %v409
        %v412 = vrot.slane %v408, 4
        %v414 = vshrl.u32 %v370, 16
        %v416 = vrot.slane %v414, 7
        %v417 = vshll.u32 %v370, 16
        %v419 = vor.u32 %v416, %v417
        %v420 = vrot.slane %v416, 4
        %v422 = vshrl.u32 %v371, 16
        %v424 = vrot.slane %v422, 7
        %v425 = vshll.u32 %v371, 16
        %v427 = vor.u32 %v424, %v425
        %v428 = vrot.slane %v424, 4
        %v430 = vshrl.u32 %v372, 16
        %v432 = vrot.slane %v430, 7
        %v433 = vshll.u32 %v372, 16
        %v435 = vor.u32 %v432, %v433
        %v436 = vrot.slane %v432, 4
        %s453 = scalar_lea.vmem [#allocation2], 8
        %vm454 = vcmask 207872
        %vm455 = vsmask.f32 7938
        %vm456 = vmand %vm454, %vm455
        %v457 = vld [vmem:[%s453] sm:$0xf]
        %v458 = vsel %vm456, %v379, %v457
        %459 = vst [vmem:[%s453] sm:$0xf] %v458
        %vm460 = vcmask 204800
        %vm461 = vsmask.f32 256
        %vm462 = vmand %vm460, %vm461
        %v463 = vld [vmem:[%s453 + $0x4] sm:$0x1]
        %v464 = vsel %vm462, %v380, %v463
        %465 = vst [vmem:[%s453 + $0x4] sm:$0x1] %v464
        %v466 = vld [vmem:[%s453 + $0x8] sm:$0xf]
        %v467 = vsel %vm456, %v387, %v466
        %468 = vst [vmem:[%s453 + $0x8] sm:$0xf] %v467
        %v469 = vld [vmem:[%s453 + $0xc] sm:$0x1]
        %v470 = vsel %vm462, %v388, %v469
        %471 = vst [vmem:[%s453 + $0xc] sm:$0x1] %v470
        %v472 = vld [vmem:[%s453 + $0x10] sm:$0xf]
        %v473 = vsel %vm456, %v395, %v472
        %474 = vst [vmem:[%s453 + $0x10] sm:$0xf] %v473
        %v475 = vld [vmem:[%s453 + $0x14] sm:$0x1]
        %v476 = vsel %vm462, %v396, %v475
        %477 = vst [vmem:[%s453 + $0x14] sm:$0x1] %v476
        %v478 = vld [vmem:[%s453 + $0x18] sm:$0xf]
        %v479 = vsel %vm456, %v403, %v478
        %480 = vst [vmem:[%s453 + $0x18] sm:$0xf] %v479
        %v481 = vld [vmem:[%s453 + $0x1c] sm:$0x1]
        %v482 = vsel %vm462, %v404, %v481
        %483 = vst [vmem:[%s453 + $0x1c] sm:$0x1] %v482
        %v484 = vld [vmem:[%s453 + $0x20] sm:$0xf]
        %v485 = vsel %vm456, %v411, %v484
        %486 = vst [vmem:[%s453 + $0x20] sm:$0xf] %v485
        %v487 = vld [vmem:[%s453 + $0x24] sm:$0x1]
        %v488 = vsel %vm462, %v412, %v487
        %489 = vst [vmem:[%s453 + $0x24] sm:$0x1] %v488
        %v490 = vld [vmem:[%s453 + $0x28] sm:$0xf]
        %v491 = vsel %vm456, %v419, %v490
        %492 = vst [vmem:[%s453 + $0x28] sm:$0xf] %v491
        %v493 = vld [vmem:[%s453 + $0x2c] sm:$0x1]
        %v494 = vsel %vm462, %v420, %v493
        %495 = vst [vmem:[%s453 + $0x2c] sm:$0x1] %v494
        %v496 = vld [vmem:[%s453 + $0x30] sm:$0xf]
        %v497 = vsel %vm456, %v427, %v496
        %498 = vst [vmem:[%s453 + $0x30] sm:$0xf] %v497
        %v499 = vld [vmem:[%s453 + $0x34] sm:$0x1]
        %v500 = vsel %vm462, %v428, %v499
        %501 = vst [vmem:[%s453 + $0x34] sm:$0x1] %v500
        %v502 = vld [vmem:[%s453 + $0x38] sm:$0xf]
        %v503 = vsel %vm456, %v435, %v502
        %504 = vst [vmem:[%s453 + $0x38] sm:$0xf] %v503
        %v505 = vld [vmem:[%s453 + $0x3c] sm:$0x1]
        %v506 = vsel %vm462, %v436, %v505
        %507 = vst [vmem:[%s453 + $0x3c] sm:$0x1] %v506
        %v508 = vld [vmem:[#allocation2] sm:$0xf]
        %v509 = vld [vmem:[#allocation2 + $0x8] sm:$0xf]
        %v510 = vld [vmem:[#allocation2 + $0x10] sm:$0xf]
        %v511 = vld [vmem:[#allocation2 + $0x18] sm:$0xf]
        %v512 = vld [vmem:[#allocation2 + $0x20] sm:$0xf]
        %v513 = vld [vmem:[#allocation2 + $0x28] sm:$0xf]
        %v514 = vld [vmem:[#allocation2 + $0x30] sm:$0xf]
        %v515 = vld [vmem:[#allocation2 + $0x38] sm:$0xf]
        %v516 = vld [vmem:[%s2] sm:$0xf]
        %v517 = vld [vmem:[%s2 + $0x4] sm:$0xf]
        %v518 = vld [vmem:[%s2 + $0x8] sm:$0xf]
        %v519 = vld [vmem:[%s2 + $0xc] sm:$0x1]
        %v520 = vld [vmem:[#allocation2 + $0x4] sm:$0x1]
        %v521 = vld [vmem:[#allocation2 + $0xc] sm:$0x1]
        %v522 = vld [vmem:[#allocation2 + $0x14] sm:$0x1]
        %v523 = vld [vmem:[#allocation2 + $0x1c] sm:$0x1]
        %v524 = vld [vmem:[#allocation2 + $0x24] sm:$0x1]
        %v525 = vld [vmem:[#allocation2 + $0x2c] sm:$0x1]
        %v526 = vld [vmem:[#allocation2 + $0x34] sm:$0x1]
        %v527 = vld [vmem:[#allocation2 + $0x3c] sm:$0x1]
        %vm528 = vsmask.f32 3328
        %vm529 = vsmask.f32 7440
        %vm530 = vmor %vm528, %vm529
        %v532 = vshrl.u32 %v508, 16
        %v534 = vrot.slane %v532, 4
        %v535 = vshll.u32 %v508, 16
        %v537 = vrot.slane %v535, 5
        %v538 = vor.u32 %v534, %v537
        %v539 = vrot.slane %v538, 4
        %v541 = vshll.u32 %v520, 16
        %v543 = vrot.slane %v541, 5
        %v544 = vsel %vm530, %v539, %v543
        %v546 = vshrl.u32 %v509, 16
        %v548 = vrot.slane %v546, 4
        %v549 = vshll.u32 %v509, 16
        %v551 = vrot.slane %v549, 5
        %v552 = vor.u32 %v548, %v551
        %v553 = vrot.slane %v552, 4
        %v555 = vshll.u32 %v521, 16
        %v557 = vrot.slane %v555, 5
        %v558 = vsel %vm530, %v553, %v557
        %v560 = vshrl.u32 %v510, 16
        %v562 = vrot.slane %v560, 4
        %v563 = vshll.u32 %v510, 16
        %v565 = vrot.slane %v563, 5
        %v566 = vor.u32 %v562, %v565
        %v567 = vrot.slane %v566, 4
        %v569 = vshll.u32 %v522, 16
        %v571 = vrot.slane %v569, 5
        %v572 = vsel %vm530, %v567, %v571
        %v574 = vshrl.u32 %v511, 16
        %v576 = vrot.slane %v574, 4
        %v577 = vshll.u32 %v511, 16
        %v579 = vrot.slane %v577, 5
        %v580 = vor.u32 %v576, %v579
        %v581 = vrot.slane %v580, 4
        %v583 = vshll.u32 %v523, 16
        %v585 = vrot.slane %v583, 5
        %v586 = vsel %vm530, %v581, %v585
        %v588 = vshrl.u32 %v512, 16
        %v590 = vrot.slane %v588, 4
        %v591 = vshll.u32 %v512, 16
        %v593 = vrot.slane %v591, 5
        %v594 = vor.u32 %v590, %v593
        %v595 = vrot.slane %v594, 4
        %v597 = vshll.u32 %v524, 16
        %v599 = vrot.slane %v597, 5
        %v600 = vsel %vm530, %v595, %v599
        %v602 = vshrl.u32 %v513, 16
        %v604 = vrot.slane %v602, 4
        %v605 = vshll.u32 %v513, 16
        %v607 = vrot.slane %v605, 5
        %v608 = vor.u32 %v604, %v607
        %v609 = vrot.slane %v608, 4
        %v611 = vshll.u32 %v525, 16
        %v613 = vrot.slane %v611, 5
        %v614 = vsel %vm530, %v609, %v613
        %v616 = vshrl.u32 %v514, 16
        %v618 = vrot.slane %v616, 4
        %v619 = vshll.u32 %v514, 16
        %v621 = vrot.slane %v619, 5
        %v622 = vor.u32 %v618, %v621
        %v623 = vrot.slane %v622, 4
        %v625 = vshll.u32 %v526, 16
        %v627 = vrot.slane %v625, 5
        %v628 = vsel %vm530, %v623, %v627
        %v630 = vshrl.u32 %v515, 16
        %v632 = vrot.slane %v630, 4
        %v633 = vshll.u32 %v515, 16
        %v635 = vrot.slane %v633, 5
        %v636 = vor.u32 %v632, %v635
        %v637 = vrot.slane %v636, 4
        %v639 = vshll.u32 %v527, 16
        %v641 = vrot.slane %v639, 5
        %v642 = vsel %vm530, %v637, %v641
        %s643 = scalar_lea.vmem %s2, 16
        %v644 = vld [vmem:[%s643] sm:$0xf]
        %v645 = vld [vmem:[%s643 + $0x4] sm:$0xf]
        %v646 = vld [vmem:[%s643 + $0x8] sm:$0xf]
        %v647 = vld [vmem:[%s643 + $0xc] sm:$0x1]
        %v648 = vunpack.c.l.b16 %v544
        %v649 = vunpack.c.l.b16 %v558
        %v650 = vunpack.c.l.b16 %v572
        %v651 = vunpack.c.l.b16 %v586
        %v652 = vunpack.c.l.b16 %v600
        %v653 = vunpack.c.l.b16 %v614
        %v654 = vunpack.c.l.b16 %v628
        %v655 = vunpack.c.l.b16 %v642
        %v656 = vpack.c.b16 %v649, %v648
        %v657 = vpack.c.b16 %v651, %v650
        %v658 = vpack.c.b16 %v653, %v652
        %v659 = vpack.c.b16 %v655, %v654
        %v664 = vunpack.c.l.b16 %v644
        %v665 = vunpack.c.l.b16 %v645
        %v666 = vunpack.c.l.b16 %v646
        %v667 = vunpack.c.l.b16 %v647
        %v668 = vpack.c.b16 %v665, %v664
        %v669 = vpack.c.b16 %v667, %v666
        %vm671 = vcmask 211968
        %v673 = vsel %vm671, %v656, 0
        %v676 = vsel %vm671, %v657, 0
        %v679 = vsel %vm671, %v658, 0
        %v682 = vsel %vm671, %v659, 0
        %vm684 = vcmask 1044480
        %v686 = vsel %vm684, %v669, 0
        %688 = vmatprep.subr.bf16.mxu0 0
        %689 = vmatpush1.bf16.msra.mxu0 %v668
        %690 = vmatprep.subr.bf16.mxu0 0
        %691 = vmatpush1.bf16.msra.mxu0 %v686
        %692 = vmatprep.subr.bf16.mxu0 0
        %693 = vmatpush1.bf16.msra.mxu0 0
        %694 = vmatprep.subr.bf16.mxu0 0
        %695 = vmatpush1.bf16.msra.mxu0 0
        %696 = vmatprep.subr.bf16.mxu0 0
        %697 = vmatpush1.bf16.msra.mxu0 0
        %698 = vmatprep.subr.bf16.mxu0 0
        %699 = vmatpush1.bf16.msra.mxu0 0
        %700 = vmatprep.subr.bf16.mxu0 0
        %701 = vmatpush1.bf16.msra.mxu0 0
        %702 = vmatprep.subr.bf16.mxu0 0
        %703 = vmatpush1.bf16.msra.mxu0 0
        %704 = vmatprep.subr.bf16.mxu0 0
        %705 = vmatpush1.bf16.msra.mxu0 0
        %706 = vmatprep.subr.bf16.mxu0 0
        %707 = vmatpush1.bf16.msra.mxu0 0
        %708 = vmatprep.subr.bf16.mxu0 0
        %709 = vmatpush1.bf16.msra.mxu0 0
        %710 = vmatprep.subr.bf16.mxu0 0
        %711 = vmatpush1.bf16.msra.mxu0 0
        %712 = vmatprep.subr.bf16.mxu0 0
        %713 = vmatpush1.bf16.msra.mxu0 0
        %714 = vmatprep.subr.bf16.mxu0 0
        %715 = vmatpush1.bf16.msra.mxu0 0
        %716 = vmatprep.subr.bf16.mxu0 0
        %717 = vmatpush1.bf16.msra.mxu0 0
        %718 = vmatprep.subr.bf16.mxu0 0
        %719 = vmatpush1.bf16.msra.mxu0 0
        %720 = vmatprep.mubr.bf16.mxu0 0
        %721 = vmatmul.mubr.bf16.gmra.mrb[0].mxu0 %v673
        %v722 = vpop.f32.mrb[0].mxu0
        %v723 = vadd.f32 0.0, %v722
        %v724 = vpop.f32.mrb[0].mxu0
        %v725 = vpop.f32.mrb[0].mxu0
        %v726 = vadd.f32 0.0, %v725
        %v727 = vpop.f32.mrb[0].mxu0
        %728 = vmatprep.mubr.bf16.mxu0 0
        %729 = vmatmul.mubr.bf16.gmra.mrb[0].mxu0 %v676
        %v730 = vpop.f32.mrb[0].mxu0
        %v731 = vadd.f32 0.0, %v730
        %v732 = vpop.f32.mrb[0].mxu0
        %v733 = vpop.f32.mrb[0].mxu0
        %v734 = vadd.f32 0.0, %v733
        %v735 = vpop.f32.mrb[0].mxu0
        %736 = vmatprep.mubr.bf16.mxu0 0
        %737 = vmatmul.mubr.bf16.gmra.mrb[0].mxu0 %v679
        %v738 = vpop.f32.mrb[0].mxu0
        %v739 = vadd.f32 0.0, %v738
        %v740 = vpop.f32.mrb[0].mxu0
        %v741 = vpop.f32.mrb[0].mxu0
        %v742 = vadd.f32 0.0, %v741
        %v743 = vpop.f32.mrb[0].mxu0
        %744 = vmatprep.mubr.bf16.mxu0 0
        %745 = vmatmul.mubr.bf16.gmra.mrb[0].mxu0 %v682
        %v746 = vpop.f32.mrb[0].mxu0
        %v747 = vadd.f32 0.0, %v746
        %v748 = vpop.f32.mrb[0].mxu0
        %v749 = vpop.f32.mrb[0].mxu0
        %v750 = vadd.f32 0.0, %v749
        %v751 = vpop.f32.mrb[0].mxu0
        %752 = vdwg.mxu0
        %v761 = vunpack.c.l.b16 %v508
        %v762 = vunpack.c.l.b16 %v509
        %v763 = vunpack.c.l.b16 %v510
        %v764 = vunpack.c.l.b16 %v511
        %v765 = vunpack.c.l.b16 %v512
        %v766 = vunpack.c.l.b16 %v513
        %v767 = vunpack.c.l.b16 %v514
        %v768 = vunpack.c.l.b16 %v515
        %v769 = vpack.c.b16 %v762, %v761
        %v770 = vpack.c.b16 %v764, %v763
        %v771 = vpack.c.b16 %v766, %v765
        %v772 = vpack.c.b16 %v768, %v767
        %v777 = vunpack.c.l.b16 %v516
        %v778 = vunpack.c.l.b16 %v517
        %v779 = vunpack.c.l.b16 %v518
        %v780 = vunpack.c.l.b16 %v519
        %v781 = vpack.c.b16 %v778, %v777
        %v782 = vpack.c.b16 %v780, %v779
        %v785 = vsel %vm671, %v769, 0
        %v788 = vsel %vm671, %v770, 0
        %v791 = vsel %vm671, %v771, 0
        %v794 = vsel %vm671, %v772, 0
        %v797 = vsel %vm684, %v782, 0
        %799 = vmatprep.subr.bf16.mxu0 0
        %800 = vmatpush1.bf16.msra.mxu0 %v781
        %801 = vmatprep.subr.bf16.mxu0 0
        %802 = vmatpush1.bf16.msra.mxu0 %v797
        %803 = vmatprep.subr.bf16.mxu0 0
        %804 = vmatpush1.bf16.msra.mxu0 0
        %805 = vmatprep.subr.bf16.mxu0 0
        %806 = vmatpush1.bf16.msra.mxu0 0
        %807 = vmatprep.subr.bf16.mxu0 0
        %808 = vmatpush1.bf16.msra.mxu0 0
        %809 = vmatprep.subr.bf16.mxu0 0
        %810 = vmatpush1.bf16.msra.mxu0 0
        %811 = vmatprep.subr.bf16.mxu0 0
        %812 = vmatpush1.bf16.msra.mxu0 0
        %813 = vmatprep.subr.bf16.mxu0 0
        %814 = vmatpush1.bf16.msra.mxu0 0
        %815 = vmatprep.subr.bf16.mxu0 0
        %816 = vmatpush1.bf16.msra.mxu0 0
        %817 = vmatprep.subr.bf16.mxu0 0
        %818 = vmatpush1.bf16.msra.mxu0 0
        %819 = vmatprep.subr.bf16.mxu0 0
        %820 = vmatpush1.bf16.msra.mxu0 0
        %821 = vmatprep.subr.bf16.mxu0 0
        %822 = vmatpush1.bf16.msra.mxu0 0
        %823 = vmatprep.subr.bf16.mxu0 0
        %824 = vmatpush1.bf16.msra.mxu0 0
        %825 = vmatprep.subr.bf16.mxu0 0
        %826 = vmatpush1.bf16.msra.mxu0 0
        %827 = vmatprep.subr.bf16.mxu0 0
        %828 = vmatpush1.bf16.msra.mxu0 0
        %829 = vmatprep.subr.bf16.mxu0 0
        %830 = vmatpush1.bf16.msra.mxu0 0
        %831 = vmatprep.mubr.bf16.mxu0 0
        %832 = vmatmul.mubr.bf16.gmra.mrb[0].mxu0 %v785
        %v833 = vpop.f32.mrb[0].mxu0
        %v834 = vadd.f32 %v723, %v833
        %v835 = vpop.f32.mrb[0].mxu0
        %v836 = vpop.f32.mrb[0].mxu0
        %v837 = vadd.f32 %v726, %v836
        %v838 = vpop.f32.mrb[0].mxu0
        %839 = vmatprep.mubr.bf16.mxu0 0
        %840 = vmatmul.mubr.bf16.gmra.mrb[0].mxu0 %v788
        %v841 = vpop.f32.mrb[0].mxu0
        %v842 = vadd.f32 %v731, %v841
        %v843 = vpop.f32.mrb[0].mxu0
        %v844 = vpop.f32.mrb[0].mxu0
        %v845 = vadd.f32 %v734, %v844
        %v846 = vpop.f32.mrb[0].mxu0
        %847 = vmatprep.mubr.bf16.mxu0 0
        %848 = vmatmul.mubr.bf16.gmra.mrb[0].mxu0 %v791
        %v849 = vpop.f32.mrb[0].mxu0
        %v850 = vadd.f32 %v739, %v849
        %v851 = vpop.f32.mrb[0].mxu0
        %v852 = vpop.f32.mrb[0].mxu0
        %v853 = vadd.f32 %v742, %v852
        %v854 = vpop.f32.mrb[0].mxu0
        %855 = vmatprep.mubr.bf16.mxu0 0
        %856 = vmatmul.mubr.bf16.gmra.mrb[0].mxu0 %v794
        %v857 = vpop.f32.mrb[0].mxu0
        %v858 = vadd.f32 %v747, %v857
        %v859 = vpop.f32.mrb[0].mxu0
        %v860 = vpop.f32.mrb[0].mxu0
        %v861 = vadd.f32 %v750, %v860
        %v862 = vpop.f32.mrb[0].mxu0
        %863 = vdwg.mxu0
        %v864 = vld [vmem:[#allocation2] sm:$0xe]
        %v865 = vld [vmem:[#allocation2 + $0x8] sm:$0xe]
        %v866 = vld [vmem:[#allocation2 + $0x10] sm:$0xe]
        %v867 = vld [vmem:[#allocation2 + $0x18] sm:$0xe]
        %v868 = vld [vmem:[#allocation2 + $0x20] sm:$0xe]
        %v869 = vld [vmem:[#allocation2 + $0x28] sm:$0xe]
        %v870 = vld [vmem:[#allocation2 + $0x30] sm:$0xe]
        %v871 = vld [vmem:[#allocation2 + $0x38] sm:$0xe]
        %vm888 = vcmask 1042432
        %vm889 = vcmask 1046532
        %vm890 = vmor %vm888, %vm889
        %v891 = vrot.slane %v864, 5
        %v892 = vrot.slane %v891, 4
        %v893 = vrot.slane %v520, 5
        %v894 = vsel %vm890, %v892, %v893
        %v895 = vrot.slane %v865, 5
        %v896 = vrot.slane %v895, 4
        %v897 = vrot.slane %v521, 5
        %v898 = vsel %vm890, %v896, %v897
        %v899 = vrot.slane %v866, 5
        %v900 = vrot.slane %v899, 4
        %v901 = vrot.slane %v522, 5
        %v902 = vsel %vm890, %v900, %v901
        %v903 = vrot.slane %v867, 5
        %v904 = vrot.slane %v903, 4
        %v905 = vrot.slane %v523, 5
        %v906 = vsel %vm890, %v904, %v905
        %v907 = vrot.slane %v868, 5
        %v908 = vrot.slane %v907, 4
        %v909 = vrot.slane %v524, 5
        %v910 = vsel %vm890, %v908, %v909
        %v911 = vrot.slane %v869, 5
        %v912 = vrot.slane %v911, 4
        %v913 = vrot.slane %v525, 5
        %v914 = vsel %vm890, %v912, %v913
        %v915 = vrot.slane %v870, 5
        %v916 = vrot.slane %v915, 4
        %v917 = vrot.slane %v526, 5
        %v918 = vsel %vm890, %v916, %v917
        %v919 = vrot.slane %v871, 5
        %v920 = vrot.slane %v919, 4
        %v921 = vrot.slane %v527, 5
        %v922 = vsel %vm890, %v920, %v921
        %s923 = scalar_lea.vmem %s2, 32
        %v924 = vld [vmem:[%s923] sm:$0xf]
        %v925 = vld [vmem:[%s923 + $0x4] sm:$0xf]
        %v926 = vld [vmem:[%s923 + $0x8] sm:$0xf]
        %v927 = vld [vmem:[%s923 + $0xc] sm:$0x1]
        %v928 = vunpack.c.l.b16 %v894
        %v929 = vunpack.c.l.b16 %v898
        %v930 = vunpack.c.l.b16 %v902
        %v931 = vunpack.c.l.b16 %v906
        %v932 = vunpack.c.l.b16 %v910
        %v933 = vunpack.c.l.b16 %v914
        %v934 = vunpack.c.l.b16 %v918
        %v935 = vunpack.c.l.b16 %v922
        %v936 = vpack.c.b16 %v929, %v928
        %v937 = vpack.c.b16 %v931, %v930
        %v938 = vpack.c.b16 %v933, %v932
        %v939 = vpack.c.b16 %v935, %v934
        %v944 = vunpack.c.l.b16 %v924
        %v945 = vunpack.c.l.b16 %v925
        %v946 = vunpack.c.l.b16 %v926
        %v947 = vunpack.c.l.b16 %v927
        %v948 = vpack.c.b16 %v945, %v944
        %v949 = vpack.c.b16 %v947, %v946
        %v952 = vsel %vm671, %v936, 0
        %v955 = vsel %vm671, %v937, 0
        %v958 = vsel %vm671, %v938, 0
        %v961 = vsel %vm671, %v939, 0
        %v964 = vsel %vm684, %v949, 0
        %966 = vmatprep.subr.bf16.mxu0 0
        %967 = vmatpush1.bf16.msra.mxu0 %v948
        %968 = vmatprep.subr.bf16.mxu0 0
        %969 = vmatpush1.bf16.msra.mxu0 %v964
        %970 = vmatprep.subr.bf16.mxu0 0
        %971 = vmatpush1.bf16.msra.mxu0 0
        %972 = vmatprep.subr.bf16.mxu0 0
        %973 = vmatpush1.bf16.msra.mxu0 0
        %974 = vmatprep.subr.bf16.mxu0 0
        %975 = vmatpush1.bf16.msra.mxu0 0
        %976 = vmatprep.subr.bf16.mxu0 0
        %977 = vmatpush1.bf16.msra.mxu0 0
        %978 = vmatprep.subr.bf16.mxu0 0
        %979 = vmatpush1.bf16.msra.mxu0 0
        %980 = vmatprep.subr.bf16.mxu0 0
        %981 = vmatpush1.bf16.msra.mxu0 0
        %982 = vmatprep.subr.bf16.mxu0 0
        %983 = vmatpush1.bf16.msra.mxu0 0
        %984 = vmatprep.subr.bf16.mxu0 0
        %985 = vmatpush1.bf16.msra.mxu0 0
        %986 = vmatprep.subr.bf16.mxu0 0
        %987 = vmatpush1.bf16.msra.mxu0 0
        %988 = vmatprep.subr.bf16.mxu0 0
        %989 = vmatpush1.bf16.msra.mxu0 0
        %990 = vmatprep.subr.bf16.mxu0 0
        %991 = vmatpush1.bf16.msra.mxu0 0
        %992 = vmatprep.subr.bf16.mxu0 0
        %993 = vmatpush1.bf16.msra.mxu0 0
        %994 = vmatprep.subr.bf16.mxu0 0
        %995 = vmatpush1.bf16.msra.mxu0 0
        %996 = vmatprep.subr.bf16.mxu0 0
        %997 = vmatpush1.bf16.msra.mxu0 0
        %998 = vmatprep.mubr.bf16.mxu0 0
        %999 = vmatmul.mubr.bf16.gmra.mrb[0].mxu0 %v952
        %v1000 = vpop.f32.mrb[0].mxu0
        %v1001 = vadd.f32 0.0, %v1000
        %v1002 = vpop.f32.mrb[0].mxu0
        %v1003 = vpop.f32.mrb[0].mxu0
        %v1004 = vadd.f32 0.0, %v1003
        %v1005 = vpop.f32.mrb[0].mxu0
        %1006 = vmatprep.mubr.bf16.mxu0 0
        %1007 = vmatmul.mubr.bf16.gmra.mrb[0].mxu0 %v955
        %v1008 = vpop.f32.mrb[0].mxu0
        %v1009 = vadd.f32 0.0, %v1008
        %v1010 = vpop.f32.mrb[0].mxu0
        %v1011 = vpop.f32.mrb[0].mxu0
        %v1012 = vadd.f32 0.0, %v1011
        %v1013 = vpop.f32.mrb[0].mxu0
        %1014 = vmatprep.mubr.bf16.mxu0 0
        %1015 = vmatmul.mubr.bf16.gmra.mrb[0].mxu0 %v958
        %v1016 = vpop.f32.mrb[0].mxu0
        %v1017 = vadd.f32 0.0, %v1016
        %v1018 = vpop.f32.mrb[0].mxu0
        %v1019 = vpop.f32.mrb[0].mxu0
        %v1020 = vadd.f32 0.0, %v1019
        %v1021 = vpop.f32.mrb[0].mxu0
        %1022 = vmatprep.mubr.bf16.mxu0 0
        %1023 = vmatmul.mubr.bf16.gmra.mrb[0].mxu0 %v961
        %v1024 = vpop.f32.mrb[0].mxu0
        %v1025 = vadd.f32 0.0, %v1024
        %v1026 = vpop.f32.mrb[0].mxu0
        %v1027 = vpop.f32.mrb[0].mxu0
        %v1028 = vadd.f32 0.0, %v1027
        %v1029 = vpop.f32.mrb[0].mxu0
        %1030 = vdwg.mxu0
        %v1031 = vadd.f32 %v834, %v1001
        %v1032 = vadd.f32 %v837, %v1004
        %v1033 = vadd.f32 %v842, %v1009
        %v1034 = vadd.f32 %v845, %v1012
        %v1035 = vadd.f32 %v850, %v1017
        %v1036 = vadd.f32 %v853, %v1020
        %v1037 = vadd.f32 %v858, %v1025
        %v1038 = vadd.f32 %v861, %v1028
        %v1039 = vld [vmem:[%s453] sm:$0xf]
        %v1040 = vld [vmem:[%s453 + $0x8] sm:$0xf]
        %v1041 = vld [vmem:[%s453 + $0x10] sm:$0xf]
        %v1042 = vld [vmem:[%s453 + $0x18] sm:$0xf]
        %v1043 = vld [vmem:[%s453 + $0x20] sm:$0xf]
        %v1044 = vld [vmem:[%s453 + $0x28] sm:$0xf]
        %v1045 = vld [vmem:[%s453 + $0x30] sm:$0xf]
        %v1046 = vld [vmem:[%s453 + $0x38] sm:$0xf]
        %s1047 = scalar_lea.vmem %s2, 48
        %v1048 = vld [vmem:[%s1047] sm:$0xf]
        %v1049 = vld [vmem:[%s1047 + $0x4] sm:$0xf]
        %v1050 = vld [vmem:[%s1047 + $0x8] sm:$0xf]
        %v1051 = vld [vmem:[%s1047 + $0xc] sm:$0x1]
        %v1060 = vunpack.c.l.b16 %v1039
        %v1061 = vunpack.c.l.b16 %v1040
        %v1062 = vunpack.c.l.b16 %v1041
        %v1063 = vunpack.c.l.b16 %v1042
        %v1064 = vunpack.c.l.b16 %v1043
        %v1065 = vunpack.c.l.b16 %v1044
        %v1066 = vunpack.c.l.b16 %v1045
        %v1067 = vunpack.c.l.b16 %v1046
        %v1068 = vpack.c.b16 %v1061, %v1060
        %v1069 = vpack.c.b16 %v1063, %v1062
        %v1070 = vpack.c.b16 %v1065, %v1064
        %v1071 = vpack.c.b16 %v1067, %v1066
        %v1076 = vunpack.c.l.b16 %v1048
        %v1077 = vunpack.c.l.b16 %v1049
        %v1078 = vunpack.c.l.b16 %v1050
        %v1079 = vunpack.c.l.b16 %v1051
        %v1080 = vpack.c.b16 %v1077, %v1076
        %v1081 = vpack.c.b16 %v1079, %v1078
        %v1084 = vsel %vm671, %v1068, 0
        %v1087 = vsel %vm671, %v1069, 0
        %v1090 = vsel %vm671, %v1070, 0
        %v1093 = vsel %vm671, %v1071, 0
        %v1096 = vsel %vm684, %v1081, 0
        %1098 = vmatprep.subr.bf16.mxu0 0
        %1099 = vmatpush1.bf16.msra.mxu0 %v1080
        %1100 = vmatprep.subr.bf16.mxu0 0
        %1101 = vmatpush1.bf16.msra.mxu0 %v1096
        %1102 = vmatprep.subr.bf16.mxu0 0
        %1103 = vmatpush1.bf16.msra.mxu0 0
        %1104 = vmatprep.subr.bf16.mxu0 0
        %1105 = vmatpush1.bf16.msra.mxu0 0
        %1106 = vmatprep.subr.bf16.mxu0 0
        %1107 = vmatpush1.bf16.msra.mxu0 0
        %1108 = vmatprep.subr.bf16.mxu0 0
        %1109 = vmatpush1.bf16.msra.mxu0 0
        %1110 = vmatprep.subr.bf16.mxu0 0
        %1111 = vmatpush1.bf16.msra.mxu0 0
        %1112 = vmatprep.subr.bf16.mxu0 0
        %1113 = vmatpush1.bf16.msra.mxu0 0
        %1114 = vmatprep.subr.bf16.mxu0 0
        %1115 = vmatpush1.bf16.msra.mxu0 0
        %1116 = vmatprep.subr.bf16.mxu0 0
        %1117 = vmatpush1.bf16.msra.mxu0 0
        %1118 = vmatprep.subr.bf16.mxu0 0
        %1119 = vmatpush1.bf16.msra.mxu0 0
        %1120 = vmatprep.subr.bf16.mxu0 0
        %1121 = vmatpush1.bf16.msra.mxu0 0
        %1122 = vmatprep.subr.bf16.mxu0 0
        %1123 = vmatpush1.bf16.msra.mxu0 0
        %1124 = vmatprep.subr.bf16.mxu0 0
        %1125 = vmatpush1.bf16.msra.mxu0 0
        %1126 = vmatprep.subr.bf16.mxu0 0
        %1127 = vmatpush1.bf16.msra.mxu0 0
        %1128 = vmatprep.subr.bf16.mxu0 0
        %1129 = vmatpush1.bf16.msra.mxu0 0
        %1130 = vmatprep.mubr.bf16.mxu0 0
        %1131 = vmatmul.mubr.bf16.gmra.mrb[0].mxu0 %v1084
        %v1132 = vpop.f32.mrb[0].mxu0
        %v1133 = vadd.f32 0.0, %v1132
        %v1134 = vpop.f32.mrb[0].mxu0
        %v1135 = vpop.f32.mrb[0].mxu0
        %v1136 = vadd.f32 0.0, %v1135
        %v1137 = vpop.f32.mrb[0].mxu0
        %1138 = vmatprep.mubr.bf16.mxu0 0
        %1139 = vmatmul.mubr.bf16.gmra.mrb[0].mxu0 %v1087
        %v1140 = vpop.f32.mrb[0].mxu0
        %v1141 = vadd.f32 0.0, %v1140
        %v1142 = vpop.f32.mrb[0].mxu0
        %v1143 = vpop.f32.mrb[0].mxu0
        %v1144 = vadd.f32 0.0, %v1143
        %v1145 = vpop.f32.mrb[0].mxu0
        %1146 = vmatprep.mubr.bf16.mxu0 0
        %1147 = vmatmul.mubr.bf16.gmra.mrb[0].mxu0 %v1090
        %v1148 = vpop.f32.mrb[0].mxu0
        %v1149 = vadd.f32 0.0, %v1148
        %v1150 = vpop.f32.mrb[0].mxu0
        %v1151 = vpop.f32.mrb[0].mxu0
        %v1152 = vadd.f32 0.0, %v1151
        %v1153 = vpop.f32.mrb[0].mxu0
        %1154 = vmatprep.mubr.bf16.mxu0 0
        %1155 = vmatmul.mubr.bf16.gmra.mrb[0].mxu0 %v1093
        %v1156 = vpop.f32.mrb[0].mxu0
        %v1157 = vadd.f32 0.0, %v1156
        %v1158 = vpop.f32.mrb[0].mxu0
        %v1159 = vpop.f32.mrb[0].mxu0
        %v1160 = vadd.f32 0.0, %v1159
        %v1161 = vpop.f32.mrb[0].mxu0
        %1162 = vdwg.mxu0
        %v1163 = vadd.f32 %v1031, %v1133
        %v1164 = vadd.f32 %v1032, %v1136
        %v1165 = vadd.f32 %v1033, %v1141
        %v1166 = vadd.f32 %v1034, %v1144
        %v1167 = vadd.f32 %v1035, %v1149
        %v1168 = vadd.f32 %v1036, %v1152
        %v1169 = vadd.f32 %v1037, %v1157
        %v1170 = vadd.f32 %v1038, %v1160
        %v1171 = vld [vmem:[%s453] sm:$0xf]
        %v1172 = vld [vmem:[%s453 + $0x4] sm:$0x1]
        %v1173 = vld [vmem:[%s453 + $0x8] sm:$0xf]
        %v1174 = vld [vmem:[%s453 + $0xc] sm:$0x1]
        %v1175 = vld [vmem:[%s453 + $0x10] sm:$0xf]
        %v1176 = vld [vmem:[%s453 + $0x14] sm:$0x1]
        %v1177 = vld [vmem:[%s453 + $0x18] sm:$0xf]
        %v1178 = vld [vmem:[%s453 + $0x1c] sm:$0x1]
        %v1179 = vld [vmem:[%s453 + $0x20] sm:$0xf]
        %v1180 = vld [vmem:[%s453 + $0x24] sm:$0x1]
        %v1181 = vld [vmem:[%s453 + $0x28] sm:$0xf]
        %v1182 = vld [vmem:[%s453 + $0x2c] sm:$0x1]
        %v1183 = vld [vmem:[%s453 + $0x30] sm:$0xf]
        %v1184 = vld [vmem:[%s453 + $0x34] sm:$0x1]
        %v1185 = vld [vmem:[%s453 + $0x38] sm:$0xf]
        %v1186 = vld [vmem:[%s453 + $0x3c] sm:$0x1]
        %v1188 = vshrl.u32 %v1171, 16
        %v1190 = vrot.slane %v1188, 4
        %v1191 = vshll.u32 %v1171, 16
        %v1193 = vrot.slane %v1191, 5
        %v1194 = vor.u32 %v1190, %v1193
        %v1195 = vrot.slane %v1194, 4
        %v1197 = vshll.u32 %v1172, 16
        %v1199 = vrot.slane %v1197, 5
        %v1200 = vsel %vm530, %v1195, %v1199
        %v1202 = vshrl.u32 %v1173, 16
        %v1204 = vrot.slane %v1202, 4
        %v1205 = vshll.u32 %v1173, 16
        %v1207 = vrot.slane %v1205, 5
        %v1208 = vor.u32 %v1204, %v1207
        %v1209 = vrot.slane %v1208, 4
        %v1211 = vshll.u32 %v1174, 16
        %v1213 = vrot.slane %v1211, 5
        %v1214 = vsel %vm530, %v1209, %v1213
        %v1216 = vshrl.u32 %v1175, 16
        %v1218 = vrot.slane %v1216, 4
        %v1219 = vshll.u32 %v1175, 16
        %v1221 = vrot.slane %v1219, 5
        %v1222 = vor.u32 %v1218, %v1221
        %v1223 = vrot.slane %v1222, 4
        %v1225 = vshll.u32 %v1176, 16
        %v1227 = vrot.slane %v1225, 5
        %v1228 = vsel %vm530, %v1223, %v1227
        %v1230 = vshrl.u32 %v1177, 16
        %v1232 = vrot.slane %v1230, 4
        %v1233 = vshll.u32 %v1177, 16
        %v1235 = vrot.slane %v1233, 5
        %v1236 = vor.u32 %v1232, %v1235
        %v1237 = vrot.slane %v1236, 4
        %v1239 = vshll.u32 %v1178, 16
        %v1241 = vrot.slane %v1239, 5
        %v1242 = vsel %vm530, %v1237, %v1241
        %v1244 = vshrl.u32 %v1179, 16
        %v1246 = vrot.slane %v1244, 4
        %v1247 = vshll.u32 %v1179, 16
        %v1249 = vrot.slane %v1247, 5
        %v1250 = vor.u32 %v1246, %v1249
        %v1251 = vrot.slane %v1250, 4
        %v1253 = vshll.u32 %v1180, 16
        %v1255 = vrot.slane %v1253, 5
        %v1256 = vsel %vm530, %v1251, %v1255
        %v1258 = vshrl.u32 %v1181, 16
        %v1260 = vrot.slane %v1258, 4
        %v1261 = vshll.u32 %v1181, 16
        %v1263 = vrot.slane %v1261, 5
        %v1264 = vor.u32 %v1260, %v1263
        %v1265 = vrot.slane %v1264, 4
        %v1267 = vshll.u32 %v1182, 16
        %v1269 = vrot.slane %v1267, 5
        %v1270 = vsel %vm530, %v1265, %v1269
        %v1272 = vshrl.u32 %v1183, 16
        %v1274 = vrot.slane %v1272, 4
        %v1275 = vshll.u32 %v1183, 16
        %v1277 = vrot.slane %v1275, 5
        %v1278 = vor.u32 %v1274, %v1277
        %v1279 = vrot.slane %v1278, 4
        %v1281 = vshll.u32 %v1184, 16
        %v1283 = vrot.slane %v1281, 5
        %v1284 = vsel %vm530, %v1279, %v1283
        %v1286 = vshrl.u32 %v1185, 16
        %v1288 = vrot.slane %v1286, 4
        %v1289 = vshll.u32 %v1185, 16
        %v1291 = vrot.slane %v1289, 5
        %v1292 = vor.u32 %v1288, %v1291
        %v1293 = vrot.slane %v1292, 4
        %v1295 = vshll.u32 %v1186, 16
        %v1297 = vrot.slane %v1295, 5
        %v1298 = vsel %vm530, %v1293, %v1297
        %s1299 = scalar_lea.vmem %s2, 64
        %v1300 = vld [vmem:[%s1299] sm:$0xf]
        %v1301 = vld [vmem:[%s1299 + $0x4] sm:$0xf]
        %v1302 = vld [vmem:[%s1299 + $0x8] sm:$0xf]
        %v1303 = vld [vmem:[%s1299 + $0xc] sm:$0x1]
        %v1304 = vunpack.c.l.b16 %v1200
        %v1305 = vunpack.c.l.b16 %v1214
        %v1306 = vunpack.c.l.b16 %v1228
        %v1307 = vunpack.c.l.b16 %v1242
        %v1308 = vunpack.c.l.b16 %v1256
        %v1309 = vunpack.c.l.b16 %v1270
        %v1310 = vunpack.c.l.b16 %v1284
        %v1311 = vunpack.c.l.b16 %v1298
        %v1312 = vpack.c.b16 %v1305, %v1304
        %v1313 = vpack.c.b16 %v1307, %v1306
        %v1314 = vpack.c.b16 %v1309, %v1308
        %v1315 = vpack.c.b16 %v1311, %v1310
        %v1320 = vunpack.c.l.b16 %v1300
        %v1321 = vunpack.c.l.b16 %v1301
        %v1322 = vunpack.c.l.b16 %v1302
        %v1323 = vunpack.c.l.b16 %v1303
        %v1324 = vpack.c.b16 %v1321, %v1320
        %v1325 = vpack.c.b16 %v1323, %v1322
        %v1328 = vsel %vm671, %v1312, 0
        %v1331 = vsel %vm671, %v1313, 0
        %v1334 = vsel %vm671, %v1314, 0
        %v1337 = vsel %vm671, %v1315, 0
        %v1340 = vsel %vm684, %v1325, 0
        %1342 = vmatprep.subr.bf16.mxu0 0
        %1343 = vmatpush1.bf16.msra.mxu0 %v1324
        %1344 = vmatprep.subr.bf16.mxu0 0
        %1345 = vmatpush1.bf16.msra.mxu0 %v1340
        %1346 = vmatprep.subr.bf16.mxu0 0
        %1347 = vmatpush1.bf16.msra.mxu0 0
        %1348 = vmatprep.subr.bf16.mxu0 0
        %1349 = vmatpush1.bf16.msra.mxu0 0
        %1350 = vmatprep.subr.bf16.mxu0 0
        %1351 = vmatpush1.bf16.msra.mxu0 0
        %1352 = vmatprep.subr.bf16.mxu0 0
        %1353 = vmatpush1.bf16.msra.mxu0 0
        %1354 = vmatprep.subr.bf16.mxu0 0
        %1355 = vmatpush1.bf16.msra.mxu0 0
        %1356 = vmatprep.subr.bf16.mxu0 0
        %1357 = vmatpush1.bf16.msra.mxu0 0
        %1358 = vmatprep.subr.bf16.mxu0 0
        %1359 = vmatpush1.bf16.msra.mxu0 0
        %1360 = vmatprep.subr.bf16.mxu0 0
        %1361 = vmatpush1.bf16.msra.mxu0 0
        %1362 = vmatprep.subr.bf16.mxu0 0
        %1363 = vmatpush1.bf16.msra.mxu0 0
        %1364 = vmatprep.subr.bf16.mxu0 0
        %1365 = vmatpush1.bf16.msra.mxu0 0
        %1366 = vmatprep.subr.bf16.mxu0 0
        %1367 = vmatpush1.bf16.msra.mxu0 0
        %1368 = vmatprep.subr.bf16.mxu0 0
        %1369 = vmatpush1.bf16.msra.mxu0 0
        %1370 = vmatprep.subr.bf16.mxu0 0
        %1371 = vmatpush1.bf16.msra.mxu0 0
        %1372 = vmatprep.subr.bf16.mxu0 0
        %1373 = vmatpush1.bf16.msra.mxu0 0
        %1374 = vmatprep.mubr.bf16.mxu0 0
        %1375 = vmatmul.mubr.bf16.gmra.mrb[0].mxu0 %v1328
        %v1376 = vpop.f32.mrb[0].mxu0
        %v1377 = vadd.f32 0.0, %v1376
        %v1378 = vpop.f32.mrb[0].mxu0
        %v1379 = vpop.f32.mrb[0].mxu0
        %v1380 = vadd.f32 0.0, %v1379
        %v1381 = vpop.f32.mrb[0].mxu0
        %1382 = vmatprep.mubr.bf16.mxu0 0
        %1383 = vmatmul.mubr.bf16.gmra.mrb[0].mxu0 %v1331
        %v1384 = vpop.f32.mrb[0].mxu0
        %v1385 = vadd.f32 0.0, %v1384
        %v1386 = vpop.f32.mrb[0].mxu0
        %v1387 = vpop.f32.mrb[0].mxu0
        %v1388 = vadd.f32 0.0, %v1387
        %v1389 = vpop.f32.mrb[0].mxu0
        %1390 = vmatprep.mubr.bf16.mxu0 0
        %1391 = vmatmul.mubr.bf16.gmra.mrb[0].mxu0 %v1334
        %v1392 = vpop.f32.mrb[0].mxu0
        %v1393 = vadd.f32 0.0, %v1392
        %v1394 = vpop.f32.mrb[0].mxu0
        %v1395 = vpop.f32.mrb[0].mxu0
        %v1396 = vadd.f32 0.0, %v1395
        %v1397 = vpop.f32.mrb[0].mxu0
        %1398 = vmatprep.mubr.bf16.mxu0 0
        %1399 = vmatmul.mubr.bf16.gmra.mrb[0].mxu0 %v1337
        %v1400 = vpop.f32.mrb[0].mxu0
        %v1401 = vadd.f32 0.0, %v1400
        %v1402 = vpop.f32.mrb[0].mxu0
        %v1403 = vpop.f32.mrb[0].mxu0
        %v1404 = vadd.f32 0.0, %v1403
        %v1405 = vpop.f32.mrb[0].mxu0
        %1406 = vdwg.mxu0
        %v1407 = vadd.f32 %v1163, %v1377
        %v1408 = vadd.f32 %v1164, %v1380
        %v1409 = vadd.f32 %v1165, %v1385
        %v1410 = vadd.f32 %v1166, %v1388
        %v1411 = vadd.f32 %v1167, %v1393
        %v1412 = vadd.f32 %v1168, %v1396
        %v1413 = vadd.f32 %v1169, %v1401
        %v1414 = vadd.f32 %v1170, %v1404
        %v1415 = vld [vmem:[%s453] sm:$0xe]
        %v1416 = vld [vmem:[%s453 + $0x8] sm:$0xe]
        %v1417 = vld [vmem:[%s453 + $0x10] sm:$0xe]
        %v1418 = vld [vmem:[%s453 + $0x18] sm:$0xe]
        %v1419 = vld [vmem:[%s453 + $0x20] sm:$0xe]
        %v1420 = vld [vmem:[%s453 + $0x28] sm:$0xe]
        %v1421 = vld [vmem:[%s453 + $0x30] sm:$0xe]
        %v1422 = vld [vmem:[%s453 + $0x38] sm:$0xe]
        %v1439 = vrot.slane %v1415, 5
        %v1440 = vrot.slane %v1439, 4
        %v1441 = vrot.slane %v1172, 5
        %v1442 = vsel %vm890, %v1440, %v1441
        %v1443 = vrot.slane %v1416, 5
        %v1444 = vrot.slane %v1443, 4
        %v1445 = vrot.slane %v1174, 5
        %v1446 = vsel %vm890, %v1444, %v1445
        %v1447 = vrot.slane %v1417, 5
        %v1448 = vrot.slane %v1447, 4
        %v1449 = vrot.slane %v1176, 5
        %v1450 = vsel %vm890, %v1448, %v1449
        %v1451 = vrot.slane %v1418, 5
        %v1452 = vrot.slane %v1451, 4
        %v1453 = vrot.slane %v1178, 5
        %v1454 = vsel %vm890, %v1452, %v1453
        %v1455 = vrot.slane %v1419, 5
        %v1456 = vrot.slane %v1455, 4
        %v1457 = vrot.slane %v1180, 5
        %v1458 = vsel %vm890, %v1456, %v1457
        %v1459 = vrot.slane %v1420, 5
        %v1460 = vrot.slane %v1459, 4
        %v1461 = vrot.slane %v1182, 5
        %v1462 = vsel %vm890, %v1460, %v1461
        %v1463 = vrot.slane %v1421, 5
        %v1464 = vrot.slane %v1463, 4
        %v1465 = vrot.slane %v1184, 5
        %v1466 = vsel %vm890, %v1464, %v1465
        %v1467 = vrot.slane %v1422, 5
        %v1468 = vrot.slane %v1467, 4
        %v1469 = vrot.slane %v1186, 5
        %v1470 = vsel %vm890, %v1468, %v1469
        %s1471 = scalar_lea.vmem %s2, 80
        %v1472 = vld [vmem:[%s1471] sm:$0xf]
        %v1473 = vld [vmem:[%s1471 + $0x4] sm:$0xf]
        %v1474 = vld [vmem:[%s1471 + $0x8] sm:$0xf]
        %v1475 = vld [vmem:[%s1471 + $0xc] sm:$0x1]
        %v1476 = vunpack.c.l.b16 %v1442
        %v1477 = vunpack.c.l.b16 %v1446
        %v1478 = vunpack.c.l.b16 %v1450
        %v1479 = vunpack.c.l.b16 %v1454
        %v1480 = vunpack.c.l.b16 %v1458
        %v1481 = vunpack.c.l.b16 %v1462
        %v1482 = vunpack.c.l.b16 %v1466
        %v1483 = vunpack.c.l.b16 %v1470
        %v1484 = vpack.c.b16 %v1477, %v1476
        %v1485 = vpack.c.b16 %v1479, %v1478
        %v1486 = vpack.c.b16 %v1481, %v1480
        %v1487 = vpack.c.b16 %v1483, %v1482
        %v1492 = vunpack.c.l.b16 %v1472
        %v1493 = vunpack.c.l.b16 %v1473
        %v1494 = vunpack.c.l.b16 %v1474
        %v1495 = vunpack.c.l.b16 %v1475
        %v1496 = vpack.c.b16 %v1493, %v1492
        %v1497 = vpack.c.b16 %v1495, %v1494
        %v1500 = vsel %vm671, %v1484, 0
        %v1503 = vsel %vm671, %v1485, 0
        %v1506 = vsel %vm671, %v1486, 0
        %v1509 = vsel %vm671, %v1487, 0
        %v1512 = vsel %vm684, %v1497, 0
        %1514 = vmatprep.subr.bf16.mxu0 0
        %1515 = vmatpush1.bf16.msra.mxu0 %v1496
        %1516 = vmatprep.subr.bf16.mxu0 0
        %1517 = vmatpush1.bf16.msra.mxu0 %v1512
        %1518 = vmatprep.subr.bf16.mxu0 0
        %1519 = vmatpush1.bf16.msra.mxu0 0
        %1520 = vmatprep.subr.bf16.mxu0 0
        %1521 = vmatpush1.bf16.msra.mxu0 0
        %1522 = vmatprep.subr.bf16.mxu0 0
        %1523 = vmatpush1.bf16.msra.mxu0 0
        %1524 = vmatprep.subr.bf16.mxu0 0
        %1525 = vmatpush1.bf16.msra.mxu0 0
        %1526 = vmatprep.subr.bf16.mxu0 0
        %1527 = vmatpush1.bf16.msra.mxu0 0
        %1528 = vmatprep.subr.bf16.mxu0 0
        %1529 = vmatpush1.bf16.msra.mxu0 0
        %1530 = vmatprep.subr.bf16.mxu0 0
        %1531 = vmatpush1.bf16.msra.mxu0 0
        %1532 = vmatprep.subr.bf16.mxu0 0
        %1533 = vmatpush1.bf16.msra.mxu0 0
        %1534 = vmatprep.subr.bf16.mxu0 0
        %1535 = vmatpush1.bf16.msra.mxu0 0
        %1536 = vmatprep.subr.bf16.mxu0 0
        %1537 = vmatpush1.bf16.msra.mxu0 0
        %1538 = vmatprep.subr.bf16.mxu0 0
        %1539 = vmatpush1.bf16.msra.mxu0 0
        %1540 = vmatprep.subr.bf16.mxu0 0
        %1541 = vmatpush1.bf16.msra.mxu0 0
        %1542 = vmatprep.subr.bf16.mxu0 0
        %1543 = vmatpush1.bf16.msra.mxu0 0
        %1544 = vmatprep.subr.bf16.mxu0 0
        %1545 = vmatpush1.bf16.msra.mxu0 0
        %1546 = vmatprep.mubr.bf16.mxu0 0
        %1547 = vmatmul.mubr.bf16.gmra.mrb[0].mxu0 %v1500
        %v1548 = vpop.f32.mrb[0].mxu0
        %v1549 = vadd.f32 0.0, %v1548
        %v1550 = vpop.f32.mrb[0].mxu0
        %v1551 = vpop.f32.mrb[0].mxu0
        %v1552 = vadd.f32 0.0, %v1551
        %v1553 = vpop.f32.mrb[0].mxu0
        %1554 = vmatprep.mubr.bf16.mxu0 0
        %1555 = vmatmul.mubr.bf16.gmra.mrb[0].mxu0 %v1503
        %v1556 = vpop.f32.mrb[0].mxu0
        %v1557 = vadd.f32 0.0, %v1556
        %v1558 = vpop.f32.mrb[0].mxu0
        %v1559 = vpop.f32.mrb[0].mxu0
        %v1560 = vadd.f32 0.0, %v1559
        %v1561 = vpop.f32.mrb[0].mxu0
        %1562 = vmatprep.mubr.bf16.mxu0 0
        %1563 = vmatmul.mubr.bf16.gmra.mrb[0].mxu0 %v1506
        %v1564 = vpop.f32.mrb[0].mxu0
        %v1565 = vadd.f32 0.0, %v1564
        %v1566 = vpop.f32.mrb[0].mxu0
        %v1567 = vpop.f32.mrb[0].mxu0
        %v1568 = vadd.f32 0.0, %v1567
        %v1569 = vpop.f32.mrb[0].mxu0
        %1570 = vmatprep.mubr.bf16.mxu0 0
        %1571 = vmatmul.mubr.bf16.gmra.mrb[0].mxu0 %v1509
        %v1572 = vpop.f32.mrb[0].mxu0
        %v1573 = vadd.f32 0.0, %v1572
        %v1574 = vpop.f32.mrb[0].mxu0
        %v1575 = vpop.f32.mrb[0].mxu0
        %v1576 = vadd.f32 0.0, %v1575
        %v1577 = vpop.f32.mrb[0].mxu0
        %1578 = vdwg.mxu0
        %v1579 = vadd.f32 %v1407, %v1549
        %v1580 = vadd.f32 %v1408, %v1552
        %v1581 = vadd.f32 %v1409, %v1557
        %v1582 = vadd.f32 %v1410, %v1560
        %v1583 = vadd.f32 %v1411, %v1565
        %v1584 = vadd.f32 %v1412, %v1568
        %v1585 = vadd.f32 %v1413, %v1573
        %v1586 = vadd.f32 %v1414, %v1576
        %s1587 = scalar_lea.vmem [#allocation2], 16
        %v1588 = vld [vmem:[%s1587] sm:$0xf]
        %v1589 = vld [vmem:[%s1587 + $0x8] sm:$0xf]
        %v1590 = vld [vmem:[%s1587 + $0x10] sm:$0xf]
        %v1591 = vld [vmem:[%s1587 + $0x18] sm:$0xf]
        %v1592 = vld [vmem:[%s1587 + $0x20] sm:$0xf]
        %v1593 = vld [vmem:[%s1587 + $0x28] sm:$0xf]
        %v1594 = vld [vmem:[%s1587 + $0x30] sm:$0xf]
        %v1595 = vld [vmem:[%s1587 + $0x38] sm:$0xf]
        %s1596 = scalar_lea.vmem %s2, 96
        %v1597 = vld [vmem:[%s1596] sm:$0xf]
        %v1598 = vld [vmem:[%s1596 + $0x4] sm:$0xf]
        %v1599 = vld [vmem:[%s1596 + $0x8] sm:$0xf]
        %v1600 = vld [vmem:[%s1596 + $0xc] sm:$0x1]
        %v1609 = vunpack.c.l.b16 %v1588
        %v1610 = vunpack.c.l.b16 %v1589
        %v1611 = vunpack.c.l.b16 %v1590
        %v1612 = vunpack.c.l.b16 %v1591
        %v1613 = vunpack.c.l.b16 %v1592
        %v1614 = vunpack.c.l.b16 %v1593
        %v1615 = vunpack.c.l.b16 %v1594
        %v1616 = vunpack.c.l.b16 %v1595
        %v1617 = vpack.c.b16 %v1610, %v1609
        %v1618 = vpack.c.b16 %v1612, %v1611
        %v1619 = vpack.c.b16 %v1614, %v1613
        %v1620 = vpack.c.b16 %v1616, %v1615
        %v1625 = vunpack.c.l.b16 %v1597
        %v1626 = vunpack.c.l.b16 %v1598
        %v1627 = vunpack.c.l.b16 %v1599
        %v1628 = vunpack.c.l.b16 %v1600
        %v1629 = vpack.c.b16 %v1626, %v1625
        %v1630 = vpack.c.b16 %v1628, %v1627
        %v1633 = vsel %vm671, %v1617, 0
        %v1636 = vsel %vm671, %v1618, 0
        %v1639 = vsel %vm671, %v1619, 0
        %v1642 = vsel %vm671, %v1620, 0
        %v1645 = vsel %vm684, %v1630, 0
        %1647 = vmatprep.subr.bf16.mxu0 0
        %1648 = vmatpush1.bf16.msra.mxu0 %v1629
        %1649 = vmatprep.subr.bf16.mxu0 0
        %1650 = vmatpush1.bf16.msra.mxu0 %v1645
        %1651 = vmatprep.subr.bf16.mxu0 0
        %1652 = vmatpush1.bf16.msra.mxu0 0
        %1653 = vmatprep.subr.bf16.mxu0 0
        %1654 = vmatpush1.bf16.msra.mxu0 0
        %1655 = vmatprep.subr.bf16.mxu0 0
        %1656 = vmatpush1.bf16.msra.mxu0 0
        %1657 = vmatprep.subr.bf16.mxu0 0
        %1658 = vmatpush1.bf16.msra.mxu0 0
        %1659 = vmatprep.subr.bf16.mxu0 0
        %1660 = vmatpush1.bf16.msra.mxu0 0
        %1661 = vmatprep.subr.bf16.mxu0 0
        %1662 = vmatpush1.bf16.msra.mxu0 0
        %1663 = vmatprep.subr.bf16.mxu0 0
        %1664 = vmatpush1.bf16.msra.mxu0 0
        %1665 = vmatprep.subr.bf16.mxu0 0
        %1666 = vmatpush1.bf16.msra.mxu0 0
        %1667 = vmatprep.subr.bf16.mxu0 0
        %1668 = vmatpush1.bf16.msra.mxu0 0
        %1669 = vmatprep.subr.bf16.mxu0 0
        %1670 = vmatpush1.bf16.msra.mxu0 0
        %1671 = vmatprep.subr.bf16.mxu0 0
        %1672 = vmatpush1.bf16.msra.mxu0 0
        %1673 = vmatprep.subr.bf16.mxu0 0
        %1674 = vmatpush1.bf16.msra.mxu0 0
        %1675 = vmatprep.subr.bf16.mxu0 0
        %1676 = vmatpush1.bf16.msra.mxu0 0
        %1677 = vmatprep.subr.bf16.mxu0 0
        %1678 = vmatpush1.bf16.msra.mxu0 0
        %1679 = vmatprep.mubr.bf16.mxu0 0
        %1680 = vmatmul.mubr.bf16.gmra.mrb[0].mxu0 %v1633
        %v1681 = vpop.f32.mrb[0].mxu0
        %v1682 = vadd.f32 0.0, %v1681
        %v1683 = vpop.f32.mrb[0].mxu0
        %v1684 = vpop.f32.mrb[0].mxu0
        %v1685 = vadd.f32 0.0, %v1684
        %v1686 = vpop.f32.mrb[0].mxu0
        %1687 = vmatprep.mubr.bf16.mxu0 0
        %1688 = vmatmul.mubr.bf16.gmra.mrb[0].mxu0 %v1636
        %v1689 = vpop.f32.mrb[0].mxu0
        %v1690 = vadd.f32 0.0, %v1689
        %v1691 = vpop.f32.mrb[0].mxu0
        %v1692 = vpop.f32.mrb[0].mxu0
        %v1693 = vadd.f32 0.0, %v1692
        %v1694 = vpop.f32.mrb[0].mxu0
        %1695 = vmatprep.mubr.bf16.mxu0 0
        %1696 = vmatmul.mubr.bf16.gmra.mrb[0].mxu0 %v1639
        %v1697 = vpop.f32.mrb[0].mxu0
        %v1698 = vadd.f32 0.0, %v1697
        %v1699 = vpop.f32.mrb[0].mxu0
        %v1700 = vpop.f32.mrb[0].mxu0
        %v1701 = vadd.f32 0.0, %v1700
        %v1702 = vpop.f32.mrb[0].mxu0
        %1703 = vmatprep.mubr.bf16.mxu0 0
        %1704 = vmatmul.mubr.bf16.gmra.mrb[0].mxu0 %v1642
        %v1705 = vpop.f32.mrb[0].mxu0
        %v1706 = vadd.f32 0.0, %v1705
        %v1707 = vpop.f32.mrb[0].mxu0
        %v1708 = vpop.f32.mrb[0].mxu0
        %v1709 = vadd.f32 0.0, %v1708
        %v1710 = vpop.f32.mrb[0].mxu0
        %1711 = vdwg.mxu0
        %v1712 = vadd.f32 %v1579, %v1682
        %v1713 = vadd.f32 %v1580, %v1685
        %v1714 = vadd.f32 %v1581, %v1690
        %v1715 = vadd.f32 %v1582, %v1693
        %v1716 = vadd.f32 %v1583, %v1698
        %v1717 = vadd.f32 %v1584, %v1701
        %v1718 = vadd.f32 %v1585, %v1706
        %v1719 = vadd.f32 %v1586, %v1709
        %v1720 = vld [vmem:[%s1587] sm:$0xf]
        %v1721 = vld [vmem:[%s1587 + $0x4] sm:$0x1]
        %v1722 = vld [vmem:[%s1587 + $0x8] sm:$0xf]
        %v1723 = vld [vmem:[%s1587 + $0xc] sm:$0x1]
        %v1724 = vld [vmem:[%s1587 + $0x10] sm:$0xf]
        %v1725 = vld [vmem:[%s1587 + $0x14] sm:$0x1]
        %v1726 = vld [vmem:[%s1587 + $0x18] sm:$0xf]
        %v1727 = vld [vmem:[%s1587 + $0x1c] sm:$0x1]
        %v1728 = vld [vmem:[%s1587 + $0x20] sm:$0xf]
        %v1729 = vld [vmem:[%s1587 + $0x24] sm:$0x1]
        %v1730 = vld [vmem:[%s1587 + $0x28] sm:$0xf]
        %v1731 = vld [vmem:[%s1587 + $0x2c] sm:$0x1]
        %v1732 = vld [vmem:[%s1587 + $0x30] sm:$0xf]
        %v1733 = vld [vmem:[%s1587 + $0x34] sm:$0x1]
        %v1734 = vld [vmem:[%s1587 + $0x38] sm:$0xf]
        %v1735 = vld [vmem:[%s1587 + $0x3c] sm:$0x1]
        %v1737 = vshrl.u32 %v1720, 16
        %v1739 = vrot.slane %v1737, 4
        %v1740 = vshll.u32 %v1720, 16
        %v1742 = vrot.slane %v1740, 5
        %v1743 = vor.u32 %v1739, %v1742
        %v1744 = vrot.slane %v1743, 4
        %v1746 = vshll.u32 %v1721, 16
        %v1748 = vrot.slane %v1746, 5
        %v1749 = vsel %vm530, %v1744, %v1748
        %v1751 = vshrl.u32 %v1722, 16
        %v1753 = vrot.slane %v1751, 4
        %v1754 = vshll.u32 %v1722, 16
        %v1756 = vrot.slane %v1754, 5
        %v1757 = vor.u32 %v1753, %v1756
        %v1758 = vrot.slane %v1757, 4
        %v1760 = vshll.u32 %v1723, 16
        %v1762 = vrot.slane %v1760, 5
        %v1763 = vsel %vm530, %v1758, %v1762
        %v1765 = vshrl.u32 %v1724, 16
        %v1767 = vrot.slane %v1765, 4
        %v1768 = vshll.u32 %v1724, 16
        %v1770 = vrot.slane %v1768, 5
        %v1771 = vor.u32 %v1767, %v1770
        %v1772 = vrot.slane %v1771, 4
        %v1774 = vshll.u32 %v1725, 16
        %v1776 = vrot.slane %v1774, 5
        %v1777 = vsel %vm530, %v1772, %v1776
        %v1779 = vshrl.u32 %v1726, 16
        %v1781 = vrot.slane %v1779, 4
        %v1782 = vshll.u32 %v1726, 16
        %v1784 = vrot.slane %v1782, 5
        %v1785 = vor.u32 %v1781, %v1784
        %v1786 = vrot.slane %v1785, 4
        %v1788 = vshll.u32 %v1727, 16
        %v1790 = vrot.slane %v1788, 5
        %v1791 = vsel %vm530, %v1786, %v1790
        %v1793 = vshrl.u32 %v1728, 16
        %v1795 = vrot.slane %v1793, 4
        %v1796 = vshll.u32 %v1728, 16
        %v1798 = vrot.slane %v1796, 5
        %v1799 = vor.u32 %v1795, %v1798
        %v1800 = vrot.slane %v1799, 4
        %v1802 = vshll.u32 %v1729, 16
        %v1804 = vrot.slane %v1802, 5
        %v1805 = vsel %vm530, %v1800, %v1804
        %v1807 = vshrl.u32 %v1730, 16
        %v1809 = vrot.slane %v1807, 4
        %v1810 = vshll.u32 %v1730, 16
        %v1812 = vrot.slane %v1810, 5
        %v1813 = vor.u32 %v1809, %v1812
        %v1814 = vrot.slane %v1813, 4
        %v1816 = vshll.u32 %v1731, 16
        %v1818 = vrot.slane %v1816, 5
        %v1819 = vsel %vm530, %v1814, %v1818
        %v1821 = vshrl.u32 %v1732, 16
        %v1823 = vrot.slane %v1821, 4
        %v1824 = vshll.u32 %v1732, 16
        %v1826 = vrot.slane %v1824, 5
        %v1827 = vor.u32 %v1823, %v1826
        %v1828 = vrot.slane %v1827, 4
        %v1830 = vshll.u32 %v1733, 16
        %v1832 = vrot.slane %v1830, 5
        %v1833 = vsel %vm530, %v1828, %v1832
        %v1835 = vshrl.u32 %v1734, 16
        %v1837 = vrot.slane %v1835, 4
        %v1838 = vshll.u32 %v1734, 16
        %v1840 = vrot.slane %v1838, 5
        %v1841 = vor.u32 %v1837, %v1840
        %v1842 = vrot.slane %v1841, 4
        %v1844 = vshll.u32 %v1735, 16
        %v1846 = vrot.slane %v1844, 5
        %v1847 = vsel %vm530, %v1842, %v1846
        %s1848 = scalar_lea.vmem %s2, 112
        %v1849 = vld [vmem:[%s1848] sm:$0xf]
        %v1850 = vld [vmem:[%s1848 + $0x4] sm:$0xf]
        %v1851 = vld [vmem:[%s1848 + $0x8] sm:$0xf]
        %v1852 = vld [vmem:[%s1848 + $0xc] sm:$0x1]
        %v1853 = vunpack.c.l.b16 %v1749
        %v1854 = vunpack.c.l.b16 %v1763
        %v1855 = vunpack.c.l.b16 %v1777
        %v1856 = vunpack.c.l.b16 %v1791
        %v1857 = vunpack.c.l.b16 %v1805
        %v1858 = vunpack.c.l.b16 %v1819
        %v1859 = vunpack.c.l.b16 %v1833
        %v1860 = vunpack.c.l.b16 %v1847
        %v1861 = vpack.c.b16 %v1854, %v1853
        %v1862 = vpack.c.b16 %v1856, %v1855
        %v1863 = vpack.c.b16 %v1858, %v1857
        %v1864 = vpack.c.b16 %v1860, %v1859
        %v1869 = vunpack.c.l.b16 %v1849
        %v1870 = vunpack.c.l.b16 %v1850
        %v1871 = vunpack.c.l.b16 %v1851
        %v1872 = vunpack.c.l.b16 %v1852
        %v1873 = vpack.c.b16 %v1870, %v1869
        %v1874 = vpack.c.b16 %v1872, %v1871
        %v1877 = vsel %vm671, %v1861, 0
        %v1880 = vsel %vm671, %v1862, 0
        %v1883 = vsel %vm671, %v1863, 0
        %v1886 = vsel %vm671, %v1864, 0
        %v1889 = vsel %vm684, %v1874, 0
        %1891 = vmatprep.subr.bf16.mxu0 0
        %1892 = vmatpush1.bf16.msra.mxu0 %v1873
        %1893 = vmatprep.subr.bf16.mxu0 0
        %1894 = vmatpush1.bf16.msra.mxu0 %v1889
        %1895 = vmatprep.subr.bf16.mxu0 0
        %1896 = vmatpush1.bf16.msra.mxu0 0
        %1897 = vmatprep.subr.bf16.mxu0 0
        %1898 = vmatpush1.bf16.msra.mxu0 0
        %1899 = vmatprep.subr.bf16.mxu0 0
        %1900 = vmatpush1.bf16.msra.mxu0 0
        %1901 = vmatprep.subr.bf16.mxu0 0
        %1902 = vmatpush1.bf16.msra.mxu0 0
        %1903 = vmatprep.subr.bf16.mxu0 0
        %1904 = vmatpush1.bf16.msra.mxu0 0
        %1905 = vmatprep.subr.bf16.mxu0 0
        %1906 = vmatpush1.bf16.msra.mxu0 0
        %1907 = vmatprep.subr.bf16.mxu0 0
        %1908 = vmatpush1.bf16.msra.mxu0 0
        %1909 = vmatprep.subr.bf16.mxu0 0
        %1910 = vmatpush1.bf16.msra.mxu0 0
        %1911 = vmatprep.subr.bf16.mxu0 0
        %1912 = vmatpush1.bf16.msra.mxu0 0
        %1913 = vmatprep.subr.bf16.mxu0 0
        %1914 = vmatpush1.bf16.msra.mxu0 0
        %1915 = vmatprep.subr.bf16.mxu0 0
        %1916 = vmatpush1.bf16.msra.mxu0 0
        %1917 = vmatprep.subr.bf16.mxu0 0
        %1918 = vmatpush1.bf16.msra.mxu0 0
        %1919 = vmatprep.subr.bf16.mxu0 0
        %1920 = vmatpush1.bf16.msra.mxu0 0
        %1921 = vmatprep.subr.bf16.mxu0 0
        %1922 = vmatpush1.bf16.msra.mxu0 0
        %1923 = vmatprep.mubr.bf16.mxu0 0
        %1924 = vmatmul.mubr.bf16.gmra.mrb[0].mxu0 %v1877
        %v1925 = vpop.f32.mrb[0].mxu0
        %v1926 = vadd.f32 0.0, %v1925
        %v1927 = vpop.f32.mrb[0].mxu0
        %v1928 = vpop.f32.mrb[0].mxu0
        %v1929 = vadd.f32 0.0, %v1928
        %v1930 = vpop.f32.mrb[0].mxu0
        %1931 = vmatprep.mubr.bf16.mxu0 0
        %1932 = vmatmul.mubr.bf16.gmra.mrb[0].mxu0 %v1880
        %v1933 = vpop.f32.mrb[0].mxu0
        %v1934 = vadd.f32 0.0, %v1933
        %v1935 = vpop.f32.mrb[0].mxu0
        %v1936 = vpop.f32.mrb[0].mxu0
        %v1937 = vadd.f32 0.0, %v1936
        %v1938 = vpop.f32.mrb[0].mxu0
        %1939 = vmatprep.mubr.bf16.mxu0 0
        %1940 = vmatmul.mubr.bf16.gmra.mrb[0].mxu0 %v1883
        %v1941 = vpop.f32.mrb[0].mxu0
        %v1942 = vadd.f32 0.0, %v1941
        %v1943 = vpop.f32.mrb[0].mxu0
        %v1944 = vpop.f32.mrb[0].mxu0
        %v1945 = vadd.f32 0.0, %v1944
        %v1946 = vpop.f32.mrb[0].mxu0
        %1947 = vmatprep.mubr.bf16.mxu0 0
        %1948 = vmatmul.mubr.bf16.gmra.mrb[0].mxu0 %v1886
        %v1949 = vpop.f32.mrb[0].mxu0
        %v1950 = vadd.f32 0.0, %v1949
        %v1951 = vpop.f32.mrb[0].mxu0
        %v1952 = vpop.f32.mrb[0].mxu0
        %v1953 = vadd.f32 0.0, %v1952
        %v1954 = vpop.f32.mrb[0].mxu0
        %1955 = vdwg.mxu0
        %v1956 = vadd.f32 %v1712, %v1926
        %v1957 = vadd.f32 %v1713, %v1929
        %v1958 = vadd.f32 %v1714, %v1934
        %v1959 = vadd.f32 %v1715, %v1937
        %v1960 = vadd.f32 %v1716, %v1942
        %v1961 = vadd.f32 %v1717, %v1945
        %v1962 = vadd.f32 %v1718, %v1950
        %v1963 = vadd.f32 %v1719, %v1953
        %v1964 = vld [vmem:[%s1587] sm:$0xe]
        %v1965 = vld [vmem:[%s1587 + $0x8] sm:$0xe]
        %v1966 = vld [vmem:[%s1587 + $0x10] sm:$0xe]
        %v1967 = vld [vmem:[%s1587 + $0x18] sm:$0xe]
        %v1968 = vld [vmem:[%s1587 + $0x20] sm:$0xe]
        %v1969 = vld [vmem:[%s1587 + $0x28] sm:$0xe]
        %v1970 = vld [vmem:[%s1587 + $0x30] sm:$0xe]
        %v1971 = vld [vmem:[%s1587 + $0x38] sm:$0xe]
        %v1988 = vrot.slane %v1964, 5
        %v1989 = vrot.slane %v1988, 4
        %v1990 = vrot.slane %v1721, 5
        %v1991 = vsel %vm890, %v1989, %v1990
        %v1992 = vrot.slane %v1965, 5
        %v1993 = vrot.slane %v1992, 4
        %v1994 = vrot.slane %v1723, 5
        %v1995 = vsel %vm890, %v1993, %v1994
        %v1996 = vrot.slane %v1966, 5
        %v1997 = vrot.slane %v1996, 4
        %v1998 = vrot.slane %v1725, 5
        %v1999 = vsel %vm890, %v1997, %v1998
        %v2000 = vrot.slane %v1967, 5
        %v2001 = vrot.slane %v2000, 4
        %v2002 = vrot.slane %v1727, 5
        %v2003 = vsel %vm890, %v2001, %v2002
        %v2004 = vrot.slane %v1968, 5
        %v2005 = vrot.slane %v2004, 4
        %v2006 = vrot.slane %v1729, 5
        %v2007 = vsel %vm890, %v2005, %v2006
        %v2008 = vrot.slane %v1969, 5
        %v2009 = vrot.slane %v2008, 4
        %v2010 = vrot.slane %v1731, 5
        %v2011 = vsel %vm890, %v2009, %v2010
        %v2012 = vrot.slane %v1970, 5
        %v2013 = vrot.slane %v2012, 4
        %v2014 = vrot.slane %v1733, 5
        %v2015 = vsel %vm890, %v2013, %v2014
        %v2016 = vrot.slane %v1971, 5
        %v2017 = vrot.slane %v2016, 4
        %v2018 = vrot.slane %v1735, 5
        %v2019 = vsel %vm890, %v2017, %v2018
        %s2020 = scalar_lea.vmem %s2, 128
        %v2021 = vld [vmem:[%s2020] sm:$0xf]
        %v2022 = vld [vmem:[%s2020 + $0x4] sm:$0xf]
        %v2023 = vld [vmem:[%s2020 + $0x8] sm:$0xf]
        %v2024 = vld [vmem:[%s2020 + $0xc] sm:$0x1]
        %v2025 = vunpack.c.l.b16 %v1991
        %v2026 = vunpack.c.l.b16 %v1995
        %v2027 = vunpack.c.l.b16 %v1999
        %v2028 = vunpack.c.l.b16 %v2003
        %v2029 = vunpack.c.l.b16 %v2007
        %v2030 = vunpack.c.l.b16 %v2011
        %v2031 = vunpack.c.l.b16 %v2015
        %v2032 = vunpack.c.l.b16 %v2019
        %v2033 = vpack.c.b16 %v2026, %v2025
        %v2034 = vpack.c.b16 %v2028, %v2027
        %v2035 = vpack.c.b16 %v2030, %v2029
        %v2036 = vpack.c.b16 %v2032, %v2031
        %v2041 = vunpack.c.l.b16 %v2021
        %v2042 = vunpack.c.l.b16 %v2022
        %v2043 = vunpack.c.l.b16 %v2023
        %v2044 = vunpack.c.l.b16 %v2024
        %v2045 = vpack.c.b16 %v2042, %v2041
        %v2046 = vpack.c.b16 %v2044, %v2043
        %v2049 = vsel %vm671, %v2033, 0
        %v2052 = vsel %vm671, %v2034, 0
        %v2055 = vsel %vm671, %v2035, 0
        %v2058 = vsel %vm671, %v2036, 0
        %v2061 = vsel %vm684, %v2046, 0
        %2063 = vmatprep.subr.bf16.mxu0 0
        %2064 = vmatpush1.bf16.msra.mxu0 %v2045
        %2065 = vmatprep.subr.bf16.mxu0 0
        %2066 = vmatpush1.bf16.msra.mxu0 %v2061
        %2067 = vmatprep.subr.bf16.mxu0 0
        %2068 = vmatpush1.bf16.msra.mxu0 0
        %2069 = vmatprep.subr.bf16.mxu0 0
        %2070 = vmatpush1.bf16.msra.mxu0 0
        %2071 = vmatprep.subr.bf16.mxu0 0
        %2072 = vmatpush1.bf16.msra.mxu0 0
        %2073 = vmatprep.subr.bf16.mxu0 0
        %2074 = vmatpush1.bf16.msra.mxu0 0
        %2075 = vmatprep.subr.bf16.mxu0 0
        %2076 = vmatpush1.bf16.msra.mxu0 0
        %2077 = vmatprep.subr.bf16.mxu0 0
        %2078 = vmatpush1.bf16.msra.mxu0 0
        %2079 = vmatprep.subr.bf16.mxu0 0
        %2080 = vmatpush1.bf16.msra.mxu0 0
        %2081 = vmatprep.subr.bf16.mxu0 0
        %2082 = vmatpush1.bf16.msra.mxu0 0
        %2083 = vmatprep.subr.bf16.mxu0 0
        %2084 = vmatpush1.bf16.msra.mxu0 0
        %2085 = vmatprep.subr.bf16.mxu0 0
        %2086 = vmatpush1.bf16.msra.mxu0 0
        %2087 = vmatprep.subr.bf16.mxu0 0
        %2088 = vmatpush1.bf16.msra.mxu0 0
        %2089 = vmatprep.subr.bf16.mxu0 0
        %2090 = vmatpush1.bf16.msra.mxu0 0
        %2091 = vmatprep.subr.bf16.mxu0 0
        %2092 = vmatpush1.bf16.msra.mxu0 0
        %2093 = vmatprep.subr.bf16.mxu0 0
        %2094 = vmatpush1.bf16.msra.mxu0 0
        %2095 = vmatprep.mubr.bf16.mxu0 0
        %2096 = vmatmul.mubr.bf16.gmra.mrb[0].mxu0 %v2049
        %v2097 = vpop.f32.mrb[0].mxu0
        %v2098 = vadd.f32 0.0, %v2097
        %v2099 = vpop.f32.mrb[0].mxu0
        %v2100 = vpop.f32.mrb[0].mxu0
        %v2101 = vadd.f32 0.0, %v2100
        %v2102 = vpop.f32.mrb[0].mxu0
        %2103 = vmatprep.mubr.bf16.mxu0 0
        %2104 = vmatmul.mubr.bf16.gmra.mrb[0].mxu0 %v2052
        %v2105 = vpop.f32.mrb[0].mxu0
        %v2106 = vadd.f32 0.0, %v2105
        %v2107 = vpop.f32.mrb[0].mxu0
        %v2108 = vpop.f32.mrb[0].mxu0
        %v2109 = vadd.f32 0.0, %v2108
        %v2110 = vpop.f32.mrb[0].mxu0
        %2111 = vmatprep.mubr.bf16.mxu0 0
        %2112 = vmatmul.mubr.bf16.gmra.mrb[0].mxu0 %v2055
        %v2113 = vpop.f32.mrb[0].mxu0
        %v2114 = vadd.f32 0.0, %v2113
        %v2115 = vpop.f32.mrb[0].mxu0
        %v2116 = vpop.f32.mrb[0].mxu0
        %v2117 = vadd.f32 0.0, %v2116
        %v2118 = vpop.f32.mrb[0].mxu0
        %2119 = vmatprep.mubr.bf16.mxu0 0
        %2120 = vmatmul.mubr.bf16.gmra.mrb[0].mxu0 %v2058
        %v2121 = vpop.f32.mrb[0].mxu0
        %v2122 = vadd.f32 0.0, %v2121
        %v2123 = vpop.f32.mrb[0].mxu0
        %v2124 = vpop.f32.mrb[0].mxu0
        %v2125 = vadd.f32 0.0, %v2124
        %v2126 = vpop.f32.mrb[0].mxu0
        %2127 = vdwg.mxu0
        %v2128 = vadd.f32 %v1956, %v2098
        %v2129 = vadd.f32 %v1957, %v2101
        %v2130 = vadd.f32 %v1958, %v2106
        %v2131 = vadd.f32 %v1959, %v2109
        %v2132 = vadd.f32 %v1960, %v2114
        %v2133 = vadd.f32 %v1961, %v2117
        %v2134 = vadd.f32 %v1962, %v2122
        %v2135 = vadd.f32 %v1963, %v2125
        %v2136 = vld [vmem:[%s3] sm:$0x1]
        %v2138 = vlaneseq
        %v2139 = vshrl.u32 %v2138, 7
        %v2140 = vsub.s32 0, %v2139
        %v2141 = vrot.slane %v2136, %v2140
        %v2143 = vadd.f32 %v2128, %v2141
        %v2144 = vadd.f32 %v2129, %v2141
        %v2145 = vadd.f32 %v2130, %v2141
        %v2146 = vadd.f32 %v2131, %v2141
        %v2147 = vadd.f32 %v2132, %v2141
        %v2148 = vadd.f32 %v2133, %v2141
        %v2149 = vadd.f32 %v2134, %v2141
        %v2150 = vadd.f32 %v2135, %v2141
        %v2151 = vmax.f32 %v2143, 0.0
        %v2152 = vmax.f32 %v2144, 0.0
        %v2153 = vmax.f32 %v2145, 0.0
        %v2154 = vmax.f32 %v2146, 0.0
        %v2155 = vmax.f32 %v2147, 0.0
        %v2156 = vmax.f32 %v2148, 0.0
        %v2157 = vmax.f32 %v2149, 0.0
        %v2158 = vmax.f32 %v2150, 0.0
        %v2159 = vpack.c.bf16 %v2152, %v2151
        %v2160 = vpack.c.bf16 %v2154, %v2153
        %v2161 = vpack.c.bf16 %v2156, %v2155
        %v2162 = vpack.c.bf16 %v2158, %v2157
        %v2163 = vld [vmem:[%s4] sm:$0xf]
        %v2164 = vld [vmem:[%s4 + $0x4] sm:$0xf]
        %v2165 = vld [vmem:[%s4 + $0x8] sm:$0xf]
        %v2166 = vld [vmem:[%s4 + $0xc] sm:$0xf]
        %v2167 = vld [vmem:[%s4 + $0x10] sm:$0xf]
        %v2168 = vld [vmem:[%s4 + $0x14] sm:$0xf]
        %v2169 = vld [vmem:[%s4 + $0x18] sm:$0xf]
        %v2170 = vld [vmem:[%s4 + $0x1c] sm:$0xf]
        %v2171 = vld [vmem:[%s5] sm:$0x1]
        %v2173 = vlaneseq
        %v2174 = vshrl.u32 %v2173, 7
        %v2175 = vsub.s32 0, %v2174
        %v2176 = vrot.slane %v2171, %v2175
        %v2186 = vunpack.c.l.b16 %v2163
        %v2187 = vunpack.c.l.b16 %v2164
        %v2188 = vunpack.c.l.b16 %v2165
        %v2189 = vunpack.c.l.b16 %v2166
        %v2190 = vunpack.c.l.b16 %v2167
        %v2191 = vunpack.c.l.b16 %v2168
        %v2192 = vunpack.c.l.b16 %v2169
        %v2193 = vunpack.c.l.b16 %v2170
        %v2194 = vpack.c.b16 %v2187, %v2186
        %v2195 = vpack.c.b16 %v2189, %v2188
        %v2196 = vpack.c.b16 %v2191, %v2190
        %v2197 = vpack.c.b16 %v2193, %v2192
        %vm2202 = vcmask 523264
        %v2204 = vsel %vm2202, %v2159, 0
        %v2207 = vsel %vm2202, %v2160, 0
        %v2210 = vsel %vm2202, %v2161, 0
        %v2213 = vsel %vm2202, %v2162, 0
        %2215 = vmatprep.subr.bf16.mxu0 0
        %2216 = vmatpush1.bf16.msra.mxu0 %v2194
        %2217 = vmatprep.subr.bf16.mxu0 0
        %2218 = vmatpush1.bf16.msra.mxu0 %v2195
        %2219 = vmatprep.subr.bf16.mxu0 0
        %2220 = vmatpush1.bf16.msra.mxu0 %v2196
        %2221 = vmatprep.subr.bf16.mxu0 0
        %2222 = vmatpush1.bf16.msra.mxu0 %v2197
        %2223 = vmatprep.subr.bf16.mxu0 0
        %2224 = vmatpush1.bf16.msra.mxu0 0
        %2225 = vmatprep.subr.bf16.mxu0 0
        %2226 = vmatpush1.bf16.msra.mxu0 0
        %2227 = vmatprep.subr.bf16.mxu0 0
        %2228 = vmatpush1.bf16.msra.mxu0 0
        %2229 = vmatprep.subr.bf16.mxu0 0
        %2230 = vmatpush1.bf16.msra.mxu0 0
        %2231 = vmatprep.subr.bf16.mxu0 0
        %2232 = vmatpush1.bf16.msra.mxu0 0
        %2233 = vmatprep.subr.bf16.mxu0 0
        %2234 = vmatpush1.bf16.msra.mxu0 0
        %2235 = vmatprep.subr.bf16.mxu0 0
        %2236 = vmatpush1.bf16.msra.mxu0 0
        %2237 = vmatprep.subr.bf16.mxu0 0
        %2238 = vmatpush1.bf16.msra.mxu0 0
        %2239 = vmatprep.subr.bf16.mxu0 0
        %2240 = vmatpush1.bf16.msra.mxu0 0
        %2241 = vmatprep.subr.bf16.mxu0 0
        %2242 = vmatpush1.bf16.msra.mxu0 0
        %2243 = vmatprep.subr.bf16.mxu0 0
        %2244 = vmatpush1.bf16.msra.mxu0 0
        %2245 = vmatprep.subr.bf16.mxu0 0
        %2246 = vmatpush1.bf16.msra.mxu0 0
        %2247 = vmatprep.mubr.bf16.mxu0 0
        %2248 = vmatmul.mubr.bf16.gmra.mrb[0].mxu0 %v2204
        %v2249 = vpop.f32.mrb[0].mxu0
        %v2250 = vadd.f32 %v2176, %v2249
        %v2251 = vpop.f32.mrb[0].mxu0
        %v2252 = vpop.f32.mrb[0].mxu0
        %v2253 = vadd.f32 %v2176, %v2252
        %v2254 = vpop.f32.mrb[0].mxu0
        %2255 = vmatprep.mubr.bf16.mxu0 0
        %2256 = vmatmul.mubr.bf16.gmra.mrb[0].mxu0 %v2207
        %v2257 = vpop.f32.mrb[0].mxu0
        %v2258 = vadd.f32 %v2176, %v2257
        %v2259 = vpop.f32.mrb[0].mxu0
        %v2260 = vpop.f32.mrb[0].mxu0
        %v2261 = vadd.f32 %v2176, %v2260
        %v2262 = vpop.f32.mrb[0].mxu0
        %2263 = vmatprep.mubr.bf16.mxu0 0
        %2264 = vmatmul.mubr.bf16.gmra.mrb[0].mxu0 %v2210
        %v2265 = vpop.f32.mrb[0].mxu0
        %v2266 = vadd.f32 %v2176, %v2265
        %v2267 = vpop.f32.mrb[0].mxu0
        %v2268 = vpop.f32.mrb[0].mxu0
        %v2269 = vadd.f32 %v2176, %v2268
        %v2270 = vpop.f32.mrb[0].mxu0
        %2271 = vmatprep.mubr.bf16.mxu0 0
        %2272 = vmatmul.mubr.bf16.gmra.mrb[0].mxu0 %v2213
        %v2273 = vpop.f32.mrb[0].mxu0
        %v2274 = vadd.f32 %v2176, %v2273
        %v2275 = vpop.f32.mrb[0].mxu0
        %v2276 = vpop.f32.mrb[0].mxu0
        %v2277 = vadd.f32 %v2176, %v2276
        %v2278 = vpop.f32.mrb[0].mxu0
        %2279 = vdwg.mxu0
        %vm2280 = vcmask 80896
        %2281 = vst.msk [vmem:[%s287] sm:$0xff] %vm2280, %v2250
        %2282 = vst.msk [vmem:[%s287 + $0x8] sm:$0xff] %vm2280, %v2253
        %2283 = vst.msk [vmem:[%s287 + $0x10] sm:$0xff] %vm2280, %v2258
        %2284 = vst.msk [vmem:[%s287 + $0x18] sm:$0xff] %vm2280, %v2261
        %2285 = vst.msk [vmem:[%s287 + $0x20] sm:$0xff] %vm2280, %v2266
        %2286 = vst.msk [vmem:[%s287 + $0x28] sm:$0xff] %vm2280, %v2269
        %2287 = vst.msk [vmem:[%s287 + $0x30] sm:$0xff] %vm2280, %v2274
        %2288 = vst.msk [vmem:[%s287 + $0x38] sm:$0xff] %vm2280, %v2277
        %v2289 = vld [vmem:[%s304] sm:$0xff]
        %v2290 = vld [vmem:[%s304 + $0x8] sm:$0xff]
        %v2291 = vld [vmem:[%s304 + $0x10] sm:$0xff]
        %v2292 = vld [vmem:[%s304 + $0x18] sm:$0xff]
        %v2293 = vld [vmem:[%s304 + $0x20] sm:$0xff]
        %v2294 = vld [vmem:[%s304 + $0x28] sm:$0xff]
        %v2295 = vld [vmem:[%s304 + $0x30] sm:$0xff]
        %v2296 = vld [vmem:[%s304 + $0x38] sm:$0xff]
        %2298 = vset.pattern.permute.xlu0 0
        %2299 = vperm.xlu0 %2298, %v2289
        %v2300 = vpop.permute.xlu0 %2299
        %2303 = vset.pattern.permute.xlu0 0
        %2304 = vperm.xlu0 %2303, %v2290
        %v2305 = vpop.permute.xlu0 %2304
        %2308 = vset.pattern.permute.xlu0 0
        %2309 = vperm.xlu0 %2308, %v2291
        %v2310 = vpop.permute.xlu0 %2309
        %2313 = vset.pattern.permute.xlu0 0
        %2314 = vperm.xlu0 %2313, %v2292
        %v2315 = vpop.permute.xlu0 %2314
        %2318 = vset.pattern.permute.xlu0 0
        %2319 = vperm.xlu0 %2318, %v2293
        %v2320 = vpop.permute.xlu0 %2319
        %2323 = vset.pattern.permute.xlu0 0
        %2324 = vperm.xlu0 %2323, %v2294
        %v2325 = vpop.permute.xlu0 %2324
        %2328 = vset.pattern.permute.xlu0 0
        %2329 = vperm.xlu0 %2328, %v2295
        %v2330 = vpop.permute.xlu0 %2329
        %2333 = vset.pattern.permute.xlu0 0
        %2334 = vperm.xlu0 %2333, %v2296
        %v2335 = vpop.permute.xlu0 %2334
        %v2337 = vmul.f32 %v2250, %v2300
        %v2338 = vmul.f32 %v2253, %v2305
        %v2339 = vmul.f32 %v2258, %v2310
        %v2340 = vmul.f32 %v2261, %v2315
        %v2341 = vmul.f32 %v2266, %v2320
        %v2342 = vmul.f32 %v2269, %v2325
        %v2343 = vmul.f32 %v2274, %v2330
        %v2344 = vmul.f32 %v2277, %v2335
        %2345 = vst.msk [vmem:[%s309] sm:$0xff] %vm2280, %v2337
        %2346 = vst.msk [vmem:[%s309 + $0x8] sm:$0xff] %vm2280, %v2338
        %2347 = vst.msk [vmem:[%s309 + $0x10] sm:$0xff] %vm2280, %v2339
        %2348 = vst.msk [vmem:[%s309 + $0x18] sm:$0xff] %vm2280, %v2340
        %2349 = vst.msk [vmem:[%s309 + $0x20] sm:$0xff] %vm2280, %v2341
        %2350 = vst.msk [vmem:[%s309 + $0x28] sm:$0xff] %vm2280, %v2342
        %2351 = vst.msk [vmem:[%s309 + $0x30] sm:$0xff] %vm2280, %v2343
        %2352 = vst.msk [vmem:[%s309 + $0x38] sm:$0xff] %vm2280, %v2344
        %s2353 = sand.u32 %s166, 1
        %s2354 = scalar_lea.sflag [#allocation4], %s2353
        %s2355 = sand.u32 %s166, 1
        %s2356 = smul.addr %s2355, 64
        %s2357 = scalar_lea.vmem [#allocation3], %s2356
        %p2358 = scmp.lt.s32.totalorder %s22, 1
        %s2359 = scalar_select %p2358, %s22, 1
        %s2360 = smul.addr %s2359, 8
        %s2361 = smul.addr %s2360, 8
        %s2362 = scalar_lea.vmem %s7, %s2361
        // Predicated region
        $region45: #{_lambda_.5} parent=43 // pred_check
          %p2363 = pneg %p176
        $region46: #{_lambda_.5} parent=43 // pred_check_branch
          %2365 = sbr.rel (%p2363) target = $region48
        $region47: #{_lambda_.5} parent=43 // pred_region
          %s2367 = ssub.s32 1024, 1024
          %2368 = vsyncadd %s2354, %s2367
          %s2369 = smul.addr %s22, 8
          %s2370 = smul.addr %s2369, 128
          %s2371 = scalar_lea.hbm %s6, %s2370
          %s2372 = sshll.u32 %s2357, 4
          %s2373 = int_to_ptr.vmem [resolvable:$true] %s2372
          %2378 = dma.vmem_to_hbm [thread:$0]  %s2373, 1024, %s2371, %s2354, 128, 128, 8
        $region48: #{_lambda_.5} parent=43 // pred_fallthru
          _
        // Predicated region
        $region49: #{_lambda_.5} parent=43 // pred_check
          %p2379 = pneg %p202
        $region50: #{_lambda_.5} parent=43 // pred_check_branch
          %2381 = sbr.rel (%p2379) target = $region52
        $region51: #{_lambda_.5} parent=43 // pred_region
          _
        $region52: #{_lambda_.5} parent=43 // pred_fallthru
          _
      $region44: #{_lambda_.5} parent=5 // pred_fallthru
        _
      %p2382 = scmp.le.s32.totalorder 2, %s17
      // Predicated region
      $region53: #{_lambda_.5} parent=5 // pred_check
        %p2383 = pneg %p2382
      $region54: #{_lambda_.5} parent=5 // pred_check_branch
        %2385 = sbr.rel (%p2383) target = $region56
      $region55: #{_lambda_.5} parent=5 // pred_region
        %s2386 = ssub.s32 %s17, 2
        // Predicated region
        $region57: #{_lambda_.5} parent=55 // pred_check
          %p2387 = pneg %p182
        $region58: #{_lambda_.5} parent=55 // pred_check_branch
          %2389 = sbr.rel (%p2387) target = $region60
        $region59: #{_lambda_.5} parent=55 // pred_region
          %s2390 = sand.u32 %s167, 1
          %s2391 = scalar_lea.sflag [#allocation4], %s2390
          %s2392 = sand.u32 %s167, 1
          %s2393 = smul.addr %s2392, 64
          %s2394 = scalar_lea.vmem [#allocation3], %s2393
          %2395 = dma.done %s2391, 1024
        $region60: #{_lambda_.5} parent=55 // pred_fallthru
          _
        // Predicated region
        $region61: #{_lambda_.5} parent=55 // pred_check
          %p2396 = pneg %p208
        $region62: #{_lambda_.5} parent=55 // pred_check_branch
          %2398 = sbr.rel (%p2396) target = $region64
        $region63: #{_lambda_.5} parent=55 // pred_region
          %p2399 = scmp.lt.s32.totalorder %s23, 1
          %s2400 = scalar_select %p2399, %s23, 1
          %s2401 = smul.addr %s2400, 8
          %s2402 = smul.addr %s2401, 8
          %s2403 = scalar_lea.vmem %s7, %s2402
        $region64: #{_lambda_.5} parent=55 // pred_fallthru
          _
      $region56: #{_lambda_.5} parent=5 // pred_fallthru
        _
    $region6: #{_lambda_.5} parent=1 // loop_footer
      %s21 = sadd.s32 1, %s17
    $region7: #{_lambda_.5} parent=1 // loop_footer_branch
      %16 = sbr.rel target = $region3
    $region8: #{_lambda_.5} parent=1 // loop_exit
      _
    %2404 = vsyncpa [#allocation4], 1
    %s2405 = scalar_lea.sflag [#allocation4], 1
    %2406 = vsyncpa %s2405, 1

// kernel: _lambda_.4
$region0: #{_lambda_.4}
  #allocation0 [shape = 'u32[]', space=smem, size = 0x4, offset = 0x4, fixed_abs, tag = 'smem constant byte address 0x4 - core index']
  #allocation1 [shape = 'u32[144,128]{1,0:T(1,128)}', space=vmem, size = 0x12000, scoped, tag = 'internal scratch']
  #allocation2 [shape = 'bf16[10,10,16]{2,1,0:T(8,128)(2,1)}', space=vmem, size = 0xa000, scoped, tag = 'scratch operand']
  %s0 = inlined_call_operand.vmem [shape: f32[2,8,8,16], index: 0, kind: input, shape index: {}]
  %s1 = inlined_call_operand.vmem [shape: f32[2,8,8,1], index: 1, kind: input, shape index: {}]
  %s2 = inlined_call_operand.vmem [shape: bf16[9,16,64], index: 2, kind: input, shape index: {}]
  %s3 = inlined_call_operand.vmem [shape: f32[1,64], index: 3, kind: input, shape index: {}]
  %s4 = inlined_call_operand.vmem [shape: bf16[1,64,10], index: 4, kind: input, shape index: {}]
  %s5 = inlined_call_operand.vmem [shape: f32[1,10], index: 5, kind: input, shape index: {}]
  %s6 = inlined_call_operand.vmem [shape: f32[2,8,8,10], index: 6, kind: output, shape index: {0}]
  %s7 = inlined_call_operand.vmem [shape: f32[2,8,8,10], index: 7, kind: output, shape index: {1}]
  %8 = xla_tuple %s6, %s7
  %s9 = sld [smem:[#allocation0]]
  $region65: #{_lambda_.4} parent=0
    _
  %s11 = ssub.s32 1, %s9
  %s12 = scalar_select 0, %s11, %s9
  loop: start=0, step=1, limit=4
  $region2: #{_lambda_.4} parent=0 // loop_pre_header
    _
  $region3: #{_lambda_.4} parent=0 // loop_header
    %s14 = sphi 0, %s18
    %p15 = scmp.ge.s32.totalorder %s14, 4
    %s24 = sphi 0, %s26
    %s27 = sphi 0, %s24
    %s28 = sphi 0, %s27
    %s44 = sphi 0, %s28
    %s50 = sphi 0, %s52
    %s53 = sphi 0, %s50
    %s54 = sphi 0, %s53
    %s70 = sphi 0, %s54
    %s74 = sphi 0, %s74
    %s76 = sphi 0, %s74
    %s77 = sphi 0, %s76
    %s91 = sphi 0, %s77
    %s95 = sphi 0, %s95
    %s97 = sphi 0, %s95
    %s98 = sphi 0, %s97
    %s112 = sphi 0, %s98
    %s116 = sphi 0, %s116
    %s118 = sphi 0, %s116
    %s119 = sphi 0, %s118
    %s133 = sphi 0, %s119
    %s137 = sphi 0, %s137
    %s139 = sphi 0, %s137
    %s140 = sphi 0, %s139
    %s154 = sphi 0, %s140
    %s160 = sphi 0, %s162
    %s163 = sphi 0, %s160
    %s164 = sphi 0, %s163
    %s180 = sphi 0, %s164
    %s186 = sphi 0, %s188
    %s189 = sphi 0, %s186
    %s190 = sphi 0, %s189
    %s206 = sphi 0, %s190
  $region4: #{_lambda_.4} parent=0 // loop_header_branch
    %17 = sbr.rel (%p15) target = $region8
  $region5: #{_lambda_.4} parent=0 // loop_body
    %s19 = ssub.s32 %s14, 1
    %s20 = ssub.s32 %s14, 2
    %s21 = sadd.s32 %s14, 1
    %s22 = ssub.s32 %s14, %s21
    %p23 = scmp.eq.s32.totalorder %s22, 0
    %s25 = sadd.s32 %s24, 1
    %s26 = scalar_select %p23, %s24, %s25
    %p29 = pneg %p23
    %p30 = scmp.eq.s32.totalorder %s14, 1
    %p31 = por %p29, %p30
    %p32 = scmp.ne.s32.totalorder %s24, %s27
    %p33 = scmp.eq.s32.totalorder %s14, 0
    %p34 = por %p32, %p33
    %p35 = scmp.ne.s32.totalorder %s24, %s27
    %p36 = scmp.eq.s32.totalorder %s19, 1
    %p37 = por %p35, %p36
    %p38 = scmp.ne.s32.totalorder %s27, %s28
    %p39 = scmp.eq.s32.totalorder %s19, 0
    %p40 = por %p38, %p39
    %p41 = scmp.ne.s32.totalorder %s27, %s28
    %p42 = scmp.eq.s32.totalorder %s20, 1
    %p43 = por %p41, %p42
    %p45 = scmp.ne.s32.totalorder %s28, %s44
    %p46 = scmp.eq.s32.totalorder %s20, 0
    %p47 = por %p45, %p46
    %s48 = ssub.s32 %s14, %s21
    %p49 = scmp.eq.s32.totalorder %s48, 0
    %s51 = sadd.s32 %s50, 1
    %s52 = scalar_select %p49, %s50, %s51
    %p55 = pneg %p49
    %p56 = scmp.eq.s32.totalorder %s14, 1
    %p57 = por %p55, %p56
    %p58 = scmp.ne.s32.totalorder %s50, %s53
    %p59 = scmp.eq.s32.totalorder %s14, 0
    %p60 = por %p58, %p59
    %p61 = scmp.ne.s32.totalorder %s50, %s53
    %p62 = scmp.eq.s32.totalorder %s19, 1
    %p63 = por %p61, %p62
    %p64 = scmp.ne.s32.totalorder %s53, %s54
    %p65 = scmp.eq.s32.totalorder %s19, 0
    %p66 = por %p64, %p65
    %p67 = scmp.ne.s32.totalorder %s53, %s54
    %p68 = scmp.eq.s32.totalorder %s20, 1
    %p69 = por %p67, %p68
    %p71 = scmp.ne.s32.totalorder %s54, %s70
    %p72 = scmp.eq.s32.totalorder %s20, 0
    %p73 = por %p71, %p72
    %s75 = sadd.s32 %s74, 1
    %p78 = scmp.eq.s32.totalorder %s14, 1
    %p79 = scmp.ne.s32.totalorder %s74, %s76
    %p80 = scmp.eq.s32.totalorder %s14, 0
    %p81 = por %p79, %p80
    %p82 = scmp.ne.s32.totalorder %s74, %s76
    %p83 = scmp.eq.s32.totalorder %s19, 1
    %p84 = por %p82, %p83
    %p85 = scmp.ne.s32.totalorder %s76, %s77
    %p86 = scmp.eq.s32.totalorder %s19, 0
    %p87 = por %p85, %p86
    %p88 = scmp.ne.s32.totalorder %s76, %s77
    %p89 = scmp.eq.s32.totalorder %s20, 1
    %p90 = por %p88, %p89
    %p92 = scmp.ne.s32.totalorder %s77, %s91
    %p93 = scmp.eq.s32.totalorder %s20, 0
    %p94 = por %p92, %p93
    %s96 = sadd.s32 %s95, 1
    %p99 = scmp.eq.s32.totalorder %s14, 1
    %p100 = scmp.ne.s32.totalorder %s95, %s97
    %p101 = scmp.eq.s32.totalorder %s14, 0
    %p102 = por %p100, %p101
    %p103 = scmp.ne.s32.totalorder %s95, %s97
    %p104 = scmp.eq.s32.totalorder %s19, 1
    %p105 = por %p103, %p104
    %p106 = scmp.ne.s32.totalorder %s97, %s98
    %p107 = scmp.eq.s32.totalorder %s19, 0
    %p108 = por %p106, %p107
    %p109 = scmp.ne.s32.totalorder %s97, %s98
    %p110 = scmp.eq.s32.totalorder %s20, 1
    %p111 = por %p109, %p110
    %p113 = scmp.ne.s32.totalorder %s98, %s112
    %p114 = scmp.eq.s32.totalorder %s20, 0
    %p115 = por %p113, %p114
    %s117 = sadd.s32 %s116, 1
    %p120 = scmp.eq.s32.totalorder %s14, 1
    %p121 = scmp.ne.s32.totalorder %s116, %s118
    %p122 = scmp.eq.s32.totalorder %s14, 0
    %p123 = por %p121, %p122
    %p124 = scmp.ne.s32.totalorder %s116, %s118
    %p125 = scmp.eq.s32.totalorder %s19, 1
    %p126 = por %p124, %p125
    %p127 = scmp.ne.s32.totalorder %s118, %s119
    %p128 = scmp.eq.s32.totalorder %s19, 0
    %p129 = por %p127, %p128
    %p130 = scmp.ne.s32.totalorder %s118, %s119
    %p131 = scmp.eq.s32.totalorder %s20, 1
    %p132 = por %p130, %p131
    %p134 = scmp.ne.s32.totalorder %s119, %s133
    %p135 = scmp.eq.s32.totalorder %s20, 0
    %p136 = por %p134, %p135
    %s138 = sadd.s32 %s137, 1
    %p141 = scmp.eq.s32.totalorder %s14, 1
    %p142 = scmp.ne.s32.totalorder %s137, %s139
    %p143 = scmp.eq.s32.totalorder %s14, 0
    %p144 = por %p142, %p143
    %p145 = scmp.ne.s32.totalorder %s137, %s139
    %p146 = scmp.eq.s32.totalorder %s19, 1
    %p147 = por %p145, %p146
    %p148 = scmp.ne.s32.totalorder %s139, %s140
    %p149 = scmp.eq.s32.totalorder %s19, 0
    %p150 = por %p148, %p149
    %p151 = scmp.ne.s32.totalorder %s139, %s140
    %p152 = scmp.eq.s32.totalorder %s20, 1
    %p153 = por %p151, %p152
    %p155 = scmp.ne.s32.totalorder %s140, %s154
    %p156 = scmp.eq.s32.totalorder %s20, 0
    %p157 = por %p155, %p156
    %s158 = ssub.s32 %s14, %s21
    %p159 = scmp.eq.s32.totalorder %s158, 0
    %s161 = sadd.s32 %s160, 1
    %s162 = scalar_select %p159, %s160, %s161
    %p165 = pneg %p159
    %p166 = scmp.eq.s32.totalorder %s14, 1
    %p167 = por %p165, %p166
    %p168 = scmp.ne.s32.totalorder %s160, %s163
    %p169 = scmp.eq.s32.totalorder %s14, 0
    %p170 = por %p168, %p169
    %p171 = scmp.ne.s32.totalorder %s160, %s163
    %p172 = scmp.eq.s32.totalorder %s19, 1
    %p173 = por %p171, %p172
    %p174 = scmp.ne.s32.totalorder %s163, %s164
    %p175 = scmp.eq.s32.totalorder %s19, 0
    %p176 = por %p174, %p175
    %p177 = scmp.ne.s32.totalorder %s163, %s164
    %p178 = scmp.eq.s32.totalorder %s20, 1
    %p179 = por %p177, %p178
    %p181 = scmp.ne.s32.totalorder %s164, %s180
    %p182 = scmp.eq.s32.totalorder %s20, 0
    %p183 = por %p181, %p182
    %s184 = ssub.s32 %s14, %s21
    %p185 = scmp.eq.s32.totalorder %s184, 0
    %s187 = sadd.s32 %s186, 1
    %s188 = scalar_select %p185, %s186, %s187
    %p191 = pneg %p185
    %p192 = scmp.eq.s32.totalorder %s14, 1
    %p193 = por %p191, %p192
    %p194 = scmp.ne.s32.totalorder %s186, %s189
    %p195 = scmp.eq.s32.totalorder %s14, 0
    %p196 = por %p194, %p195
    %p197 = scmp.ne.s32.totalorder %s186, %s189
    %p198 = scmp.eq.s32.totalorder %s19, 1
    %p199 = por %p197, %p198
    %p200 = scmp.ne.s32.totalorder %s189, %s190
    %p201 = scmp.eq.s32.totalorder %s19, 0
    %p202 = por %p200, %p201
    %p203 = scmp.ne.s32.totalorder %s189, %s190
    %p204 = scmp.eq.s32.totalorder %s20, 1
    %p205 = por %p203, %p204
    %p207 = scmp.ne.s32.totalorder %s190, %s206
    %p208 = scmp.eq.s32.totalorder %s20, 0
    %p209 = por %p207, %p208
    %p210 = scmp.le.s32.totalorder 1, %s14
    %p211 = scmp.lt.s32.totalorder %s14, 3
    %p212 = pnand %p210, %p211
    %p213 = pneg %p212
    // Predicated region
    $region9: #{_lambda_.4} parent=5 // pred_check
      _
    $region10: #{_lambda_.4} parent=5 // pred_check_branch
      %215 = sbr.rel (%p212) target = $region12
    $region11: #{_lambda_.4} parent=5 // pred_region
      %s216 = ssub.s32 %s14, 1
      // Predicated region
      $region13: #{_lambda_.4} parent=11 // pred_check
        %p217 = pneg %p87
      $region14: #{_lambda_.4} parent=11 // pred_check_branch
        %219 = sbr.rel (%p217) target = $region16
      $region15: #{_lambda_.4} parent=11 // pred_region
        _
      $region16: #{_lambda_.4} parent=11 // pred_fallthru
        _
      // Predicated region
      $region17: #{_lambda_.4} parent=11 // pred_check
        %p220 = pneg %p108
      $region18: #{_lambda_.4} parent=11 // pred_check_branch
        %222 = sbr.rel (%p220) target = $region20
      $region19: #{_lambda_.4} parent=11 // pred_region
        _
      $region20: #{_lambda_.4} parent=11 // pred_fallthru
        _
      // Predicated region
      $region21: #{_lambda_.4} parent=11 // pred_check
        %p223 = pneg %p129
      $region22: #{_lambda_.4} parent=11 // pred_check_branch
        %225 = sbr.rel (%p223) target = $region24
      $region23: #{_lambda_.4} parent=11 // pred_region
        _
      $region24: #{_lambda_.4} parent=11 // pred_fallthru
        _
      // Predicated region
      $region25: #{_lambda_.4} parent=11 // pred_check
        %p226 = pneg %p150
      $region26: #{_lambda_.4} parent=11 // pred_check_branch
        %228 = sbr.rel (%p226) target = $region28
      $region27: #{_lambda_.4} parent=11 // pred_region
        _
      $region28: #{_lambda_.4} parent=11 // pred_fallthru
        _
    $region12: #{_lambda_.4} parent=5 // pred_fallthru
      _
    %p229 = scmp.lt.s32.totalorder %s14, 2
    // Predicated region
    $region29: #{_lambda_.4} parent=5 // pred_check
      %p230 = pneg %p229
    $region30: #{_lambda_.4} parent=5 // pred_check_branch
      %232 = sbr.rel (%p230) target = $region32
    $region31: #{_lambda_.4} parent=5 // pred_region
      // Predicated region
      $region33: #{_lambda_.4} parent=31 // pred_check
        %p233 = pneg %p34
      $region34: #{_lambda_.4} parent=31 // pred_check_branch
        %235 = sbr.rel (%p233) target = $region36
      $region35: #{_lambda_.4} parent=31 // pred_region
        %p236 = scmp.lt.s32.totalorder %s14, 1
        %s237 = scalar_select %p236, %s14, 1
        %s238 = smul.addr %s237, 8
        %s239 = smul.addr %s238, 8
        %s240 = scalar_lea.vmem %s0, %s239
      $region36: #{_lambda_.4} parent=31 // pred_fallthru
        _
      // Predicated region
      $region37: #{_lambda_.4} parent=31 // pred_check
        %p241 = pneg %p60
      $region38: #{_lambda_.4} parent=31 // pred_check_branch
        %243 = sbr.rel (%p241) target = $region40
      $region39: #{_lambda_.4} parent=31 // pred_region
        %p244 = scmp.lt.s32.totalorder %s14, 1
        %s245 = scalar_select %p244, %s14, 1
        %s246 = smul.addr %s245, 8
        %s247 = smul.addr %s246, 8
        %s248 = scalar_lea.vmem %s1, %s247
      $region40: #{_lambda_.4} parent=31 // pred_fallthru
        _
    $region32: #{_lambda_.4} parent=5 // pred_fallthru
      _
    %p249 = scmp.le.s32.totalorder 1, %s14
    %p250 = scmp.lt.s32.totalorder %s14, 3
    %p251 = pnand %p249, %p250
    %p252 = pneg %p251
    // Predicated region
    $region41: #{_lambda_.4} parent=5 // pred_check
      _
    $region42: #{_lambda_.4} parent=5 // pred_check_branch
      %254 = sbr.rel (%p251) target = $region44
    $region43: #{_lambda_.4} parent=5 // pred_region
      %s255 = ssub.s32 %s14, 1
      %p256 = scmp.lt.s32.totalorder %s19, 1
      %s257 = scalar_select %p256, %s19, 1
      %s258 = smul.addr %s257, 8
      %s259 = smul.addr %s258, 8
      %s260 = scalar_lea.vmem %s0, %s259
      %p261 = pneg %p40
      %p262 = pneg %p37
      %p263 = scmp.lt.s32.totalorder %s19, 1
      %s264 = scalar_select %p263, %s19, 1
      %s265 = smul.addr %s264, 8
      %s266 = smul.addr %s265, 8
      %s267 = scalar_lea.vmem %s1, %s266
      %p268 = pneg %p66
      %p269 = pneg %p63
      %p270 = pneg %p87
      %p271 = pneg %p84
      %p272 = pneg %p108
      %p273 = pneg %p105
      %p274 = pneg %p129
      %p275 = pneg %p126
      %p276 = pneg %p150
      %p277 = pneg %p147
      %p278 = pneg %p176
      %p279 = pneg %p173
      %p280 = scmp.lt.s32.totalorder %s19, 1
      %s281 = scalar_select %p280, %s19, 1
      %s282 = smul.addr %s281, 8
      %s283 = smul.addr %s282, 8
      %s284 = scalar_lea.vmem %s6, %s283
      %p285 = pneg %p202
      %p286 = pneg %p199
      %p287 = scmp.lt.s32.totalorder %s19, 1
      %s288 = scalar_select %p287, %s19, 1
      %s289 = smul.addr %s288, 8
      %s290 = smul.addr %s289, 8
      %s291 = scalar_lea.vmem %s7, %s290
      %p292 = scmp.lt.s32.totalorder %s19, 1
      %s293 = scalar_select %p292, %s19, 1
      %s294 = smul.addr %s293, 8
      %s295 = smul.addr %s294, 8
      %s296 = scalar_lea.vmem %s0, %s295
      %p297 = scmp.lt.s32.totalorder %s19, 1
      %s298 = scalar_select %p297, %s19, 1
      %s299 = smul.addr %s298, 8
      %s300 = smul.addr %s299, 8
      %s301 = scalar_lea.vmem %s1, %s300
      %p302 = scmp.lt.s32.totalorder %s19, 1
      %s303 = scalar_select %p302, %s19, 1
      %s304 = smul.addr %s303, 8
      %s305 = smul.addr %s304, 8
      %s306 = scalar_lea.vmem %s6, %s305
      %p307 = scmp.lt.s32.totalorder %s19, 1
      %s308 = scalar_select %p307, %s19, 1
      %s309 = smul.addr %s308, 8
      %s310 = smul.addr %s309, 8
      %s311 = scalar_lea.vmem %s7, %s310
      %v313 = vld [vmem:[%s296] sm:$0xff]
      %v314 = vld [vmem:[%s296 + $0x8] sm:$0xff]
      %v315 = vld [vmem:[%s296 + $0x10] sm:$0xff]
      %v316 = vld [vmem:[%s296 + $0x18] sm:$0xff]
      %v317 = vld [vmem:[%s296 + $0x20] sm:$0xff]
      %v318 = vld [vmem:[%s296 + $0x28] sm:$0xff]
      %v319 = vld [vmem:[%s296 + $0x30] sm:$0xff]
      %v320 = vld [vmem:[%s296 + $0x38] sm:$0xff]
      %vm321 = vcmask 125952
      %322 = vst.msk [vmem:[#allocation2] sm:$0xf] %vm321, 0
      %vm323 = vcmask 122880
      %324 = vst.msk [vmem:[#allocation2 + $0x4] sm:$0x1] %vm323, 0
      %325 = vst.msk [vmem:[#allocation2 + $0x8] sm:$0xf] %vm321, 0
      %326 = vst.msk [vmem:[#allocation2 + $0xc] sm:$0x1] %vm323, 0
      %327 = vst.msk [vmem:[#allocation2 + $0x10] sm:$0xf] %vm321, 0
      %328 = vst.msk [vmem:[#allocation2 + $0x14] sm:$0x1] %vm323, 0
      %329 = vst.msk [vmem:[#allocation2 + $0x18] sm:$0xf] %vm321, 0
      %330 = vst.msk [vmem:[#allocation2 + $0x1c] sm:$0x1] %vm323, 0
      %331 = vst.msk [vmem:[#allocation2 + $0x20] sm:$0xf] %vm321, 0
      %332 = vst.msk [vmem:[#allocation2 + $0x24] sm:$0x1] %vm323, 0
      %333 = vst.msk [vmem:[#allocation2 + $0x28] sm:$0xf] %vm321, 0
      %334 = vst.msk [vmem:[#allocation2 + $0x2c] sm:$0x1] %vm323, 0
      %335 = vst.msk [vmem:[#allocation2 + $0x30] sm:$0xf] %vm321, 0
      %336 = vst.msk [vmem:[#allocation2 + $0x34] sm:$0x1] %vm323, 0
      %337 = vst.msk [vmem:[#allocation2 + $0x38] sm:$0xf] %vm321, 0
      %338 = vst.msk [vmem:[#allocation2 + $0x3c] sm:$0x1] %vm323, 0
      %339 = vst.msk [vmem:[#allocation2 + $0x40] sm:$0xf] %vm321, 0
      %340 = vst.msk [vmem:[#allocation2 + $0x44] sm:$0x1] %vm323, 0
      %341 = vst.msk [vmem:[#allocation2 + $0x48] sm:$0xf] %vm321, 0
      %342 = vst.msk [vmem:[#allocation2 + $0x4c] sm:$0x1] %vm323, 0
      %v343 = vpack.c.bf16 %v313, %v313
      %v344 = vpack.c.bf16 %v314, %v314
      %v345 = vpack.c.bf16 %v315, %v315
      %v346 = vpack.c.bf16 %v316, %v316
      %v347 = vpack.c.bf16 %v317, %v317
      %v348 = vpack.c.bf16 %v318, %v318
      %v349 = vpack.c.bf16 %v319, %v319
      %v350 = vpack.c.bf16 %v320, %v320
      %v359 = vunpack.c.l.b16 %v343
      %v360 = vunpack.c.l.b16 %v344
      %v361 = vunpack.c.l.b16 %v345
      %v362 = vunpack.c.l.b16 %v346
      %v363 = vunpack.c.l.b16 %v347
      %v364 = vunpack.c.l.b16 %v348
      %v365 = vunpack.c.l.b16 %v349
      %v366 = vunpack.c.l.b16 %v350
      %v367 = vpack.c.b16 %v359, %v359
      %v368 = vpack.c.b16 %v360, %v360
      %v369 = vpack.c.b16 %v361, %v361
      %v370 = vpack.c.b16 %v362, %v362
      %v371 = vpack.c.b16 %v363, %v363
      %v372 = vpack.c.b16 %v364, %v364
      %v373 = vpack.c.b16 %v365, %v365
      %v374 = vpack.c.b16 %v366, %v366
      %v376 = vshrl.u32 %v367, 16
      %v378 = vrot.slane %v376, 7
      %v379 = vshll.u32 %v367, 16
      %v381 = vor.u32 %v378, %v379
      %v382 = vrot.slane %v378, 4
      %v384 = vshrl.u32 %v368, 16
      %v386 = vrot.slane %v384, 7
      %v387 = vshll.u32 %v368, 16
      %v389 = vor.u32 %v386, %v387
      %v390 = vrot.slane %v386, 4
      %v392 = vshrl.u32 %v369, 16
      %v394 = vrot.slane %v392, 7
      %v395 = vshll.u32 %v369, 16
      %v397 = vor.u32 %v394, %v395
      %v398 = vrot.slane %v394, 4
      %v400 = vshrl.u32 %v370, 16
      %v402 = vrot.slane %v400, 7
      %v403 = vshll.u32 %v370, 16
      %v405 = vor.u32 %v402, %v403
      %v406 = vrot.slane %v402, 4
      %v408 = vshrl.u32 %v371, 16
      %v410 = vrot.slane %v408, 7
      %v411 = vshll.u32 %v371, 16
      %v413 = vor.u32 %v410, %v411
      %v414 = vrot.slane %v410, 4
      %v416 = vshrl.u32 %v372, 16
      %v418 = vrot.slane %v416, 7
      %v419 = vshll.u32 %v372, 16
      %v421 = vor.u32 %v418, %v419
      %v422 = vrot.slane %v418, 4
      %v424 = vshrl.u32 %v373, 16
      %v426 = vrot.slane %v424, 7
      %v427 = vshll.u32 %v373, 16
      %v429 = vor.u32 %v426, %v427
      %v430 = vrot.slane %v426, 4
      %v432 = vshrl.u32 %v374, 16
      %v434 = vrot.slane %v432, 7
      %v435 = vshll.u32 %v374, 16
      %v437 = vor.u32 %v434, %v435
      %v438 = vrot.slane %v434, 4
      %s455 = scalar_lea.vmem [#allocation2], 8
      %vm456 = vcmask 125952
      %vm457 = vsmask.f32 7938
      %vm458 = vmand %vm456, %vm457
      %v459 = vld [vmem:[%s455] sm:$0xf]
      %v460 = vsel %vm458, %v381, %v459
      %461 = vst [vmem:[%s455] sm:$0xf] %v460
      %vm462 = vcmask 122880
      %vm463 = vsmask.f32 256
      %vm464 = vmand %vm462, %vm463
      %v465 = vld [vmem:[%s455 + $0x4] sm:$0x1]
      %v466 = vsel %vm464, %v382, %v465
      %467 = vst [vmem:[%s455 + $0x4] sm:$0x1] %v466
      %v468 = vld [vmem:[%s455 + $0x8] sm:$0xf]
      %v469 = vsel %vm458, %v389, %v468
      %470 = vst [vmem:[%s455 + $0x8] sm:$0xf] %v469
      %v471 = vld [vmem:[%s455 + $0xc] sm:$0x1]
      %v472 = vsel %vm464, %v390, %v471
      %473 = vst [vmem:[%s455 + $0xc] sm:$0x1] %v472
      %v474 = vld [vmem:[%s455 + $0x10] sm:$0xf]
      %v475 = vsel %vm458, %v397, %v474
      %476 = vst [vmem:[%s455 + $0x10] sm:$0xf] %v475
      %v477 = vld [vmem:[%s455 + $0x14] sm:$0x1]
      %v478 = vsel %vm464, %v398, %v477
      %479 = vst [vmem:[%s455 + $0x14] sm:$0x1] %v478
      %v480 = vld [vmem:[%s455 + $0x18] sm:$0xf]
      %v481 = vsel %vm458, %v405, %v480
      %482 = vst [vmem:[%s455 + $0x18] sm:$0xf] %v481
      %v483 = vld [vmem:[%s455 + $0x1c] sm:$0x1]
      %v484 = vsel %vm464, %v406, %v483
      %485 = vst [vmem:[%s455 + $0x1c] sm:$0x1] %v484
      %v486 = vld [vmem:[%s455 + $0x20] sm:$0xf]
      %v487 = vsel %vm458, %v413, %v486
      %488 = vst [vmem:[%s455 + $0x20] sm:$0xf] %v487
      %v489 = vld [vmem:[%s455 + $0x24] sm:$0x1]
      %v490 = vsel %vm464, %v414, %v489
      %491 = vst [vmem:[%s455 + $0x24] sm:$0x1] %v490
      %v492 = vld [vmem:[%s455 + $0x28] sm:$0xf]
      %v493 = vsel %vm458, %v421, %v492
      %494 = vst [vmem:[%s455 + $0x28] sm:$0xf] %v493
      %v495 = vld [vmem:[%s455 + $0x2c] sm:$0x1]
      %v496 = vsel %vm464, %v422, %v495
      %497 = vst [vmem:[%s455 + $0x2c] sm:$0x1] %v496
      %v498 = vld [vmem:[%s455 + $0x30] sm:$0xf]
      %v499 = vsel %vm458, %v429, %v498
      %500 = vst [vmem:[%s455 + $0x30] sm:$0xf] %v499
      %v501 = vld [vmem:[%s455 + $0x34] sm:$0x1]
      %v502 = vsel %vm464, %v430, %v501
      %503 = vst [vmem:[%s455 + $0x34] sm:$0x1] %v502
      %v504 = vld [vmem:[%s455 + $0x38] sm:$0xf]
      %v505 = vsel %vm458, %v437, %v504
      %506 = vst [vmem:[%s455 + $0x38] sm:$0xf] %v505
      %v507 = vld [vmem:[%s455 + $0x3c] sm:$0x1]
      %v508 = vsel %vm464, %v438, %v507
      %509 = vst [vmem:[%s455 + $0x3c] sm:$0x1] %v508
      %v510 = vld [vmem:[#allocation2] sm:$0xf]
      %v511 = vld [vmem:[#allocation2 + $0x8] sm:$0xf]
      %v512 = vld [vmem:[#allocation2 + $0x10] sm:$0xf]
      %v513 = vld [vmem:[#allocation2 + $0x18] sm:$0xf]
      %v514 = vld [vmem:[#allocation2 + $0x20] sm:$0xf]
      %v515 = vld [vmem:[#allocation2 + $0x28] sm:$0xf]
      %v516 = vld [vmem:[#allocation2 + $0x30] sm:$0xf]
      %v517 = vld [vmem:[#allocation2 + $0x38] sm:$0xf]
      %v518 = vld [vmem:[%s2] sm:$0xf]
      %v519 = vld [vmem:[%s2 + $0x4] sm:$0xf]
      %v520 = vld [vmem:[#allocation2 + $0x4] sm:$0x1]
      %v521 = vld [vmem:[#allocation2 + $0xc] sm:$0x1]
      %v522 = vld [vmem:[#allocation2 + $0x14] sm:$0x1]
      %v523 = vld [vmem:[#allocation2 + $0x1c] sm:$0x1]
      %v524 = vld [vmem:[#allocation2 + $0x24] sm:$0x1]
      %v525 = vld [vmem:[#allocation2 + $0x2c] sm:$0x1]
      %v526 = vld [vmem:[#allocation2 + $0x34] sm:$0x1]
      %v527 = vld [vmem:[#allocation2 + $0x3c] sm:$0x1]
      %vm528 = vsmask.f32 3328
      %vm529 = vsmask.f32 7440
      %vm530 = vmor %vm528, %vm529
      %v532 = vshrl.u32 %v510, 16
      %v534 = vrot.slane %v532, 4
      %v535 = vshll.u32 %v510, 16
      %v537 = vrot.slane %v535, 5
      %v538 = vor.u32 %v534, %v537
      %v539 = vrot.slane %v538, 4
      %v541 = vshll.u32 %v520, 16
      %v543 = vrot.slane %v541, 5
      %v544 = vsel %vm530, %v539, %v543
      %v546 = vshrl.u32 %v511, 16
      %v548 = vrot.slane %v546, 4
      %v549 = vshll.u32 %v511, 16
      %v551 = vrot.slane %v549, 5
      %v552 = vor.u32 %v548, %v551
      %v553 = vrot.slane %v552, 4
      %v555 = vshll.u32 %v521, 16
      %v557 = vrot.slane %v555, 5
      %v558 = vsel %vm530, %v553, %v557
      %v560 = vshrl.u32 %v512, 16
      %v562 = vrot.slane %v560, 4
      %v563 = vshll.u32 %v512, 16
      %v565 = vrot.slane %v563, 5
      %v566 = vor.u32 %v562, %v565
      %v567 = vrot.slane %v566, 4
      %v569 = vshll.u32 %v522, 16
      %v571 = vrot.slane %v569, 5
      %v572 = vsel %vm530, %v567, %v571
      %v574 = vshrl.u32 %v513, 16
      %v576 = vrot.slane %v574, 4
      %v577 = vshll.u32 %v513, 16
      %v579 = vrot.slane %v577, 5
      %v580 = vor.u32 %v576, %v579
      %v581 = vrot.slane %v580, 4
      %v583 = vshll.u32 %v523, 16
      %v585 = vrot.slane %v583, 5
      %v586 = vsel %vm530, %v581, %v585
      %v588 = vshrl.u32 %v514, 16
      %v590 = vrot.slane %v588, 4
      %v591 = vshll.u32 %v514, 16
      %v593 = vrot.slane %v591, 5
      %v594 = vor.u32 %v590, %v593
      %v595 = vrot.slane %v594, 4
      %v597 = vshll.u32 %v524, 16
      %v599 = vrot.slane %v597, 5
      %v600 = vsel %vm530, %v595, %v599
      %v602 = vshrl.u32 %v515, 16
      %v604 = vrot.slane %v602, 4
      %v605 = vshll.u32 %v515, 16
      %v607 = vrot.slane %v605, 5
      %v608 = vor.u32 %v604, %v607
      %v609 = vrot.slane %v608, 4
      %v611 = vshll.u32 %v525, 16
      %v613 = vrot.slane %v611, 5
      %v614 = vsel %vm530, %v609, %v613
      %v616 = vshrl.u32 %v516, 16
      %v618 = vrot.slane %v616, 4
      %v619 = vshll.u32 %v516, 16
      %v621 = vrot.slane %v619, 5
      %v622 = vor.u32 %v618, %v621
      %v623 = vrot.slane %v622, 4
      %v625 = vshll.u32 %v526, 16
      %v627 = vrot.slane %v625, 5
      %v628 = vsel %vm530, %v623, %v627
      %v630 = vshrl.u32 %v517, 16
      %v632 = vrot.slane %v630, 4
      %v633 = vshll.u32 %v517, 16
      %v635 = vrot.slane %v633, 5
      %v636 = vor.u32 %v632, %v635
      %v637 = vrot.slane %v636, 4
      %v639 = vshll.u32 %v527, 16
      %v641 = vrot.slane %v639, 5
      %v642 = vsel %vm530, %v637, %v641
      %s643 = scalar_lea.vmem %s2, 8
      %v644 = vld [vmem:[%s643] sm:$0xf]
      %v645 = vld [vmem:[%s643 + $0x4] sm:$0xf]
      %v646 = vunpack.c.l.b16 %v544
      %v647 = vunpack.c.l.b16 %v558
      %v648 = vunpack.c.l.b16 %v572
      %v649 = vunpack.c.l.b16 %v586
      %v650 = vunpack.c.l.b16 %v600
      %v651 = vunpack.c.l.b16 %v614
      %v652 = vunpack.c.l.b16 %v628
      %v653 = vunpack.c.l.b16 %v642
      %v654 = vpack.c.b16 %v647, %v646
      %v655 = vpack.c.b16 %v649, %v648
      %v656 = vpack.c.b16 %v651, %v650
      %v657 = vpack.c.b16 %v653, %v652
      %v660 = vunpack.c.l.b16 %v644
      %v661 = vunpack.c.l.b16 %v645
      %v662 = vpack.c.b16 %v661, %v660
      %vm664 = vcmask 130048
      %v666 = vsel %vm664, %v654, 0
      %v669 = vsel %vm664, %v655, 0
      %v672 = vsel %vm664, %v656, 0
      %v675 = vsel %vm664, %v657, 0
      %677 = vmatprep.subr.bf16.mxu0 0
      %678 = vmatpush1.bf16.msra.mxu0 %v662
      %679 = vmatprep.subr.bf16.mxu0 0
      %680 = vmatpush1.bf16.msra.mxu0 0
      %681 = vmatprep.subr.bf16.mxu0 0
      %682 = vmatpush1.bf16.msra.mxu0 0
      %683 = vmatprep.subr.bf16.mxu0 0
      %684 = vmatpush1.bf16.msra.mxu0 0
      %685 = vmatprep.subr.bf16.mxu0 0
      %686 = vmatpush1.bf16.msra.mxu0 0
      %687 = vmatprep.subr.bf16.mxu0 0
      %688 = vmatpush1.bf16.msra.mxu0 0
      %689 = vmatprep.subr.bf16.mxu0 0
      %690 = vmatpush1.bf16.msra.mxu0 0
      %691 = vmatprep.subr.bf16.mxu0 0
      %692 = vmatpush1.bf16.msra.mxu0 0
      %693 = vmatprep.subr.bf16.mxu0 0
      %694 = vmatpush1.bf16.msra.mxu0 0
      %695 = vmatprep.subr.bf16.mxu0 0
      %696 = vmatpush1.bf16.msra.mxu0 0
      %697 = vmatprep.subr.bf16.mxu0 0
      %698 = vmatpush1.bf16.msra.mxu0 0
      %699 = vmatprep.subr.bf16.mxu0 0
      %700 = vmatpush1.bf16.msra.mxu0 0
      %701 = vmatprep.subr.bf16.mxu0 0
      %702 = vmatpush1.bf16.msra.mxu0 0
      %703 = vmatprep.subr.bf16.mxu0 0
      %704 = vmatpush1.bf16.msra.mxu0 0
      %705 = vmatprep.subr.bf16.mxu0 0
      %706 = vmatpush1.bf16.msra.mxu0 0
      %707 = vmatprep.subr.bf16.mxu0 0
      %708 = vmatpush1.bf16.msra.mxu0 0
      %709 = vmatprep.mubr.bf16.mxu0 0
      %710 = vmatmul.mubr.bf16.gmra.mrb[0].mxu0 %v666
      %v711 = vpop.f32.mrb[0].mxu0
      %v712 = vadd.f32 0.0, %v711
      %v713 = vpop.f32.mrb[0].mxu0
      %v714 = vpop.f32.mrb[0].mxu0
      %v715 = vadd.f32 0.0, %v714
      %v716 = vpop.f32.mrb[0].mxu0
      %717 = vmatprep.mubr.bf16.mxu0 0
      %718 = vmatmul.mubr.bf16.gmra.mrb[0].mxu0 %v669
      %v719 = vpop.f32.mrb[0].mxu0
      %v720 = vadd.f32 0.0, %v719
      %v721 = vpop.f32.mrb[0].mxu0
      %v722 = vpop.f32.mrb[0].mxu0
      %v723 = vadd.f32 0.0, %v722
      %v724 = vpop.f32.mrb[0].mxu0
      %725 = vmatprep.mubr.bf16.mxu0 0
      %726 = vmatmul.mubr.bf16.gmra.mrb[0].mxu0 %v672
      %v727 = vpop.f32.mrb[0].mxu0
      %v728 = vadd.f32 0.0, %v727
      %v729 = vpop.f32.mrb[0].mxu0
      %v730 = vpop.f32.mrb[0].mxu0
      %v731 = vadd.f32 0.0, %v730
      %v732 = vpop.f32.mrb[0].mxu0
      %733 = vmatprep.mubr.bf16.mxu0 0
      %734 = vmatmul.mubr.bf16.gmra.mrb[0].mxu0 %v675
      %v735 = vpop.f32.mrb[0].mxu0
      %v736 = vadd.f32 0.0, %v735
      %v737 = vpop.f32.mrb[0].mxu0
      %v738 = vpop.f32.mrb[0].mxu0
      %v739 = vadd.f32 0.0, %v738
      %v740 = vpop.f32.mrb[0].mxu0
      %741 = vdwg.mxu0
      %v750 = vunpack.c.l.b16 %v510
      %v751 = vunpack.c.l.b16 %v511
      %v752 = vunpack.c.l.b16 %v512
      %v753 = vunpack.c.l.b16 %v513
      %v754 = vunpack.c.l.b16 %v514
      %v755 = vunpack.c.l.b16 %v515
      %v756 = vunpack.c.l.b16 %v516
      %v757 = vunpack.c.l.b16 %v517
      %v758 = vpack.c.b16 %v751, %v750
      %v759 = vpack.c.b16 %v753, %v752
      %v760 = vpack.c.b16 %v755, %v754
      %v761 = vpack.c.b16 %v757, %v756
      %v764 = vunpack.c.l.b16 %v518
      %v765 = vunpack.c.l.b16 %v519
      %v766 = vpack.c.b16 %v765, %v764
      %v769 = vsel %vm664, %v758, 0
      %v772 = vsel %vm664, %v759, 0
      %v775 = vsel %vm664, %v760, 0
      %v778 = vsel %vm664, %v761, 0
      %780 = vmatprep.subr.bf16.mxu0 0
      %781 = vmatpush1.bf16.msra.mxu0 %v766
      %782 = vmatprep.subr.bf16.mxu0 0
      %783 = vmatpush1.bf16.msra.mxu0 0
      %784 = vmatprep.subr.bf16.mxu0 0
      %785 = vmatpush1.bf16.msra.mxu0 0
      %786 = vmatprep.subr.bf16.mxu0 0
      %787 = vmatpush1.bf16.msra.mxu0 0
      %788 = vmatprep.subr.bf16.mxu0 0
      %789 = vmatpush1.bf16.msra.mxu0 0
      %790 = vmatprep.subr.bf16.mxu0 0
      %791 = vmatpush1.bf16.msra.mxu0 0
      %792 = vmatprep.subr.bf16.mxu0 0
      %793 = vmatpush1.bf16.msra.mxu0 0
      %794 = vmatprep.subr.bf16.mxu0 0
      %795 = vmatpush1.bf16.msra.mxu0 0
      %796 = vmatprep.subr.bf16.mxu0 0
      %797 = vmatpush1.bf16.msra.mxu0 0
      %798 = vmatprep.subr.bf16.mxu0 0
      %799 = vmatpush1.bf16.msra.mxu0 0
      %800 = vmatprep.subr.bf16.mxu0 0
      %801 = vmatpush1.bf16.msra.mxu0 0
      %802 = vmatprep.subr.bf16.mxu0 0
      %803 = vmatpush1.bf16.msra.mxu0 0
      %804 = vmatprep.subr.bf16.mxu0 0
      %805 = vmatpush1.bf16.msra.mxu0 0
      %806 = vmatprep.subr.bf16.mxu0 0
      %807 = vmatpush1.bf16.msra.mxu0 0
      %808 = vmatprep.subr.bf16.mxu0 0
      %809 = vmatpush1.bf16.msra.mxu0 0
      %810 = vmatprep.subr.bf16.mxu0 0
      %811 = vmatpush1.bf16.msra.mxu0 0
      %812 = vmatprep.mubr.bf16.mxu0 0
      %813 = vmatmul.mubr.bf16.gmra.mrb[0].mxu0 %v769
      %v814 = vpop.f32.mrb[0].mxu0
      %v815 = vadd.f32 %v712, %v814
      %v816 = vpop.f32.mrb[0].mxu0
      %v817 = vpop.f32.mrb[0].mxu0
      %v818 = vadd.f32 %v715, %v817
      %v819 = vpop.f32.mrb[0].mxu0
      %820 = vmatprep.mubr.bf16.mxu0 0
      %821 = vmatmul.mubr.bf16.gmra.mrb[0].mxu0 %v772
      %v822 = vpop.f32.mrb[0].mxu0
      %v823 = vadd.f32 %v720, %v822
      %v824 = vpop.f32.mrb[0].mxu0
      %v825 = vpop.f32.mrb[0].mxu0
      %v826 = vadd.f32 %v723, %v825
      %v827 = vpop.f32.mrb[0].mxu0
      %828 = vmatprep.mubr.bf16.mxu0 0
      %829 = vmatmul.mubr.bf16.gmra.mrb[0].mxu0 %v775
      %v830 = vpop.f32.mrb[0].mxu0
      %v831 = vadd.f32 %v728, %v830
      %v832 = vpop.f32.mrb[0].mxu0
      %v833 = vpop.f32.mrb[0].mxu0
      %v834 = vadd.f32 %v731, %v833
      %v835 = vpop.f32.mrb[0].mxu0
      %836 = vmatprep.mubr.bf16.mxu0 0
      %837 = vmatmul.mubr.bf16.gmra.mrb[0].mxu0 %v778
      %v838 = vpop.f32.mrb[0].mxu0
      %v839 = vadd.f32 %v736, %v838
      %v840 = vpop.f32.mrb[0].mxu0
      %v841 = vpop.f32.mrb[0].mxu0
      %v842 = vadd.f32 %v739, %v841
      %v843 = vpop.f32.mrb[0].mxu0
      %844 = vdwg.mxu0
      %v845 = vld [vmem:[#allocation2] sm:$0xe]
      %v846 = vld [vmem:[#allocation2 + $0x8] sm:$0xe]
      %v847 = vld [vmem:[#allocation2 + $0x10] sm:$0xe]
      %v848 = vld [vmem:[#allocation2 + $0x18] sm:$0xe]
      %v849 = vld [vmem:[#allocation2 + $0x20] sm:$0xe]
      %v850 = vld [vmem:[#allocation2 + $0x28] sm:$0xe]
      %v851 = vld [vmem:[#allocation2 + $0x30] sm:$0xe]
      %v852 = vld [vmem:[#allocation2 + $0x38] sm:$0xe]
      %vm869 = vcmask 1042432
      %vm870 = vcmask 1046532
      %vm871 = vmor %vm869, %vm870
      %v872 = vrot.slane %v845, 5
      %v873 = vrot.slane %v872, 4
      %v874 = vrot.slane %v520, 5
      %v875 = vsel %vm871, %v873, %v874
      %v876 = vrot.slane %v846, 5
      %v877 = vrot.slane %v876, 4
      %v878 = vrot.slane %v521, 5
      %v879 = vsel %vm871, %v877, %v878
      %v880 = vrot.slane %v847, 5
      %v881 = vrot.slane %v880, 4
      %v882 = vrot.slane %v522, 5
      %v883 = vsel %vm871, %v881, %v882
      %v884 = vrot.slane %v848, 5
      %v885 = vrot.slane %v884, 4
      %v886 = vrot.slane %v523, 5
      %v887 = vsel %vm871, %v885, %v886
      %v888 = vrot.slane %v849, 5
      %v889 = vrot.slane %v888, 4
      %v890 = vrot.slane %v524, 5
      %v891 = vsel %vm871, %v889, %v890
      %v892 = vrot.slane %v850, 5
      %v893 = vrot.slane %v892, 4
      %v894 = vrot.slane %v525, 5
      %v895 = vsel %vm871, %v893, %v894
      %v896 = vrot.slane %v851, 5
      %v897 = vrot.slane %v896, 4
      %v898 = vrot.slane %v526, 5
      %v899 = vsel %vm871, %v897, %v898
      %v900 = vrot.slane %v852, 5
      %v901 = vrot.slane %v900, 4
      %v902 = vrot.slane %v527, 5
      %v903 = vsel %vm871, %v901, %v902
      %s904 = scalar_lea.vmem %s2, 16
      %v905 = vld [vmem:[%s904] sm:$0xf]
      %v906 = vld [vmem:[%s904 + $0x4] sm:$0xf]
      %v907 = vunpack.c.l.b16 %v875
      %v908 = vunpack.c.l.b16 %v879
      %v909 = vunpack.c.l.b16 %v883
      %v910 = vunpack.c.l.b16 %v887
      %v911 = vunpack.c.l.b16 %v891
      %v912 = vunpack.c.l.b16 %v895
      %v913 = vunpack.c.l.b16 %v899
      %v914 = vunpack.c.l.b16 %v903
      %v915 = vpack.c.b16 %v908, %v907
      %v916 = vpack.c.b16 %v910, %v909
      %v917 = vpack.c.b16 %v912, %v911
      %v918 = vpack.c.b16 %v914, %v913
      %v921 = vunpack.c.l.b16 %v905
      %v922 = vunpack.c.l.b16 %v906
      %v923 = vpack.c.b16 %v922, %v921
      %v926 = vsel %vm664, %v915, 0
      %v929 = vsel %vm664, %v916, 0
      %v932 = vsel %vm664, %v917, 0
      %v935 = vsel %vm664, %v918, 0
      %937 = vmatprep.subr.bf16.mxu0 0
      %938 = vmatpush1.bf16.msra.mxu0 %v923
      %939 = vmatprep.subr.bf16.mxu0 0
      %940 = vmatpush1.bf16.msra.mxu0 0
      %941 = vmatprep.subr.bf16.mxu0 0
      %942 = vmatpush1.bf16.msra.mxu0 0
      %943 = vmatprep.subr.bf16.mxu0 0
      %944 = vmatpush1.bf16.msra.mxu0 0
      %945 = vmatprep.subr.bf16.mxu0 0
      %946 = vmatpush1.bf16.msra.mxu0 0
      %947 = vmatprep.subr.bf16.mxu0 0
      %948 = vmatpush1.bf16.msra.mxu0 0
      %949 = vmatprep.subr.bf16.mxu0 0
      %950 = vmatpush1.bf16.msra.mxu0 0
      %951 = vmatprep.subr.bf16.mxu0 0
      %952 = vmatpush1.bf16.msra.mxu0 0
      %953 = vmatprep.subr.bf16.mxu0 0
      %954 = vmatpush1.bf16.msra.mxu0 0
      %955 = vmatprep.subr.bf16.mxu0 0
      %956 = vmatpush1.bf16.msra.mxu0 0
      %957 = vmatprep.subr.bf16.mxu0 0
      %958 = vmatpush1.bf16.msra.mxu0 0
      %959 = vmatprep.subr.bf16.mxu0 0
      %960 = vmatpush1.bf16.msra.mxu0 0
      %961 = vmatprep.subr.bf16.mxu0 0
      %962 = vmatpush1.bf16.msra.mxu0 0
      %963 = vmatprep.subr.bf16.mxu0 0
      %964 = vmatpush1.bf16.msra.mxu0 0
      %965 = vmatprep.subr.bf16.mxu0 0
      %966 = vmatpush1.bf16.msra.mxu0 0
      %967 = vmatprep.subr.bf16.mxu0 0
      %968 = vmatpush1.bf16.msra.mxu0 0
      %969 = vmatprep.mubr.bf16.mxu0 0
      %970 = vmatmul.mubr.bf16.gmra.mrb[0].mxu0 %v926
      %v971 = vpop.f32.mrb[0].mxu0
      %v972 = vadd.f32 0.0, %v971
      %v973 = vpop.f32.mrb[0].mxu0
      %v974 = vpop.f32.mrb[0].mxu0
      %v975 = vadd.f32 0.0, %v974
      %v976 = vpop.f32.mrb[0].mxu0
      %977 = vmatprep.mubr.bf16.mxu0 0
      %978 = vmatmul.mubr.bf16.gmra.mrb[0].mxu0 %v929
      %v979 = vpop.f32.mrb[0].mxu0
      %v980 = vadd.f32 0.0, %v979
      %v981 = vpop.f32.mrb[0].mxu0
      %v982 = vpop.f32.mrb[0].mxu0
      %v983 = vadd.f32 0.0, %v982
      %v984 = vpop.f32.mrb[0].mxu0
      %985 = vmatprep.mubr.bf16.mxu0 0
      %986 = vmatmul.mubr.bf16.gmra.mrb[0].mxu0 %v932
      %v987 = vpop.f32.mrb[0].mxu0
      %v988 = vadd.f32 0.0, %v987
      %v989 = vpop.f32.mrb[0].mxu0
      %v990 = vpop.f32.mrb[0].mxu0
      %v991 = vadd.f32 0.0, %v990
      %v992 = vpop.f32.mrb[0].mxu0
      %993 = vmatprep.mubr.bf16.mxu0 0
      %994 = vmatmul.mubr.bf16.gmra.mrb[0].mxu0 %v935
      %v995 = vpop.f32.mrb[0].mxu0
      %v996 = vadd.f32 0.0, %v995
      %v997 = vpop.f32.mrb[0].mxu0
      %v998 = vpop.f32.mrb[0].mxu0
      %v999 = vadd.f32 0.0, %v998
      %v1000 = vpop.f32.mrb[0].mxu0
      %1001 = vdwg.mxu0
      %v1002 = vadd.f32 %v815, %v972
      %v1003 = vadd.f32 %v818, %v975
      %v1004 = vadd.f32 %v823, %v980
      %v1005 = vadd.f32 %v826, %v983
      %v1006 = vadd.f32 %v831, %v988
      %v1007 = vadd.f32 %v834, %v991
      %v1008 = vadd.f32 %v839, %v996
      %v1009 = vadd.f32 %v842, %v999
      %v1010 = vld [vmem:[%s455] sm:$0xf]
      %v1011 = vld [vmem:[%s455 + $0x8] sm:$0xf]
      %v1012 = vld [vmem:[%s455 + $0x10] sm:$0xf]
      %v1013 = vld [vmem:[%s455 + $0x18] sm:$0xf]
      %v1014 = vld [vmem:[%s455 + $0x20] sm:$0xf]
      %v1015 = vld [vmem:[%s455 + $0x28] sm:$0xf]
      %v1016 = vld [vmem:[%s455 + $0x30] sm:$0xf]
      %v1017 = vld [vmem:[%s455 + $0x38] sm:$0xf]
      %s1018 = scalar_lea.vmem %s2, 24
      %v1019 = vld [vmem:[%s1018] sm:$0xf]
      %v1020 = vld [vmem:[%s1018 + $0x4] sm:$0xf]
      %v1029 = vunpack.c.l.b16 %v1010
      %v1030 = vunpack.c.l.b16 %v1011
      %v1031 = vunpack.c.l.b16 %v1012
      %v1032 = vunpack.c.l.b16 %v1013
      %v1033 = vunpack.c.l.b16 %v1014
      %v1034 = vunpack.c.l.b16 %v1015
      %v1035 = vunpack.c.l.b16 %v1016
      %v1036 = vunpack.c.l.b16 %v1017
      %v1037 = vpack.c.b16 %v1030, %v1029
      %v1038 = vpack.c.b16 %v1032, %v1031
      %v1039 = vpack.c.b16 %v1034, %v1033
      %v1040 = vpack.c.b16 %v1036, %v1035
      %v1043 = vunpack.c.l.b16 %v1019
      %v1044 = vunpack.c.l.b16 %v1020
      %v1045 = vpack.c.b16 %v1044, %v1043
      %v1048 = vsel %vm664, %v1037, 0
      %v1051 = vsel %vm664, %v1038, 0
      %v1054 = vsel %vm664, %v1039, 0
      %v1057 = vsel %vm664, %v1040, 0
      %1059 = vmatprep.subr.bf16.mxu0 0
      %1060 = vmatpush1.bf16.msra.mxu0 %v1045
      %1061 = vmatprep.subr.bf16.mxu0 0
      %1062 = vmatpush1.bf16.msra.mxu0 0
      %1063 = vmatprep.subr.bf16.mxu0 0
      %1064 = vmatpush1.bf16.msra.mxu0 0
      %1065 = vmatprep.subr.bf16.mxu0 0
      %1066 = vmatpush1.bf16.msra.mxu0 0
      %1067 = vmatprep.subr.bf16.mxu0 0
      %1068 = vmatpush1.bf16.msra.mxu0 0
      %1069 = vmatprep.subr.bf16.mxu0 0
      %1070 = vmatpush1.bf16.msra.mxu0 0
      %1071 = vmatprep.subr.bf16.mxu0 0
      %1072 = vmatpush1.bf16.msra.mxu0 0
      %1073 = vmatprep.subr.bf16.mxu0 0
      %1074 = vmatpush1.bf16.msra.mxu0 0
      %1075 = vmatprep.subr.bf16.mxu0 0
      %1076 = vmatpush1.bf16.msra.mxu0 0
      %1077 = vmatprep.subr.bf16.mxu0 0
      %1078 = vmatpush1.bf16.msra.mxu0 0
      %1079 = vmatprep.subr.bf16.mxu0 0
      %1080 = vmatpush1.bf16.msra.mxu0 0
      %1081 = vmatprep.subr.bf16.mxu0 0
      %1082 = vmatpush1.bf16.msra.mxu0 0
      %1083 = vmatprep.subr.bf16.mxu0 0
      %1084 = vmatpush1.bf16.msra.mxu0 0
      %1085 = vmatprep.subr.bf16.mxu0 0
      %1086 = vmatpush1.bf16.msra.mxu0 0
      %1087 = vmatprep.subr.bf16.mxu0 0
      %1088 = vmatpush1.bf16.msra.mxu0 0
      %1089 = vmatprep.subr.bf16.mxu0 0
      %1090 = vmatpush1.bf16.msra.mxu0 0
      %1091 = vmatprep.mubr.bf16.mxu0 0
      %1092 = vmatmul.mubr.bf16.gmra.mrb[0].mxu0 %v1048
      %v1093 = vpop.f32.mrb[0].mxu0
      %v1094 = vadd.f32 0.0, %v1093
      %v1095 = vpop.f32.mrb[0].mxu0
      %v1096 = vpop.f32.mrb[0].mxu0
      %v1097 = vadd.f32 0.0, %v1096
      %v1098 = vpop.f32.mrb[0].mxu0
      %1099 = vmatprep.mubr.bf16.mxu0 0
      %1100 = vmatmul.mubr.bf16.gmra.mrb[0].mxu0 %v1051
      %v1101 = vpop.f32.mrb[0].mxu0
      %v1102 = vadd.f32 0.0, %v1101
      %v1103 = vpop.f32.mrb[0].mxu0
      %v1104 = vpop.f32.mrb[0].mxu0
      %v1105 = vadd.f32 0.0, %v1104
      %v1106 = vpop.f32.mrb[0].mxu0
      %1107 = vmatprep.mubr.bf16.mxu0 0
      %1108 = vmatmul.mubr.bf16.gmra.mrb[0].mxu0 %v1054
      %v1109 = vpop.f32.mrb[0].mxu0
      %v1110 = vadd.f32 0.0, %v1109
      %v1111 = vpop.f32.mrb[0].mxu0
      %v1112 = vpop.f32.mrb[0].mxu0
      %v1113 = vadd.f32 0.0, %v1112
      %v1114 = vpop.f32.mrb[0].mxu0
      %1115 = vmatprep.mubr.bf16.mxu0 0
      %1116 = vmatmul.mubr.bf16.gmra.mrb[0].mxu0 %v1057
      %v1117 = vpop.f32.mrb[0].mxu0
      %v1118 = vadd.f32 0.0, %v1117
      %v1119 = vpop.f32.mrb[0].mxu0
      %v1120 = vpop.f32.mrb[0].mxu0
      %v1121 = vadd.f32 0.0, %v1120
      %v1122 = vpop.f32.mrb[0].mxu0
      %1123 = vdwg.mxu0
      %v1124 = vadd.f32 %v1002, %v1094
      %v1125 = vadd.f32 %v1003, %v1097
      %v1126 = vadd.f32 %v1004, %v1102
      %v1127 = vadd.f32 %v1005, %v1105
      %v1128 = vadd.f32 %v1006, %v1110
      %v1129 = vadd.f32 %v1007, %v1113
      %v1130 = vadd.f32 %v1008, %v1118
      %v1131 = vadd.f32 %v1009, %v1121
      %v1132 = vld [vmem:[%s455] sm:$0xf]
      %v1133 = vld [vmem:[%s455 + $0x4] sm:$0x1]
      %v1134 = vld [vmem:[%s455 + $0x8] sm:$0xf]
      %v1135 = vld [vmem:[%s455 + $0xc] sm:$0x1]
      %v1136 = vld [vmem:[%s455 + $0x10] sm:$0xf]
      %v1137 = vld [vmem:[%s455 + $0x14] sm:$0x1]
      %v1138 = vld [vmem:[%s455 + $0x18] sm:$0xf]
      %v1139 = vld [vmem:[%s455 + $0x1c] sm:$0x1]
      %v1140 = vld [vmem:[%s455 + $0x20] sm:$0xf]
      %v1141 = vld [vmem:[%s455 + $0x24] sm:$0x1]
      %v1142 = vld [vmem:[%s455 + $0x28] sm:$0xf]
      %v1143 = vld [vmem:[%s455 + $0x2c] sm:$0x1]
      %v1144 = vld [vmem:[%s455 + $0x30] sm:$0xf]
      %v1145 = vld [vmem:[%s455 + $0x34] sm:$0x1]
      %v1146 = vld [vmem:[%s455 + $0x38] sm:$0xf]
      %v1147 = vld [vmem:[%s455 + $0x3c] sm:$0x1]
      %v1149 = vshrl.u32 %v1132, 16
      %v1151 = vrot.slane %v1149, 4
      %v1152 = vshll.u32 %v1132, 16
      %v1154 = vrot.slane %v1152, 5
      %v1155 = vor.u32 %v1151, %v1154
      %v1156 = vrot.slane %v1155, 4
      %v1158 = vshll.u32 %v1133, 16
      %v1160 = vrot.slane %v1158, 5
      %v1161 = vsel %vm530, %v1156, %v1160
      %v1163 = vshrl.u32 %v1134, 16
      %v1165 = vrot.slane %v1163, 4
      %v1166 = vshll.u32 %v1134, 16
      %v1168 = vrot.slane %v1166, 5
      %v1169 = vor.u32 %v1165, %v1168
      %v1170 = vrot.slane %v1169, 4
      %v1172 = vshll.u32 %v1135, 16
      %v1174 = vrot.slane %v1172, 5
      %v1175 = vsel %vm530, %v1170, %v1174
      %v1177 = vshrl.u32 %v1136, 16
      %v1179 = vrot.slane %v1177, 4
      %v1180 = vshll.u32 %v1136, 16
      %v1182 = vrot.slane %v1180, 5
      %v1183 = vor.u32 %v1179, %v1182
      %v1184 = vrot.slane %v1183, 4
      %v1186 = vshll.u32 %v1137, 16
      %v1188 = vrot.slane %v1186, 5
      %v1189 = vsel %vm530, %v1184, %v1188
      %v1191 = vshrl.u32 %v1138, 16
      %v1193 = vrot.slane %v1191, 4
      %v1194 = vshll.u32 %v1138, 16
      %v1196 = vrot.slane %v1194, 5
      %v1197 = vor.u32 %v1193, %v1196
      %v1198 = vrot.slane %v1197, 4
      %v1200 = vshll.u32 %v1139, 16
      %v1202 = vrot.slane %v1200, 5
      %v1203 = vsel %vm530, %v1198, %v1202
      %v1205 = vshrl.u32 %v1140, 16
      %v1207 = vrot.slane %v1205, 4
      %v1208 = vshll.u32 %v1140, 16
      %v1210 = vrot.slane %v1208, 5
      %v1211 = vor.u32 %v1207, %v1210
      %v1212 = vrot.slane %v1211, 4
      %v1214 = vshll.u32 %v1141, 16
      %v1216 = vrot.slane %v1214, 5
      %v1217 = vsel %vm530, %v1212, %v1216
      %v1219 = vshrl.u32 %v1142, 16
      %v1221 = vrot.slane %v1219, 4
      %v1222 = vshll.u32 %v1142, 16
      %v1224 = vrot.slane %v1222, 5
      %v1225 = vor.u32 %v1221, %v1224
      %v1226 = vrot.slane %v1225, 4
      %v1228 = vshll.u32 %v1143, 16
      %v1230 = vrot.slane %v1228, 5
      %v1231 = vsel %vm530, %v1226, %v1230
      %v1233 = vshrl.u32 %v1144, 16
      %v1235 = vrot.slane %v1233, 4
      %v1236 = vshll.u32 %v1144, 16
      %v1238 = vrot.slane %v1236, 5
      %v1239 = vor.u32 %v1235, %v1238
      %v1240 = vrot.slane %v1239, 4
      %v1242 = vshll.u32 %v1145, 16
      %v1244 = vrot.slane %v1242, 5
      %v1245 = vsel %vm530, %v1240, %v1244
      %v1247 = vshrl.u32 %v1146, 16
      %v1249 = vrot.slane %v1247, 4
      %v1250 = vshll.u32 %v1146, 16
      %v1252 = vrot.slane %v1250, 5
      %v1253 = vor.u32 %v1249, %v1252
      %v1254 = vrot.slane %v1253, 4
      %v1256 = vshll.u32 %v1147, 16
      %v1258 = vrot.slane %v1256, 5
      %v1259 = vsel %vm530, %v1254, %v1258
      %s1260 = scalar_lea.vmem %s2, 32
      %v1261 = vld [vmem:[%s1260] sm:$0xf]
      %v1262 = vld [vmem:[%s1260 + $0x4] sm:$0xf]
      %v1263 = vunpack.c.l.b16 %v1161
      %v1264 = vunpack.c.l.b16 %v1175
      %v1265 = vunpack.c.l.b16 %v1189
      %v1266 = vunpack.c.l.b16 %v1203
      %v1267 = vunpack.c.l.b16 %v1217
      %v1268 = vunpack.c.l.b16 %v1231
      %v1269 = vunpack.c.l.b16 %v1245
      %v1270 = vunpack.c.l.b16 %v1259
      %v1271 = vpack.c.b16 %v1264, %v1263
      %v1272 = vpack.c.b16 %v1266, %v1265
      %v1273 = vpack.c.b16 %v1268, %v1267
      %v1274 = vpack.c.b16 %v1270, %v1269
      %v1277 = vunpack.c.l.b16 %v1261
      %v1278 = vunpack.c.l.b16 %v1262
      %v1279 = vpack.c.b16 %v1278, %v1277
      %v1282 = vsel %vm664, %v1271, 0
      %v1285 = vsel %vm664, %v1272, 0
      %v1288 = vsel %vm664, %v1273, 0
      %v1291 = vsel %vm664, %v1274, 0
      %1293 = vmatprep.subr.bf16.mxu0 0
      %1294 = vmatpush1.bf16.msra.mxu0 %v1279
      %1295 = vmatprep.subr.bf16.mxu0 0
      %1296 = vmatpush1.bf16.msra.mxu0 0
      %1297 = vmatprep.subr.bf16.mxu0 0
      %1298 = vmatpush1.bf16.msra.mxu0 0
      %1299 = vmatprep.subr.bf16.mxu0 0
      %1300 = vmatpush1.bf16.msra.mxu0 0
      %1301 = vmatprep.subr.bf16.mxu0 0
      %1302 = vmatpush1.bf16.msra.mxu0 0
      %1303 = vmatprep.subr.bf16.mxu0 0
      %1304 = vmatpush1.bf16.msra.mxu0 0
      %1305 = vmatprep.subr.bf16.mxu0 0
      %1306 = vmatpush1.bf16.msra.mxu0 0
      %1307 = vmatprep.subr.bf16.mxu0 0
      %1308 = vmatpush1.bf16.msra.mxu0 0
      %1309 = vmatprep.subr.bf16.mxu0 0
      %1310 = vmatpush1.bf16.msra.mxu0 0
      %1311 = vmatprep.subr.bf16.mxu0 0
      %1312 = vmatpush1.bf16.msra.mxu0 0
      %1313 = vmatprep.subr.bf16.mxu0 0
      %1314 = vmatpush1.bf16.msra.mxu0 0
      %1315 = vmatprep.subr.bf16.mxu0 0
      %1316 = vmatpush1.bf16.msra.mxu0 0
      %1317 = vmatprep.subr.bf16.mxu0 0
      %1318 = vmatpush1.bf16.msra.mxu0 0
      %1319 = vmatprep.subr.bf16.mxu0 0
      %1320 = vmatpush1.bf16.msra.mxu0 0
      %1321 = vmatprep.subr.bf16.mxu0 0
      %1322 = vmatpush1.bf16.msra.mxu0 0
      %1323 = vmatprep.subr.bf16.mxu0 0
      %1324 = vmatpush1.bf16.msra.mxu0 0
      %1325 = vmatprep.mubr.bf16.mxu0 0
      %1326 = vmatmul.mubr.bf16.gmra.mrb[0].mxu0 %v1282
      %v1327 = vpop.f32.mrb[0].mxu0
      %v1328 = vadd.f32 0.0, %v1327
      %v1329 = vpop.f32.mrb[0].mxu0
      %v1330 = vpop.f32.mrb[0].mxu0
      %v1331 = vadd.f32 0.0, %v1330
      %v1332 = vpop.f32.mrb[0].mxu0
      %1333 = vmatprep.mubr.bf16.mxu0 0
      %1334 = vmatmul.mubr.bf16.gmra.mrb[0].mxu0 %v1285
      %v1335 = vpop.f32.mrb[0].mxu0
      %v1336 = vadd.f32 0.0, %v1335
      %v1337 = vpop.f32.mrb[0].mxu0
      %v1338 = vpop.f32.mrb[0].mxu0
      %v1339 = vadd.f32 0.0, %v1338
      %v1340 = vpop.f32.mrb[0].mxu0
      %1341 = vmatprep.mubr.bf16.mxu0 0
      %1342 = vmatmul.mubr.bf16.gmra.mrb[0].mxu0 %v1288
      %v1343 = vpop.f32.mrb[0].mxu0
      %v1344 = vadd.f32 0.0, %v1343
      %v1345 = vpop.f32.mrb[0].mxu0
      %v1346 = vpop.f32.mrb[0].mxu0
      %v1347 = vadd.f32 0.0, %v1346
      %v1348 = vpop.f32.mrb[0].mxu0
      %1349 = vmatprep.mubr.bf16.mxu0 0
      %1350 = vmatmul.mubr.bf16.gmra.mrb[0].mxu0 %v1291
      %v1351 = vpop.f32.mrb[0].mxu0
      %v1352 = vadd.f32 0.0, %v1351
      %v1353 = vpop.f32.mrb[0].mxu0
      %v1354 = vpop.f32.mrb[0].mxu0
      %v1355 = vadd.f32 0.0, %v1354
      %v1356 = vpop.f32.mrb[0].mxu0
      %1357 = vdwg.mxu0
      %v1358 = vadd.f32 %v1124, %v1328
      %v1359 = vadd.f32 %v1125, %v1331
      %v1360 = vadd.f32 %v1126, %v1336
      %v1361 = vadd.f32 %v1127, %v1339
      %v1362 = vadd.f32 %v1128, %v1344
      %v1363 = vadd.f32 %v1129, %v1347
      %v1364 = vadd.f32 %v1130, %v1352
      %v1365 = vadd.f32 %v1131, %v1355
      %v1366 = vld [vmem:[%s455] sm:$0xe]
      %v1367 = vld [vmem:[%s455 + $0x8] sm:$0xe]
      %v1368 = vld [vmem:[%s455 + $0x10] sm:$0xe]
      %v1369 = vld [vmem:[%s455 + $0x18] sm:$0xe]
      %v1370 = vld [vmem:[%s455 + $0x20] sm:$0xe]
      %v1371 = vld [vmem:[%s455 + $0x28] sm:$0xe]
      %v1372 = vld [vmem:[%s455 + $0x30] sm:$0xe]
      %v1373 = vld [vmem:[%s455 + $0x38] sm:$0xe]
      %v1390 = vrot.slane %v1366, 5
      %v1391 = vrot.slane %v1390, 4
      %v1392 = vrot.slane %v1133, 5
      %v1393 = vsel %vm871, %v1391, %v1392
      %v1394 = vrot.slane %v1367, 5
      %v1395 = vrot.slane %v1394, 4
      %v1396 = vrot.slane %v1135, 5
      %v1397 = vsel %vm871, %v1395, %v1396
      %v1398 = vrot.slane %v1368, 5
      %v1399 = vrot.slane %v1398, 4
      %v1400 = vrot.slane %v1137, 5
      %v1401 = vsel %vm871, %v1399, %v1400
      %v1402 = vrot.slane %v1369, 5
      %v1403 = vrot.slane %v1402, 4
      %v1404 = vrot.slane %v1139, 5
      %v1405 = vsel %vm871, %v1403, %v1404
      %v1406 = vrot.slane %v1370, 5
      %v1407 = vrot.slane %v1406, 4
      %v1408 = vrot.slane %v1141, 5
      %v1409 = vsel %vm871, %v1407, %v1408
      %v1410 = vrot.slane %v1371, 5
      %v1411 = vrot.slane %v1410, 4
      %v1412 = vrot.slane %v1143, 5
      %v1413 = vsel %vm871, %v1411, %v1412
      %v1414 = vrot.slane %v1372, 5
      %v1415 = vrot.slane %v1414, 4
      %v1416 = vrot.slane %v1145, 5
      %v1417 = vsel %vm871, %v1415, %v1416
      %v1418 = vrot.slane %v1373, 5
      %v1419 = vrot.slane %v1418, 4
      %v1420 = vrot.slane %v1147, 5
      %v1421 = vsel %vm871, %v1419, %v1420
      %s1422 = scalar_lea.vmem %s2, 40
      %v1423 = vld [vmem:[%s1422] sm:$0xf]
      %v1424 = vld [vmem:[%s1422 + $0x4] sm:$0xf]
      %v1425 = vunpack.c.l.b16 %v1393
      %v1426 = vunpack.c.l.b16 %v1397
      %v1427 = vunpack.c.l.b16 %v1401
      %v1428 = vunpack.c.l.b16 %v1405
      %v1429 = vunpack.c.l.b16 %v1409
      %v1430 = vunpack.c.l.b16 %v1413
      %v1431 = vunpack.c.l.b16 %v1417
      %v1432 = vunpack.c.l.b16 %v1421
      %v1433 = vpack.c.b16 %v1426, %v1425
      %v1434 = vpack.c.b16 %v1428, %v1427
      %v1435 = vpack.c.b16 %v1430, %v1429
      %v1436 = vpack.c.b16 %v1432, %v1431
      %v1439 = vunpack.c.l.b16 %v1423
      %v1440 = vunpack.c.l.b16 %v1424
      %v1441 = vpack.c.b16 %v1440, %v1439
      %v1444 = vsel %vm664, %v1433, 0
      %v1447 = vsel %vm664, %v1434, 0
      %v1450 = vsel %vm664, %v1435, 0
      %v1453 = vsel %vm664, %v1436, 0
      %1455 = vmatprep.subr.bf16.mxu0 0
      %1456 = vmatpush1.bf16.msra.mxu0 %v1441
      %1457 = vmatprep.subr.bf16.mxu0 0
      %1458 = vmatpush1.bf16.msra.mxu0 0
      %1459 = vmatprep.subr.bf16.mxu0 0
      %1460 = vmatpush1.bf16.msra.mxu0 0
      %1461 = vmatprep.subr.bf16.mxu0 0
      %1462 = vmatpush1.bf16.msra.mxu0 0
      %1463 = vmatprep.subr.bf16.mxu0 0
      %1464 = vmatpush1.bf16.msra.mxu0 0
      %1465 = vmatprep.subr.bf16.mxu0 0
      %1466 = vmatpush1.bf16.msra.mxu0 0
      %1467 = vmatprep.subr.bf16.mxu0 0
      %1468 = vmatpush1.bf16.msra.mxu0 0
      %1469 = vmatprep.subr.bf16.mxu0 0
      %1470 = vmatpush1.bf16.msra.mxu0 0
      %1471 = vmatprep.subr.bf16.mxu0 0
      %1472 = vmatpush1.bf16.msra.mxu0 0
      %1473 = vmatprep.subr.bf16.mxu0 0
      %1474 = vmatpush1.bf16.msra.mxu0 0
      %1475 = vmatprep.subr.bf16.mxu0 0
      %1476 = vmatpush1.bf16.msra.mxu0 0
      %1477 = vmatprep.subr.bf16.mxu0 0
      %1478 = vmatpush1.bf16.msra.mxu0 0
      %1479 = vmatprep.subr.bf16.mxu0 0
      %1480 = vmatpush1.bf16.msra.mxu0 0
      %1481 = vmatprep.subr.bf16.mxu0 0
      %1482 = vmatpush1.bf16.msra.mxu0 0
      %1483 = vmatprep.subr.bf16.mxu0 0
      %1484 = vmatpush1.bf16.msra.mxu0 0
      %1485 = vmatprep.subr.bf16.mxu0 0
      %1486 = vmatpush1.bf16.msra.mxu0 0
      %1487 = vmatprep.mubr.bf16.mxu0 0
      %1488 = vmatmul.mubr.bf16.gmra.mrb[0].mxu0 %v1444
      %v1489 = vpop.f32.mrb[0].mxu0
      %v1490 = vadd.f32 0.0, %v1489
      %v1491 = vpop.f32.mrb[0].mxu0
      %v1492 = vpop.f32.mrb[0].mxu0
      %v1493 = vadd.f32 0.0, %v1492
      %v1494 = vpop.f32.mrb[0].mxu0
      %1495 = vmatprep.mubr.bf16.mxu0 0
      %1496 = vmatmul.mubr.bf16.gmra.mrb[0].mxu0 %v1447
      %v1497 = vpop.f32.mrb[0].mxu0
      %v1498 = vadd.f32 0.0, %v1497
      %v1499 = vpop.f32.mrb[0].mxu0
      %v1500 = vpop.f32.mrb[0].mxu0
      %v1501 = vadd.f32 0.0, %v1500
      %v1502 = vpop.f32.mrb[0].mxu0
      %1503 = vmatprep.mubr.bf16.mxu0 0
      %1504 = vmatmul.mubr.bf16.gmra.mrb[0].mxu0 %v1450
      %v1505 = vpop.f32.mrb[0].mxu0
      %v1506 = vadd.f32 0.0, %v1505
      %v1507 = vpop.f32.mrb[0].mxu0
      %v1508 = vpop.f32.mrb[0].mxu0
      %v1509 = vadd.f32 0.0, %v1508
      %v1510 = vpop.f32.mrb[0].mxu0
      %1511 = vmatprep.mubr.bf16.mxu0 0
      %1512 = vmatmul.mubr.bf16.gmra.mrb[0].mxu0 %v1453
      %v1513 = vpop.f32.mrb[0].mxu0
      %v1514 = vadd.f32 0.0, %v1513
      %v1515 = vpop.f32.mrb[0].mxu0
      %v1516 = vpop.f32.mrb[0].mxu0
      %v1517 = vadd.f32 0.0, %v1516
      %v1518 = vpop.f32.mrb[0].mxu0
      %1519 = vdwg.mxu0
      %v1520 = vadd.f32 %v1358, %v1490
      %v1521 = vadd.f32 %v1359, %v1493
      %v1522 = vadd.f32 %v1360, %v1498
      %v1523 = vadd.f32 %v1361, %v1501
      %v1524 = vadd.f32 %v1362, %v1506
      %v1525 = vadd.f32 %v1363, %v1509
      %v1526 = vadd.f32 %v1364, %v1514
      %v1527 = vadd.f32 %v1365, %v1517
      %s1528 = scalar_lea.vmem [#allocation2], 16
      %v1529 = vld [vmem:[%s1528] sm:$0xf]
      %v1530 = vld [vmem:[%s1528 + $0x8] sm:$0xf]
      %v1531 = vld [vmem:[%s1528 + $0x10] sm:$0xf]
      %v1532 = vld [vmem:[%s1528 + $0x18] sm:$0xf]
      %v1533 = vld [vmem:[%s1528 + $0x20] sm:$0xf]
      %v1534 = vld [vmem:[%s1528 + $0x28] sm:$0xf]
      %v1535 = vld [vmem:[%s1528 + $0x30] sm:$0xf]
      %v1536 = vld [vmem:[%s1528 + $0x38] sm:$0xf]
      %s1537 = scalar_lea.vmem %s2, 48
      %v1538 = vld [vmem:[%s1537] sm:$0xf]
      %v1539 = vld [vmem:[%s1537 + $0x4] sm:$0xf]
      %v1548 = vunpack.c.l.b16 %v1529
      %v1549 = vunpack.c.l.b16 %v1530
      %v1550 = vunpack.c.l.b16 %v1531
      %v1551 = vunpack.c.l.b16 %v1532
      %v1552 = vunpack.c.l.b16 %v1533
      %v1553 = vunpack.c.l.b16 %v1534
      %v1554 = vunpack.c.l.b16 %v1535
      %v1555 = vunpack.c.l.b16 %v1536
      %v1556 = vpack.c.b16 %v1549, %v1548
      %v1557 = vpack.c.b16 %v1551, %v1550
      %v1558 = vpack.c.b16 %v1553, %v1552
      %v1559 = vpack.c.b16 %v1555, %v1554
      %v1562 = vunpack.c.l.b16 %v1538
      %v1563 = vunpack.c.l.b16 %v1539
      %v1564 = vpack.c.b16 %v1563, %v1562
      %v1567 = vsel %vm664, %v1556, 0
      %v1570 = vsel %vm664, %v1557, 0
      %v1573 = vsel %vm664, %v1558, 0
      %v1576 = vsel %vm664, %v1559, 0
      %1578 = vmatprep.subr.bf16.mxu0 0
      %1579 = vmatpush1.bf16.msra.mxu0 %v1564
      %1580 = vmatprep.subr.bf16.mxu0 0
      %1581 = vmatpush1.bf16.msra.mxu0 0
      %1582 = vmatprep.subr.bf16.mxu0 0
      %1583 = vmatpush1.bf16.msra.mxu0 0
      %1584 = vmatprep.subr.bf16.mxu0 0
      %1585 = vmatpush1.bf16.msra.mxu0 0
      %1586 = vmatprep.subr.bf16.mxu0 0
      %1587 = vmatpush1.bf16.msra.mxu0 0
      %1588 = vmatprep.subr.bf16.mxu0 0
      %1589 = vmatpush1.bf16.msra.mxu0 0
      %1590 = vmatprep.subr.bf16.mxu0 0
      %1591 = vmatpush1.bf16.msra.mxu0 0
      %1592 = vmatprep.subr.bf16.mxu0 0
      %1593 = vmatpush1.bf16.msra.mxu0 0
      %1594 = vmatprep.subr.bf16.mxu0 0
      %1595 = vmatpush1.bf16.msra.mxu0 0
      %1596 = vmatprep.subr.bf16.mxu0 0
      %1597 = vmatpush1.bf16.msra.mxu0 0
      %1598 = vmatprep.subr.bf16.mxu0 0
      %1599 = vmatpush1.bf16.msra.mxu0 0
      %1600 = vmatprep.subr.bf16.mxu0 0
      %1601 = vmatpush1.bf16.msra.mxu0 0
      %1602 = vmatprep.subr.bf16.mxu0 0
      %1603 = vmatpush1.bf16.msra.mxu0 0
      %1604 = vmatprep.subr.bf16.mxu0 0
      %1605 = vmatpush1.bf16.msra.mxu0 0
      %1606 = vmatprep.subr.bf16.mxu0 0
      %1607 = vmatpush1.bf16.msra.mxu0 0
      %1608 = vmatprep.subr.bf16.mxu0 0
      %1609 = vmatpush1.bf16.msra.mxu0 0
      %1610 = vmatprep.mubr.bf16.mxu0 0
      %1611 = vmatmul.mubr.bf16.gmra.mrb[0].mxu0 %v1567
      %v1612 = vpop.f32.mrb[0].mxu0
      %v1613 = vadd.f32 0.0, %v1612
      %v1614 = vpop.f32.mrb[0].mxu0
      %v1615 = vpop.f32.mrb[0].mxu0
      %v1616 = vadd.f32 0.0, %v1615
      %v1617 = vpop.f32.mrb[0].mxu0
      %1618 = vmatprep.mubr.bf16.mxu0 0
      %1619 = vmatmul.mubr.bf16.gmra.mrb[0].mxu0 %v1570
      %v1620 = vpop.f32.mrb[0].mxu0
      %v1621 = vadd.f32 0.0, %v1620
      %v1622 = vpop.f32.mrb[0].mxu0
      %v1623 = vpop.f32.mrb[0].mxu0
      %v1624 = vadd.f32 0.0, %v1623
      %v1625 = vpop.f32.mrb[0].mxu0
      %1626 = vmatprep.mubr.bf16.mxu0 0
      %1627 = vmatmul.mubr.bf16.gmra.mrb[0].mxu0 %v1573
      %v1628 = vpop.f32.mrb[0].mxu0
      %v1629 = vadd.f32 0.0, %v1628
      %v1630 = vpop.f32.mrb[0].mxu0
      %v1631 = vpop.f32.mrb[0].mxu0
      %v1632 = vadd.f32 0.0, %v1631
      %v1633 = vpop.f32.mrb[0].mxu0
      %1634 = vmatprep.mubr.bf16.mxu0 0
      %1635 = vmatmul.mubr.bf16.gmra.mrb[0].mxu0 %v1576
      %v1636 = vpop.f32.mrb[0].mxu0
      %v1637 = vadd.f32 0.0, %v1636
      %v1638 = vpop.f32.mrb[0].mxu0
      %v1639 = vpop.f32.mrb[0].mxu0
      %v1640 = vadd.f32 0.0, %v1639
      %v1641 = vpop.f32.mrb[0].mxu0
      %1642 = vdwg.mxu0
      %v1643 = vadd.f32 %v1520, %v1613
      %v1644 = vadd.f32 %v1521, %v1616
      %v1645 = vadd.f32 %v1522, %v1621
      %v1646 = vadd.f32 %v1523, %v1624
      %v1647 = vadd.f32 %v1524, %v1629
      %v1648 = vadd.f32 %v1525, %v1632
      %v1649 = vadd.f32 %v1526, %v1637
      %v1650 = vadd.f32 %v1527, %v1640
      %v1651 = vld [vmem:[%s1528] sm:$0xf]
      %v1652 = vld [vmem:[%s1528 + $0x4] sm:$0x1]
      %v1653 = vld [vmem:[%s1528 + $0x8] sm:$0xf]
      %v1654 = vld [vmem:[%s1528 + $0xc] sm:$0x1]
      %v1655 = vld [vmem:[%s1528 + $0x10] sm:$0xf]
      %v1656 = vld [vmem:[%s1528 + $0x14] sm:$0x1]
      %v1657 = vld [vmem:[%s1528 + $0x18] sm:$0xf]
      %v1658 = vld [vmem:[%s1528 + $0x1c] sm:$0x1]
      %v1659 = vld [vmem:[%s1528 + $0x20] sm:$0xf]
      %v1660 = vld [vmem:[%s1528 + $0x24] sm:$0x1]
      %v1661 = vld [vmem:[%s1528 + $0x28] sm:$0xf]
      %v1662 = vld [vmem:[%s1528 + $0x2c] sm:$0x1]
      %v1663 = vld [vmem:[%s1528 + $0x30] sm:$0xf]
      %v1664 = vld [vmem:[%s1528 + $0x34] sm:$0x1]
      %v1665 = vld [vmem:[%s1528 + $0x38] sm:$0xf]
      %v1666 = vld [vmem:[%s1528 + $0x3c] sm:$0x1]
      %v1668 = vshrl.u32 %v1651, 16
      %v1670 = vrot.slane %v1668, 4
      %v1671 = vshll.u32 %v1651, 16
      %v1673 = vrot.slane %v1671, 5
      %v1674 = vor.u32 %v1670, %v1673
      %v1675 = vrot.slane %v1674, 4
      %v1677 = vshll.u32 %v1652, 16
      %v1679 = vrot.slane %v1677, 5
      %v1680 = vsel %vm530, %v1675, %v1679
      %v1682 = vshrl.u32 %v1653, 16
      %v1684 = vrot.slane %v1682, 4
      %v1685 = vshll.u32 %v1653, 16
      %v1687 = vrot.slane %v1685, 5
      %v1688 = vor.u32 %v1684, %v1687
      %v1689 = vrot.slane %v1688, 4
      %v1691 = vshll.u32 %v1654, 16
      %v1693 = vrot.slane %v1691, 5
      %v1694 = vsel %vm530, %v1689, %v1693
      %v1696 = vshrl.u32 %v1655, 16
      %v1698 = vrot.slane %v1696, 4
      %v1699 = vshll.u32 %v1655, 16
      %v1701 = vrot.slane %v1699, 5
      %v1702 = vor.u32 %v1698, %v1701
      %v1703 = vrot.slane %v1702, 4
      %v1705 = vshll.u32 %v1656, 16
      %v1707 = vrot.slane %v1705, 5
      %v1708 = vsel %vm530, %v1703, %v1707
      %v1710 = vshrl.u32 %v1657, 16
      %v1712 = vrot.slane %v1710, 4
      %v1713 = vshll.u32 %v1657, 16
      %v1715 = vrot.slane %v1713, 5
      %v1716 = vor.u32 %v1712, %v1715
      %v1717 = vrot.slane %v1716, 4
      %v1719 = vshll.u32 %v1658, 16
      %v1721 = vrot.slane %v1719, 5
      %v1722 = vsel %vm530, %v1717, %v1721
      %v1724 = vshrl.u32 %v1659, 16
      %v1726 = vrot.slane %v1724, 4
      %v1727 = vshll.u32 %v1659, 16
      %v1729 = vrot.slane %v1727, 5
      %v1730 = vor.u32 %v1726, %v1729
      %v1731 = vrot.slane %v1730, 4
      %v1733 = vshll.u32 %v1660, 16
      %v1735 = vrot.slane %v1733, 5
      %v1736 = vsel %vm530, %v1731, %v1735
      %v1738 = vshrl.u32 %v1661, 16
      %v1740 = vrot.slane %v1738, 4
      %v1741 = vshll.u32 %v1661, 16
      %v1743 = vrot.slane %v1741, 5
      %v1744 = vor.u32 %v1740, %v1743
      %v1745 = vrot.slane %v1744, 4
      %v1747 = vshll.u32 %v1662, 16
      %v1749 = vrot.slane %v1747, 5
      %v1750 = vsel %vm530, %v1745, %v1749
      %v1752 = vshrl.u32 %v1663, 16
      %v1754 = vrot.slane %v1752, 4
      %v1755 = vshll.u32 %v1663, 16
      %v1757 = vrot.slane %v1755, 5
      %v1758 = vor.u32 %v1754, %v1757
      %v1759 = vrot.slane %v1758, 4
      %v1761 = vshll.u32 %v1664, 16
      %v1763 = vrot.slane %v1761, 5
      %v1764 = vsel %vm530, %v1759, %v1763
      %v1766 = vshrl.u32 %v1665, 16
      %v1768 = vrot.slane %v1766, 4
      %v1769 = vshll.u32 %v1665, 16
      %v1771 = vrot.slane %v1769, 5
      %v1772 = vor.u32 %v1768, %v1771
      %v1773 = vrot.slane %v1772, 4
      %v1775 = vshll.u32 %v1666, 16
      %v1777 = vrot.slane %v1775, 5
      %v1778 = vsel %vm530, %v1773, %v1777
      %s1779 = scalar_lea.vmem %s2, 56
      %v1780 = vld [vmem:[%s1779] sm:$0xf]
      %v1781 = vld [vmem:[%s1779 + $0x4] sm:$0xf]
      %v1782 = vunpack.c.l.b16 %v1680
      %v1783 = vunpack.c.l.b16 %v1694
      %v1784 = vunpack.c.l.b16 %v1708
      %v1785 = vunpack.c.l.b16 %v1722
      %v1786 = vunpack.c.l.b16 %v1736
      %v1787 = vunpack.c.l.b16 %v1750
      %v1788 = vunpack.c.l.b16 %v1764
      %v1789 = vunpack.c.l.b16 %v1778
      %v1790 = vpack.c.b16 %v1783, %v1782
      %v1791 = vpack.c.b16 %v1785, %v1784
      %v1792 = vpack.c.b16 %v1787, %v1786
      %v1793 = vpack.c.b16 %v1789, %v1788
      %v1796 = vunpack.c.l.b16 %v1780
      %v1797 = vunpack.c.l.b16 %v1781
      %v1798 = vpack.c.b16 %v1797, %v1796
      %v1801 = vsel %vm664, %v1790, 0
      %v1804 = vsel %vm664, %v1791, 0
      %v1807 = vsel %vm664, %v1792, 0
      %v1810 = vsel %vm664, %v1793, 0
      %1812 = vmatprep.subr.bf16.mxu0 0
      %1813 = vmatpush1.bf16.msra.mxu0 %v1798
      %1814 = vmatprep.subr.bf16.mxu0 0
      %1815 = vmatpush1.bf16.msra.mxu0 0
      %1816 = vmatprep.subr.bf16.mxu0 0
      %1817 = vmatpush1.bf16.msra.mxu0 0
      %1818 = vmatprep.subr.bf16.mxu0 0
      %1819 = vmatpush1.bf16.msra.mxu0 0
      %1820 = vmatprep.subr.bf16.mxu0 0
      %1821 = vmatpush1.bf16.msra.mxu0 0
      %1822 = vmatprep.subr.bf16.mxu0 0
      %1823 = vmatpush1.bf16.msra.mxu0 0
      %1824 = vmatprep.subr.bf16.mxu0 0
      %1825 = vmatpush1.bf16.msra.mxu0 0
      %1826 = vmatprep.subr.bf16.mxu0 0
      %1827 = vmatpush1.bf16.msra.mxu0 0
      %1828 = vmatprep.subr.bf16.mxu0 0
      %1829 = vmatpush1.bf16.msra.mxu0 0
      %1830 = vmatprep.subr.bf16.mxu0 0
      %1831 = vmatpush1.bf16.msra.mxu0 0
      %1832 = vmatprep.subr.bf16.mxu0 0
      %1833 = vmatpush1.bf16.msra.mxu0 0
      %1834 = vmatprep.subr.bf16.mxu0 0
      %1835 = vmatpush1.bf16.msra.mxu0 0
      %1836 = vmatprep.subr.bf16.mxu0 0
      %1837 = vmatpush1.bf16.msra.mxu0 0
      %1838 = vmatprep.subr.bf16.mxu0 0
      %1839 = vmatpush1.bf16.msra.mxu0 0
      %1840 = vmatprep.subr.bf16.mxu0 0
      %1841 = vmatpush1.bf16.msra.mxu0 0
      %1842 = vmatprep.subr.bf16.mxu0 0
      %1843 = vmatpush1.bf16.msra.mxu0 0
      %1844 = vmatprep.mubr.bf16.mxu0 0
      %1845 = vmatmul.mubr.bf16.gmra.mrb[0].mxu0 %v1801
      %v1846 = vpop.f32.mrb[0].mxu0
      %v1847 = vadd.f32 0.0, %v1846
      %v1848 = vpop.f32.mrb[0].mxu0
      %v1849 = vpop.f32.mrb[0].mxu0
      %v1850 = vadd.f32 0.0, %v1849
      %v1851 = vpop.f32.mrb[0].mxu0
      %1852 = vmatprep.mubr.bf16.mxu0 0
      %1853 = vmatmul.mubr.bf16.gmra.mrb[0].mxu0 %v1804
      %v1854 = vpop.f32.mrb[0].mxu0
      %v1855 = vadd.f32 0.0, %v1854
      %v1856 = vpop.f32.mrb[0].mxu0
      %v1857 = vpop.f32.mrb[0].mxu0
      %v1858 = vadd.f32 0.0, %v1857
      %v1859 = vpop.f32.mrb[0].mxu0
      %1860 = vmatprep.mubr.bf16.mxu0 0
      %1861 = vmatmul.mubr.bf16.gmra.mrb[0].mxu0 %v1807
      %v1862 = vpop.f32.mrb[0].mxu0
      %v1863 = vadd.f32 0.0, %v1862
      %v1864 = vpop.f32.mrb[0].mxu0
      %v1865 = vpop.f32.mrb[0].mxu0
      %v1866 = vadd.f32 0.0, %v1865
      %v1867 = vpop.f32.mrb[0].mxu0
      %1868 = vmatprep.mubr.bf16.mxu0 0
      %1869 = vmatmul.mubr.bf16.gmra.mrb[0].mxu0 %v1810
      %v1870 = vpop.f32.mrb[0].mxu0
      %v1871 = vadd.f32 0.0, %v1870
      %v1872 = vpop.f32.mrb[0].mxu0
      %v1873 = vpop.f32.mrb[0].mxu0
      %v1874 = vadd.f32 0.0, %v1873
      %v1875 = vpop.f32.mrb[0].mxu0
      %1876 = vdwg.mxu0
      %v1877 = vadd.f32 %v1643, %v1847
      %v1878 = vadd.f32 %v1644, %v1850
      %v1879 = vadd.f32 %v1645, %v1855
      %v1880 = vadd.f32 %v1646, %v1858
      %v1881 = vadd.f32 %v1647, %v1863
      %v1882 = vadd.f32 %v1648, %v1866
      %v1883 = vadd.f32 %v1649, %v1871
      %v1884 = vadd.f32 %v1650, %v1874
      %v1885 = vld [vmem:[%s1528] sm:$0xe]
      %v1886 = vld [vmem:[%s1528 + $0x8] sm:$0xe]
      %v1887 = vld [vmem:[%s1528 + $0x10] sm:$0xe]
      %v1888 = vld [vmem:[%s1528 + $0x18] sm:$0xe]
      %v1889 = vld [vmem:[%s1528 + $0x20] sm:$0xe]
      %v1890 = vld [vmem:[%s1528 + $0x28] sm:$0xe]
      %v1891 = vld [vmem:[%s1528 + $0x30] sm:$0xe]
      %v1892 = vld [vmem:[%s1528 + $0x38] sm:$0xe]
      %v1909 = vrot.slane %v1885, 5
      %v1910 = vrot.slane %v1909, 4
      %v1911 = vrot.slane %v1652, 5
      %v1912 = vsel %vm871, %v1910, %v1911
      %v1913 = vrot.slane %v1886, 5
      %v1914 = vrot.slane %v1913, 4
      %v1915 = vrot.slane %v1654, 5
      %v1916 = vsel %vm871, %v1914, %v1915
      %v1917 = vrot.slane %v1887, 5
      %v1918 = vrot.slane %v1917, 4
      %v1919 = vrot.slane %v1656, 5
      %v1920 = vsel %vm871, %v1918, %v1919
      %v1921 = vrot.slane %v1888, 5
      %v1922 = vrot.slane %v1921, 4
      %v1923 = vrot.slane %v1658, 5
      %v1924 = vsel %vm871, %v1922, %v1923
      %v1925 = vrot.slane %v1889, 5
      %v1926 = vrot.slane %v1925, 4
      %v1927 = vrot.slane %v1660, 5
      %v1928 = vsel %vm871, %v1926, %v1927
      %v1929 = vrot.slane %v1890, 5
      %v1930 = vrot.slane %v1929, 4
      %v1931 = vrot.slane %v1662, 5
      %v1932 = vsel %vm871, %v1930, %v1931
      %v1933 = vrot.slane %v1891, 5
      %v1934 = vrot.slane %v1933, 4
      %v1935 = vrot.slane %v1664, 5
      %v1936 = vsel %vm871, %v1934, %v1935
      %v1937 = vrot.slane %v1892, 5
      %v1938 = vrot.slane %v1937, 4
      %v1939 = vrot.slane %v1666, 5
      %v1940 = vsel %vm871, %v1938, %v1939
      %s1941 = scalar_lea.vmem %s2, 64
      %v1942 = vld [vmem:[%s1941] sm:$0xf]
      %v1943 = vld [vmem:[%s1941 + $0x4] sm:$0xf]
      %v1944 = vunpack.c.l.b16 %v1912
      %v1945 = vunpack.c.l.b16 %v1916
      %v1946 = vunpack.c.l.b16 %v1920
      %v1947 = vunpack.c.l.b16 %v1924
      %v1948 = vunpack.c.l.b16 %v1928
      %v1949 = vunpack.c.l.b16 %v1932
      %v1950 = vunpack.c.l.b16 %v1936
      %v1951 = vunpack.c.l.b16 %v1940
      %v1952 = vpack.c.b16 %v1945, %v1944
      %v1953 = vpack.c.b16 %v1947, %v1946
      %v1954 = vpack.c.b16 %v1949, %v1948
      %v1955 = vpack.c.b16 %v1951, %v1950
      %v1958 = vunpack.c.l.b16 %v1942
      %v1959 = vunpack.c.l.b16 %v1943
      %v1960 = vpack.c.b16 %v1959, %v1958
      %v1963 = vsel %vm664, %v1952, 0
      %v1966 = vsel %vm664, %v1953, 0
      %v1969 = vsel %vm664, %v1954, 0
      %v1972 = vsel %vm664, %v1955, 0
      %1974 = vmatprep.subr.bf16.mxu0 0
      %1975 = vmatpush1.bf16.msra.mxu0 %v1960
      %1976 = vmatprep.subr.bf16.mxu0 0
      %1977 = vmatpush1.bf16.msra.mxu0 0
      %1978 = vmatprep.subr.bf16.mxu0 0
      %1979 = vmatpush1.bf16.msra.mxu0 0
      %1980 = vmatprep.subr.bf16.mxu0 0
      %1981 = vmatpush1.bf16.msra.mxu0 0
      %1982 = vmatprep.subr.bf16.mxu0 0
      %1983 = vmatpush1.bf16.msra.mxu0 0
      %1984 = vmatprep.subr.bf16.mxu0 0
      %1985 = vmatpush1.bf16.msra.mxu0 0
      %1986 = vmatprep.subr.bf16.mxu0 0
      %1987 = vmatpush1.bf16.msra.mxu0 0
      %1988 = vmatprep.subr.bf16.mxu0 0
      %1989 = vmatpush1.bf16.msra.mxu0 0
      %1990 = vmatprep.subr.bf16.mxu0 0
      %1991 = vmatpush1.bf16.msra.mxu0 0
      %1992 = vmatprep.subr.bf16.mxu0 0
      %1993 = vmatpush1.bf16.msra.mxu0 0
      %1994 = vmatprep.subr.bf16.mxu0 0
      %1995 = vmatpush1.bf16.msra.mxu0 0
      %1996 = vmatprep.subr.bf16.mxu0 0
      %1997 = vmatpush1.bf16.msra.mxu0 0
      %1998 = vmatprep.subr.bf16.mxu0 0
      %1999 = vmatpush1.bf16.msra.mxu0 0
      %2000 = vmatprep.subr.bf16.mxu0 0
      %2001 = vmatpush1.bf16.msra.mxu0 0
      %2002 = vmatprep.subr.bf16.mxu0 0
      %2003 = vmatpush1.bf16.msra.mxu0 0
      %2004 = vmatprep.subr.bf16.mxu0 0
      %2005 = vmatpush1.bf16.msra.mxu0 0
      %2006 = vmatprep.mubr.bf16.mxu0 0
      %2007 = vmatmul.mubr.bf16.gmra.mrb[0].mxu0 %v1963
      %v2008 = vpop.f32.mrb[0].mxu0
      %v2009 = vadd.f32 0.0, %v2008
      %v2010 = vpop.f32.mrb[0].mxu0
      %v2011 = vpop.f32.mrb[0].mxu0
      %v2012 = vadd.f32 0.0, %v2011
      %v2013 = vpop.f32.mrb[0].mxu0
      %2014 = vmatprep.mubr.bf16.mxu0 0
      %2015 = vmatmul.mubr.bf16.gmra.mrb[0].mxu0 %v1966
      %v2016 = vpop.f32.mrb[0].mxu0
      %v2017 = vadd.f32 0.0, %v2016
      %v2018 = vpop.f32.mrb[0].mxu0
      %v2019 = vpop.f32.mrb[0].mxu0
      %v2020 = vadd.f32 0.0, %v2019
      %v2021 = vpop.f32.mrb[0].mxu0
      %2022 = vmatprep.mubr.bf16.mxu0 0
      %2023 = vmatmul.mubr.bf16.gmra.mrb[0].mxu0 %v1969
      %v2024 = vpop.f32.mrb[0].mxu0
      %v2025 = vadd.f32 0.0, %v2024
      %v2026 = vpop.f32.mrb[0].mxu0
      %v2027 = vpop.f32.mrb[0].mxu0
      %v2028 = vadd.f32 0.0, %v2027
      %v2029 = vpop.f32.mrb[0].mxu0
      %2030 = vmatprep.mubr.bf16.mxu0 0
      %2031 = vmatmul.mubr.bf16.gmra.mrb[0].mxu0 %v1972
      %v2032 = vpop.f32.mrb[0].mxu0
      %v2033 = vadd.f32 0.0, %v2032
      %v2034 = vpop.f32.mrb[0].mxu0
      %v2035 = vpop.f32.mrb[0].mxu0
      %v2036 = vadd.f32 0.0, %v2035
      %v2037 = vpop.f32.mrb[0].mxu0
      %2038 = vdwg.mxu0
      %v2039 = vadd.f32 %v1877, %v2009
      %v2040 = vadd.f32 %v1878, %v2012
      %v2041 = vadd.f32 %v1879, %v2017
      %v2042 = vadd.f32 %v1880, %v2020
      %v2043 = vadd.f32 %v1881, %v2025
      %v2044 = vadd.f32 %v1882, %v2028
      %v2045 = vadd.f32 %v1883, %v2033
      %v2046 = vadd.f32 %v1884, %v2036
      %v2047 = vld [vmem:[%s3] sm:$0x1]
      %v2049 = vlaneseq
      %v2050 = vshrl.u32 %v2049, 7
      %v2051 = vsub.s32 0, %v2050
      %v2052 = vrot.slane %v2047, %v2051
      %v2054 = vadd.f32 %v2039, %v2052
      %v2055 = vadd.f32 %v2040, %v2052
      %v2056 = vadd.f32 %v2041, %v2052
      %v2057 = vadd.f32 %v2042, %v2052
      %v2058 = vadd.f32 %v2043, %v2052
      %v2059 = vadd.f32 %v2044, %v2052
      %v2060 = vadd.f32 %v2045, %v2052
      %v2061 = vadd.f32 %v2046, %v2052
      %v2062 = vmax.f32 %v2054, 0.0
      %v2063 = vmax.f32 %v2055, 0.0
      %v2064 = vmax.f32 %v2056, 0.0
      %v2065 = vmax.f32 %v2057, 0.0
      %v2066 = vmax.f32 %v2058, 0.0
      %v2067 = vmax.f32 %v2059, 0.0
      %v2068 = vmax.f32 %v2060, 0.0
      %v2069 = vmax.f32 %v2061, 0.0
      %v2070 = vpack.c.bf16 %v2063, %v2062
      %v2071 = vpack.c.bf16 %v2065, %v2064
      %v2072 = vpack.c.bf16 %v2067, %v2066
      %v2073 = vpack.c.bf16 %v2069, %v2068
      %v2074 = vld [vmem:[%s4] sm:$0xf]
      %v2075 = vld [vmem:[%s4 + $0x4] sm:$0xf]
      %v2076 = vld [vmem:[%s4 + $0x8] sm:$0xf]
      %v2077 = vld [vmem:[%s4 + $0xc] sm:$0xf]
      %v2078 = vld [vmem:[%s4 + $0x10] sm:$0xf]
      %v2079 = vld [vmem:[%s4 + $0x14] sm:$0xf]
      %v2080 = vld [vmem:[%s4 + $0x18] sm:$0xf]
      %v2081 = vld [vmem:[%s4 + $0x1c] sm:$0xf]
      %v2082 = vld [vmem:[%s5] sm:$0x1]
      %v2084 = vlaneseq
      %v2085 = vshrl.u32 %v2084, 7
      %v2086 = vsub.s32 0, %v2085
      %v2087 = vrot.slane %v2082, %v2086
      %v2097 = vunpack.c.l.b16 %v2074
      %v2098 = vunpack.c.l.b16 %v2075
      %v2099 = vunpack.c.l.b16 %v2076
      %v2100 = vunpack.c.l.b16 %v2077
      %v2101 = vunpack.c.l.b16 %v2078
      %v2102 = vunpack.c.l.b16 %v2079
      %v2103 = vunpack.c.l.b16 %v2080
      %v2104 = vunpack.c.l.b16 %v2081
      %v2105 = vpack.c.b16 %v2098, %v2097
      %v2106 = vpack.c.b16 %v2100, %v2099
      %v2107 = vpack.c.b16 %v2102, %v2101
      %v2108 = vpack.c.b16 %v2104, %v2103
      %vm2113 = vcmask 523264
      %v2115 = vsel %vm2113, %v2070, 0
      %v2118 = vsel %vm2113, %v2071, 0
      %v2121 = vsel %vm2113, %v2072, 0
      %v2124 = vsel %vm2113, %v2073, 0
      %2126 = vmatprep.subr.bf16.mxu0 0
      %2127 = vmatpush1.bf16.msra.mxu0 %v2105
      %2128 = vmatprep.subr.bf16.mxu0 0
      %2129 = vmatpush1.bf16.msra.mxu0 %v2106
      %2130 = vmatprep.subr.bf16.mxu0 0
      %2131 = vmatpush1.bf16.msra.mxu0 %v2107
      %2132 = vmatprep.subr.bf16.mxu0 0
      %2133 = vmatpush1.bf16.msra.mxu0 %v2108
      %2134 = vmatprep.subr.bf16.mxu0 0
      %2135 = vmatpush1.bf16.msra.mxu0 0
      %2136 = vmatprep.subr.bf16.mxu0 0
      %2137 = vmatpush1.bf16.msra.mxu0 0
      %2138 = vmatprep.subr.bf16.mxu0 0
      %2139 = vmatpush1.bf16.msra.mxu0 0
      %2140 = vmatprep.subr.bf16.mxu0 0
      %2141 = vmatpush1.bf16.msra.mxu0 0
      %2142 = vmatprep.subr.bf16.mxu0 0
      %2143 = vmatpush1.bf16.msra.mxu0 0
      %2144 = vmatprep.subr.bf16.mxu0 0
      %2145 = vmatpush1.bf16.msra.mxu0 0
      %2146 = vmatprep.subr.bf16.mxu0 0
      %2147 = vmatpush1.bf16.msra.mxu0 0
      %2148 = vmatprep.subr.bf16.mxu0 0
      %2149 = vmatpush1.bf16.msra.mxu0 0
      %2150 = vmatprep.subr.bf16.mxu0 0
      %2151 = vmatpush1.bf16.msra.mxu0 0
      %2152 = vmatprep.subr.bf16.mxu0 0
      %2153 = vmatpush1.bf16.msra.mxu0 0
      %2154 = vmatprep.subr.bf16.mxu0 0
      %2155 = vmatpush1.bf16.msra.mxu0 0
      %2156 = vmatprep.subr.bf16.mxu0 0
      %2157 = vmatpush1.bf16.msra.mxu0 0
      %2158 = vmatprep.mubr.bf16.mxu0 0
      %2159 = vmatmul.mubr.bf16.gmra.mrb[0].mxu0 %v2115
      %v2160 = vpop.f32.mrb[0].mxu0
      %v2161 = vadd.f32 %v2087, %v2160
      %v2162 = vpop.f32.mrb[0].mxu0
      %v2163 = vpop.f32.mrb[0].mxu0
      %v2164 = vadd.f32 %v2087, %v2163
      %v2165 = vpop.f32.mrb[0].mxu0
      %2166 = vmatprep.mubr.bf16.mxu0 0
      %2167 = vmatmul.mubr.bf16.gmra.mrb[0].mxu0 %v2118
      %v2168 = vpop.f32.mrb[0].mxu0
      %v2169 = vadd.f32 %v2087, %v2168
      %v2170 = vpop.f32.mrb[0].mxu0
      %v2171 = vpop.f32.mrb[0].mxu0
      %v2172 = vadd.f32 %v2087, %v2171
      %v2173 = vpop.f32.mrb[0].mxu0
      %2174 = vmatprep.mubr.bf16.mxu0 0
      %2175 = vmatmul.mubr.bf16.gmra.mrb[0].mxu0 %v2121
      %v2176 = vpop.f32.mrb[0].mxu0
      %v2177 = vadd.f32 %v2087, %v2176
      %v2178 = vpop.f32.mrb[0].mxu0
      %v2179 = vpop.f32.mrb[0].mxu0
      %v2180 = vadd.f32 %v2087, %v2179
      %v2181 = vpop.f32.mrb[0].mxu0
      %2182 = vmatprep.mubr.bf16.mxu0 0
      %2183 = vmatmul.mubr.bf16.gmra.mrb[0].mxu0 %v2124
      %v2184 = vpop.f32.mrb[0].mxu0
      %v2185 = vadd.f32 %v2087, %v2184
      %v2186 = vpop.f32.mrb[0].mxu0
      %v2187 = vpop.f32.mrb[0].mxu0
      %v2188 = vadd.f32 %v2087, %v2187
      %v2189 = vpop.f32.mrb[0].mxu0
      %2190 = vdwg.mxu0
      %vm2191 = vcmask 80896
      %2192 = vst.msk [vmem:[%s306] sm:$0xff] %vm2191, %v2161
      %2193 = vst.msk [vmem:[%s306 + $0x8] sm:$0xff] %vm2191, %v2164
      %2194 = vst.msk [vmem:[%s306 + $0x10] sm:$0xff] %vm2191, %v2169
      %2195 = vst.msk [vmem:[%s306 + $0x18] sm:$0xff] %vm2191, %v2172
      %2196 = vst.msk [vmem:[%s306 + $0x20] sm:$0xff] %vm2191, %v2177
      %2197 = vst.msk [vmem:[%s306 + $0x28] sm:$0xff] %vm2191, %v2180
      %2198 = vst.msk [vmem:[%s306 + $0x30] sm:$0xff] %vm2191, %v2185
      %2199 = vst.msk [vmem:[%s306 + $0x38] sm:$0xff] %vm2191, %v2188
      %v2200 = vld [vmem:[%s301] sm:$0xff]
      %v2201 = vld [vmem:[%s301 + $0x8] sm:$0xff]
      %v2202 = vld [vmem:[%s301 + $0x10] sm:$0xff]
      %v2203 = vld [vmem:[%s301 + $0x18] sm:$0xff]
      %v2204 = vld [vmem:[%s301 + $0x20] sm:$0xff]
      %v2205 = vld [vmem:[%s301 + $0x28] sm:$0xff]
      %v2206 = vld [vmem:[%s301 + $0x30] sm:$0xff]
      %v2207 = vld [vmem:[%s301 + $0x38] sm:$0xff]
      %2209 = vset.pattern.permute.xlu0 0
      %2210 = vperm.xlu0 %2209, %v2200
      %v2211 = vpop.permute.xlu0 %2210
      %2214 = vset.pattern.permute.xlu0 0
      %2215 = vperm.xlu0 %2214, %v2201
      %v2216 = vpop.permute.xlu0 %2215
      %2219 = vset.pattern.permute.xlu0 0
      %2220 = vperm.xlu0 %2219, %v2202
      %v2221 = vpop.permute.xlu0 %2220
      %2224 = vset.pattern.permute.xlu0 0
      %2225 = vperm.xlu0 %2224, %v2203
      %v2226 = vpop.permute.xlu0 %2225
      %2229 = vset.pattern.permute.xlu0 0
      %2230 = vperm.xlu0 %2229, %v2204
      %v2231 = vpop.permute.xlu0 %2230
      %2234 = vset.pattern.permute.xlu0 0
      %2235 = vperm.xlu0 %2234, %v2205
      %v2236 = vpop.permute.xlu0 %2235
      %2239 = vset.pattern.permute.xlu0 0
      %2240 = vperm.xlu0 %2239, %v2206
      %v2241 = vpop.permute.xlu0 %2240
      %2244 = vset.pattern.permute.xlu0 0
      %2245 = vperm.xlu0 %2244, %v2207
      %v2246 = vpop.permute.xlu0 %2245
      %v2248 = vmul.f32 %v2161, %v2211
      %v2249 = vmul.f32 %v2164, %v2216
      %v2250 = vmul.f32 %v2169, %v2221
      %v2251 = vmul.f32 %v2172, %v2226
      %v2252 = vmul.f32 %v2177, %v2231
      %v2253 = vmul.f32 %v2180, %v2236
      %v2254 = vmul.f32 %v2185, %v2241
      %v2255 = vmul.f32 %v2188, %v2246
      %2256 = vst.msk [vmem:[%s311] sm:$0xff] %vm2191, %v2248
      %2257 = vst.msk [vmem:[%s311 + $0x8] sm:$0xff] %vm2191, %v2249
      %2258 = vst.msk [vmem:[%s311 + $0x10] sm:$0xff] %vm2191, %v2250
      %2259 = vst.msk [vmem:[%s311 + $0x18] sm:$0xff] %vm2191, %v2251
      %2260 = vst.msk [vmem:[%s311 + $0x20] sm:$0xff] %vm2191, %v2252
      %2261 = vst.msk [vmem:[%s311 + $0x28] sm:$0xff] %vm2191, %v2253
      %2262 = vst.msk [vmem:[%s311 + $0x30] sm:$0xff] %vm2191, %v2254
      %2263 = vst.msk [vmem:[%s311 + $0x38] sm:$0xff] %vm2191, %v2255
      %p2264 = scmp.lt.s32.totalorder %s19, 1
      %s2265 = scalar_select %p2264, %s19, 1
      %s2266 = smul.addr %s2265, 8
      %s2267 = smul.addr %s2266, 8
      %s2268 = scalar_lea.vmem %s6, %s2267
      %p2269 = scmp.lt.s32.totalorder %s19, 1
      %s2270 = scalar_select %p2269, %s19, 1
      %s2271 = smul.addr %s2270, 8
      %s2272 = smul.addr %s2271, 8
      %s2273 = scalar_lea.vmem %s7, %s2272
      // Predicated region
      $region45: #{_lambda_.4} parent=43 // pred_check
        %p2274 = pneg %p173
      $region46: #{_lambda_.4} parent=43 // pred_check_branch
        %2276 = sbr.rel (%p2274) target = $region48
      $region47: #{_lambda_.4} parent=43 // pred_region
        _
      $region48: #{_lambda_.4} parent=43 // pred_fallthru
        _
      // Predicated region
      $region49: #{_lambda_.4} parent=43 // pred_check
        %p2277 = pneg %p199
      $region50: #{_lambda_.4} parent=43 // pred_check_branch
        %2279 = sbr.rel (%p2277) target = $region52
      $region51: #{_lambda_.4} parent=43 // pred_region
        _
      $region52: #{_lambda_.4} parent=43 // pred_fallthru
        _
    $region44: #{_lambda_.4} parent=5 // pred_fallthru
      _
    %p2280 = scmp.le.s32.totalorder 2, %s14
    // Predicated region
    $region53: #{_lambda_.4} parent=5 // pred_check
      %p2281 = pneg %p2280
    $region54: #{_lambda_.4} parent=5 // pred_check_branch
      %2283 = sbr.rel (%p2281) target = $region56
    $region55: #{_lambda_.4} parent=5 // pred_region
      %s2284 = ssub.s32 %s14, 2
      // Predicated region
      $region57: #{_lambda_.4} parent=55 // pred_check
        %p2285 = pneg %p179
      $region58: #{_lambda_.4} parent=55 // pred_check_branch
        %2287 = sbr.rel (%p2285) target = $region60
      $region59: #{_lambda_.4} parent=55 // pred_region
        %p2288 = scmp.lt.s32.totalorder %s20, 1
        %s2289 = scalar_select %p2288, %s20, 1
        %s2290 = smul.addr %s2289, 8
        %s2291 = smul.addr %s2290, 8
        %s2292 = scalar_lea.vmem %s6, %s2291
      $region60: #{_lambda_.4} parent=55 // pred_fallthru
        _
      // Predicated region
      $region61: #{_lambda_.4} parent=55 // pred_check
        %p2293 = pneg %p205
      $region62: #{_lambda_.4} parent=55 // pred_check_branch
        %2295 = sbr.rel (%p2293) target = $region64
      $region63: #{_lambda_.4} parent=55 // pred_region
        %p2296 = scmp.lt.s32.totalorder %s20, 1
        %s2297 = scalar_select %p2296, %s20, 1
        %s2298 = smul.addr %s2297, 8
        %s2299 = smul.addr %s2298, 8
        %s2300 = scalar_lea.vmem %s7, %s2299
      $region64: #{_lambda_.4} parent=55 // pred_fallthru
        _
    $region56: #{_lambda_.4} parent=5 // pred_fallthru
      _
  $region6: #{_lambda_.4} parent=0 // loop_footer
    %s18 = sadd.s32 1, %s14
  $region7: #{_lambda_.4} parent=0 // loop_footer_branch
    %13 = sbr.rel target = $region3
  $region8: #{_lambda_.4} parent=0 // loop_exit
    _

// kernel: _lambda_.3
$region0: #{_lambda_.3}
  #allocation0 [shape = 'u32[]', space=smem, size = 0x4, offset = 0x4, fixed_abs, tag = 'smem constant byte address 0x4 - core index']
  #allocation1 [shape = 'u32[144,128]{1,0:T(1,128)}', space=vmem, size = 0x12000, scoped, tag = 'internal scratch']
  #allocation2 [shape = 'bf16[18,18,4]{2,1,0:T(8,128)(2,1)}', space=vmem, size = 0x1b000, scoped, tag = 'scratch operand']
  #allocation3 [shape = 'f32[8,8,8]{2,1,0:T(8,128)}', space=vmem, size = 0x8000, scoped, tag = 'scratch operand']
  #allocation4 [shape = 'bf16[10,10,8]{2,1,0:T(8,128)(2,1)}', space=vmem, size = 0xa000, scoped, tag = 'scratch operand']
  %s0 = inlined_call_operand.vmem [shape: f32[2,16,16,4], index: 0, kind: input, shape index: {}]
  %s1 = inlined_call_operand.vmem [shape: bf16[9,4,8], index: 1, kind: input, shape index: {}]
  %s2 = inlined_call_operand.vmem [shape: f32[1,8], index: 2, kind: input, shape index: {}]
  %s3 = inlined_call_operand.vmem [shape: bf16[9,8,16], index: 3, kind: input, shape index: {}]
  %s4 = inlined_call_operand.vmem [shape: f32[1,16], index: 4, kind: input, shape index: {}]
  %s5 = inlined_call_operand.vmem [shape: f32[2,8,8,16], index: 5, kind: output, shape index: {}]
  %s6 = sld [smem:[#allocation0]]
  $region53: #{_lambda_.3} parent=0
    _
  %s8 = ssub.s32 1, %s6
  %s9 = scalar_select 0, %s8, %s6
  loop: start=0, step=1, limit=4
  $region2: #{_lambda_.3} parent=0 // loop_pre_header
    _
  $region3: #{_lambda_.3} parent=0 // loop_header
    %s11 = sphi 0, %s15
    %p12 = scmp.ge.s32.totalorder %s11, 4
    %s21 = sphi 0, %s23
    %s24 = sphi 0, %s21
    %s25 = sphi 0, %s24
    %s41 = sphi 0, %s25
    %s45 = sphi 0, %s45
    %s47 = sphi 0, %s45
    %s48 = sphi 0, %s47
    %s62 = sphi 0, %s48
    %s66 = sphi 0, %s66
    %s68 = sphi 0, %s66
    %s69 = sphi 0, %s68
    %s83 = sphi 0, %s69
    %s87 = sphi 0, %s87
    %s89 = sphi 0, %s87
    %s90 = sphi 0, %s89
    %s104 = sphi 0, %s90
    %s108 = sphi 0, %s108
    %s110 = sphi 0, %s108
    %s111 = sphi 0, %s110
    %s125 = sphi 0, %s111
    %s131 = sphi 0, %s133
    %s134 = sphi 0, %s131
    %s135 = sphi 0, %s134
    %s151 = sphi 0, %s135
  $region4: #{_lambda_.3} parent=0 // loop_header_branch
    %14 = sbr.rel (%p12) target = $region8
  $region5: #{_lambda_.3} parent=0 // loop_body
    %s16 = ssub.s32 %s11, 1
    %s17 = ssub.s32 %s11, 2
    %s18 = sadd.s32 %s11, 1
    %s19 = ssub.s32 %s11, %s18
    %p20 = scmp.eq.s32.totalorder %s19, 0
    %s22 = sadd.s32 %s21, 1
    %s23 = scalar_select %p20, %s21, %s22
    %p26 = pneg %p20
    %p27 = scmp.eq.s32.totalorder %s11, 1
    %p28 = por %p26, %p27
    %p29 = scmp.ne.s32.totalorder %s21, %s24
    %p30 = scmp.eq.s32.totalorder %s11, 0
    %p31 = por %p29, %p30
    %p32 = scmp.ne.s32.totalorder %s21, %s24
    %p33 = scmp.eq.s32.totalorder %s16, 1
    %p34 = por %p32, %p33
    %p35 = scmp.ne.s32.totalorder %s24, %s25
    %p36 = scmp.eq.s32.totalorder %s16, 0
    %p37 = por %p35, %p36
    %p38 = scmp.ne.s32.totalorder %s24, %s25
    %p39 = scmp.eq.s32.totalorder %s17, 1
    %p40 = por %p38, %p39
    %p42 = scmp.ne.s32.totalorder %s25, %s41
    %p43 = scmp.eq.s32.totalorder %s17, 0
    %p44 = por %p42, %p43
    %s46 = sadd.s32 %s45, 1
    %p49 = scmp.eq.s32.totalorder %s11, 1
    %p50 = scmp.ne.s32.totalorder %s45, %s47
    %p51 = scmp.eq.s32.totalorder %s11, 0
    %p52 = por %p50, %p51
    %p53 = scmp.ne.s32.totalorder %s45, %s47
    %p54 = scmp.eq.s32.totalorder %s16, 1
    %p55 = por %p53, %p54
    %p56 = scmp.ne.s32.totalorder %s47, %s48
    %p57 = scmp.eq.s32.totalorder %s16, 0
    %p58 = por %p56, %p57
    %p59 = scmp.ne.s32.totalorder %s47, %s48
    %p60 = scmp.eq.s32.totalorder %s17, 1
    %p61 = por %p59, %p60
    %p63 = scmp.ne.s32.totalorder %s48, %s62
    %p64 = scmp.eq.s32.totalorder %s17, 0
    %p65 = por %p63, %p64
    %s67 = sadd.s32 %s66, 1
    %p70 = scmp.eq.s32.totalorder %s11, 1
    %p71 = scmp.ne.s32.totalorder %s66, %s68
    %p72 = scmp.eq.s32.totalorder %s11, 0
    %p73 = por %p71, %p72
    %p74 = scmp.ne.s32.totalorder %s66, %s68
    %p75 = scmp.eq.s32.totalorder %s16, 1
    %p76 = por %p74, %p75
    %p77 = scmp.ne.s32.totalorder %s68, %s69
    %p78 = scmp.eq.s32.totalorder %s16, 0
    %p79 = por %p77, %p78
    %p80 = scmp.ne.s32.totalorder %s68, %s69
    %p81 = scmp.eq.s32.totalorder %s17, 1
    %p82 = por %p80, %p81
    %p84 = scmp.ne.s32.totalorder %s69, %s83
    %p85 = scmp.eq.s32.totalorder %s17, 0
    %p86 = por %p84, %p85
    %s88 = sadd.s32 %s87, 1
    %p91 = scmp.eq.s32.totalorder %s11, 1
    %p92 = scmp.ne.s32.totalorder %s87, %s89
    %p93 = scmp.eq.s32.totalorder %s11, 0
    %p94 = por %p92, %p93
    %p95 = scmp.ne.s32.totalorder %s87, %s89
    %p96 = scmp.eq.s32.totalorder %s16, 1
    %p97 = por %p95, %p96
    %p98 = scmp.ne.s32.totalorder %s89, %s90
    %p99 = scmp.eq.s32.totalorder %s16, 0
    %p100 = por %p98, %p99
    %p101 = scmp.ne.s32.totalorder %s89, %s90
    %p102 = scmp.eq.s32.totalorder %s17, 1
    %p103 = por %p101, %p102
    %p105 = scmp.ne.s32.totalorder %s90, %s104
    %p106 = scmp.eq.s32.totalorder %s17, 0
    %p107 = por %p105, %p106
    %s109 = sadd.s32 %s108, 1
    %p112 = scmp.eq.s32.totalorder %s11, 1
    %p113 = scmp.ne.s32.totalorder %s108, %s110
    %p114 = scmp.eq.s32.totalorder %s11, 0
    %p115 = por %p113, %p114
    %p116 = scmp.ne.s32.totalorder %s108, %s110
    %p117 = scmp.eq.s32.totalorder %s16, 1
    %p118 = por %p116, %p117
    %p119 = scmp.ne.s32.totalorder %s110, %s111
    %p120 = scmp.eq.s32.totalorder %s16, 0
    %p121 = por %p119, %p120
    %p122 = scmp.ne.s32.totalorder %s110, %s111
    %p123 = scmp.eq.s32.totalorder %s17, 1
    %p124 = por %p122, %p123
    %p126 = scmp.ne.s32.totalorder %s111, %s125
    %p127 = scmp.eq.s32.totalorder %s17, 0
    %p128 = por %p126, %p127
    %s129 = ssub.s32 %s11, %s18
    %p130 = scmp.eq.s32.totalorder %s129, 0
    %s132 = sadd.s32 %s131, 1
    %s133 = scalar_select %p130, %s131, %s132
    %p136 = pneg %p130
    %p137 = scmp.eq.s32.totalorder %s11, 1
    %p138 = por %p136, %p137
    %p139 = scmp.ne.s32.totalorder %s131, %s134
    %p140 = scmp.eq.s32.totalorder %s11, 0
    %p141 = por %p139, %p140
    %p142 = scmp.ne.s32.totalorder %s131, %s134
    %p143 = scmp.eq.s32.totalorder %s16, 1
    %p144 = por %p142, %p143
    %p145 = scmp.ne.s32.totalorder %s134, %s135
    %p146 = scmp.eq.s32.totalorder %s16, 0
    %p147 = por %p145, %p146
    %p148 = scmp.ne.s32.totalorder %s134, %s135
    %p149 = scmp.eq.s32.totalorder %s17, 1
    %p150 = por %p148, %p149
    %p152 = scmp.ne.s32.totalorder %s135, %s151
    %p153 = scmp.eq.s32.totalorder %s17, 0
    %p154 = por %p152, %p153
    %p155 = scmp.le.s32.totalorder 1, %s11
    %p156 = scmp.lt.s32.totalorder %s11, 3
    %p157 = pnand %p155, %p156
    %p158 = pneg %p157
    // Predicated region
    $region9: #{_lambda_.3} parent=5 // pred_check
      _
    $region10: #{_lambda_.3} parent=5 // pred_check_branch
      %160 = sbr.rel (%p157) target = $region12
    $region11: #{_lambda_.3} parent=5 // pred_region
      %s161 = ssub.s32 %s11, 1
      // Predicated region
      $region13: #{_lambda_.3} parent=11 // pred_check
        %p162 = pneg %p58
      $region14: #{_lambda_.3} parent=11 // pred_check_branch
        %164 = sbr.rel (%p162) target = $region16
      $region15: #{_lambda_.3} parent=11 // pred_region
        _
      $region16: #{_lambda_.3} parent=11 // pred_fallthru
        _
      // Predicated region
      $region17: #{_lambda_.3} parent=11 // pred_check
        %p165 = pneg %p79
      $region18: #{_lambda_.3} parent=11 // pred_check_branch
        %167 = sbr.rel (%p165) target = $region20
      $region19: #{_lambda_.3} parent=11 // pred_region
        _
      $region20: #{_lambda_.3} parent=11 // pred_fallthru
        _
      // Predicated region
      $region21: #{_lambda_.3} parent=11 // pred_check
        %p168 = pneg %p100
      $region22: #{_lambda_.3} parent=11 // pred_check_branch
        %170 = sbr.rel (%p168) target = $region24
      $region23: #{_lambda_.3} parent=11 // pred_region
        _
      $region24: #{_lambda_.3} parent=11 // pred_fallthru
        _
      // Predicated region
      $region25: #{_lambda_.3} parent=11 // pred_check
        %p171 = pneg %p121
      $region26: #{_lambda_.3} parent=11 // pred_check_branch
        %173 = sbr.rel (%p171) target = $region28
      $region27: #{_lambda_.3} parent=11 // pred_region
        _
      $region28: #{_lambda_.3} parent=11 // pred_fallthru
        _
    $region12: #{_lambda_.3} parent=5 // pred_fallthru
      _
    %p174 = scmp.lt.s32.totalorder %s11, 2
    // Predicated region
    $region29: #{_lambda_.3} parent=5 // pred_check
      %p175 = pneg %p174
    $region30: #{_lambda_.3} parent=5 // pred_check_branch
      %177 = sbr.rel (%p175) target = $region32
    $region31: #{_lambda_.3} parent=5 // pred_region
      // Predicated region
      $region33: #{_lambda_.3} parent=31 // pred_check
        %p178 = pneg %p31
      $region34: #{_lambda_.3} parent=31 // pred_check_branch
        %180 = sbr.rel (%p178) target = $region36
      $region35: #{_lambda_.3} parent=31 // pred_region
        %p181 = scmp.lt.s32.totalorder %s11, 1
        %s182 = scalar_select %p181, %s11, 1
        %s183 = smul.addr %s182, 32
        %s184 = smul.addr %s183, 8
        %s185 = scalar_lea.vmem %s0, %s184
      $region36: #{_lambda_.3} parent=31 // pred_fallthru
        _
    $region32: #{_lambda_.3} parent=5 // pred_fallthru
      _
    %p186 = scmp.le.s32.totalorder 1, %s11
    %p187 = scmp.lt.s32.totalorder %s11, 3
    %p188 = pnand %p186, %p187
    %p189 = pneg %p188
    // Predicated region
    $region37: #{_lambda_.3} parent=5 // pred_check
      _
    $region38: #{_lambda_.3} parent=5 // pred_check_branch
      %191 = sbr.rel (%p188) target = $region40
    $region39: #{_lambda_.3} parent=5 // pred_region
      %s192 = ssub.s32 %s11, 1
      %p193 = scmp.lt.s32.totalorder %s16, 1
      %s194 = scalar_select %p193, %s16, 1
      %s195 = smul.addr %s194, 32
      %s196 = smul.addr %s195, 8
      %s197 = scalar_lea.vmem %s0, %s196
      %p198 = pneg %p37
      %p199 = pneg %p34
      %p200 = pneg %p58
      %p201 = pneg %p55
      %p202 = pneg %p79
      %p203 = pneg %p76
      %p204 = pneg %p100
      %p205 = pneg %p97
      %p206 = pneg %p121
      %p207 = pneg %p118
      %p208 = pneg %p147
      %p209 = pneg %p144
      %p210 = scmp.lt.s32.totalorder %s16, 1
      %s211 = scalar_select %p210, %s16, 1
      %s212 = smul.addr %s211, 8
      %s213 = smul.addr %s212, 8
      %s214 = scalar_lea.vmem %s5, %s213
      %p215 = scmp.lt.s32.totalorder %s16, 1
      %s216 = scalar_select %p215, %s16, 1
      %s217 = smul.addr %s216, 32
      %s218 = smul.addr %s217, 8
      %s219 = scalar_lea.vmem %s0, %s218
      %p220 = scmp.lt.s32.totalorder %s16, 1
      %s221 = scalar_select %p220, %s16, 1
      %s222 = smul.addr %s221, 8
      %s223 = smul.addr %s222, 8
      %s224 = scalar_lea.vmem %s5, %s223
      %v226 = vld [vmem:[%s219] sm:$0xff]
      %v227 = vld [vmem:[%s219 + $0x8] sm:$0xff]
      %v228 = vld [vmem:[%s219 + $0x10] sm:$0xff]
      %v229 = vld [vmem:[%s219 + $0x18] sm:$0xff]
      %v230 = vld [vmem:[%s219 + $0x20] sm:$0xff]
      %v231 = vld [vmem:[%s219 + $0x28] sm:$0xff]
      %v232 = vld [vmem:[%s219 + $0x30] sm:$0xff]
      %v233 = vld [vmem:[%s219 + $0x38] sm:$0xff]
      %v234 = vld [vmem:[%s219 + $0x40] sm:$0xff]
      %v235 = vld [vmem:[%s219 + $0x48] sm:$0xff]
      %v236 = vld [vmem:[%s219 + $0x50] sm:$0xff]
      %v237 = vld [vmem:[%s219 + $0x58] sm:$0xff]
      %v238 = vld [vmem:[%s219 + $0x60] sm:$0xff]
      %v239 = vld [vmem:[%s219 + $0x68] sm:$0xff]
      %v240 = vld [vmem:[%s219 + $0x70] sm:$0xff]
      %v241 = vld [vmem:[%s219 + $0x78] sm:$0xff]
      %v242 = vld [vmem:[%s219 + $0x80] sm:$0xff]
      %v243 = vld [vmem:[%s219 + $0x88] sm:$0xff]
      %v244 = vld [vmem:[%s219 + $0x90] sm:$0xff]
      %v245 = vld [vmem:[%s219 + $0x98] sm:$0xff]
      %v246 = vld [vmem:[%s219 + $0xa0] sm:$0xff]
      %v247 = vld [vmem:[%s219 + $0xa8] sm:$0xff]
      %v248 = vld [vmem:[%s219 + $0xb0] sm:$0xff]
      %v249 = vld [vmem:[%s219 + $0xb8] sm:$0xff]
      %v250 = vld [vmem:[%s219 + $0xc0] sm:$0xff]
      %v251 = vld [vmem:[%s219 + $0xc8] sm:$0xff]
      %v252 = vld [vmem:[%s219 + $0xd0] sm:$0xff]
      %v253 = vld [vmem:[%s219 + $0xd8] sm:$0xff]
      %v254 = vld [vmem:[%s219 + $0xe0] sm:$0xff]
      %v255 = vld [vmem:[%s219 + $0xe8] sm:$0xff]
      %v256 = vld [vmem:[%s219 + $0xf0] sm:$0xff]
      %v257 = vld [vmem:[%s219 + $0xf8] sm:$0xff]
      %vm258 = vcmask 27648
      %259 = vst.msk [vmem:[#allocation2] sm:$0xf] %vm258, 0
      %260 = vst.msk [vmem:[#allocation2 + $0x4] sm:$0xf] %vm258, 0
      %vm261 = vcmask 24576
      %262 = vst.msk [vmem:[#allocation2 + $0x8] sm:$0x1] %vm261, 0
      %263 = vst.msk [vmem:[#allocation2 + $0xc] sm:$0xf] %vm258, 0
      %264 = vst.msk [vmem:[#allocation2 + $0x10] sm:$0xf] %vm258, 0
      %265 = vst.msk [vmem:[#allocation2 + $0x14] sm:$0x1] %vm261, 0
      %266 = vst.msk [vmem:[#allocation2 + $0x18] sm:$0xf] %vm258, 0
      %267 = vst.msk [vmem:[#allocation2 + $0x1c] sm:$0xf] %vm258, 0
      %268 = vst.msk [vmem:[#allocation2 + $0x20] sm:$0x1] %vm261, 0
      %269 = vst.msk [vmem:[#allocation2 + $0x24] sm:$0xf] %vm258, 0
      %270 = vst.msk [vmem:[#allocation2 + $0x28] sm:$0xf] %vm258, 0
      %271 = vst.msk [vmem:[#allocation2 + $0x2c] sm:$0x1] %vm261, 0
      %272 = vst.msk [vmem:[#allocation2 + $0x30] sm:$0xf] %vm258, 0
      %273 = vst.msk [vmem:[#allocation2 + $0x34] sm:$0xf] %vm258, 0
      %274 = vst.msk [vmem:[#allocation2 + $0x38] sm:$0x1] %vm261, 0
      %275 = vst.msk [vmem:[#allocation2 + $0x3c] sm:$0xf] %vm258, 0
      %276 = vst.msk [vmem:[#allocation2 + $0x40] sm:$0xf] %vm258, 0
      %277 = vst.msk [vmem:[#allocation2 + $0x44] sm:$0x1] %vm261, 0
      %278 = vst.msk [vmem:[#allocation2 + $0x48] sm:$0xf] %vm258, 0
      %279 = vst.msk [vmem:[#allocation2 + $0x4c] sm:$0xf] %vm258, 0
      %280 = vst.msk [vmem:[#allocation2 + $0x50] sm:$0x1] %vm261, 0
      %281 = vst.msk [vmem:[#allocation2 + $0x54] sm:$0xf] %vm258, 0
      %282 = vst.msk [vmem:[#allocation2 + $0x58] sm:$0xf] %vm258, 0
      %283 = vst.msk [vmem:[#allocation2 + $0x5c] sm:$0x1] %vm261, 0
      %284 = vst.msk [vmem:[#allocation2 + $0x60] sm:$0xf] %vm258, 0
      %285 = vst.msk [vmem:[#allocation2 + $0x64] sm:$0xf] %vm258, 0
      %286 = vst.msk [vmem:[#allocation2 + $0x68] sm:$0x1] %vm261, 0
      %287 = vst.msk [vmem:[#allocation2 + $0x6c] sm:$0xf] %vm258, 0
      %288 = vst.msk [vmem:[#allocation2 + $0x70] sm:$0xf] %vm258, 0
      %289 = vst.msk [vmem:[#allocation2 + $0x74] sm:$0x1] %vm261, 0
      %290 = vst.msk [vmem:[#allocation2 + $0x78] sm:$0xf] %vm258, 0
      %291 = vst.msk [vmem:[#allocation2 + $0x7c] sm:$0xf] %vm258, 0
      %292 = vst.msk [vmem:[#allocation2 + $0x80] sm:$0x1] %vm261, 0
      %293 = vst.msk [vmem:[#allocation2 + $0x84] sm:$0xf] %vm258, 0
      %294 = vst.msk [vmem:[#allocation2 + $0x88] sm:$0xf] %vm258, 0
      %295 = vst.msk [vmem:[#allocation2 + $0x8c] sm:$0x1] %vm261, 0
      %296 = vst.msk [vmem:[#allocation2 + $0x90] sm:$0xf] %vm258, 0
      %297 = vst.msk [vmem:[#allocation2 + $0x94] sm:$0xf] %vm258, 0
      %298 = vst.msk [vmem:[#allocation2 + $0x98] sm:$0x1] %vm261, 0
      %299 = vst.msk [vmem:[#allocation2 + $0x9c] sm:$0xf] %vm258, 0
      %300 = vst.msk [vmem:[#allocation2 + $0xa0] sm:$0xf] %vm258, 0
      %301 = vst.msk [vmem:[#allocation2 + $0xa4] sm:$0x1] %vm261, 0
      %302 = vst.msk [vmem:[#allocation2 + $0xa8] sm:$0xf] %vm258, 0
      %303 = vst.msk [vmem:[#allocation2 + $0xac] sm:$0xf] %vm258, 0
      %304 = vst.msk [vmem:[#allocation2 + $0xb0] sm:$0x1] %vm261, 0
      %305 = vst.msk [vmem:[#allocation2 + $0xb4] sm:$0xf] %vm258, 0
      %306 = vst.msk [vmem:[#allocation2 + $0xb8] sm:$0xf] %vm258, 0
      %307 = vst.msk [vmem:[#allocation2 + $0xbc] sm:$0x1] %vm261, 0
      %308 = vst.msk [vmem:[#allocation2 + $0xc0] sm:$0xf] %vm258, 0
      %309 = vst.msk [vmem:[#allocation2 + $0xc4] sm:$0xf] %vm258, 0
      %310 = vst.msk [vmem:[#allocation2 + $0xc8] sm:$0x1] %vm261, 0
      %311 = vst.msk [vmem:[#allocation2 + $0xcc] sm:$0xf] %vm258, 0
      %312 = vst.msk [vmem:[#allocation2 + $0xd0] sm:$0xf] %vm258, 0
      %313 = vst.msk [vmem:[#allocation2 + $0xd4] sm:$0x1] %vm261, 0
      %v314 = vpack.c.bf16 %v227, %v226
      %v315 = vpack.c.bf16 %v229, %v228
      %v316 = vpack.c.bf16 %v231, %v230
      %v317 = vpack.c.bf16 %v233, %v232
      %v318 = vpack.c.bf16 %v235, %v234
      %v319 = vpack.c.bf16 %v237, %v236
      %v320 = vpack.c.bf16 %v239, %v238
      %v321 = vpack.c.bf16 %v241, %v240
      %v322 = vpack.c.bf16 %v243, %v242
      %v323 = vpack.c.bf16 %v245, %v244
      %v324 = vpack.c.bf16 %v247, %v246
      %v325 = vpack.c.bf16 %v249, %v248
      %v326 = vpack.c.bf16 %v251, %v250
      %v327 = vpack.c.bf16 %v253, %v252
      %v328 = vpack.c.bf16 %v255, %v254
      %v329 = vpack.c.bf16 %v257, %v256
      %v346 = vunpack.c.l.b16 %v314
      %v347 = vunpack.c.h.b16 %v314
      %v348 = vunpack.c.l.b16 %v315
      %v349 = vunpack.c.h.b16 %v315
      %v350 = vunpack.c.l.b16 %v316
      %v351 = vunpack.c.h.b16 %v316
      %v352 = vunpack.c.l.b16 %v317
      %v353 = vunpack.c.h.b16 %v317
      %v354 = vunpack.c.l.b16 %v318
      %v355 = vunpack.c.h.b16 %v318
      %v356 = vunpack.c.l.b16 %v319
      %v357 = vunpack.c.h.b16 %v319
      %v358 = vunpack.c.l.b16 %v320
      %v359 = vunpack.c.h.b16 %v320
      %v360 = vunpack.c.l.b16 %v321
      %v361 = vunpack.c.h.b16 %v321
      %v362 = vunpack.c.l.b16 %v322
      %v363 = vunpack.c.h.b16 %v322
      %v364 = vunpack.c.l.b16 %v323
      %v365 = vunpack.c.h.b16 %v323
      %v366 = vunpack.c.l.b16 %v324
      %v367 = vunpack.c.h.b16 %v324
      %v368 = vunpack.c.l.b16 %v325
      %v369 = vunpack.c.h.b16 %v325
      %v370 = vunpack.c.l.b16 %v326
      %v371 = vunpack.c.h.b16 %v326
      %v372 = vunpack.c.l.b16 %v327
      %v373 = vunpack.c.h.b16 %v327
      %v374 = vunpack.c.l.b16 %v328
      %v375 = vunpack.c.h.b16 %v328
      %v376 = vunpack.c.l.b16 %v329
      %v377 = vunpack.c.h.b16 %v329
      %v378 = vpack.c.b16 %v346, %v346
      %v379 = vpack.c.b16 %v347, %v347
      %v380 = vpack.c.b16 %v348, %v348
      %v381 = vpack.c.b16 %v349, %v349
      %v382 = vpack.c.b16 %v350, %v350
      %v383 = vpack.c.b16 %v351, %v351
      %v384 = vpack.c.b16 %v352, %v352
      %v385 = vpack.c.b16 %v353, %v353
      %v386 = vpack.c.b16 %v354, %v354
      %v387 = vpack.c.b16 %v355, %v355
      %v388 = vpack.c.b16 %v356, %v356
      %v389 = vpack.c.b16 %v357, %v357
      %v390 = vpack.c.b16 %v358, %v358
      %v391 = vpack.c.b16 %v359, %v359
      %v392 = vpack.c.b16 %v360, %v360
      %v393 = vpack.c.b16 %v361, %v361
      %v394 = vpack.c.b16 %v362, %v362
      %v395 = vpack.c.b16 %v363, %v363
      %v396 = vpack.c.b16 %v364, %v364
      %v397 = vpack.c.b16 %v365, %v365
      %v398 = vpack.c.b16 %v366, %v366
      %v399 = vpack.c.b16 %v367, %v367
      %v400 = vpack.c.b16 %v368, %v368
      %v401 = vpack.c.b16 %v369, %v369
      %v402 = vpack.c.b16 %v370, %v370
      %v403 = vpack.c.b16 %v371, %v371
      %v404 = vpack.c.b16 %v372, %v372
      %v405 = vpack.c.b16 %v373, %v373
      %v406 = vpack.c.b16 %v374, %v374
      %v407 = vpack.c.b16 %v375, %v375
      %v408 = vpack.c.b16 %v376, %v376
      %v409 = vpack.c.b16 %v377, %v377
      %vm410 = vsmask.f32 256
      %vm411 = vsmask.f32 4368
      %vm412 = vmor %vm410, %vm411
      %v414 = vshrl.u32 %v378, 16
      %v416 = vrot.slane %v414, 7
      %v417 = vshll.u32 %v378, 16
      %v419 = vor.u32 %v416, %v417
      %v420 = vrot.slane %v416, 4
      %v422 = vshrl.u32 %v379, 16
      %v424 = vrot.slane %v422, 7
      %v425 = vshll.u32 %v379, 16
      %v427 = vor.u32 %v424, %v425
      %v428 = vsel %vm412, %v420, %v427
      %v429 = vrot.slane %v424, 4
      %v431 = vshrl.u32 %v380, 16
      %v433 = vrot.slane %v431, 7
      %v434 = vshll.u32 %v380, 16
      %v436 = vor.u32 %v433, %v434
      %v437 = vrot.slane %v433, 4
      %v439 = vshrl.u32 %v381, 16
      %v441 = vrot.slane %v439, 7
      %v442 = vshll.u32 %v381, 16
      %v444 = vor.u32 %v441, %v442
      %v445 = vsel %vm412, %v437, %v444
      %v446 = vrot.slane %v441, 4
      %v448 = vshrl.u32 %v382, 16
      %v450 = vrot.slane %v448, 7
      %v451 = vshll.u32 %v382, 16
      %v453 = vor.u32 %v450, %v451
      %v454 = vrot.slane %v450, 4
      %v456 = vshrl.u32 %v383, 16
      %v458 = vrot.slane %v456, 7
      %v459 = vshll.u32 %v383, 16
      %v461 = vor.u32 %v458, %v459
      %v462 = vsel %vm412, %v454, %v461
      %v463 = vrot.slane %v458, 4
      %v465 = vshrl.u32 %v384, 16
      %v467 = vrot.slane %v465, 7
      %v468 = vshll.u32 %v384, 16
      %v470 = vor.u32 %v467, %v468
      %v471 = vrot.slane %v467, 4
      %v473 = vshrl.u32 %v385, 16
      %v475 = vrot.slane %v473, 7
      %v476 = vshll.u32 %v385, 16
      %v478 = vor.u32 %v475, %v476
      %v479 = vsel %vm412, %v471, %v478
      %v480 = vrot.slane %v475, 4
      %v482 = vshrl.u32 %v386, 16
      %v484 = vrot.slane %v482, 7
      %v485 = vshll.u32 %v386, 16
      %v487 = vor.u32 %v484, %v485
      %v488 = vrot.slane %v484, 4
      %v490 = vshrl.u32 %v387, 16
      %v492 = vrot.slane %v490, 7
      %v493 = vshll.u32 %v387, 16
      %v495 = vor.u32 %v492, %v493
      %v496 = vsel %vm412, %v488, %v495
      %v497 = vrot.slane %v492, 4
      %v499 = vshrl.u32 %v388, 16
      %v501 = vrot.slane %v499, 7
      %v502 = vshll.u32 %v388, 16
      %v504 = vor.u32 %v501, %v502
      %v505 = vrot.slane %v501, 4
      %v507 = vshrl.u32 %v389, 16
      %v509 = vrot.slane %v507, 7
      %v510 = vshll.u32 %v389, 16
      %v512 = vor.u32 %v509, %v510
      %v513 = vsel %vm412, %v505, %v512
      %v514 = vrot.slane %v509, 4
      %v516 = vshrl.u32 %v390, 16
      %v518 = vrot.slane %v516, 7
      %v519 = vshll.u32 %v390, 16
      %v521 = vor.u32 %v518, %v519
      %v522 = vrot.slane %v518, 4
      %v524 = vshrl.u32 %v391, 16
      %v526 = vrot.slane %v524, 7
      %v527 = vshll.u32 %v391, 16
      %v529 = vor.u32 %v526, %v527
      %v530 = vsel %vm412, %v522, %v529
      %v531 = vrot.slane %v526, 4
      %v533 = vshrl.u32 %v392, 16
      %v535 = vrot.slane %v533, 7
      %v536 = vshll.u32 %v392, 16
      %v538 = vor.u32 %v535, %v536
      %v539 = vrot.slane %v535, 4
      %v541 = vshrl.u32 %v393, 16
      %v543 = vrot.slane %v541, 7
      %v544 = vshll.u32 %v393, 16
      %v546 = vor.u32 %v543, %v544
      %v547 = vsel %vm412, %v539, %v546
      %v548 = vrot.slane %v543, 4
      %v550 = vshrl.u32 %v394, 16
      %v552 = vrot.slane %v550, 7
      %v553 = vshll.u32 %v394, 16
      %v555 = vor.u32 %v552, %v553
      %v556 = vrot.slane %v552, 4
      %v558 = vshrl.u32 %v395, 16
      %v560 = vrot.slane %v558, 7
      %v561 = vshll.u32 %v395, 16
      %v563 = vor.u32 %v560, %v561
      %v564 = vsel %vm412, %v556, %v563
      %v565 = vrot.slane %v560, 4
      %v567 = vshrl.u32 %v396, 16
      %v569 = vrot.slane %v567, 7
      %v570 = vshll.u32 %v396, 16
      %v572 = vor.u32 %v569, %v570
      %v573 = vrot.slane %v569, 4
      %v575 = vshrl.u32 %v397, 16
      %v577 = vrot.slane %v575, 7
      %v578 = vshll.u32 %v397, 16
      %v580 = vor.u32 %v577, %v578
      %v581 = vsel %vm412, %v573, %v580
      %v582 = vrot.slane %v577, 4
      %v584 = vshrl.u32 %v398, 16
      %v586 = vrot.slane %v584, 7
      %v587 = vshll.u32 %v398, 16
      %v589 = vor.u32 %v586, %v587
      %v590 = vrot.slane %v586, 4
      %v592 = vshrl.u32 %v399, 16
      %v594 = vrot.slane %v592, 7
      %v595 = vshll.u32 %v399, 16
      %v597 = vor.u32 %v594, %v595
      %v598 = vsel %vm412, %v590, %v597
      %v599 = vrot.slane %v594, 4
      %v601 = vshrl.u32 %v400, 16
      %v603 = vrot.slane %v601, 7
      %v604 = vshll.u32 %v400, 16
      %v606 = vor.u32 %v603, %v604
      %v607 = vrot.slane %v603, 4
      %v609 = vshrl.u32 %v401, 16
      %v611 = vrot.slane %v609, 7
      %v612 = vshll.u32 %v401, 16
      %v614 = vor.u32 %v611, %v612
      %v615 = vsel %vm412, %v607, %v614
      %v616 = vrot.slane %v611, 4
      %v618 = vshrl.u32 %v402, 16
      %v620 = vrot.slane %v618, 7
      %v621 = vshll.u32 %v402, 16
      %v623 = vor.u32 %v620, %v621
      %v624 = vrot.slane %v620, 4
      %v626 = vshrl.u32 %v403, 16
      %v628 = vrot.slane %v626, 7
      %v629 = vshll.u32 %v403, 16
      %v631 = vor.u32 %v628, %v629
      %v632 = vsel %vm412, %v624, %v631
      %v633 = vrot.slane %v628, 4
      %v635 = vshrl.u32 %v404, 16
      %v637 = vrot.slane %v635, 7
      %v638 = vshll.u32 %v404, 16
      %v640 = vor.u32 %v637, %v638
      %v641 = vrot.slane %v637, 4
      %v643 = vshrl.u32 %v405, 16
      %v645 = vrot.slane %v643, 7
      %v646 = vshll.u32 %v405, 16
      %v648 = vor.u32 %v645, %v646
      %v649 = vsel %vm412, %v641, %v648
      %v650 = vrot.slane %v645, 4
      %v652 = vshrl.u32 %v406, 16
      %v654 = vrot.slane %v652, 7
      %v655 = vshll.u32 %v406, 16
      %v657 = vor.u32 %v654, %v655
      %v658 = vrot.slane %v654, 4
      %v660 = vshrl.u32 %v407, 16
      %v662 = vrot.slane %v660, 7
      %v663 = vshll.u32 %v407, 16
      %v665 = vor.u32 %v662, %v663
      %v666 = vsel %vm412, %v658, %v665
      %v667 = vrot.slane %v662, 4
      %v669 = vshrl.u32 %v408, 16
      %v671 = vrot.slane %v669, 7
      %v672 = vshll.u32 %v408, 16
      %v674 = vor.u32 %v671, %v672
      %v675 = vrot.slane %v671, 4
      %v677 = vshrl.u32 %v409, 16
      %v679 = vrot.slane %v677, 7
      %v680 = vshll.u32 %v409, 16
      %v682 = vor.u32 %v679, %v680
      %v683 = vsel %vm412, %v675, %v682
      %v684 = vrot.slane %v679, 4
      %s733 = scalar_lea.vmem [#allocation2], 12
      %vm734 = vcmask 27648
      %vm735 = vsmask.f32 7938
      %vm736 = vmand %vm734, %vm735
      %v737 = vld [vmem:[%s733] sm:$0xf]
      %v738 = vsel %vm736, %v419, %v737
      %739 = vst [vmem:[%s733] sm:$0xf] %v738
      %740 = vst.msk [vmem:[%s733 + $0x4] sm:$0xf] %vm258, %v428
      %vm741 = vcmask 24576
      %vm742 = vmand %vm741, %vm410
      %v743 = vld [vmem:[%s733 + $0x8] sm:$0x1]
      %v744 = vsel %vm742, %v429, %v743
      %745 = vst [vmem:[%s733 + $0x8] sm:$0x1] %v744
      %v746 = vld [vmem:[%s733 + $0xc] sm:$0xf]
      %v747 = vsel %vm736, %v436, %v746
      %748 = vst [vmem:[%s733 + $0xc] sm:$0xf] %v747
      %749 = vst.msk [vmem:[%s733 + $0x10] sm:$0xf] %vm258, %v445
      %v750 = vld [vmem:[%s733 + $0x14] sm:$0x1]
      %v751 = vsel %vm742, %v446, %v750
      %752 = vst [vmem:[%s733 + $0x14] sm:$0x1] %v751
      %v753 = vld [vmem:[%s733 + $0x18] sm:$0xf]
      %v754 = vsel %vm736, %v453, %v753
      %755 = vst [vmem:[%s733 + $0x18] sm:$0xf] %v754
      %756 = vst.msk [vmem:[%s733 + $0x1c] sm:$0xf] %vm258, %v462
      %v757 = vld [vmem:[%s733 + $0x20] sm:$0x1]
      %v758 = vsel %vm742, %v463, %v757
      %759 = vst [vmem:[%s733 + $0x20] sm:$0x1] %v758
      %v760 = vld [vmem:[%s733 + $0x24] sm:$0xf]
      %v761 = vsel %vm736, %v470, %v760
      %762 = vst [vmem:[%s733 + $0x24] sm:$0xf] %v761
      %763 = vst.msk [vmem:[%s733 + $0x28] sm:$0xf] %vm258, %v479
      %v764 = vld [vmem:[%s733 + $0x2c] sm:$0x1]
      %v765 = vsel %vm742, %v480, %v764
      %766 = vst [vmem:[%s733 + $0x2c] sm:$0x1] %v765
      %v767 = vld [vmem:[%s733 + $0x30] sm:$0xf]
      %v768 = vsel %vm736, %v487, %v767
      %769 = vst [vmem:[%s733 + $0x30] sm:$0xf] %v768
      %770 = vst.msk [vmem:[%s733 + $0x34] sm:$0xf] %vm258, %v496
      %v771 = vld [vmem:[%s733 + $0x38] sm:$0x1]
      %v772 = vsel %vm742, %v497, %v771
      %773 = vst [vmem:[%s733 + $0x38] sm:$0x1] %v772
      %v774 = vld [vmem:[%s733 + $0x3c] sm:$0xf]
      %v775 = vsel %vm736, %v504, %v774
      %776 = vst [vmem:[%s733 + $0x3c] sm:$0xf] %v775
      %777 = vst.msk [vmem:[%s733 + $0x40] sm:$0xf] %vm258, %v513
      %v778 = vld [vmem:[%s733 + $0x44] sm:$0x1]
      %v779 = vsel %vm742, %v514, %v778
      %780 = vst [vmem:[%s733 + $0x44] sm:$0x1] %v779
      %v781 = vld [vmem:[%s733 + $0x48] sm:$0xf]
      %v782 = vsel %vm736, %v521, %v781
      %783 = vst [vmem:[%s733 + $0x48] sm:$0xf] %v782
      %784 = vst.msk [vmem:[%s733 + $0x4c] sm:$0xf] %vm258, %v530
      %v785 = vld [vmem:[%s733 + $0x50] sm:$0x1]
      %v786 = vsel %vm742, %v531, %v785
      %787 = vst [vmem:[%s733 + $0x50] sm:$0x1] %v786
      %v788 = vld [vmem:[%s733 + $0x54] sm:$0xf]
      %v789 = vsel %vm736, %v538, %v788
      %790 = vst [vmem:[%s733 + $0x54] sm:$0xf] %v789
      %791 = vst.msk [vmem:[%s733 + $0x58] sm:$0xf] %vm258, %v547
      %v792 = vld [vmem:[%s733 + $0x5c] sm:$0x1]
      %v793 = vsel %vm742, %v548, %v792
      %794 = vst [vmem:[%s733 + $0x5c] sm:$0x1] %v793
      %v795 = vld [vmem:[%s733 + $0x60] sm:$0xf]
      %v796 = vsel %vm736, %v555, %v795
      %797 = vst [vmem:[%s733 + $0x60] sm:$0xf] %v796
      %798 = vst.msk [vmem:[%s733 + $0x64] sm:$0xf] %vm258, %v564
      %v799 = vld [vmem:[%s733 + $0x68] sm:$0x1]
      %v800 = vsel %vm742, %v565, %v799
      %801 = vst [vmem:[%s733 + $0x68] sm:$0x1] %v800
      %v802 = vld [vmem:[%s733 + $0x6c] sm:$0xf]
      %v803 = vsel %vm736, %v572, %v802
      %804 = vst [vmem:[%s733 + $0x6c] sm:$0xf] %v803
      %805 = vst.msk [vmem:[%s733 + $0x70] sm:$0xf] %vm258, %v581
      %v806 = vld [vmem:[%s733 + $0x74] sm:$0x1]
      %v807 = vsel %vm742, %v582, %v806
      %808 = vst [vmem:[%s733 + $0x74] sm:$0x1] %v807
      %v809 = vld [vmem:[%s733 + $0x78] sm:$0xf]
      %v810 = vsel %vm736, %v589, %v809
      %811 = vst [vmem:[%s733 + $0x78] sm:$0xf] %v810
      %812 = vst.msk [vmem:[%s733 + $0x7c] sm:$0xf] %vm258, %v598
      %v813 = vld [vmem:[%s733 + $0x80] sm:$0x1]
      %v814 = vsel %vm742, %v599, %v813
      %815 = vst [vmem:[%s733 + $0x80] sm:$0x1] %v814
      %v816 = vld [vmem:[%s733 + $0x84] sm:$0xf]
      %v817 = vsel %vm736, %v606, %v816
      %818 = vst [vmem:[%s733 + $0x84] sm:$0xf] %v817
      %819 = vst.msk [vmem:[%s733 + $0x88] sm:$0xf] %vm258, %v615
      %v820 = vld [vmem:[%s733 + $0x8c] sm:$0x1]
      %v821 = vsel %vm742, %v616, %v820
      %822 = vst [vmem:[%s733 + $0x8c] sm:$0x1] %v821
      %v823 = vld [vmem:[%s733 + $0x90] sm:$0xf]
      %v824 = vsel %vm736, %v623, %v823
      %825 = vst [vmem:[%s733 + $0x90] sm:$0xf] %v824
      %826 = vst.msk [vmem:[%s733 + $0x94] sm:$0xf] %vm258, %v632
      %v827 = vld [vmem:[%s733 + $0x98] sm:$0x1]
      %v828 = vsel %vm742, %v633, %v827
      %829 = vst [vmem:[%s733 + $0x98] sm:$0x1] %v828
      %v830 = vld [vmem:[%s733 + $0x9c] sm:$0xf]
      %v831 = vsel %vm736, %v640, %v830
      %832 = vst [vmem:[%s733 + $0x9c] sm:$0xf] %v831
      %833 = vst.msk [vmem:[%s733 + $0xa0] sm:$0xf] %vm258, %v649
      %v834 = vld [vmem:[%s733 + $0xa4] sm:$0x1]
      %v835 = vsel %vm742, %v650, %v834
      %836 = vst [vmem:[%s733 + $0xa4] sm:$0x1] %v835
      %v837 = vld [vmem:[%s733 + $0xa8] sm:$0xf]
      %v838 = vsel %vm736, %v657, %v837
      %839 = vst [vmem:[%s733 + $0xa8] sm:$0xf] %v838
      %840 = vst.msk [vmem:[%s733 + $0xac] sm:$0xf] %vm258, %v666
      %v841 = vld [vmem:[%s733 + $0xb0] sm:$0x1]
      %v842 = vsel %vm742, %v667, %v841
      %843 = vst [vmem:[%s733 + $0xb0] sm:$0x1] %v842
      %v844 = vld [vmem:[%s733 + $0xb4] sm:$0xf]
      %v845 = vsel %vm736, %v674, %v844
      %846 = vst [vmem:[%s733 + $0xb4] sm:$0xf] %v845
      %847 = vst.msk [vmem:[%s733 + $0xb8] sm:$0xf] %vm258, %v683
      %v848 = vld [vmem:[%s733 + $0xbc] sm:$0x1]
      %v849 = vsel %vm742, %v684, %v848
      %850 = vst [vmem:[%s733 + $0xbc] sm:$0x1] %v849
      %v851 = vld [vmem:[#allocation2] sm:$0xf]
      %v852 = vld [vmem:[#allocation2 + $0x4] sm:$0xf]
      %v853 = vld [vmem:[#allocation2 + $0xc] sm:$0xf]
      %v854 = vld [vmem:[#allocation2 + $0x10] sm:$0xf]
      %v855 = vld [vmem:[#allocation2 + $0x18] sm:$0xf]
      %v856 = vld [vmem:[#allocation2 + $0x1c] sm:$0xf]
      %v857 = vld [vmem:[#allocation2 + $0x24] sm:$0xf]
      %v858 = vld [vmem:[#allocation2 + $0x28] sm:$0xf]
      %v859 = vld [vmem:[#allocation2 + $0x30] sm:$0xf]
      %v860 = vld [vmem:[#allocation2 + $0x34] sm:$0xf]
      %v861 = vld [vmem:[#allocation2 + $0x3c] sm:$0xf]
      %v862 = vld [vmem:[#allocation2 + $0x40] sm:$0xf]
      %v863 = vld [vmem:[#allocation2 + $0x48] sm:$0xf]
      %v864 = vld [vmem:[#allocation2 + $0x4c] sm:$0xf]
      %v865 = vld [vmem:[#allocation2 + $0x54] sm:$0xf]
      %v866 = vld [vmem:[#allocation2 + $0x58] sm:$0xf]
      %v867 = vld [vmem:[#allocation2 + $0x60] sm:$0xf]
      %v868 = vld [vmem:[#allocation2 + $0x64] sm:$0xf]
      %v869 = vld [vmem:[#allocation2 + $0x6c] sm:$0xf]
      %v870 = vld [vmem:[#allocation2 + $0x70] sm:$0xf]
      %v871 = vld [vmem:[#allocation2 + $0x78] sm:$0xf]
      %v872 = vld [vmem:[#allocation2 + $0x7c] sm:$0xf]
      %v873 = vld [vmem:[#allocation2 + $0x84] sm:$0xf]
      %v874 = vld [vmem:[#allocation2 + $0x88] sm:$0xf]
      %v875 = vld [vmem:[#allocation2 + $0x90] sm:$0xf]
      %v876 = vld [vmem:[#allocation2 + $0x94] sm:$0xf]
      %v877 = vld [vmem:[#allocation2 + $0x9c] sm:$0xf]
      %v878 = vld [vmem:[#allocation2 + $0xa0] sm:$0xf]
      %v879 = vld [vmem:[#allocation2 + $0xa8] sm:$0xf]
      %v880 = vld [vmem:[#allocation2 + $0xac] sm:$0xf]
      %v881 = vld [vmem:[#allocation2 + $0xb4] sm:$0xf]
      %v882 = vld [vmem:[#allocation2 + $0xb8] sm:$0xf]
      %v883 = vld [vmem:[%s1] sm:$0x3]
      %v884 = vld [vmem:[#allocation2 + $0x8] sm:$0x1]
      %v885 = vld [vmem:[#allocation2 + $0x14] sm:$0x1]
      %v886 = vld [vmem:[#allocation2 + $0x20] sm:$0x1]
      %v887 = vld [vmem:[#allocation2 + $0x2c] sm:$0x1]
      %v888 = vld [vmem:[#allocation2 + $0x38] sm:$0x1]
      %v889 = vld [vmem:[#allocation2 + $0x44] sm:$0x1]
      %v890 = vld [vmem:[#allocation2 + $0x50] sm:$0x1]
      %v891 = vld [vmem:[#allocation2 + $0x5c] sm:$0x1]
      %v892 = vld [vmem:[#allocation2 + $0x68] sm:$0x1]
      %v893 = vld [vmem:[#allocation2 + $0x74] sm:$0x1]
      %v894 = vld [vmem:[#allocation2 + $0x80] sm:$0x1]
      %v895 = vld [vmem:[#allocation2 + $0x8c] sm:$0x1]
      %v896 = vld [vmem:[#allocation2 + $0x98] sm:$0x1]
      %v897 = vld [vmem:[#allocation2 + $0xa4] sm:$0x1]
      %v898 = vld [vmem:[#allocation2 + $0xb0] sm:$0x1]
      %v899 = vld [vmem:[#allocation2 + $0xbc] sm:$0x1]
      %vm900 = vsmask.f32 3328
      %vm901 = vsmask.f32 7440
      %vm902 = vmor %vm900, %vm901
      %v904 = vshrl.u32 %v851, 16
      %v906 = vrot.slane %v904, 4
      %v907 = vshll.u32 %v851, 16
      %v909 = vrot.slane %v907, 5
      %v910 = vor.u32 %v906, %v909
      %v911 = vrot.slane %v910, 4
      %v913 = vshll.u32 %v852, 16
      %v915 = vrot.slane %v913, 5
      %v916 = vsel %vm902, %v911, %v915
      %v917 = vshrl.u32 %v852, 16
      %v919 = vrot.slane %v917, 4
      %v920 = vor.u32 %v919, %v915
      %v921 = vrot.slane %v920, 4
      %v923 = vshll.u32 %v884, 16
      %v925 = vrot.slane %v923, 5
      %v926 = vsel %vm902, %v921, %v925
      %v928 = vshrl.u32 %v853, 16
      %v930 = vrot.slane %v928, 4
      %v931 = vshll.u32 %v853, 16
      %v933 = vrot.slane %v931, 5
      %v934 = vor.u32 %v930, %v933
      %v935 = vrot.slane %v934, 4
      %v937 = vshll.u32 %v854, 16
      %v939 = vrot.slane %v937, 5
      %v940 = vsel %vm902, %v935, %v939
      %v941 = vshrl.u32 %v854, 16
      %v943 = vrot.slane %v941, 4
      %v944 = vor.u32 %v943, %v939
      %v945 = vrot.slane %v944, 4
      %v947 = vshll.u32 %v885, 16
      %v949 = vrot.slane %v947, 5
      %v950 = vsel %vm902, %v945, %v949
      %v952 = vshrl.u32 %v855, 16
      %v954 = vrot.slane %v952, 4
      %v955 = vshll.u32 %v855, 16
      %v957 = vrot.slane %v955, 5
      %v958 = vor.u32 %v954, %v957
      %v959 = vrot.slane %v958, 4
      %v961 = vshll.u32 %v856, 16
      %v963 = vrot.slane %v961, 5
      %v964 = vsel %vm902, %v959, %v963
      %v965 = vshrl.u32 %v856, 16
      %v967 = vrot.slane %v965, 4
      %v968 = vor.u32 %v967, %v963
      %v969 = vrot.slane %v968, 4
      %v971 = vshll.u32 %v886, 16
      %v973 = vrot.slane %v971, 5
      %v974 = vsel %vm902, %v969, %v973
      %v976 = vshrl.u32 %v857, 16
      %v978 = vrot.slane %v976, 4
      %v979 = vshll.u32 %v857, 16
      %v981 = vrot.slane %v979, 5
      %v982 = vor.u32 %v978, %v981
      %v983 = vrot.slane %v982, 4
      %v985 = vshll.u32 %v858, 16
      %v987 = vrot.slane %v985, 5
      %v988 = vsel %vm902, %v983, %v987
      %v989 = vshrl.u32 %v858, 16
      %v991 = vrot.slane %v989, 4
      %v992 = vor.u32 %v991, %v987
      %v993 = vrot.slane %v992, 4
      %v995 = vshll.u32 %v887, 16
      %v997 = vrot.slane %v995, 5
      %v998 = vsel %vm902, %v993, %v997
      %v1000 = vshrl.u32 %v859, 16
      %v1002 = vrot.slane %v1000, 4
      %v1003 = vshll.u32 %v859, 16
      %v1005 = vrot.slane %v1003, 5
      %v1006 = vor.u32 %v1002, %v1005
      %v1007 = vrot.slane %v1006, 4
      %v1009 = vshll.u32 %v860, 16
      %v1011 = vrot.slane %v1009, 5
      %v1012 = vsel %vm902, %v1007, %v1011
      %v1013 = vshrl.u32 %v860, 16
      %v1015 = vrot.slane %v1013, 4
      %v1016 = vor.u32 %v1015, %v1011
      %v1017 = vrot.slane %v1016, 4
      %v1019 = vshll.u32 %v888, 16
      %v1021 = vrot.slane %v1019, 5
      %v1022 = vsel %vm902, %v1017, %v1021
      %v1024 = vshrl.u32 %v861, 16
      %v1026 = vrot.slane %v1024, 4
      %v1027 = vshll.u32 %v861, 16
      %v1029 = vrot.slane %v1027, 5
      %v1030 = vor.u32 %v1026, %v1029
      %v1031 = vrot.slane %v1030, 4
      %v1033 = vshll.u32 %v862, 16
      %v1035 = vrot.slane %v1033, 5
      %v1036 = vsel %vm902, %v1031, %v1035
      %v1037 = vshrl.u32 %v862, 16
      %v1039 = vrot.slane %v1037, 4
      %v1040 = vor.u32 %v1039, %v1035
      %v1041 = vrot.slane %v1040, 4
      %v1043 = vshll.u32 %v889, 16
      %v1045 = vrot.slane %v1043, 5
      %v1046 = vsel %vm902, %v1041, %v1045
      %v1048 = vshrl.u32 %v863, 16
      %v1050 = vrot.slane %v1048, 4
      %v1051 = vshll.u32 %v863, 16
      %v1053 = vrot.slane %v1051, 5
      %v1054 = vor.u32 %v1050, %v1053
      %v1055 = vrot.slane %v1054, 4
      %v1057 = vshll.u32 %v864, 16
      %v1059 = vrot.slane %v1057, 5
      %v1060 = vsel %vm902, %v1055, %v1059
      %v1061 = vshrl.u32 %v864, 16
      %v1063 = vrot.slane %v1061, 4
      %v1064 = vor.u32 %v1063, %v1059
      %v1065 = vrot.slane %v1064, 4
      %v1067 = vshll.u32 %v890, 16
      %v1069 = vrot.slane %v1067, 5
      %v1070 = vsel %vm902, %v1065, %v1069
      %v1072 = vshrl.u32 %v865, 16
      %v1074 = vrot.slane %v1072, 4
      %v1075 = vshll.u32 %v865, 16
      %v1077 = vrot.slane %v1075, 5
      %v1078 = vor.u32 %v1074, %v1077
      %v1079 = vrot.slane %v1078, 4
      %v1081 = vshll.u32 %v866, 16
      %v1083 = vrot.slane %v1081, 5
      %v1084 = vsel %vm902, %v1079, %v1083
      %v1085 = vshrl.u32 %v866, 16
      %v1087 = vrot.slane %v1085, 4
      %v1088 = vor.u32 %v1087, %v1083
      %v1089 = vrot.slane %v1088, 4
      %v1091 = vshll.u32 %v891, 16
      %v1093 = vrot.slane %v1091, 5
      %v1094 = vsel %vm902, %v1089, %v1093
      %v1096 = vshrl.u32 %v867, 16
      %v1098 = vrot.slane %v1096, 4
      %v1099 = vshll.u32 %v867, 16
      %v1101 = vrot.slane %v1099, 5
      %v1102 = vor.u32 %v1098, %v1101
      %v1103 = vrot.slane %v1102, 4
      %v1105 = vshll.u32 %v868, 16
      %v1107 = vrot.slane %v1105, 5
      %v1108 = vsel %vm902, %v1103, %v1107
      %v1109 = vshrl.u32 %v868, 16
      %v1111 = vrot.slane %v1109, 4
      %v1112 = vor.u32 %v1111, %v1107
      %v1113 = vrot.slane %v1112, 4
      %v1115 = vshll.u32 %v892, 16
      %v1117 = vrot.slane %v1115, 5
      %v1118 = vsel %vm902, %v1113, %v1117
      %v1120 = vshrl.u32 %v869, 16
      %v1122 = vrot.slane %v1120, 4
      %v1123 = vshll.u32 %v869, 16
      %v1125 = vrot.slane %v1123, 5
      %v1126 = vor.u32 %v1122, %v1125
      %v1127 = vrot.slane %v1126, 4
      %v1129 = vshll.u32 %v870, 16
      %v1131 = vrot.slane %v1129, 5
      %v1132 = vsel %vm902, %v1127, %v1131
      %v1133 = vshrl.u32 %v870, 16
      %v1135 = vrot.slane %v1133, 4
      %v1136 = vor.u32 %v1135, %v1131
      %v1137 = vrot.slane %v1136, 4
      %v1139 = vshll.u32 %v893, 16
      %v1141 = vrot.slane %v1139, 5
      %v1142 = vsel %vm902, %v1137, %v1141
      %v1144 = vshrl.u32 %v871, 16
      %v1146 = vrot.slane %v1144, 4
      %v1147 = vshll.u32 %v871, 16
      %v1149 = vrot.slane %v1147, 5
      %v1150 = vor.u32 %v1146, %v1149
      %v1151 = vrot.slane %v1150, 4
      %v1153 = vshll.u32 %v872, 16
      %v1155 = vrot.slane %v1153, 5
      %v1156 = vsel %vm902, %v1151, %v1155
      %v1157 = vshrl.u32 %v872, 16
      %v1159 = vrot.slane %v1157, 4
      %v1160 = vor.u32 %v1159, %v1155
      %v1161 = vrot.slane %v1160, 4
      %v1163 = vshll.u32 %v894, 16
      %v1165 = vrot.slane %v1163, 5
      %v1166 = vsel %vm902, %v1161, %v1165
      %v1168 = vshrl.u32 %v873, 16
      %v1170 = vrot.slane %v1168, 4
      %v1171 = vshll.u32 %v873, 16
      %v1173 = vrot.slane %v1171, 5
      %v1174 = vor.u32 %v1170, %v1173
      %v1175 = vrot.slane %v1174, 4
      %v1177 = vshll.u32 %v874, 16
      %v1179 = vrot.slane %v1177, 5
      %v1180 = vsel %vm902, %v1175, %v1179
      %v1181 = vshrl.u32 %v874, 16
      %v1183 = vrot.slane %v1181, 4
      %v1184 = vor.u32 %v1183, %v1179
      %v1185 = vrot.slane %v1184, 4
      %v1187 = vshll.u32 %v895, 16
      %v1189 = vrot.slane %v1187, 5
      %v1190 = vsel %vm902, %v1185, %v1189
      %v1192 = vshrl.u32 %v875, 16
      %v1194 = vrot.slane %v1192, 4
      %v1195 = vshll.u32 %v875, 16
      %v1197 = vrot.slane %v1195, 5
      %v1198 = vor.u32 %v1194, %v1197
      %v1199 = vrot.slane %v1198, 4
      %v1201 = vshll.u32 %v876, 16
      %v1203 = vrot.slane %v1201, 5
      %v1204 = vsel %vm902, %v1199, %v1203
      %v1205 = vshrl.u32 %v876, 16
      %v1207 = vrot.slane %v1205, 4
      %v1208 = vor.u32 %v1207, %v1203
      %v1209 = vrot.slane %v1208, 4
      %v1211 = vshll.u32 %v896, 16
      %v1213 = vrot.slane %v1211, 5
      %v1214 = vsel %vm902, %v1209, %v1213
      %v1216 = vshrl.u32 %v877, 16
      %v1218 = vrot.slane %v1216, 4
      %v1219 = vshll.u32 %v877, 16
      %v1221 = vrot.slane %v1219, 5
      %v1222 = vor.u32 %v1218, %v1221
      %v1223 = vrot.slane %v1222, 4
      %v1225 = vshll.u32 %v878, 16
      %v1227 = vrot.slane %v1225, 5
      %v1228 = vsel %vm902, %v1223, %v1227
      %v1229 = vshrl.u32 %v878, 16
      %v1231 = vrot.slane %v1229, 4
      %v1232 = vor.u32 %v1231, %v1227
      %v1233 = vrot.slane %v1232, 4
      %v1235 = vshll.u32 %v897, 16
      %v1237 = vrot.slane %v1235, 5
      %v1238 = vsel %vm902, %v1233, %v1237
      %v1240 = vshrl.u32 %v879, 16
      %v1242 = vrot.slane %v1240, 4
      %v1243 = vshll.u32 %v879, 16
      %v1245 = vrot.slane %v1243, 5
      %v1246 = vor.u32 %v1242, %v1245
      %v1247 = vrot.slane %v1246, 4
      %v1249 = vshll.u32 %v880, 16
      %v1251 = vrot.slane %v1249, 5
      %v1252 = vsel %vm902, %v1247, %v1251
      %v1253 = vshrl.u32 %v880, 16
      %v1255 = vrot.slane %v1253, 4
      %v1256 = vor.u32 %v1255, %v1251
      %v1257 = vrot.slane %v1256, 4
      %v1259 = vshll.u32 %v898, 16
      %v1261 = vrot.slane %v1259, 5
      %v1262 = vsel %vm902, %v1257, %v1261
      %v1264 = vshrl.u32 %v881, 16
      %v1266 = vrot.slane %v1264, 4
      %v1267 = vshll.u32 %v881, 16
      %v1269 = vrot.slane %v1267, 5
      %v1270 = vor.u32 %v1266, %v1269
      %v1271 = vrot.slane %v1270, 4
      %v1273 = vshll.u32 %v882, 16
      %v1275 = vrot.slane %v1273, 5
      %v1276 = vsel %vm902, %v1271, %v1275
      %v1277 = vshrl.u32 %v882, 16
      %v1279 = vrot.slane %v1277, 4
      %v1280 = vor.u32 %v1279, %v1275
      %v1281 = vrot.slane %v1280, 4
      %v1283 = vshll.u32 %v899, 16
      %v1285 = vrot.slane %v1283, 5
      %v1286 = vsel %vm902, %v1281, %v1285
      %s1287 = scalar_lea.vmem %s1, 2
      %v1288 = vld [vmem:[%s1287] sm:$0x3]
      %v1289 = vunpack.c.l.b16 %v916
      %v1290 = vunpack.c.l.b16 %v926
      %v1291 = vunpack.c.l.b16 %v940
      %v1292 = vunpack.c.l.b16 %v950
      %v1293 = vunpack.c.l.b16 %v964
      %v1294 = vunpack.c.l.b16 %v974
      %v1295 = vunpack.c.l.b16 %v988
      %v1296 = vunpack.c.l.b16 %v998
      %v1297 = vunpack.c.l.b16 %v1012
      %v1298 = vunpack.c.l.b16 %v1022
      %v1299 = vunpack.c.l.b16 %v1036
      %v1300 = vunpack.c.l.b16 %v1046
      %v1301 = vunpack.c.l.b16 %v1060
      %v1302 = vunpack.c.l.b16 %v1070
      %v1303 = vunpack.c.l.b16 %v1084
      %v1304 = vunpack.c.l.b16 %v1094
      %v1305 = vunpack.c.l.b16 %v1108
      %v1306 = vunpack.c.l.b16 %v1118
      %v1307 = vunpack.c.l.b16 %v1132
      %v1308 = vunpack.c.l.b16 %v1142
      %v1309 = vunpack.c.l.b16 %v1156
      %v1310 = vunpack.c.l.b16 %v1166
      %v1311 = vunpack.c.l.b16 %v1180
      %v1312 = vunpack.c.l.b16 %v1190
      %v1313 = vunpack.c.l.b16 %v1204
      %v1314 = vunpack.c.l.b16 %v1214
      %v1315 = vunpack.c.l.b16 %v1228
      %v1316 = vunpack.c.l.b16 %v1238
      %v1317 = vunpack.c.l.b16 %v1252
      %v1318 = vunpack.c.l.b16 %v1262
      %v1319 = vunpack.c.l.b16 %v1276
      %v1320 = vunpack.c.l.b16 %v1286
      %v1321 = vpack.c.b16 %v1290, %v1289
      %v1322 = vpack.c.b16 %v1292, %v1291
      %v1323 = vpack.c.b16 %v1294, %v1293
      %v1324 = vpack.c.b16 %v1296, %v1295
      %v1325 = vpack.c.b16 %v1298, %v1297
      %v1326 = vpack.c.b16 %v1300, %v1299
      %v1327 = vpack.c.b16 %v1302, %v1301
      %v1328 = vpack.c.b16 %v1304, %v1303
      %v1329 = vpack.c.b16 %v1306, %v1305
      %v1330 = vpack.c.b16 %v1308, %v1307
      %v1331 = vpack.c.b16 %v1310, %v1309
      %v1332 = vpack.c.b16 %v1312, %v1311
      %v1333 = vpack.c.b16 %v1314, %v1313
      %v1334 = vpack.c.b16 %v1316, %v1315
      %v1335 = vpack.c.b16 %v1318, %v1317
      %v1336 = vpack.c.b16 %v1320, %v1319
      %vm1337 = vcmask 31744
      %v1339 = vsel %vm1337, %v1321, 0
      %v1342 = vsel %vm1337, %v1322, 0
      %v1345 = vsel %vm1337, %v1323, 0
      %v1348 = vsel %vm1337, %v1324, 0
      %v1351 = vsel %vm1337, %v1325, 0
      %v1354 = vsel %vm1337, %v1326, 0
      %v1357 = vsel %vm1337, %v1327, 0
      %v1360 = vsel %vm1337, %v1328, 0
      %v1363 = vsel %vm1337, %v1329, 0
      %v1366 = vsel %vm1337, %v1330, 0
      %v1369 = vsel %vm1337, %v1331, 0
      %v1372 = vsel %vm1337, %v1332, 0
      %v1375 = vsel %vm1337, %v1333, 0
      %v1378 = vsel %vm1337, %v1334, 0
      %v1381 = vsel %vm1337, %v1335, 0
      %v1384 = vsel %vm1337, %v1336, 0
      %vm1386 = vcmask 1041408
      %v1388 = vsel %vm1386, %v1288, 0
      %1390 = vmatprep.subr.bf16.mxu0 0
      %1391 = vmatpush1.bf16.msra.mxu0 %v1388
      %1392 = vmatprep.subr.bf16.mxu0 0
      %1393 = vmatpush1.bf16.msra.mxu0 0
      %1394 = vmatprep.subr.bf16.mxu0 0
      %1395 = vmatpush1.bf16.msra.mxu0 0
      %1396 = vmatprep.subr.bf16.mxu0 0
      %1397 = vmatpush1.bf16.msra.mxu0 0
      %1398 = vmatprep.subr.bf16.mxu0 0
      %1399 = vmatpush1.bf16.msra.mxu0 0
      %1400 = vmatprep.subr.bf16.mxu0 0
      %1401 = vmatpush1.bf16.msra.mxu0 0
      %1402 = vmatprep.subr.bf16.mxu0 0
      %1403 = vmatpush1.bf16.msra.mxu0 0
      %1404 = vmatprep.subr.bf16.mxu0 0
      %1405 = vmatpush1.bf16.msra.mxu0 0
      %1406 = vmatprep.subr.bf16.mxu0 0
      %1407 = vmatpush1.bf16.msra.mxu0 0
      %1408 = vmatprep.subr.bf16.mxu0 0
      %1409 = vmatpush1.bf16.msra.mxu0 0
      %1410 = vmatprep.subr.bf16.mxu0 0
      %1411 = vmatpush1.bf16.msra.mxu0 0
      %1412 = vmatprep.subr.bf16.mxu0 0
      %1413 = vmatpush1.bf16.msra.mxu0 0
      %1414 = vmatprep.subr.bf16.mxu0 0
      %1415 = vmatpush1.bf16.msra.mxu0 0
      %1416 = vmatprep.subr.bf16.mxu0 0
      %1417 = vmatpush1.bf16.msra.mxu0 0
      %1418 = vmatprep.subr.bf16.mxu0 0
      %1419 = vmatpush1.bf16.msra.mxu0 0
      %1420 = vmatprep.subr.bf16.mxu0 0
      %1421 = vmatpush1.bf16.msra.mxu0 0
      %1422 = vmatprep.mubr.bf16.mxu0 0
      %1423 = vmatmul.mubr.bf16.gmra.mrb[0].mxu0 %v1339
      %v1424 = vpop.f32.mrb[0].mxu0
      %v1425 = vadd.f32 0.0, %v1424
      %v1426 = vpop.f32.mrb[0].mxu0
      %v1427 = vpop.f32.mrb[0].mxu0
      %v1428 = vadd.f32 0.0, %v1427
      %v1429 = vpop.f32.mrb[0].mxu0
      %1430 = vmatprep.mubr.bf16.mxu0 0
      %1431 = vmatmul.mubr.bf16.gmra.mrb[0].mxu0 %v1342
      %v1432 = vpop.f32.mrb[0].mxu0
      %v1433 = vadd.f32 0.0, %v1432
      %v1434 = vpop.f32.mrb[0].mxu0
      %v1435 = vpop.f32.mrb[0].mxu0
      %v1436 = vadd.f32 0.0, %v1435
      %v1437 = vpop.f32.mrb[0].mxu0
      %1438 = vmatprep.mubr.bf16.mxu0 0
      %1439 = vmatmul.mubr.bf16.gmra.mrb[0].mxu0 %v1345
      %v1440 = vpop.f32.mrb[0].mxu0
      %v1441 = vadd.f32 0.0, %v1440
      %v1442 = vpop.f32.mrb[0].mxu0
      %v1443 = vpop.f32.mrb[0].mxu0
      %v1444 = vadd.f32 0.0, %v1443
      %v1445 = vpop.f32.mrb[0].mxu0
      %1446 = vmatprep.mubr.bf16.mxu0 0
      %1447 = vmatmul.mubr.bf16.gmra.mrb[0].mxu0 %v1348
      %v1448 = vpop.f32.mrb[0].mxu0
      %v1449 = vadd.f32 0.0, %v1448
      %v1450 = vpop.f32.mrb[0].mxu0
      %v1451 = vpop.f32.mrb[0].mxu0
      %v1452 = vadd.f32 0.0, %v1451
      %v1453 = vpop.f32.mrb[0].mxu0
      %1454 = vmatprep.mubr.bf16.mxu0 0
      %1455 = vmatmul.mubr.bf16.gmra.mrb[0].mxu0 %v1351
      %v1456 = vpop.f32.mrb[0].mxu0
      %v1457 = vadd.f32 0.0, %v1456
      %v1458 = vpop.f32.mrb[0].mxu0
      %v1459 = vpop.f32.mrb[0].mxu0
      %v1460 = vadd.f32 0.0, %v1459
      %v1461 = vpop.f32.mrb[0].mxu0
      %1462 = vmatprep.mubr.bf16.mxu0 0
      %1463 = vmatmul.mubr.bf16.gmra.mrb[0].mxu0 %v1354
      %v1464 = vpop.f32.mrb[0].mxu0
      %v1465 = vadd.f32 0.0, %v1464
      %v1466 = vpop.f32.mrb[0].mxu0
      %v1467 = vpop.f32.mrb[0].mxu0
      %v1468 = vadd.f32 0.0, %v1467
      %v1469 = vpop.f32.mrb[0].mxu0
      %1470 = vmatprep.mubr.bf16.mxu0 0
      %1471 = vmatmul.mubr.bf16.gmra.mrb[0].mxu0 %v1357
      %v1472 = vpop.f32.mrb[0].mxu0
      %v1473 = vadd.f32 0.0, %v1472
      %v1474 = vpop.f32.mrb[0].mxu0
      %v1475 = vpop.f32.mrb[0].mxu0
      %v1476 = vadd.f32 0.0, %v1475
      %v1477 = vpop.f32.mrb[0].mxu0
      %1478 = vmatprep.mubr.bf16.mxu0 0
      %1479 = vmatmul.mubr.bf16.gmra.mrb[0].mxu0 %v1360
      %v1480 = vpop.f32.mrb[0].mxu0
      %v1481 = vadd.f32 0.0, %v1480
      %v1482 = vpop.f32.mrb[0].mxu0
      %v1483 = vpop.f32.mrb[0].mxu0
      %v1484 = vadd.f32 0.0, %v1483
      %v1485 = vpop.f32.mrb[0].mxu0
      %1486 = vmatprep.mubr.bf16.mxu0 0
      %1487 = vmatmul.mubr.bf16.gmra.mrb[0].mxu0 %v1363
      %v1488 = vpop.f32.mrb[0].mxu0
      %v1489 = vadd.f32 0.0, %v1488
      %v1490 = vpop.f32.mrb[0].mxu0
      %v1491 = vpop.f32.mrb[0].mxu0
      %v1492 = vadd.f32 0.0, %v1491
      %v1493 = vpop.f32.mrb[0].mxu0
      %1494 = vmatprep.mubr.bf16.mxu0 0
      %1495 = vmatmul.mubr.bf16.gmra.mrb[0].mxu0 %v1366
      %v1496 = vpop.f32.mrb[0].mxu0
      %v1497 = vadd.f32 0.0, %v1496
      %v1498 = vpop.f32.mrb[0].mxu0
      %v1499 = vpop.f32.mrb[0].mxu0
      %v1500 = vadd.f32 0.0, %v1499
      %v1501 = vpop.f32.mrb[0].mxu0
      %1502 = vmatprep.mubr.bf16.mxu0 0
      %1503 = vmatmul.mubr.bf16.gmra.mrb[0].mxu0 %v1369
      %v1504 = vpop.f32.mrb[0].mxu0
      %v1505 = vadd.f32 0.0, %v1504
      %v1506 = vpop.f32.mrb[0].mxu0
      %v1507 = vpop.f32.mrb[0].mxu0
      %v1508 = vadd.f32 0.0, %v1507
      %v1509 = vpop.f32.mrb[0].mxu0
      %1510 = vmatprep.mubr.bf16.mxu0 0
      %1511 = vmatmul.mubr.bf16.gmra.mrb[0].mxu0 %v1372
      %v1512 = vpop.f32.mrb[0].mxu0
      %v1513 = vadd.f32 0.0, %v1512
      %v1514 = vpop.f32.mrb[0].mxu0
      %v1515 = vpop.f32.mrb[0].mxu0
      %v1516 = vadd.f32 0.0, %v1515
      %v1517 = vpop.f32.mrb[0].mxu0
      %1518 = vmatprep.mubr.bf16.mxu0 0
      %1519 = vmatmul.mubr.bf16.gmra.mrb[0].mxu0 %v1375
      %v1520 = vpop.f32.mrb[0].mxu0
      %v1521 = vadd.f32 0.0, %v1520
      %v1522 = vpop.f32.mrb[0].mxu0
      %v1523 = vpop.f32.mrb[0].mxu0
      %v1524 = vadd.f32 0.0, %v1523
      %v1525 = vpop.f32.mrb[0].mxu0
      %1526 = vmatprep.mubr.bf16.mxu0 0
      %1527 = vmatmul.mubr.bf16.gmra.mrb[0].mxu0 %v1378
      %v1528 = vpop.f32.mrb[0].mxu0
      %v1529 = vadd.f32 0.0, %v1528
      %v1530 = vpop.f32.mrb[0].mxu0
      %v1531 = vpop.f32.mrb[0].mxu0
      %v1532 = vadd.f32 0.0, %v1531
      %v1533 = vpop.f32.mrb[0].mxu0
      %1534 = vmatprep.mubr.bf16.mxu0 0
      %1535 = vmatmul.mubr.bf16.gmra.mrb[0].mxu0 %v1381
      %v1536 = vpop.f32.mrb[0].mxu0
      %v1537 = vadd.f32 0.0, %v1536
      %v1538 = vpop.f32.mrb[0].mxu0
      %v1539 = vpop.f32.mrb[0].mxu0
      %v1540 = vadd.f32 0.0, %v1539
      %v1541 = vpop.f32.mrb[0].mxu0
      %1542 = vmatprep.mubr.bf16.mxu0 0
      %1543 = vmatmul.mubr.bf16.gmra.mrb[0].mxu0 %v1384
      %v1544 = vpop.f32.mrb[0].mxu0
      %v1545 = vadd.f32 0.0, %v1544
      %v1546 = vpop.f32.mrb[0].mxu0
      %v1547 = vpop.f32.mrb[0].mxu0
      %v1548 = vadd.f32 0.0, %v1547
      %v1549 = vpop.f32.mrb[0].mxu0
      %1550 = vdwg.mxu0
      %v1583 = vunpack.c.l.b16 %v851
      %v1584 = vunpack.c.l.b16 %v852
      %v1585 = vunpack.c.l.b16 %v853
      %v1586 = vunpack.c.l.b16 %v854
      %v1587 = vunpack.c.l.b16 %v855
      %v1588 = vunpack.c.l.b16 %v856
      %v1589 = vunpack.c.l.b16 %v857
      %v1590 = vunpack.c.l.b16 %v858
      %v1591 = vunpack.c.l.b16 %v859
      %v1592 = vunpack.c.l.b16 %v860
      %v1593 = vunpack.c.l.b16 %v861
      %v1594 = vunpack.c.l.b16 %v862
      %v1595 = vunpack.c.l.b16 %v863
      %v1596 = vunpack.c.l.b16 %v864
      %v1597 = vunpack.c.l.b16 %v865
      %v1598 = vunpack.c.l.b16 %v866
      %v1599 = vunpack.c.l.b16 %v867
      %v1600 = vunpack.c.l.b16 %v868
      %v1601 = vunpack.c.l.b16 %v869
      %v1602 = vunpack.c.l.b16 %v870
      %v1603 = vunpack.c.l.b16 %v871
      %v1604 = vunpack.c.l.b16 %v872
      %v1605 = vunpack.c.l.b16 %v873
      %v1606 = vunpack.c.l.b16 %v874
      %v1607 = vunpack.c.l.b16 %v875
      %v1608 = vunpack.c.l.b16 %v876
      %v1609 = vunpack.c.l.b16 %v877
      %v1610 = vunpack.c.l.b16 %v878
      %v1611 = vunpack.c.l.b16 %v879
      %v1612 = vunpack.c.l.b16 %v880
      %v1613 = vunpack.c.l.b16 %v881
      %v1614 = vunpack.c.l.b16 %v882
      %v1615 = vpack.c.b16 %v1584, %v1583
      %v1616 = vpack.c.b16 %v1586, %v1585
      %v1617 = vpack.c.b16 %v1588, %v1587
      %v1618 = vpack.c.b16 %v1590, %v1589
      %v1619 = vpack.c.b16 %v1592, %v1591
      %v1620 = vpack.c.b16 %v1594, %v1593
      %v1621 = vpack.c.b16 %v1596, %v1595
      %v1622 = vpack.c.b16 %v1598, %v1597
      %v1623 = vpack.c.b16 %v1600, %v1599
      %v1624 = vpack.c.b16 %v1602, %v1601
      %v1625 = vpack.c.b16 %v1604, %v1603
      %v1626 = vpack.c.b16 %v1606, %v1605
      %v1627 = vpack.c.b16 %v1608, %v1607
      %v1628 = vpack.c.b16 %v1610, %v1609
      %v1629 = vpack.c.b16 %v1612, %v1611
      %v1630 = vpack.c.b16 %v1614, %v1613
      %v1632 = vsel %vm1337, %v1615, 0
      %v1635 = vsel %vm1337, %v1616, 0
      %v1638 = vsel %vm1337, %v1617, 0
      %v1641 = vsel %vm1337, %v1618, 0
      %v1644 = vsel %vm1337, %v1619, 0
      %v1647 = vsel %vm1337, %v1620, 0
      %v1650 = vsel %vm1337, %v1621, 0
      %v1653 = vsel %vm1337, %v1622, 0
      %v1656 = vsel %vm1337, %v1623, 0
      %v1659 = vsel %vm1337, %v1624, 0
      %v1662 = vsel %vm1337, %v1625, 0
      %v1665 = vsel %vm1337, %v1626, 0
      %v1668 = vsel %vm1337, %v1627, 0
      %v1671 = vsel %vm1337, %v1628, 0
      %v1674 = vsel %vm1337, %v1629, 0
      %v1677 = vsel %vm1337, %v1630, 0
      %v1680 = vsel %vm1386, %v883, 0
      %1682 = vmatprep.subr.bf16.mxu0 0
      %1683 = vmatpush1.bf16.msra.mxu0 %v1680
      %1684 = vmatprep.subr.bf16.mxu0 0
      %1685 = vmatpush1.bf16.msra.mxu0 0
      %1686 = vmatprep.subr.bf16.mxu0 0
      %1687 = vmatpush1.bf16.msra.mxu0 0
      %1688 = vmatprep.subr.bf16.mxu0 0
      %1689 = vmatpush1.bf16.msra.mxu0 0
      %1690 = vmatprep.subr.bf16.mxu0 0
      %1691 = vmatpush1.bf16.msra.mxu0 0
      %1692 = vmatprep.subr.bf16.mxu0 0
      %1693 = vmatpush1.bf16.msra.mxu0 0
      %1694 = vmatprep.subr.bf16.mxu0 0
      %1695 = vmatpush1.bf16.msra.mxu0 0
      %1696 = vmatprep.subr.bf16.mxu0 0
      %1697 = vmatpush1.bf16.msra.mxu0 0
      %1698 = vmatprep.subr.bf16.mxu0 0
      %1699 = vmatpush1.bf16.msra.mxu0 0
      %1700 = vmatprep.subr.bf16.mxu0 0
      %1701 = vmatpush1.bf16.msra.mxu0 0
      %1702 = vmatprep.subr.bf16.mxu0 0
      %1703 = vmatpush1.bf16.msra.mxu0 0
      %1704 = vmatprep.subr.bf16.mxu0 0
      %1705 = vmatpush1.bf16.msra.mxu0 0
      %1706 = vmatprep.subr.bf16.mxu0 0
      %1707 = vmatpush1.bf16.msra.mxu0 0
      %1708 = vmatprep.subr.bf16.mxu0 0
      %1709 = vmatpush1.bf16.msra.mxu0 0
      %1710 = vmatprep.subr.bf16.mxu0 0
      %1711 = vmatpush1.bf16.msra.mxu0 0
      %1712 = vmatprep.subr.bf16.mxu0 0
      %1713 = vmatpush1.bf16.msra.mxu0 0
      %1714 = vmatprep.mubr.bf16.mxu0 0
      %1715 = vmatmul.mubr.bf16.gmra.mrb[0].mxu0 %v1632
      %v1716 = vpop.f32.mrb[0].mxu0
      %v1717 = vadd.f32 %v1425, %v1716
      %v1718 = vpop.f32.mrb[0].mxu0
      %v1719 = vpop.f32.mrb[0].mxu0
      %v1720 = vadd.f32 %v1428, %v1719
      %v1721 = vpop.f32.mrb[0].mxu0
      %1722 = vmatprep.mubr.bf16.mxu0 0
      %1723 = vmatmul.mubr.bf16.gmra.mrb[0].mxu0 %v1635
      %v1724 = vpop.f32.mrb[0].mxu0
      %v1725 = vadd.f32 %v1433, %v1724
      %v1726 = vpop.f32.mrb[0].mxu0
      %v1727 = vpop.f32.mrb[0].mxu0
      %v1728 = vadd.f32 %v1436, %v1727
      %v1729 = vpop.f32.mrb[0].mxu0
      %1730 = vmatprep.mubr.bf16.mxu0 0
      %1731 = vmatmul.mubr.bf16.gmra.mrb[0].mxu0 %v1638
      %v1732 = vpop.f32.mrb[0].mxu0
      %v1733 = vadd.f32 %v1441, %v1732
      %v1734 = vpop.f32.mrb[0].mxu0
      %v1735 = vpop.f32.mrb[0].mxu0
      %v1736 = vadd.f32 %v1444, %v1735
      %v1737 = vpop.f32.mrb[0].mxu0
      %1738 = vmatprep.mubr.bf16.mxu0 0
      %1739 = vmatmul.mubr.bf16.gmra.mrb[0].mxu0 %v1641
      %v1740 = vpop.f32.mrb[0].mxu0
      %v1741 = vadd.f32 %v1449, %v1740
      %v1742 = vpop.f32.mrb[0].mxu0
      %v1743 = vpop.f32.mrb[0].mxu0
      %v1744 = vadd.f32 %v1452, %v1743
      %v1745 = vpop.f32.mrb[0].mxu0
      %1746 = vmatprep.mubr.bf16.mxu0 0
      %1747 = vmatmul.mubr.bf16.gmra.mrb[0].mxu0 %v1644
      %v1748 = vpop.f32.mrb[0].mxu0
      %v1749 = vadd.f32 %v1457, %v1748
      %v1750 = vpop.f32.mrb[0].mxu0
      %v1751 = vpop.f32.mrb[0].mxu0
      %v1752 = vadd.f32 %v1460, %v1751
      %v1753 = vpop.f32.mrb[0].mxu0
      %1754 = vmatprep.mubr.bf16.mxu0 0
      %1755 = vmatmul.mubr.bf16.gmra.mrb[0].mxu0 %v1647
      %v1756 = vpop.f32.mrb[0].mxu0
      %v1757 = vadd.f32 %v1465, %v1756
      %v1758 = vpop.f32.mrb[0].mxu0
      %v1759 = vpop.f32.mrb[0].mxu0
      %v1760 = vadd.f32 %v1468, %v1759
      %v1761 = vpop.f32.mrb[0].mxu0
      %1762 = vmatprep.mubr.bf16.mxu0 0
      %1763 = vmatmul.mubr.bf16.gmra.mrb[0].mxu0 %v1650
      %v1764 = vpop.f32.mrb[0].mxu0
      %v1765 = vadd.f32 %v1473, %v1764
      %v1766 = vpop.f32.mrb[0].mxu0
      %v1767 = vpop.f32.mrb[0].mxu0
      %v1768 = vadd.f32 %v1476, %v1767
      %v1769 = vpop.f32.mrb[0].mxu0
      %1770 = vmatprep.mubr.bf16.mxu0 0
      %1771 = vmatmul.mubr.bf16.gmra.mrb[0].mxu0 %v1653
      %v1772 = vpop.f32.mrb[0].mxu0
      %v1773 = vadd.f32 %v1481, %v1772
      %v1774 = vpop.f32.mrb[0].mxu0
      %v1775 = vpop.f32.mrb[0].mxu0
      %v1776 = vadd.f32 %v1484, %v1775
      %v1777 = vpop.f32.mrb[0].mxu0
      %1778 = vmatprep.mubr.bf16.mxu0 0
      %1779 = vmatmul.mubr.bf16.gmra.mrb[0].mxu0 %v1656
      %v1780 = vpop.f32.mrb[0].mxu0
      %v1781 = vadd.f32 %v1489, %v1780
      %v1782 = vpop.f32.mrb[0].mxu0
      %v1783 = vpop.f32.mrb[0].mxu0
      %v1784 = vadd.f32 %v1492, %v1783
      %v1785 = vpop.f32.mrb[0].mxu0
      %1786 = vmatprep.mubr.bf16.mxu0 0
      %1787 = vmatmul.mubr.bf16.gmra.mrb[0].mxu0 %v1659
      %v1788 = vpop.f32.mrb[0].mxu0
      %v1789 = vadd.f32 %v1497, %v1788
      %v1790 = vpop.f32.mrb[0].mxu0
      %v1791 = vpop.f32.mrb[0].mxu0
      %v1792 = vadd.f32 %v1500, %v1791
      %v1793 = vpop.f32.mrb[0].mxu0
      %1794 = vmatprep.mubr.bf16.mxu0 0
      %1795 = vmatmul.mubr.bf16.gmra.mrb[0].mxu0 %v1662
      %v1796 = vpop.f32.mrb[0].mxu0
      %v1797 = vadd.f32 %v1505, %v1796
      %v1798 = vpop.f32.mrb[0].mxu0
      %v1799 = vpop.f32.mrb[0].mxu0
      %v1800 = vadd.f32 %v1508, %v1799
      %v1801 = vpop.f32.mrb[0].mxu0
      %1802 = vmatprep.mubr.bf16.mxu0 0
      %1803 = vmatmul.mubr.bf16.gmra.mrb[0].mxu0 %v1665
      %v1804 = vpop.f32.mrb[0].mxu0
      %v1805 = vadd.f32 %v1513, %v1804
      %v1806 = vpop.f32.mrb[0].mxu0
      %v1807 = vpop.f32.mrb[0].mxu0
      %v1808 = vadd.f32 %v1516, %v1807
      %v1809 = vpop.f32.mrb[0].mxu0
      %1810 = vmatprep.mubr.bf16.mxu0 0
      %1811 = vmatmul.mubr.bf16.gmra.mrb[0].mxu0 %v1668
      %v1812 = vpop.f32.mrb[0].mxu0
      %v1813 = vadd.f32 %v1521, %v1812
      %v1814 = vpop.f32.mrb[0].mxu0
      %v1815 = vpop.f32.mrb[0].mxu0
      %v1816 = vadd.f32 %v1524, %v1815
      %v1817 = vpop.f32.mrb[0].mxu0
      %1818 = vmatprep.mubr.bf16.mxu0 0
      %1819 = vmatmul.mubr.bf16.gmra.mrb[0].mxu0 %v1671
      %v1820 = vpop.f32.mrb[0].mxu0
      %v1821 = vadd.f32 %v1529, %v1820
      %v1822 = vpop.f32.mrb[0].mxu0
      %v1823 = vpop.f32.mrb[0].mxu0
      %v1824 = vadd.f32 %v1532, %v1823
      %v1825 = vpop.f32.mrb[0].mxu0
      %1826 = vmatprep.mubr.bf16.mxu0 0
      %1827 = vmatmul.mubr.bf16.gmra.mrb[0].mxu0 %v1674
      %v1828 = vpop.f32.mrb[0].mxu0
      %v1829 = vadd.f32 %v1537, %v1828
      %v1830 = vpop.f32.mrb[0].mxu0
      %v1831 = vpop.f32.mrb[0].mxu0
      %v1832 = vadd.f32 %v1540, %v1831
      %v1833 = vpop.f32.mrb[0].mxu0
      %1834 = vmatprep.mubr.bf16.mxu0 0
      %1835 = vmatmul.mubr.bf16.gmra.mrb[0].mxu0 %v1677
      %v1836 = vpop.f32.mrb[0].mxu0
      %v1837 = vadd.f32 %v1545, %v1836
      %v1838 = vpop.f32.mrb[0].mxu0
      %v1839 = vpop.f32.mrb[0].mxu0
      %v1840 = vadd.f32 %v1548, %v1839
      %v1841 = vpop.f32.mrb[0].mxu0
      %1842 = vdwg.mxu0
      %v1843 = vld [vmem:[#allocation2] sm:$0xe]
      %v1844 = vld [vmem:[#allocation2 + $0xc] sm:$0xe]
      %v1845 = vld [vmem:[#allocation2 + $0x18] sm:$0xe]
      %v1846 = vld [vmem:[#allocation2 + $0x24] sm:$0xe]
      %v1847 = vld [vmem:[#allocation2 + $0x30] sm:$0xe]
      %v1848 = vld [vmem:[#allocation2 + $0x3c] sm:$0xe]
      %v1849 = vld [vmem:[#allocation2 + $0x48] sm:$0xe]
      %v1850 = vld [vmem:[#allocation2 + $0x54] sm:$0xe]
      %v1851 = vld [vmem:[#allocation2 + $0x60] sm:$0xe]
      %v1852 = vld [vmem:[#allocation2 + $0x6c] sm:$0xe]
      %v1853 = vld [vmem:[#allocation2 + $0x78] sm:$0xe]
      %v1854 = vld [vmem:[#allocation2 + $0x84] sm:$0xe]
      %v1855 = vld [vmem:[#allocation2 + $0x90] sm:$0xe]
      %v1856 = vld [vmem:[#allocation2 + $0x9c] sm:$0xe]
      %v1857 = vld [vmem:[#allocation2 + $0xa8] sm:$0xe]
      %v1858 = vld [vmem:[#allocation2 + $0xb4] sm:$0xe]
      %vm1891 = vcmask 1042432
      %vm1892 = vcmask 1046532
      %vm1893 = vmor %vm1891, %vm1892
      %v1894 = vrot.slane %v1843, 5
      %v1895 = vrot.slane %v1894, 4
      %v1896 = vrot.slane %v852, 5
      %v1897 = vsel %vm1893, %v1895, %v1896
      %v1898 = vrot.slane %v1896, 4
      %v1899 = vrot.slane %v884, 5
      %v1900 = vsel %vm1893, %v1898, %v1899
      %v1901 = vrot.slane %v1844, 5
      %v1902 = vrot.slane %v1901, 4
      %v1903 = vrot.slane %v854, 5
      %v1904 = vsel %vm1893, %v1902, %v1903
      %v1905 = vrot.slane %v1903, 4
      %v1906 = vrot.slane %v885, 5
      %v1907 = vsel %vm1893, %v1905, %v1906
      %v1908 = vrot.slane %v1845, 5
      %v1909 = vrot.slane %v1908, 4
      %v1910 = vrot.slane %v856, 5
      %v1911 = vsel %vm1893, %v1909, %v1910
      %v1912 = vrot.slane %v1910, 4
      %v1913 = vrot.slane %v886, 5
      %v1914 = vsel %vm1893, %v1912, %v1913
      %v1915 = vrot.slane %v1846, 5
      %v1916 = vrot.slane %v1915, 4
      %v1917 = vrot.slane %v858, 5
      %v1918 = vsel %vm1893, %v1916, %v1917
      %v1919 = vrot.slane %v1917, 4
      %v1920 = vrot.slane %v887, 5
      %v1921 = vsel %vm1893, %v1919, %v1920
      %v1922 = vrot.slane %v1847, 5
      %v1923 = vrot.slane %v1922, 4
      %v1924 = vrot.slane %v860, 5
      %v1925 = vsel %vm1893, %v1923, %v1924
      %v1926 = vrot.slane %v1924, 4
      %v1927 = vrot.slane %v888, 5
      %v1928 = vsel %vm1893, %v1926, %v1927
      %v1929 = vrot.slane %v1848, 5
      %v1930 = vrot.slane %v1929, 4
      %v1931 = vrot.slane %v862, 5
      %v1932 = vsel %vm1893, %v1930, %v1931
      %v1933 = vrot.slane %v1931, 4
      %v1934 = vrot.slane %v889, 5
      %v1935 = vsel %vm1893, %v1933, %v1934
      %v1936 = vrot.slane %v1849, 5
      %v1937 = vrot.slane %v1936, 4
      %v1938 = vrot.slane %v864, 5
      %v1939 = vsel %vm1893, %v1937, %v1938
      %v1940 = vrot.slane %v1938, 4
      %v1941 = vrot.slane %v890, 5
      %v1942 = vsel %vm1893, %v1940, %v1941
      %v1943 = vrot.slane %v1850, 5
      %v1944 = vrot.slane %v1943, 4
      %v1945 = vrot.slane %v866, 5
      %v1946 = vsel %vm1893, %v1944, %v1945
      %v1947 = vrot.slane %v1945, 4
      %v1948 = vrot.slane %v891, 5
      %v1949 = vsel %vm1893, %v1947, %v1948
      %v1950 = vrot.slane %v1851, 5
      %v1951 = vrot.slane %v1950, 4
      %v1952 = vrot.slane %v868, 5
      %v1953 = vsel %vm1893, %v1951, %v1952
      %v1954 = vrot.slane %v1952, 4
      %v1955 = vrot.slane %v892, 5
      %v1956 = vsel %vm1893, %v1954, %v1955
      %v1957 = vrot.slane %v1852, 5
      %v1958 = vrot.slane %v1957, 4
      %v1959 = vrot.slane %v870, 5
      %v1960 = vsel %vm1893, %v1958, %v1959
      %v1961 = vrot.slane %v1959, 4
      %v1962 = vrot.slane %v893, 5
      %v1963 = vsel %vm1893, %v1961, %v1962
      %v1964 = vrot.slane %v1853, 5
      %v1965 = vrot.slane %v1964, 4
      %v1966 = vrot.slane %v872, 5
      %v1967 = vsel %vm1893, %v1965, %v1966
      %v1968 = vrot.slane %v1966, 4
      %v1969 = vrot.slane %v894, 5
      %v1970 = vsel %vm1893, %v1968, %v1969
      %v1971 = vrot.slane %v1854, 5
      %v1972 = vrot.slane %v1971, 4
      %v1973 = vrot.slane %v874, 5
      %v1974 = vsel %vm1893, %v1972, %v1973
      %v1975 = vrot.slane %v1973, 4
      %v1976 = vrot.slane %v895, 5
      %v1977 = vsel %vm1893, %v1975, %v1976
      %v1978 = vrot.slane %v1855, 5
      %v1979 = vrot.slane %v1978, 4
      %v1980 = vrot.slane %v876, 5
      %v1981 = vsel %vm1893, %v1979, %v1980
      %v1982 = vrot.slane %v1980, 4
      %v1983 = vrot.slane %v896, 5
      %v1984 = vsel %vm1893, %v1982, %v1983
      %v1985 = vrot.slane %v1856, 5
      %v1986 = vrot.slane %v1985, 4
      %v1987 = vrot.slane %v878, 5
      %v1988 = vsel %vm1893, %v1986, %v1987
      %v1989 = vrot.slane %v1987, 4
      %v1990 = vrot.slane %v897, 5
      %v1991 = vsel %vm1893, %v1989, %v1990
      %v1992 = vrot.slane %v1857, 5
      %v1993 = vrot.slane %v1992, 4
      %v1994 = vrot.slane %v880, 5
      %v1995 = vsel %vm1893, %v1993, %v1994
      %v1996 = vrot.slane %v1994, 4
      %v1997 = vrot.slane %v898, 5
      %v1998 = vsel %vm1893, %v1996, %v1997
      %v1999 = vrot.slane %v1858, 5
      %v2000 = vrot.slane %v1999, 4
      %v2001 = vrot.slane %v882, 5
      %v2002 = vsel %vm1893, %v2000, %v2001
      %v2003 = vrot.slane %v2001, 4
      %v2004 = vrot.slane %v899, 5
      %v2005 = vsel %vm1893, %v2003, %v2004
      %s2006 = scalar_lea.vmem %s1, 4
      %v2007 = vld [vmem:[%s2006] sm:$0x3]
      %v2008 = vunpack.c.l.b16 %v1897
      %v2009 = vunpack.c.l.b16 %v1900
      %v2010 = vunpack.c.l.b16 %v1904
      %v2011 = vunpack.c.l.b16 %v1907
      %v2012 = vunpack.c.l.b16 %v1911
      %v2013 = vunpack.c.l.b16 %v1914
      %v2014 = vunpack.c.l.b16 %v1918
      %v2015 = vunpack.c.l.b16 %v1921
      %v2016 = vunpack.c.l.b16 %v1925
      %v2017 = vunpack.c.l.b16 %v1928
      %v2018 = vunpack.c.l.b16 %v1932
      %v2019 = vunpack.c.l.b16 %v1935
      %v2020 = vunpack.c.l.b16 %v1939
      %v2021 = vunpack.c.l.b16 %v1942
      %v2022 = vunpack.c.l.b16 %v1946
      %v2023 = vunpack.c.l.b16 %v1949
      %v2024 = vunpack.c.l.b16 %v1953
      %v2025 = vunpack.c.l.b16 %v1956
      %v2026 = vunpack.c.l.b16 %v1960
      %v2027 = vunpack.c.l.b16 %v1963
      %v2028 = vunpack.c.l.b16 %v1967
      %v2029 = vunpack.c.l.b16 %v1970
      %v2030 = vunpack.c.l.b16 %v1974
      %v2031 = vunpack.c.l.b16 %v1977
      %v2032 = vunpack.c.l.b16 %v1981
      %v2033 = vunpack.c.l.b16 %v1984
      %v2034 = vunpack.c.l.b16 %v1988
      %v2035 = vunpack.c.l.b16 %v1991
      %v2036 = vunpack.c.l.b16 %v1995
      %v2037 = vunpack.c.l.b16 %v1998
      %v2038 = vunpack.c.l.b16 %v2002
      %v2039 = vunpack.c.l.b16 %v2005
      %v2040 = vpack.c.b16 %v2009, %v2008
      %v2041 = vpack.c.b16 %v2011, %v2010
      %v2042 = vpack.c.b16 %v2013, %v2012
      %v2043 = vpack.c.b16 %v2015, %v2014
      %v2044 = vpack.c.b16 %v2017, %v2016
      %v2045 = vpack.c.b16 %v2019, %v2018
      %v2046 = vpack.c.b16 %v2021, %v2020
      %v2047 = vpack.c.b16 %v2023, %v2022
      %v2048 = vpack.c.b16 %v2025, %v2024
      %v2049 = vpack.c.b16 %v2027, %v2026
      %v2050 = vpack.c.b16 %v2029, %v2028
      %v2051 = vpack.c.b16 %v2031, %v2030
      %v2052 = vpack.c.b16 %v2033, %v2032
      %v2053 = vpack.c.b16 %v2035, %v2034
      %v2054 = vpack.c.b16 %v2037, %v2036
      %v2055 = vpack.c.b16 %v2039, %v2038
      %v2057 = vsel %vm1337, %v2040, 0
      %v2060 = vsel %vm1337, %v2041, 0
      %v2063 = vsel %vm1337, %v2042, 0
      %v2066 = vsel %vm1337, %v2043, 0
      %v2069 = vsel %vm1337, %v2044, 0
      %v2072 = vsel %vm1337, %v2045, 0
      %v2075 = vsel %vm1337, %v2046, 0
      %v2078 = vsel %vm1337, %v2047, 0
      %v2081 = vsel %vm1337, %v2048, 0
      %v2084 = vsel %vm1337, %v2049, 0
      %v2087 = vsel %vm1337, %v2050, 0
      %v2090 = vsel %vm1337, %v2051, 0
      %v2093 = vsel %vm1337, %v2052, 0
      %v2096 = vsel %vm1337, %v2053, 0
      %v2099 = vsel %vm1337, %v2054, 0
      %v2102 = vsel %vm1337, %v2055, 0
      %v2105 = vsel %vm1386, %v2007, 0
      %2107 = vmatprep.subr.bf16.mxu0 0
      %2108 = vmatpush1.bf16.msra.mxu0 %v2105
      %2109 = vmatprep.subr.bf16.mxu0 0
      %2110 = vmatpush1.bf16.msra.mxu0 0
      %2111 = vmatprep.subr.bf16.mxu0 0
      %2112 = vmatpush1.bf16.msra.mxu0 0
      %2113 = vmatprep.subr.bf16.mxu0 0
      %2114 = vmatpush1.bf16.msra.mxu0 0
      %2115 = vmatprep.subr.bf16.mxu0 0
      %2116 = vmatpush1.bf16.msra.mxu0 0
      %2117 = vmatprep.subr.bf16.mxu0 0
      %2118 = vmatpush1.bf16.msra.mxu0 0
      %2119 = vmatprep.subr.bf16.mxu0 0
      %2120 = vmatpush1.bf16.msra.mxu0 0
      %2121 = vmatprep.subr.bf16.mxu0 0
      %2122 = vmatpush1.bf16.msra.mxu0 0
      %2123 = vmatprep.subr.bf16.mxu0 0
      %2124 = vmatpush1.bf16.msra.mxu0 0
      %2125 = vmatprep.subr.bf16.mxu0 0
      %2126 = vmatpush1.bf16.msra.mxu0 0
      %2127 = vmatprep.subr.bf16.mxu0 0
      %2128 = vmatpush1.bf16.msra.mxu0 0
      %2129 = vmatprep.subr.bf16.mxu0 0
      %2130 = vmatpush1.bf16.msra.mxu0 0
      %2131 = vmatprep.subr.bf16.mxu0 0
      %2132 = vmatpush1.bf16.msra.mxu0 0
      %2133 = vmatprep.subr.bf16.mxu0 0
      %2134 = vmatpush1.bf16.msra.mxu0 0
      %2135 = vmatprep.subr.bf16.mxu0 0
      %2136 = vmatpush1.bf16.msra.mxu0 0
      %2137 = vmatprep.subr.bf16.mxu0 0
      %2138 = vmatpush1.bf16.msra.mxu0 0
      %2139 = vmatprep.mubr.bf16.mxu0 0
      %2140 = vmatmul.mubr.bf16.gmra.mrb[0].mxu0 %v2057
      %v2141 = vpop.f32.mrb[0].mxu0
      %v2142 = vadd.f32 0.0, %v2141
      %v2143 = vpop.f32.mrb[0].mxu0
      %v2144 = vpop.f32.mrb[0].mxu0
      %v2145 = vadd.f32 0.0, %v2144
      %v2146 = vpop.f32.mrb[0].mxu0
      %2147 = vmatprep.mubr.bf16.mxu0 0
      %2148 = vmatmul.mubr.bf16.gmra.mrb[0].mxu0 %v2060
      %v2149 = vpop.f32.mrb[0].mxu0
      %v2150 = vadd.f32 0.0, %v2149
      %v2151 = vpop.f32.mrb[0].mxu0
      %v2152 = vpop.f32.mrb[0].mxu0
      %v2153 = vadd.f32 0.0, %v2152
      %v2154 = vpop.f32.mrb[0].mxu0
      %2155 = vmatprep.mubr.bf16.mxu0 0
      %2156 = vmatmul.mubr.bf16.gmra.mrb[0].mxu0 %v2063
      %v2157 = vpop.f32.mrb[0].mxu0
      %v2158 = vadd.f32 0.0, %v2157
      %v2159 = vpop.f32.mrb[0].mxu0
      %v2160 = vpop.f32.mrb[0].mxu0
      %v2161 = vadd.f32 0.0, %v2160
      %v2162 = vpop.f32.mrb[0].mxu0
      %2163 = vmatprep.mubr.bf16.mxu0 0
      %2164 = vmatmul.mubr.bf16.gmra.mrb[0].mxu0 %v2066
      %v2165 = vpop.f32.mrb[0].mxu0
      %v2166 = vadd.f32 0.0, %v2165
      %v2167 = vpop.f32.mrb[0].mxu0
      %v2168 = vpop.f32.mrb[0].mxu0
      %v2169 = vadd.f32 0.0, %v2168
      %v2170 = vpop.f32.mrb[0].mxu0
      %2171 = vmatprep.mubr.bf16.mxu0 0
      %2172 = vmatmul.mubr.bf16.gmra.mrb[0].mxu0 %v2069
      %v2173 = vpop.f32.mrb[0].mxu0
      %v2174 = vadd.f32 0.0, %v2173
      %v2175 = vpop.f32.mrb[0].mxu0
      %v2176 = vpop.f32.mrb[0].mxu0
      %v2177 = vadd.f32 0.0, %v2176
      %v2178 = vpop.f32.mrb[0].mxu0
      %2179 = vmatprep.mubr.bf16.mxu0 0
      %2180 = vmatmul.mubr.bf16.gmra.mrb[0].mxu0 %v2072
      %v2181 = vpop.f32.mrb[0].mxu0
      %v2182 = vadd.f32 0.0, %v2181
      %v2183 = vpop.f32.mrb[0].mxu0
      %v2184 = vpop.f32.mrb[0].mxu0
      %v2185 = vadd.f32 0.0, %v2184
      %v2186 = vpop.f32.mrb[0].mxu0
      %2187 = vmatprep.mubr.bf16.mxu0 0
      %2188 = vmatmul.mubr.bf16.gmra.mrb[0].mxu0 %v2075
      %v2189 = vpop.f32.mrb[0].mxu0
      %v2190 = vadd.f32 0.0, %v2189
      %v2191 = vpop.f32.mrb[0].mxu0
      %v2192 = vpop.f32.mrb[0].mxu0
      %v2193 = vadd.f32 0.0, %v2192
      %v2194 = vpop.f32.mrb[0].mxu0
      %2195 = vmatprep.mubr.bf16.mxu0 0
      %2196 = vmatmul.mubr.bf16.gmra.mrb[0].mxu0 %v2078
      %v2197 = vpop.f32.mrb[0].mxu0
      %v2198 = vadd.f32 0.0, %v2197
      %v2199 = vpop.f32.mrb[0].mxu0
      %v2200 = vpop.f32.mrb[0].mxu0
      %v2201 = vadd.f32 0.0, %v2200
      %v2202 = vpop.f32.mrb[0].mxu0
      %2203 = vmatprep.mubr.bf16.mxu0 0
      %2204 = vmatmul.mubr.bf16.gmra.mrb[0].mxu0 %v2081
      %v2205 = vpop.f32.mrb[0].mxu0
      %v2206 = vadd.f32 0.0, %v2205
      %v2207 = vpop.f32.mrb[0].mxu0
      %v2208 = vpop.f32.mrb[0].mxu0
      %v2209 = vadd.f32 0.0, %v2208
      %v2210 = vpop.f32.mrb[0].mxu0
      %2211 = vmatprep.mubr.bf16.mxu0 0
      %2212 = vmatmul.mubr.bf16.gmra.mrb[0].mxu0 %v2084
      %v2213 = vpop.f32.mrb[0].mxu0
      %v2214 = vadd.f32 0.0, %v2213
      %v2215 = vpop.f32.mrb[0].mxu0
      %v2216 = vpop.f32.mrb[0].mxu0
      %v2217 = vadd.f32 0.0, %v2216
      %v2218 = vpop.f32.mrb[0].mxu0
      %2219 = vmatprep.mubr.bf16.mxu0 0
      %2220 = vmatmul.mubr.bf16.gmra.mrb[0].mxu0 %v2087
      %v2221 = vpop.f32.mrb[0].mxu0
      %v2222 = vadd.f32 0.0, %v2221
      %v2223 = vpop.f32.mrb[0].mxu0
      %v2224 = vpop.f32.mrb[0].mxu0
      %v2225 = vadd.f32 0.0, %v2224
      %v2226 = vpop.f32.mrb[0].mxu0
      %2227 = vmatprep.mubr.bf16.mxu0 0
      %2228 = vmatmul.mubr.bf16.gmra.mrb[0].mxu0 %v2090
      %v2229 = vpop.f32.mrb[0].mxu0
      %v2230 = vadd.f32 0.0, %v2229
      %v2231 = vpop.f32.mrb[0].mxu0
      %v2232 = vpop.f32.mrb[0].mxu0
      %v2233 = vadd.f32 0.0, %v2232
      %v2234 = vpop.f32.mrb[0].mxu0
      %2235 = vmatprep.mubr.bf16.mxu0 0
      %2236 = vmatmul.mubr.bf16.gmra.mrb[0].mxu0 %v2093
      %v2237 = vpop.f32.mrb[0].mxu0
      %v2238 = vadd.f32 0.0, %v2237
      %v2239 = vpop.f32.mrb[0].mxu0
      %v2240 = vpop.f32.mrb[0].mxu0
      %v2241 = vadd.f32 0.0, %v2240
      %v2242 = vpop.f32.mrb[0].mxu0
      %2243 = vmatprep.mubr.bf16.mxu0 0
      %2244 = vmatmul.mubr.bf16.gmra.mrb[0].mxu0 %v2096
      %v2245 = vpop.f32.mrb[0].mxu0
      %v2246 = vadd.f32 0.0, %v2245
      %v2247 = vpop.f32.mrb[0].mxu0
      %v2248 = vpop.f32.mrb[0].mxu0
      %v2249 = vadd.f32 0.0, %v2248
      %v2250 = vpop.f32.mrb[0].mxu0
      %2251 = vmatprep.mubr.bf16.mxu0 0
      %2252 = vmatmul.mubr.bf16.gmra.mrb[0].mxu0 %v2099
      %v2253 = vpop.f32.mrb[0].mxu0
      %v2254 = vadd.f32 0.0, %v2253
      %v2255 = vpop.f32.mrb[0].mxu0
      %v2256 = vpop.f32.mrb[0].mxu0
      %v2257 = vadd.f32 0.0, %v2256
      %v2258 = vpop.f32.mrb[0].mxu0
      %2259 = vmatprep.mubr.bf16.mxu0 0
      %2260 = vmatmul.mubr.bf16.gmra.mrb[0].mxu0 %v2102
      %v2261 = vpop.f32.mrb[0].mxu0
      %v2262 = vadd.f32 0.0, %v2261
      %v2263 = vpop.f32.mrb[0].mxu0
      %v2264 = vpop.f32.mrb[0].mxu0
      %v2265 = vadd.f32 0.0, %v2264
      %v2266 = vpop.f32.mrb[0].mxu0
      %2267 = vdwg.mxu0
      %v2268 = vadd.f32 %v1717, %v2142
      %v2269 = vadd.f32 %v1720, %v2145
      %v2270 = vadd.f32 %v1725, %v2150
      %v2271 = vadd.f32 %v1728, %v2153
      %v2272 = vadd.f32 %v1733, %v2158
      %v2273 = vadd.f32 %v1736, %v2161
      %v2274 = vadd.f32 %v1741, %v2166
      %v2275 = vadd.f32 %v1744, %v2169
      %v2276 = vadd.f32 %v1749, %v2174
      %v2277 = vadd.f32 %v1752, %v2177
      %v2278 = vadd.f32 %v1757, %v2182
      %v2279 = vadd.f32 %v1760, %v2185
      %v2280 = vadd.f32 %v1765, %v2190
      %v2281 = vadd.f32 %v1768, %v2193
      %v2282 = vadd.f32 %v1773, %v2198
      %v2283 = vadd.f32 %v1776, %v2201
      %v2284 = vadd.f32 %v1781, %v2206
      %v2285 = vadd.f32 %v1784, %v2209
      %v2286 = vadd.f32 %v1789, %v2214
      %v2287 = vadd.f32 %v1792, %v2217
      %v2288 = vadd.f32 %v1797, %v2222
      %v2289 = vadd.f32 %v1800, %v2225
      %v2290 = vadd.f32 %v1805, %v2230
      %v2291 = vadd.f32 %v1808, %v2233
      %v2292 = vadd.f32 %v1813, %v2238
      %v2293 = vadd.f32 %v1816, %v2241
      %v2294 = vadd.f32 %v1821, %v2246
      %v2295 = vadd.f32 %v1824, %v2249
      %v2296 = vadd.f32 %v1829, %v2254
      %v2297 = vadd.f32 %v1832, %v2257
      %v2298 = vadd.f32 %v1837, %v2262
      %v2299 = vadd.f32 %v1840, %v2265
      %v2300 = vld [vmem:[%s733] sm:$0xf]
      %v2301 = vld [vmem:[%s733 + $0x4] sm:$0xf]
      %v2302 = vld [vmem:[%s733 + $0xc] sm:$0xf]
      %v2303 = vld [vmem:[%s733 + $0x10] sm:$0xf]
      %v2304 = vld [vmem:[%s733 + $0x18] sm:$0xf]
      %v2305 = vld [vmem:[%s733 + $0x1c] sm:$0xf]
      %v2306 = vld [vmem:[%s733 + $0x24] sm:$0xf]
      %v2307 = vld [vmem:[%s733 + $0x28] sm:$0xf]
      %v2308 = vld [vmem:[%s733 + $0x30] sm:$0xf]
      %v2309 = vld [vmem:[%s733 + $0x34] sm:$0xf]
      %v2310 = vld [vmem:[%s733 + $0x3c] sm:$0xf]
      %v2311 = vld [vmem:[%s733 + $0x40] sm:$0xf]
      %v2312 = vld [vmem:[%s733 + $0x48] sm:$0xf]
      %v2313 = vld [vmem:[%s733 + $0x4c] sm:$0xf]
      %v2314 = vld [vmem:[%s733 + $0x54] sm:$0xf]
      %v2315 = vld [vmem:[%s733 + $0x58] sm:$0xf]
      %v2316 = vld [vmem:[%s733 + $0x60] sm:$0xf]
      %v2317 = vld [vmem:[%s733 + $0x64] sm:$0xf]
      %v2318 = vld [vmem:[%s733 + $0x6c] sm:$0xf]
      %v2319 = vld [vmem:[%s733 + $0x70] sm:$0xf]
      %v2320 = vld [vmem:[%s733 + $0x78] sm:$0xf]
      %v2321 = vld [vmem:[%s733 + $0x7c] sm:$0xf]
      %v2322 = vld [vmem:[%s733 + $0x84] sm:$0xf]
      %v2323 = vld [vmem:[%s733 + $0x88] sm:$0xf]
      %v2324 = vld [vmem:[%s733 + $0x90] sm:$0xf]
      %v2325 = vld [vmem:[%s733 + $0x94] sm:$0xf]
      %v2326 = vld [vmem:[%s733 + $0x9c] sm:$0xf]
      %v2327 = vld [vmem:[%s733 + $0xa0] sm:$0xf]
      %v2328 = vld [vmem:[%s733 + $0xa8] sm:$0xf]
      %v2329 = vld [vmem:[%s733 + $0xac] sm:$0xf]
      %v2330 = vld [vmem:[%s733 + $0xb4] sm:$0xf]
      %v2331 = vld [vmem:[%s733 + $0xb8] sm:$0xf]
      %s2332 = scalar_lea.vmem %s1, 6
      %v2333 = vld [vmem:[%s2332] sm:$0x3]
      %v2366 = vunpack.c.l.b16 %v2300
      %v2367 = vunpack.c.l.b16 %v2301
      %v2368 = vunpack.c.l.b16 %v2302
      %v2369 = vunpack.c.l.b16 %v2303
      %v2370 = vunpack.c.l.b16 %v2304
      %v2371 = vunpack.c.l.b16 %v2305
      %v2372 = vunpack.c.l.b16 %v2306
      %v2373 = vunpack.c.l.b16 %v2307
      %v2374 = vunpack.c.l.b16 %v2308
      %v2375 = vunpack.c.l.b16 %v2309
      %v2376 = vunpack.c.l.b16 %v2310
      %v2377 = vunpack.c.l.b16 %v2311
      %v2378 = vunpack.c.l.b16 %v2312
      %v2379 = vunpack.c.l.b16 %v2313
      %v2380 = vunpack.c.l.b16 %v2314
      %v2381 = vunpack.c.l.b16 %v2315
      %v2382 = vunpack.c.l.b16 %v2316
      %v2383 = vunpack.c.l.b16 %v2317
      %v2384 = vunpack.c.l.b16 %v2318
      %v2385 = vunpack.c.l.b16 %v2319
      %v2386 = vunpack.c.l.b16 %v2320
      %v2387 = vunpack.c.l.b16 %v2321
      %v2388 = vunpack.c.l.b16 %v2322
      %v2389 = vunpack.c.l.b16 %v2323
      %v2390 = vunpack.c.l.b16 %v2324
      %v2391 = vunpack.c.l.b16 %v2325
      %v2392 = vunpack.c.l.b16 %v2326
      %v2393 = vunpack.c.l.b16 %v2327
      %v2394 = vunpack.c.l.b16 %v2328
      %v2395 = vunpack.c.l.b16 %v2329
      %v2396 = vunpack.c.l.b16 %v2330
      %v2397 = vunpack.c.l.b16 %v2331
      %v2398 = vpack.c.b16 %v2367, %v2366
      %v2399 = vpack.c.b16 %v2369, %v2368
      %v2400 = vpack.c.b16 %v2371, %v2370
      %v2401 = vpack.c.b16 %v2373, %v2372
      %v2402 = vpack.c.b16 %v2375, %v2374
      %v2403 = vpack.c.b16 %v2377, %v2376
      %v2404 = vpack.c.b16 %v2379, %v2378
      %v2405 = vpack.c.b16 %v2381, %v2380
      %v2406 = vpack.c.b16 %v2383, %v2382
      %v2407 = vpack.c.b16 %v2385, %v2384
      %v2408 = vpack.c.b16 %v2387, %v2386
      %v2409 = vpack.c.b16 %v2389, %v2388
      %v2410 = vpack.c.b16 %v2391, %v2390
      %v2411 = vpack.c.b16 %v2393, %v2392
      %v2412 = vpack.c.b16 %v2395, %v2394
      %v2413 = vpack.c.b16 %v2397, %v2396
      %v2415 = vsel %vm1337, %v2398, 0
      %v2418 = vsel %vm1337, %v2399, 0
      %v2421 = vsel %vm1337, %v2400, 0
      %v2424 = vsel %vm1337, %v2401, 0
      %v2427 = vsel %vm1337, %v2402, 0
      %v2430 = vsel %vm1337, %v2403, 0
      %v2433 = vsel %vm1337, %v2404, 0
      %v2436 = vsel %vm1337, %v2405, 0
      %v2439 = vsel %vm1337, %v2406, 0
      %v2442 = vsel %vm1337, %v2407, 0
      %v2445 = vsel %vm1337, %v2408, 0
      %v2448 = vsel %vm1337, %v2409, 0
      %v2451 = vsel %vm1337, %v2410, 0
      %v2454 = vsel %vm1337, %v2411, 0
      %v2457 = vsel %vm1337, %v2412, 0
      %v2460 = vsel %vm1337, %v2413, 0
      %v2463 = vsel %vm1386, %v2333, 0
      %2465 = vmatprep.subr.bf16.mxu0 0
      %2466 = vmatpush1.bf16.msra.mxu0 %v2463
      %2467 = vmatprep.subr.bf16.mxu0 0
      %2468 = vmatpush1.bf16.msra.mxu0 0
      %2469 = vmatprep.subr.bf16.mxu0 0
      %2470 = vmatpush1.bf16.msra.mxu0 0
      %2471 = vmatprep.subr.bf16.mxu0 0
      %2472 = vmatpush1.bf16.msra.mxu0 0
      %2473 = vmatprep.subr.bf16.mxu0 0
      %2474 = vmatpush1.bf16.msra.mxu0 0
      %2475 = vmatprep.subr.bf16.mxu0 0
      %2476 = vmatpush1.bf16.msra.mxu0 0
      %2477 = vmatprep.subr.bf16.mxu0 0
      %2478 = vmatpush1.bf16.msra.mxu0 0
      %2479 = vmatprep.subr.bf16.mxu0 0
      %2480 = vmatpush1.bf16.msra.mxu0 0
      %2481 = vmatprep.subr.bf16.mxu0 0
      %2482 = vmatpush1.bf16.msra.mxu0 0
      %2483 = vmatprep.subr.bf16.mxu0 0
      %2484 = vmatpush1.bf16.msra.mxu0 0
      %2485 = vmatprep.subr.bf16.mxu0 0
      %2486 = vmatpush1.bf16.msra.mxu0 0
      %2487 = vmatprep.subr.bf16.mxu0 0
      %2488 = vmatpush1.bf16.msra.mxu0 0
      %2489 = vmatprep.subr.bf16.mxu0 0
      %2490 = vmatpush1.bf16.msra.mxu0 0
      %2491 = vmatprep.subr.bf16.mxu0 0
      %2492 = vmatpush1.bf16.msra.mxu0 0
      %2493 = vmatprep.subr.bf16.mxu0 0
      %2494 = vmatpush1.bf16.msra.mxu0 0
      %2495 = vmatprep.subr.bf16.mxu0 0
      %2496 = vmatpush1.bf16.msra.mxu0 0
      %2497 = vmatprep.mubr.bf16.mxu0 0
      %2498 = vmatmul.mubr.bf16.gmra.mrb[0].mxu0 %v2415
      %v2499 = vpop.f32.mrb[0].mxu0
      %v2500 = vadd.f32 0.0, %v2499
      %v2501 = vpop.f32.mrb[0].mxu0
      %v2502 = vpop.f32.mrb[0].mxu0
      %v2503 = vadd.f32 0.0, %v2502
      %v2504 = vpop.f32.mrb[0].mxu0
      %2505 = vmatprep.mubr.bf16.mxu0 0
      %2506 = vmatmul.mubr.bf16.gmra.mrb[0].mxu0 %v2418
      %v2507 = vpop.f32.mrb[0].mxu0
      %v2508 = vadd.f32 0.0, %v2507
      %v2509 = vpop.f32.mrb[0].mxu0
      %v2510 = vpop.f32.mrb[0].mxu0
      %v2511 = vadd.f32 0.0, %v2510
      %v2512 = vpop.f32.mrb[0].mxu0
      %2513 = vmatprep.mubr.bf16.mxu0 0
      %2514 = vmatmul.mubr.bf16.gmra.mrb[0].mxu0 %v2421
      %v2515 = vpop.f32.mrb[0].mxu0
      %v2516 = vadd.f32 0.0, %v2515
      %v2517 = vpop.f32.mrb[0].mxu0
      %v2518 = vpop.f32.mrb[0].mxu0
      %v2519 = vadd.f32 0.0, %v2518
      %v2520 = vpop.f32.mrb[0].mxu0
      %2521 = vmatprep.mubr.bf16.mxu0 0
      %2522 = vmatmul.mubr.bf16.gmra.mrb[0].mxu0 %v2424
      %v2523 = vpop.f32.mrb[0].mxu0
      %v2524 = vadd.f32 0.0, %v2523
      %v2525 = vpop.f32.mrb[0].mxu0
      %v2526 = vpop.f32.mrb[0].mxu0
      %v2527 = vadd.f32 0.0, %v2526
      %v2528 = vpop.f32.mrb[0].mxu0
      %2529 = vmatprep.mubr.bf16.mxu0 0
      %2530 = vmatmul.mubr.bf16.gmra.mrb[0].mxu0 %v2427
      %v2531 = vpop.f32.mrb[0].mxu0
      %v2532 = vadd.f32 0.0, %v2531
      %v2533 = vpop.f32.mrb[0].mxu0
      %v2534 = vpop.f32.mrb[0].mxu0
      %v2535 = vadd.f32 0.0, %v2534
      %v2536 = vpop.f32.mrb[0].mxu0
      %2537 = vmatprep.mubr.bf16.mxu0 0
      %2538 = vmatmul.mubr.bf16.gmra.mrb[0].mxu0 %v2430
      %v2539 = vpop.f32.mrb[0].mxu0
      %v2540 = vadd.f32 0.0, %v2539
      %v2541 = vpop.f32.mrb[0].mxu0
      %v2542 = vpop.f32.mrb[0].mxu0
      %v2543 = vadd.f32 0.0, %v2542
      %v2544 = vpop.f32.mrb[0].mxu0
      %2545 = vmatprep.mubr.bf16.mxu0 0
      %2546 = vmatmul.mubr.bf16.gmra.mrb[0].mxu0 %v2433
      %v2547 = vpop.f32.mrb[0].mxu0
      %v2548 = vadd.f32 0.0, %v2547
      %v2549 = vpop.f32.mrb[0].mxu0
      %v2550 = vpop.f32.mrb[0].mxu0
      %v2551 = vadd.f32 0.0, %v2550
      %v2552 = vpop.f32.mrb[0].mxu0
      %2553 = vmatprep.mubr.bf16.mxu0 0
      %2554 = vmatmul.mubr.bf16.gmra.mrb[0].mxu0 %v2436
      %v2555 = vpop.f32.mrb[0].mxu0
      %v2556 = vadd.f32 0.0, %v2555
      %v2557 = vpop.f32.mrb[0].mxu0
      %v2558 = vpop.f32.mrb[0].mxu0
      %v2559 = vadd.f32 0.0, %v2558
      %v2560 = vpop.f32.mrb[0].mxu0
      %2561 = vmatprep.mubr.bf16.mxu0 0
      %2562 = vmatmul.mubr.bf16.gmra.mrb[0].mxu0 %v2439
      %v2563 = vpop.f32.mrb[0].mxu0
      %v2564 = vadd.f32 0.0, %v2563
      %v2565 = vpop.f32.mrb[0].mxu0
      %v2566 = vpop.f32.mrb[0].mxu0
      %v2567 = vadd.f32 0.0, %v2566
      %v2568 = vpop.f32.mrb[0].mxu0
      %2569 = vmatprep.mubr.bf16.mxu0 0
      %2570 = vmatmul.mubr.bf16.gmra.mrb[0].mxu0 %v2442
      %v2571 = vpop.f32.mrb[0].mxu0
      %v2572 = vadd.f32 0.0, %v2571
      %v2573 = vpop.f32.mrb[0].mxu0
      %v2574 = vpop.f32.mrb[0].mxu0
      %v2575 = vadd.f32 0.0, %v2574
      %v2576 = vpop.f32.mrb[0].mxu0
      %2577 = vmatprep.mubr.bf16.mxu0 0
      %2578 = vmatmul.mubr.bf16.gmra.mrb[0].mxu0 %v2445
      %v2579 = vpop.f32.mrb[0].mxu0
      %v2580 = vadd.f32 0.0, %v2579
      %v2581 = vpop.f32.mrb[0].mxu0
      %v2582 = vpop.f32.mrb[0].mxu0
      %v2583 = vadd.f32 0.0, %v2582
      %v2584 = vpop.f32.mrb[0].mxu0
      %2585 = vmatprep.mubr.bf16.mxu0 0
      %2586 = vmatmul.mubr.bf16.gmra.mrb[0].mxu0 %v2448
      %v2587 = vpop.f32.mrb[0].mxu0
      %v2588 = vadd.f32 0.0, %v2587
      %v2589 = vpop.f32.mrb[0].mxu0
      %v2590 = vpop.f32.mrb[0].mxu0
      %v2591 = vadd.f32 0.0, %v2590
      %v2592 = vpop.f32.mrb[0].mxu0
      %2593 = vmatprep.mubr.bf16.mxu0 0
      %2594 = vmatmul.mubr.bf16.gmra.mrb[0].mxu0 %v2451
      %v2595 = vpop.f32.mrb[0].mxu0
      %v2596 = vadd.f32 0.0, %v2595
      %v2597 = vpop.f32.mrb[0].mxu0
      %v2598 = vpop.f32.mrb[0].mxu0
      %v2599 = vadd.f32 0.0, %v2598
      %v2600 = vpop.f32.mrb[0].mxu0
      %2601 = vmatprep.mubr.bf16.mxu0 0
      %2602 = vmatmul.mubr.bf16.gmra.mrb[0].mxu0 %v2454
      %v2603 = vpop.f32.mrb[0].mxu0
      %v2604 = vadd.f32 0.0, %v2603
      %v2605 = vpop.f32.mrb[0].mxu0
      %v2606 = vpop.f32.mrb[0].mxu0
      %v2607 = vadd.f32 0.0, %v2606
      %v2608 = vpop.f32.mrb[0].mxu0
      %2609 = vmatprep.mubr.bf16.mxu0 0
      %2610 = vmatmul.mubr.bf16.gmra.mrb[0].mxu0 %v2457
      %v2611 = vpop.f32.mrb[0].mxu0
      %v2612 = vadd.f32 0.0, %v2611
      %v2613 = vpop.f32.mrb[0].mxu0
      %v2614 = vpop.f32.mrb[0].mxu0
      %v2615 = vadd.f32 0.0, %v2614
      %v2616 = vpop.f32.mrb[0].mxu0
      %2617 = vmatprep.mubr.bf16.mxu0 0
      %2618 = vmatmul.mubr.bf16.gmra.mrb[0].mxu0 %v2460
      %v2619 = vpop.f32.mrb[0].mxu0
      %v2620 = vadd.f32 0.0, %v2619
      %v2621 = vpop.f32.mrb[0].mxu0
      %v2622 = vpop.f32.mrb[0].mxu0
      %v2623 = vadd.f32 0.0, %v2622
      %v2624 = vpop.f32.mrb[0].mxu0
      %2625 = vdwg.mxu0
      %v2626 = vadd.f32 %v2268, %v2500
      %v2627 = vadd.f32 %v2269, %v2503
      %v2628 = vadd.f32 %v2270, %v2508
      %v2629 = vadd.f32 %v2271, %v2511
      %v2630 = vadd.f32 %v2272, %v2516
      %v2631 = vadd.f32 %v2273, %v2519
      %v2632 = vadd.f32 %v2274, %v2524
      %v2633 = vadd.f32 %v2275, %v2527
      %v2634 = vadd.f32 %v2276, %v2532
      %v2635 = vadd.f32 %v2277, %v2535
      %v2636 = vadd.f32 %v2278, %v2540
      %v2637 = vadd.f32 %v2279, %v2543
      %v2638 = vadd.f32 %v2280, %v2548
      %v2639 = vadd.f32 %v2281, %v2551
      %v2640 = vadd.f32 %v2282, %v2556
      %v2641 = vadd.f32 %v2283, %v2559
      %v2642 = vadd.f32 %v2284, %v2564
      %v2643 = vadd.f32 %v2285, %v2567
      %v2644 = vadd.f32 %v2286, %v2572
      %v2645 = vadd.f32 %v2287, %v2575
      %v2646 = vadd.f32 %v2288, %v2580
      %v2647 = vadd.f32 %v2289, %v2583
      %v2648 = vadd.f32 %v2290, %v2588
      %v2649 = vadd.f32 %v2291, %v2591
      %v2650 = vadd.f32 %v2292, %v2596
      %v2651 = vadd.f32 %v2293, %v2599
      %v2652 = vadd.f32 %v2294, %v2604
      %v2653 = vadd.f32 %v2295, %v2607
      %v2654 = vadd.f32 %v2296, %v2612
      %v2655 = vadd.f32 %v2297, %v2615
      %v2656 = vadd.f32 %v2298, %v2620
      %v2657 = vadd.f32 %v2299, %v2623
      %v2658 = vld [vmem:[%s733] sm:$0xf]
      %v2659 = vld [vmem:[%s733 + $0x4] sm:$0xf]
      %v2660 = vld [vmem:[%s733 + $0x8] sm:$0x1]
      %v2661 = vld [vmem:[%s733 + $0xc] sm:$0xf]
      %v2662 = vld [vmem:[%s733 + $0x10] sm:$0xf]
      %v2663 = vld [vmem:[%s733 + $0x14] sm:$0x1]
      %v2664 = vld [vmem:[%s733 + $0x18] sm:$0xf]
      %v2665 = vld [vmem:[%s733 + $0x1c] sm:$0xf]
      %v2666 = vld [vmem:[%s733 + $0x20] sm:$0x1]
      %v2667 = vld [vmem:[%s733 + $0x24] sm:$0xf]
      %v2668 = vld [vmem:[%s733 + $0x28] sm:$0xf]
      %v2669 = vld [vmem:[%s733 + $0x2c] sm:$0x1]
      %v2670 = vld [vmem:[%s733 + $0x30] sm:$0xf]
      %v2671 = vld [vmem:[%s733 + $0x34] sm:$0xf]
      %v2672 = vld [vmem:[%s733 + $0x38] sm:$0x1]
      %v2673 = vld [vmem:[%s733 + $0x3c] sm:$0xf]
      %v2674 = vld [vmem:[%s733 + $0x40] sm:$0xf]
      %v2675 = vld [vmem:[%s733 + $0x44] sm:$0x1]
      %v2676 = vld [vmem:[%s733 + $0x48] sm:$0xf]
      %v2677 = vld [vmem:[%s733 + $0x4c] sm:$0xf]
      %v2678 = vld [vmem:[%s733 + $0x50] sm:$0x1]
      %v2679 = vld [vmem:[%s733 + $0x54] sm:$0xf]
      %v2680 = vld [vmem:[%s733 + $0x58] sm:$0xf]
      %v2681 = vld [vmem:[%s733 + $0x5c] sm:$0x1]
      %v2682 = vld [vmem:[%s733 + $0x60] sm:$0xf]
      %v2683 = vld [vmem:[%s733 + $0x64] sm:$0xf]
      %v2684 = vld [vmem:[%s733 + $0x68] sm:$0x1]
      %v2685 = vld [vmem:[%s733 + $0x6c] sm:$0xf]
      %v2686 = vld [vmem:[%s733 + $0x70] sm:$0xf]
      %v2687 = vld [vmem:[%s733 + $0x74] sm:$0x1]
      %v2688 = vld [vmem:[%s733 + $0x78] sm:$0xf]
      %v2689 = vld [vmem:[%s733 + $0x7c] sm:$0xf]
      %v2690 = vld [vmem:[%s733 + $0x80] sm:$0x1]
      %v2691 = vld [vmem:[%s733 + $0x84] sm:$0xf]
      %v2692 = vld [vmem:[%s733 + $0x88] sm:$0xf]
      %v2693 = vld [vmem:[%s733 + $0x8c] sm:$0x1]
      %v2694 = vld [vmem:[%s733 + $0x90] sm:$0xf]
      %v2695 = vld [vmem:[%s733 + $0x94] sm:$0xf]
      %v2696 = vld [vmem:[%s733 + $0x98] sm:$0x1]
      %v2697 = vld [vmem:[%s733 + $0x9c] sm:$0xf]
      %v2698 = vld [vmem:[%s733 + $0xa0] sm:$0xf]
      %v2699 = vld [vmem:[%s733 + $0xa4] sm:$0x1]
      %v2700 = vld [vmem:[%s733 + $0xa8] sm:$0xf]
      %v2701 = vld [vmem:[%s733 + $0xac] sm:$0xf]
      %v2702 = vld [vmem:[%s733 + $0xb0] sm:$0x1]
      %v2703 = vld [vmem:[%s733 + $0xb4] sm:$0xf]
      %v2704 = vld [vmem:[%s733 + $0xb8] sm:$0xf]
      %v2705 = vld [vmem:[%s733 + $0xbc] sm:$0x1]
      %v2707 = vshrl.u32 %v2658, 16
      %v2709 = vrot.slane %v2707, 4
      %v2710 = vshll.u32 %v2658, 16
      %v2712 = vrot.slane %v2710, 5
      %v2713 = vor.u32 %v2709, %v2712
      %v2714 = vrot.slane %v2713, 4
      %v2716 = vshll.u32 %v2659, 16
      %v2718 = vrot.slane %v2716, 5
      %v2719 = vsel %vm902, %v2714, %v2718
      %v2720 = vshrl.u32 %v2659, 16
      %v2722 = vrot.slane %v2720, 4
      %v2723 = vor.u32 %v2722, %v2718
      %v2724 = vrot.slane %v2723, 4
      %v2726 = vshll.u32 %v2660, 16
      %v2728 = vrot.slane %v2726, 5
      %v2729 = vsel %vm902, %v2724, %v2728
      %v2731 = vshrl.u32 %v2661, 16
      %v2733 = vrot.slane %v2731, 4
      %v2734 = vshll.u32 %v2661, 16
      %v2736 = vrot.slane %v2734, 5
      %v2737 = vor.u32 %v2733, %v2736
      %v2738 = vrot.slane %v2737, 4
      %v2740 = vshll.u32 %v2662, 16
      %v2742 = vrot.slane %v2740, 5
      %v2743 = vsel %vm902, %v2738, %v2742
      %v2744 = vshrl.u32 %v2662, 16
      %v2746 = vrot.slane %v2744, 4
      %v2747 = vor.u32 %v2746, %v2742
      %v2748 = vrot.slane %v2747, 4
      %v2750 = vshll.u32 %v2663, 16
      %v2752 = vrot.slane %v2750, 5
      %v2753 = vsel %vm902, %v2748, %v2752
      %v2755 = vshrl.u32 %v2664, 16
      %v2757 = vrot.slane %v2755, 4
      %v2758 = vshll.u32 %v2664, 16
      %v2760 = vrot.slane %v2758, 5
      %v2761 = vor.u32 %v2757, %v2760
      %v2762 = vrot.slane %v2761, 4
      %v2764 = vshll.u32 %v2665, 16
      %v2766 = vrot.slane %v2764, 5
      %v2767 = vsel %vm902, %v2762, %v2766
      %v2768 = vshrl.u32 %v2665, 16
      %v2770 = vrot.slane %v2768, 4
      %v2771 = vor.u32 %v2770, %v2766
      %v2772 = vrot.slane %v2771, 4
      %v2774 = vshll.u32 %v2666, 16
      %v2776 = vrot.slane %v2774, 5
      %v2777 = vsel %vm902, %v2772, %v2776
      %v2779 = vshrl.u32 %v2667, 16
      %v2781 = vrot.slane %v2779, 4
      %v2782 = vshll.u32 %v2667, 16
      %v2784 = vrot.slane %v2782, 5
      %v2785 = vor.u32 %v2781, %v2784
      %v2786 = vrot.slane %v2785, 4
      %v2788 = vshll.u32 %v2668, 16
      %v2790 = vrot.slane %v2788, 5
      %v2791 = vsel %vm902, %v2786, %v2790
      %v2792 = vshrl.u32 %v2668, 16
      %v2794 = vrot.slane %v2792, 4
      %v2795 = vor.u32 %v2794, %v2790
      %v2796 = vrot.slane %v2795, 4
      %v2798 = vshll.u32 %v2669, 16
      %v2800 = vrot.slane %v2798, 5
      %v2801 = vsel %vm902, %v2796, %v2800
      %v2803 = vshrl.u32 %v2670, 16
      %v2805 = vrot.slane %v2803, 4
      %v2806 = vshll.u32 %v2670, 16
      %v2808 = vrot.slane %v2806, 5
      %v2809 = vor.u32 %v2805, %v2808
      %v2810 = vrot.slane %v2809, 4
      %v2812 = vshll.u32 %v2671, 16
      %v2814 = vrot.slane %v2812, 5
      %v2815 = vsel %vm902, %v2810, %v2814
      %v2816 = vshrl.u32 %v2671, 16
      %v2818 = vrot.slane %v2816, 4
      %v2819 = vor.u32 %v2818, %v2814
      %v2820 = vrot.slane %v2819, 4
      %v2822 = vshll.u32 %v2672, 16
      %v2824 = vrot.slane %v2822, 5
      %v2825 = vsel %vm902, %v2820, %v2824
      %v2827 = vshrl.u32 %v2673, 16
      %v2829 = vrot.slane %v2827, 4
      %v2830 = vshll.u32 %v2673, 16
      %v2832 = vrot.slane %v2830, 5
      %v2833 = vor.u32 %v2829, %v2832
      %v2834 = vrot.slane %v2833, 4
      %v2836 = vshll.u32 %v2674, 16
      %v2838 = vrot.slane %v2836, 5
      %v2839 = vsel %vm902, %v2834, %v2838
      %v2840 = vshrl.u32 %v2674, 16
      %v2842 = vrot.slane %v2840, 4
      %v2843 = vor.u32 %v2842, %v2838
      %v2844 = vrot.slane %v2843, 4
      %v2846 = vshll.u32 %v2675, 16
      %v2848 = vrot.slane %v2846, 5
      %v2849 = vsel %vm902, %v2844, %v2848
      %v2851 = vshrl.u32 %v2676, 16
      %v2853 = vrot.slane %v2851, 4
      %v2854 = vshll.u32 %v2676, 16
      %v2856 = vrot.slane %v2854, 5
      %v2857 = vor.u32 %v2853, %v2856
      %v2858 = vrot.slane %v2857, 4
      %v2860 = vshll.u32 %v2677, 16
      %v2862 = vrot.slane %v2860, 5
      %v2863 = vsel %vm902, %v2858, %v2862
      %v2864 = vshrl.u32 %v2677, 16
      %v2866 = vrot.slane %v2864, 4
      %v2867 = vor.u32 %v2866, %v2862
      %v2868 = vrot.slane %v2867, 4
      %v2870 = vshll.u32 %v2678, 16
      %v2872 = vrot.slane %v2870, 5
      %v2873 = vsel %vm902, %v2868, %v2872
      %v2875 = vshrl.u32 %v2679, 16
      %v2877 = vrot.slane %v2875, 4
      %v2878 = vshll.u32 %v2679, 16
      %v2880 = vrot.slane %v2878, 5
      %v2881 = vor.u32 %v2877, %v2880
      %v2882 = vrot.slane %v2881, 4
      %v2884 = vshll.u32 %v2680, 16
      %v2886 = vrot.slane %v2884, 5
      %v2887 = vsel %vm902, %v2882, %v2886
      %v2888 = vshrl.u32 %v2680, 16
      %v2890 = vrot.slane %v2888, 4
      %v2891 = vor.u32 %v2890, %v2886
      %v2892 = vrot.slane %v2891, 4
      %v2894 = vshll.u32 %v2681, 16
      %v2896 = vrot.slane %v2894, 5
      %v2897 = vsel %vm902, %v2892, %v2896
      %v2899 = vshrl.u32 %v2682, 16
      %v2901 = vrot.slane %v2899, 4
      %v2902 = vshll.u32 %v2682, 16
      %v2904 = vrot.slane %v2902, 5
      %v2905 = vor.u32 %v2901, %v2904
      %v2906 = vrot.slane %v2905, 4
      %v2908 = vshll.u32 %v2683, 16
      %v2910 = vrot.slane %v2908, 5
      %v2911 = vsel %vm902, %v2906, %v2910
      %v2912 = vshrl.u32 %v2683, 16
      %v2914 = vrot.slane %v2912, 4
      %v2915 = vor.u32 %v2914, %v2910
      %v2916 = vrot.slane %v2915, 4
      %v2918 = vshll.u32 %v2684, 16
      %v2920 = vrot.slane %v2918, 5
      %v2921 = vsel %vm902, %v2916, %v2920
      %v2923 = vshrl.u32 %v2685, 16
      %v2925 = vrot.slane %v2923, 4
      %v2926 = vshll.u32 %v2685, 16
      %v2928 = vrot.slane %v2926, 5
      %v2929 = vor.u32 %v2925, %v2928
      %v2930 = vrot.slane %v2929, 4
      %v2932 = vshll.u32 %v2686, 16
      %v2934 = vrot.slane %v2932, 5
      %v2935 = vsel %vm902, %v2930, %v2934
      %v2936 = vshrl.u32 %v2686, 16
      %v2938 = vrot.slane %v2936, 4
      %v2939 = vor.u32 %v2938, %v2934
      %v2940 = vrot.slane %v2939, 4
      %v2942 = vshll.u32 %v2687, 16
      %v2944 = vrot.slane %v2942, 5
      %v2945 = vsel %vm902, %v2940, %v2944
      %v2947 = vshrl.u32 %v2688, 16
      %v2949 = vrot.slane %v2947, 4
      %v2950 = vshll.u32 %v2688, 16
      %v2952 = vrot.slane %v2950, 5
      %v2953 = vor.u32 %v2949, %v2952
      %v2954 = vrot.slane %v2953, 4
      %v2956 = vshll.u32 %v2689, 16
      %v2958 = vrot.slane %v2956, 5
      %v2959 = vsel %vm902, %v2954, %v2958
      %v2960 = vshrl.u32 %v2689, 16
      %v2962 = vrot.slane %v2960, 4
      %v2963 = vor.u32 %v2962, %v2958
      %v2964 = vrot.slane %v2963, 4
      %v2966 = vshll.u32 %v2690, 16
      %v2968 = vrot.slane %v2966, 5
      %v2969 = vsel %vm902, %v2964, %v2968
      %v2971 = vshrl.u32 %v2691, 16
      %v2973 = vrot.slane %v2971, 4
      %v2974 = vshll.u32 %v2691, 16
      %v2976 = vrot.slane %v2974, 5
      %v2977 = vor.u32 %v2973, %v2976
      %v2978 = vrot.slane %v2977, 4
      %v2980 = vshll.u32 %v2692, 16
      %v2982 = vrot.slane %v2980, 5
      %v2983 = vsel %vm902, %v2978, %v2982
      %v2984 = vshrl.u32 %v2692, 16
      %v2986 = vrot.slane %v2984, 4
      %v2987 = vor.u32 %v2986, %v2982
      %v2988 = vrot.slane %v2987, 4
      %v2990 = vshll.u32 %v2693, 16
      %v2992 = vrot.slane %v2990, 5
      %v2993 = vsel %vm902, %v2988, %v2992
      %v2995 = vshrl.u32 %v2694, 16
      %v2997 = vrot.slane %v2995, 4
      %v2998 = vshll.u32 %v2694, 16
      %v3000 = vrot.slane %v2998, 5
      %v3001 = vor.u32 %v2997, %v3000
      %v3002 = vrot.slane %v3001, 4
      %v3004 = vshll.u32 %v2695, 16
      %v3006 = vrot.slane %v3004, 5
      %v3007 = vsel %vm902, %v3002, %v3006
      %v3008 = vshrl.u32 %v2695, 16
      %v3010 = vrot.slane %v3008, 4
      %v3011 = vor.u32 %v3010, %v3006
      %v3012 = vrot.slane %v3011, 4
      %v3014 = vshll.u32 %v2696, 16
      %v3016 = vrot.slane %v3014, 5
      %v3017 = vsel %vm902, %v3012, %v3016
      %v3019 = vshrl.u32 %v2697, 16
      %v3021 = vrot.slane %v3019, 4
      %v3022 = vshll.u32 %v2697, 16
      %v3024 = vrot.slane %v3022, 5
      %v3025 = vor.u32 %v3021, %v3024
      %v3026 = vrot.slane %v3025, 4
      %v3028 = vshll.u32 %v2698, 16
      %v3030 = vrot.slane %v3028, 5
      %v3031 = vsel %vm902, %v3026, %v3030
      %v3032 = vshrl.u32 %v2698, 16
      %v3034 = vrot.slane %v3032, 4
      %v3035 = vor.u32 %v3034, %v3030
      %v3036 = vrot.slane %v3035, 4
      %v3038 = vshll.u32 %v2699, 16
      %v3040 = vrot.slane %v3038, 5
      %v3041 = vsel %vm902, %v3036, %v3040
      %v3043 = vshrl.u32 %v2700, 16
      %v3045 = vrot.slane %v3043, 4
      %v3046 = vshll.u32 %v2700, 16
      %v3048 = vrot.slane %v3046, 5
      %v3049 = vor.u32 %v3045, %v3048
      %v3050 = vrot.slane %v3049, 4
      %v3052 = vshll.u32 %v2701, 16
      %v3054 = vrot.slane %v3052, 5
      %v3055 = vsel %vm902, %v3050, %v3054
      %v3056 = vshrl.u32 %v2701, 16
      %v3058 = vrot.slane %v3056, 4
      %v3059 = vor.u32 %v3058, %v3054
      %v3060 = vrot.slane %v3059, 4
      %v3062 = vshll.u32 %v2702, 16
      %v3064 = vrot.slane %v3062, 5
      %v3065 = vsel %vm902, %v3060, %v3064
      %v3067 = vshrl.u32 %v2703, 16
      %v3069 = vrot.slane %v3067, 4
      %v3070 = vshll.u32 %v2703, 16
      %v3072 = vrot.slane %v3070, 5
      %v3073 = vor.u32 %v3069, %v3072
      %v3074 = vrot.slane %v3073, 4
      %v3076 = vshll.u32 %v2704, 16
      %v3078 = vrot.slane %v3076, 5
      %v3079 = vsel %vm902, %v3074, %v3078
      %v3080 = vshrl.u32 %v2704, 16
      %v3082 = vrot.slane %v3080, 4
      %v3083 = vor.u32 %v3082, %v3078
      %v3084 = vrot.slane %v3083, 4
      %v3086 = vshll.u32 %v2705, 16
      %v3088 = vrot.slane %v3086, 5
      %v3089 = vsel %vm902, %v3084, %v3088
      %s3090 = scalar_lea.vmem %s1, 8
      %v3091 = vld [vmem:[%s3090] sm:$0x3]
      %v3092 = vunpack.c.l.b16 %v2719
      %v3093 = vunpack.c.l.b16 %v2729
      %v3094 = vunpack.c.l.b16 %v2743
      %v3095 = vunpack.c.l.b16 %v2753
      %v3096 = vunpack.c.l.b16 %v2767
      %v3097 = vunpack.c.l.b16 %v2777
      %v3098 = vunpack.c.l.b16 %v2791
      %v3099 = vunpack.c.l.b16 %v2801
      %v3100 = vunpack.c.l.b16 %v2815
      %v3101 = vunpack.c.l.b16 %v2825
      %v3102 = vunpack.c.l.b16 %v2839
      %v3103 = vunpack.c.l.b16 %v2849
      %v3104 = vunpack.c.l.b16 %v2863
      %v3105 = vunpack.c.l.b16 %v2873
      %v3106 = vunpack.c.l.b16 %v2887
      %v3107 = vunpack.c.l.b16 %v2897
      %v3108 = vunpack.c.l.b16 %v2911
      %v3109 = vunpack.c.l.b16 %v2921
      %v3110 = vunpack.c.l.b16 %v2935
      %v3111 = vunpack.c.l.b16 %v2945
      %v3112 = vunpack.c.l.b16 %v2959
      %v3113 = vunpack.c.l.b16 %v2969
      %v3114 = vunpack.c.l.b16 %v2983
      %v3115 = vunpack.c.l.b16 %v2993
      %v3116 = vunpack.c.l.b16 %v3007
      %v3117 = vunpack.c.l.b16 %v3017
      %v3118 = vunpack.c.l.b16 %v3031
      %v3119 = vunpack.c.l.b16 %v3041
      %v3120 = vunpack.c.l.b16 %v3055
      %v3121 = vunpack.c.l.b16 %v3065
      %v3122 = vunpack.c.l.b16 %v3079
      %v3123 = vunpack.c.l.b16 %v3089
      %v3124 = vpack.c.b16 %v3093, %v3092
      %v3125 = vpack.c.b16 %v3095, %v3094
      %v3126 = vpack.c.b16 %v3097, %v3096
      %v3127 = vpack.c.b16 %v3099, %v3098
      %v3128 = vpack.c.b16 %v3101, %v3100
      %v3129 = vpack.c.b16 %v3103, %v3102
      %v3130 = vpack.c.b16 %v3105, %v3104
      %v3131 = vpack.c.b16 %v3107, %v3106
      %v3132 = vpack.c.b16 %v3109, %v3108
      %v3133 = vpack.c.b16 %v3111, %v3110
      %v3134 = vpack.c.b16 %v3113, %v3112
      %v3135 = vpack.c.b16 %v3115, %v3114
      %v3136 = vpack.c.b16 %v3117, %v3116
      %v3137 = vpack.c.b16 %v3119, %v3118
      %v3138 = vpack.c.b16 %v3121, %v3120
      %v3139 = vpack.c.b16 %v3123, %v3122
      %v3141 = vsel %vm1337, %v3124, 0
      %v3144 = vsel %vm1337, %v3125, 0
      %v3147 = vsel %vm1337, %v3126, 0
      %v3150 = vsel %vm1337, %v3127, 0
      %v3153 = vsel %vm1337, %v3128, 0
      %v3156 = vsel %vm1337, %v3129, 0
      %v3159 = vsel %vm1337, %v3130, 0
      %v3162 = vsel %vm1337, %v3131, 0
      %v3165 = vsel %vm1337, %v3132, 0
      %v3168 = vsel %vm1337, %v3133, 0
      %v3171 = vsel %vm1337, %v3134, 0
      %v3174 = vsel %vm1337, %v3135, 0
      %v3177 = vsel %vm1337, %v3136, 0
      %v3180 = vsel %vm1337, %v3137, 0
      %v3183 = vsel %vm1337, %v3138, 0
      %v3186 = vsel %vm1337, %v3139, 0
      %v3189 = vsel %vm1386, %v3091, 0
      %3191 = vmatprep.subr.bf16.mxu0 0
      %3192 = vmatpush1.bf16.msra.mxu0 %v3189
      %3193 = vmatprep.subr.bf16.mxu0 0
      %3194 = vmatpush1.bf16.msra.mxu0 0
      %3195 = vmatprep.subr.bf16.mxu0 0
      %3196 = vmatpush1.bf16.msra.mxu0 0
      %3197 = vmatprep.subr.bf16.mxu0 0
      %3198 = vmatpush1.bf16.msra.mxu0 0
      %3199 = vmatprep.subr.bf16.mxu0 0
      %3200 = vmatpush1.bf16.msra.mxu0 0
      %3201 = vmatprep.subr.bf16.mxu0 0
      %3202 = vmatpush1.bf16.msra.mxu0 0
      %3203 = vmatprep.subr.bf16.mxu0 0
      %3204 = vmatpush1.bf16.msra.mxu0 0
      %3205 = vmatprep.subr.bf16.mxu0 0
      %3206 = vmatpush1.bf16.msra.mxu0 0
      %3207 = vmatprep.subr.bf16.mxu0 0
      %3208 = vmatpush1.bf16.msra.mxu0 0
      %3209 = vmatprep.subr.bf16.mxu0 0
      %3210 = vmatpush1.bf16.msra.mxu0 0
      %3211 = vmatprep.subr.bf16.mxu0 0
      %3212 = vmatpush1.bf16.msra.mxu0 0
      %3213 = vmatprep.subr.bf16.mxu0 0
      %3214 = vmatpush1.bf16.msra.mxu0 0
      %3215 = vmatprep.subr.bf16.mxu0 0
      %3216 = vmatpush1.bf16.msra.mxu0 0
      %3217 = vmatprep.subr.bf16.mxu0 0
      %3218 = vmatpush1.bf16.msra.mxu0 0
      %3219 = vmatprep.subr.bf16.mxu0 0
      %3220 = vmatpush1.bf16.msra.mxu0 0
      %3221 = vmatprep.subr.bf16.mxu0 0
      %3222 = vmatpush1.bf16.msra.mxu0 0
      %3223 = vmatprep.mubr.bf16.mxu0 0
      %3224 = vmatmul.mubr.bf16.gmra.mrb[0].mxu0 %v3141
      %v3225 = vpop.f32.mrb[0].mxu0
      %v3226 = vadd.f32 0.0, %v3225
      %v3227 = vpop.f32.mrb[0].mxu0
      %v3228 = vpop.f32.mrb[0].mxu0
      %v3229 = vadd.f32 0.0, %v3228
      %v3230 = vpop.f32.mrb[0].mxu0
      %3231 = vmatprep.mubr.bf16.mxu0 0
      %3232 = vmatmul.mubr.bf16.gmra.mrb[0].mxu0 %v3144
      %v3233 = vpop.f32.mrb[0].mxu0
      %v3234 = vadd.f32 0.0, %v3233
      %v3235 = vpop.f32.mrb[0].mxu0
      %v3236 = vpop.f32.mrb[0].mxu0
      %v3237 = vadd.f32 0.0, %v3236
      %v3238 = vpop.f32.mrb[0].mxu0
      %3239 = vmatprep.mubr.bf16.mxu0 0
      %3240 = vmatmul.mubr.bf16.gmra.mrb[0].mxu0 %v3147
      %v3241 = vpop.f32.mrb[0].mxu0
      %v3242 = vadd.f32 0.0, %v3241
      %v3243 = vpop.f32.mrb[0].mxu0
      %v3244 = vpop.f32.mrb[0].mxu0
      %v3245 = vadd.f32 0.0, %v3244
      %v3246 = vpop.f32.mrb[0].mxu0
      %3247 = vmatprep.mubr.bf16.mxu0 0
      %3248 = vmatmul.mubr.bf16.gmra.mrb[0].mxu0 %v3150
      %v3249 = vpop.f32.mrb[0].mxu0
      %v3250 = vadd.f32 0.0, %v3249
      %v3251 = vpop.f32.mrb[0].mxu0
      %v3252 = vpop.f32.mrb[0].mxu0
      %v3253 = vadd.f32 0.0, %v3252
      %v3254 = vpop.f32.mrb[0].mxu0
      %3255 = vmatprep.mubr.bf16.mxu0 0
      %3256 = vmatmul.mubr.bf16.gmra.mrb[0].mxu0 %v3153
      %v3257 = vpop.f32.mrb[0].mxu0
      %v3258 = vadd.f32 0.0, %v3257
      %v3259 = vpop.f32.mrb[0].mxu0
      %v3260 = vpop.f32.mrb[0].mxu0
      %v3261 = vadd.f32 0.0, %v3260
      %v3262 = vpop.f32.mrb[0].mxu0
      %3263 = vmatprep.mubr.bf16.mxu0 0
      %3264 = vmatmul.mubr.bf16.gmra.mrb[0].mxu0 %v3156
      %v3265 = vpop.f32.mrb[0].mxu0
      %v3266 = vadd.f32 0.0, %v3265
      %v3267 = vpop.f32.mrb[0].mxu0
      %v3268 = vpop.f32.mrb[0].mxu0
      %v3269 = vadd.f32 0.0, %v3268
      %v3270 = vpop.f32.mrb[0].mxu0
      %3271 = vmatprep.mubr.bf16.mxu0 0
      %3272 = vmatmul.mubr.bf16.gmra.mrb[0].mxu0 %v3159
      %v3273 = vpop.f32.mrb[0].mxu0
      %v3274 = vadd.f32 0.0, %v3273
      %v3275 = vpop.f32.mrb[0].mxu0
      %v3276 = vpop.f32.mrb[0].mxu0
      %v3277 = vadd.f32 0.0, %v3276
      %v3278 = vpop.f32.mrb[0].mxu0
      %3279 = vmatprep.mubr.bf16.mxu0 0
      %3280 = vmatmul.mubr.bf16.gmra.mrb[0].mxu0 %v3162
      %v3281 = vpop.f32.mrb[0].mxu0
      %v3282 = vadd.f32 0.0, %v3281
      %v3283 = vpop.f32.mrb[0].mxu0
      %v3284 = vpop.f32.mrb[0].mxu0
      %v3285 = vadd.f32 0.0, %v3284
      %v3286 = vpop.f32.mrb[0].mxu0
      %3287 = vmatprep.mubr.bf16.mxu0 0
      %3288 = vmatmul.mubr.bf16.gmra.mrb[0].mxu0 %v3165
      %v3289 = vpop.f32.mrb[0].mxu0
      %v3290 = vadd.f32 0.0, %v3289
      %v3291 = vpop.f32.mrb[0].mxu0
      %v3292 = vpop.f32.mrb[0].mxu0
      %v3293 = vadd.f32 0.0, %v3292
      %v3294 = vpop.f32.mrb[0].mxu0
      %3295 = vmatprep.mubr.bf16.mxu0 0
      %3296 = vmatmul.mubr.bf16.gmra.mrb[0].mxu0 %v3168
      %v3297 = vpop.f32.mrb[0].mxu0
      %v3298 = vadd.f32 0.0, %v3297
      %v3299 = vpop.f32.mrb[0].mxu0
      %v3300 = vpop.f32.mrb[0].mxu0
      %v3301 = vadd.f32 0.0, %v3300
      %v3302 = vpop.f32.mrb[0].mxu0
      %3303 = vmatprep.mubr.bf16.mxu0 0
      %3304 = vmatmul.mubr.bf16.gmra.mrb[0].mxu0 %v3171
      %v3305 = vpop.f32.mrb[0].mxu0
      %v3306 = vadd.f32 0.0, %v3305
      %v3307 = vpop.f32.mrb[0].mxu0
      %v3308 = vpop.f32.mrb[0].mxu0
      %v3309 = vadd.f32 0.0, %v3308
      %v3310 = vpop.f32.mrb[0].mxu0
      %3311 = vmatprep.mubr.bf16.mxu0 0
      %3312 = vmatmul.mubr.bf16.gmra.mrb[0].mxu0 %v3174
      %v3313 = vpop.f32.mrb[0].mxu0
      %v3314 = vadd.f32 0.0, %v3313
      %v3315 = vpop.f32.mrb[0].mxu0
      %v3316 = vpop.f32.mrb[0].mxu0
      %v3317 = vadd.f32 0.0, %v3316
      %v3318 = vpop.f32.mrb[0].mxu0
      %3319 = vmatprep.mubr.bf16.mxu0 0
      %3320 = vmatmul.mubr.bf16.gmra.mrb[0].mxu0 %v3177
      %v3321 = vpop.f32.mrb[0].mxu0
      %v3322 = vadd.f32 0.0, %v3321
      %v3323 = vpop.f32.mrb[0].mxu0
      %v3324 = vpop.f32.mrb[0].mxu0
      %v3325 = vadd.f32 0.0, %v3324
      %v3326 = vpop.f32.mrb[0].mxu0
      %3327 = vmatprep.mubr.bf16.mxu0 0
      %3328 = vmatmul.mubr.bf16.gmra.mrb[0].mxu0 %v3180
      %v3329 = vpop.f32.mrb[0].mxu0
      %v3330 = vadd.f32 0.0, %v3329
      %v3331 = vpop.f32.mrb[0].mxu0
      %v3332 = vpop.f32.mrb[0].mxu0
      %v3333 = vadd.f32 0.0, %v3332
      %v3334 = vpop.f32.mrb[0].mxu0
      %3335 = vmatprep.mubr.bf16.mxu0 0
      %3336 = vmatmul.mubr.bf16.gmra.mrb[0].mxu0 %v3183
      %v3337 = vpop.f32.mrb[0].mxu0
      %v3338 = vadd.f32 0.0, %v3337
      %v3339 = vpop.f32.mrb[0].mxu0
      %v3340 = vpop.f32.mrb[0].mxu0
      %v3341 = vadd.f32 0.0, %v3340
      %v3342 = vpop.f32.mrb[0].mxu0
      %3343 = vmatprep.mubr.bf16.mxu0 0
      %3344 = vmatmul.mubr.bf16.gmra.mrb[0].mxu0 %v3186
      %v3345 = vpop.f32.mrb[0].mxu0
      %v3346 = vadd.f32 0.0, %v3345
      %v3347 = vpop.f32.mrb[0].mxu0
      %v3348 = vpop.f32.mrb[0].mxu0
      %v3349 = vadd.f32 0.0, %v3348
      %v3350 = vpop.f32.mrb[0].mxu0
      %3351 = vdwg.mxu0
      %v3352 = vadd.f32 %v2626, %v3226
      %v3353 = vadd.f32 %v2627, %v3229
      %v3354 = vadd.f32 %v2628, %v3234
      %v3355 = vadd.f32 %v2629, %v3237
      %v3356 = vadd.f32 %v2630, %v3242
      %v3357 = vadd.f32 %v2631, %v3245
      %v3358 = vadd.f32 %v2632, %v3250
      %v3359 = vadd.f32 %v2633, %v3253
      %v3360 = vadd.f32 %v2634, %v3258
      %v3361 = vadd.f32 %v2635, %v3261
      %v3362 = vadd.f32 %v2636, %v3266
      %v3363 = vadd.f32 %v2637, %v3269
      %v3364 = vadd.f32 %v2638, %v3274
      %v3365 = vadd.f32 %v2639, %v3277
      %v3366 = vadd.f32 %v2640, %v3282
      %v3367 = vadd.f32 %v2641, %v3285
      %v3368 = vadd.f32 %v2642, %v3290
      %v3369 = vadd.f32 %v2643, %v3293
      %v3370 = vadd.f32 %v2644, %v3298
      %v3371 = vadd.f32 %v2645, %v3301
      %v3372 = vadd.f32 %v2646, %v3306
      %v3373 = vadd.f32 %v2647, %v3309
      %v3374 = vadd.f32 %v2648, %v3314
      %v3375 = vadd.f32 %v2649, %v3317
      %v3376 = vadd.f32 %v2650, %v3322
      %v3377 = vadd.f32 %v2651, %v3325
      %v3378 = vadd.f32 %v2652, %v3330
      %v3379 = vadd.f32 %v2653, %v3333
      %v3380 = vadd.f32 %v2654, %v3338
      %v3381 = vadd.f32 %v2655, %v3341
      %v3382 = vadd.f32 %v2656, %v3346
      %v3383 = vadd.f32 %v2657, %v3349
      %v3384 = vld [vmem:[%s733] sm:$0xe]
      %v3385 = vld [vmem:[%s733 + $0xc] sm:$0xe]
      %v3386 = vld [vmem:[%s733 + $0x18] sm:$0xe]
      %v3387 = vld [vmem:[%s733 + $0x24] sm:$0xe]
      %v3388 = vld [vmem:[%s733 + $0x30] sm:$0xe]
      %v3389 = vld [vmem:[%s733 + $0x3c] sm:$0xe]
      %v3390 = vld [vmem:[%s733 + $0x48] sm:$0xe]
      %v3391 = vld [vmem:[%s733 + $0x54] sm:$0xe]
      %v3392 = vld [vmem:[%s733 + $0x60] sm:$0xe]
      %v3393 = vld [vmem:[%s733 + $0x6c] sm:$0xe]
      %v3394 = vld [vmem:[%s733 + $0x78] sm:$0xe]
      %v3395 = vld [vmem:[%s733 + $0x84] sm:$0xe]
      %v3396 = vld [vmem:[%s733 + $0x90] sm:$0xe]
      %v3397 = vld [vmem:[%s733 + $0x9c] sm:$0xe]
      %v3398 = vld [vmem:[%s733 + $0xa8] sm:$0xe]
      %v3399 = vld [vmem:[%s733 + $0xb4] sm:$0xe]
      %v3448 = vrot.slane %v3384, 5
      %v3449 = vrot.slane %v3448, 4
      %v3450 = vrot.slane %v2659, 5
      %v3451 = vsel %vm1893, %v3449, %v3450
      %v3452 = vrot.slane %v3450, 4
      %v3453 = vrot.slane %v2660, 5
      %v3454 = vsel %vm1893, %v3452, %v3453
      %v3455 = vrot.slane %v3385, 5
      %v3456 = vrot.slane %v3455, 4
      %v3457 = vrot.slane %v2662, 5
      %v3458 = vsel %vm1893, %v3456, %v3457
      %v3459 = vrot.slane %v3457, 4
      %v3460 = vrot.slane %v2663, 5
      %v3461 = vsel %vm1893, %v3459, %v3460
      %v3462 = vrot.slane %v3386, 5
      %v3463 = vrot.slane %v3462, 4
      %v3464 = vrot.slane %v2665, 5
      %v3465 = vsel %vm1893, %v3463, %v3464
      %v3466 = vrot.slane %v3464, 4
      %v3467 = vrot.slane %v2666, 5
      %v3468 = vsel %vm1893, %v3466, %v3467
      %v3469 = vrot.slane %v3387, 5
      %v3470 = vrot.slane %v3469, 4
      %v3471 = vrot.slane %v2668, 5
      %v3472 = vsel %vm1893, %v3470, %v3471
      %v3473 = vrot.slane %v3471, 4
      %v3474 = vrot.slane %v2669, 5
      %v3475 = vsel %vm1893, %v3473, %v3474
      %v3476 = vrot.slane %v3388, 5
      %v3477 = vrot.slane %v3476, 4
      %v3478 = vrot.slane %v2671, 5
      %v3479 = vsel %vm1893, %v3477, %v3478
      %v3480 = vrot.slane %v3478, 4
      %v3481 = vrot.slane %v2672, 5
      %v3482 = vsel %vm1893, %v3480, %v3481
      %v3483 = vrot.slane %v3389, 5
      %v3484 = vrot.slane %v3483, 4
      %v3485 = vrot.slane %v2674, 5
      %v3486 = vsel %vm1893, %v3484, %v3485
      %v3487 = vrot.slane %v3485, 4
      %v3488 = vrot.slane %v2675, 5
      %v3489 = vsel %vm1893, %v3487, %v3488
      %v3490 = vrot.slane %v3390, 5
      %v3491 = vrot.slane %v3490, 4
      %v3492 = vrot.slane %v2677, 5
      %v3493 = vsel %vm1893, %v3491, %v3492
      %v3494 = vrot.slane %v3492, 4
      %v3495 = vrot.slane %v2678, 5
      %v3496 = vsel %vm1893, %v3494, %v3495
      %v3497 = vrot.slane %v3391, 5
      %v3498 = vrot.slane %v3497, 4
      %v3499 = vrot.slane %v2680, 5
      %v3500 = vsel %vm1893, %v3498, %v3499
      %v3501 = vrot.slane %v3499, 4
      %v3502 = vrot.slane %v2681, 5
      %v3503 = vsel %vm1893, %v3501, %v3502
      %v3504 = vrot.slane %v3392, 5
      %v3505 = vrot.slane %v3504, 4
      %v3506 = vrot.slane %v2683, 5
      %v3507 = vsel %vm1893, %v3505, %v3506
      %v3508 = vrot.slane %v3506, 4
      %v3509 = vrot.slane %v2684, 5
      %v3510 = vsel %vm1893, %v3508, %v3509
      %v3511 = vrot.slane %v3393, 5
      %v3512 = vrot.slane %v3511, 4
      %v3513 = vrot.slane %v2686, 5
      %v3514 = vsel %vm1893, %v3512, %v3513
      %v3515 = vrot.slane %v3513, 4
      %v3516 = vrot.slane %v2687, 5
      %v3517 = vsel %vm1893, %v3515, %v3516
      %v3518 = vrot.slane %v3394, 5
      %v3519 = vrot.slane %v3518, 4
      %v3520 = vrot.slane %v2689, 5
      %v3521 = vsel %vm1893, %v3519, %v3520
      %v3522 = vrot.slane %v3520, 4
      %v3523 = vrot.slane %v2690, 5
      %v3524 = vsel %vm1893, %v3522, %v3523
      %v3525 = vrot.slane %v3395, 5
      %v3526 = vrot.slane %v3525, 4
      %v3527 = vrot.slane %v2692, 5
      %v3528 = vsel %vm1893, %v3526, %v3527
      %v3529 = vrot.slane %v3527, 4
      %v3530 = vrot.slane %v2693, 5
      %v3531 = vsel %vm1893, %v3529, %v3530
      %v3532 = vrot.slane %v3396, 5
      %v3533 = vrot.slane %v3532, 4
      %v3534 = vrot.slane %v2695, 5
      %v3535 = vsel %vm1893, %v3533, %v3534
      %v3536 = vrot.slane %v3534, 4
      %v3537 = vrot.slane %v2696, 5
      %v3538 = vsel %vm1893, %v3536, %v3537
      %v3539 = vrot.slane %v3397, 5
      %v3540 = vrot.slane %v3539, 4
      %v3541 = vrot.slane %v2698, 5
      %v3542 = vsel %vm1893, %v3540, %v3541
      %v3543 = vrot.slane %v3541, 4
      %v3544 = vrot.slane %v2699, 5
      %v3545 = vsel %vm1893, %v3543, %v3544
      %v3546 = vrot.slane %v3398, 5
      %v3547 = vrot.slane %v3546, 4
      %v3548 = vrot.slane %v2701, 5
      %v3549 = vsel %vm1893, %v3547, %v3548
      %v3550 = vrot.slane %v3548, 4
      %v3551 = vrot.slane %v2702, 5
      %v3552 = vsel %vm1893, %v3550, %v3551
      %v3553 = vrot.slane %v3399, 5
      %v3554 = vrot.slane %v3553, 4
      %v3555 = vrot.slane %v2704, 5
      %v3556 = vsel %vm1893, %v3554, %v3555
      %v3557 = vrot.slane %v3555, 4
      %v3558 = vrot.slane %v2705, 5
      %v3559 = vsel %vm1893, %v3557, %v3558
      %s3560 = scalar_lea.vmem %s1, 10
      %v3561 = vld [vmem:[%s3560] sm:$0x3]
      %v3562 = vunpack.c.l.b16 %v3451
      %v3563 = vunpack.c.l.b16 %v3454
      %v3564 = vunpack.c.l.b16 %v3458
      %v3565 = vunpack.c.l.b16 %v3461
      %v3566 = vunpack.c.l.b16 %v3465
      %v3567 = vunpack.c.l.b16 %v3468
      %v3568 = vunpack.c.l.b16 %v3472
      %v3569 = vunpack.c.l.b16 %v3475
      %v3570 = vunpack.c.l.b16 %v3479
      %v3571 = vunpack.c.l.b16 %v3482
      %v3572 = vunpack.c.l.b16 %v3486
      %v3573 = vunpack.c.l.b16 %v3489
      %v3574 = vunpack.c.l.b16 %v3493
      %v3575 = vunpack.c.l.b16 %v3496
      %v3576 = vunpack.c.l.b16 %v3500
      %v3577 = vunpack.c.l.b16 %v3503
      %v3578 = vunpack.c.l.b16 %v3507
      %v3579 = vunpack.c.l.b16 %v3510
      %v3580 = vunpack.c.l.b16 %v3514
      %v3581 = vunpack.c.l.b16 %v3517
      %v3582 = vunpack.c.l.b16 %v3521
      %v3583 = vunpack.c.l.b16 %v3524
      %v3584 = vunpack.c.l.b16 %v3528
      %v3585 = vunpack.c.l.b16 %v3531
      %v3586 = vunpack.c.l.b16 %v3535
      %v3587 = vunpack.c.l.b16 %v3538
      %v3588 = vunpack.c.l.b16 %v3542
      %v3589 = vunpack.c.l.b16 %v3545
      %v3590 = vunpack.c.l.b16 %v3549
      %v3591 = vunpack.c.l.b16 %v3552
      %v3592 = vunpack.c.l.b16 %v3556
      %v3593 = vunpack.c.l.b16 %v3559
      %v3594 = vpack.c.b16 %v3563, %v3562
      %v3595 = vpack.c.b16 %v3565, %v3564
      %v3596 = vpack.c.b16 %v3567, %v3566
      %v3597 = vpack.c.b16 %v3569, %v3568
      %v3598 = vpack.c.b16 %v3571, %v3570
      %v3599 = vpack.c.b16 %v3573, %v3572
      %v3600 = vpack.c.b16 %v3575, %v3574
      %v3601 = vpack.c.b16 %v3577, %v3576
      %v3602 = vpack.c.b16 %v3579, %v3578
      %v3603 = vpack.c.b16 %v3581, %v3580
      %v3604 = vpack.c.b16 %v3583, %v3582
      %v3605 = vpack.c.b16 %v3585, %v3584
      %v3606 = vpack.c.b16 %v3587, %v3586
      %v3607 = vpack.c.b16 %v3589, %v3588
      %v3608 = vpack.c.b16 %v3591, %v3590
      %v3609 = vpack.c.b16 %v3593, %v3592
      %v3611 = vsel %vm1337, %v3594, 0
      %v3614 = vsel %vm1337, %v3595, 0
      %v3617 = vsel %vm1337, %v3596, 0
      %v3620 = vsel %vm1337, %v3597, 0
      %v3623 = vsel %vm1337, %v3598, 0
      %v3626 = vsel %vm1337, %v3599, 0
      %v3629 = vsel %vm1337, %v3600, 0
      %v3632 = vsel %vm1337, %v3601, 0
      %v3635 = vsel %vm1337, %v3602, 0
      %v3638 = vsel %vm1337, %v3603, 0
      %v3641 = vsel %vm1337, %v3604, 0
      %v3644 = vsel %vm1337, %v3605, 0
      %v3647 = vsel %vm1337, %v3606, 0
      %v3650 = vsel %vm1337, %v3607, 0
      %v3653 = vsel %vm1337, %v3608, 0
      %v3656 = vsel %vm1337, %v3609, 0
      %v3659 = vsel %vm1386, %v3561, 0
      %3661 = vmatprep.subr.bf16.mxu0 0
      %3662 = vmatpush1.bf16.msra.mxu0 %v3659
      %3663 = vmatprep.subr.bf16.mxu0 0
      %3664 = vmatpush1.bf16.msra.mxu0 0
      %3665 = vmatprep.subr.bf16.mxu0 0
      %3666 = vmatpush1.bf16.msra.mxu0 0
      %3667 = vmatprep.subr.bf16.mxu0 0
      %3668 = vmatpush1.bf16.msra.mxu0 0
      %3669 = vmatprep.subr.bf16.mxu0 0
      %3670 = vmatpush1.bf16.msra.mxu0 0
      %3671 = vmatprep.subr.bf16.mxu0 0
      %3672 = vmatpush1.bf16.msra.mxu0 0
      %3673 = vmatprep.subr.bf16.mxu0 0
      %3674 = vmatpush1.bf16.msra.mxu0 0
      %3675 = vmatprep.subr.bf16.mxu0 0
      %3676 = vmatpush1.bf16.msra.mxu0 0
      %3677 = vmatprep.subr.bf16.mxu0 0
      %3678 = vmatpush1.bf16.msra.mxu0 0
      %3679 = vmatprep.subr.bf16.mxu0 0
      %3680 = vmatpush1.bf16.msra.mxu0 0
      %3681 = vmatprep.subr.bf16.mxu0 0
      %3682 = vmatpush1.bf16.msra.mxu0 0
      %3683 = vmatprep.subr.bf16.mxu0 0
      %3684 = vmatpush1.bf16.msra.mxu0 0
      %3685 = vmatprep.subr.bf16.mxu0 0
      %3686 = vmatpush1.bf16.msra.mxu0 0
      %3687 = vmatprep.subr.bf16.mxu0 0
      %3688 = vmatpush1.bf16.msra.mxu0 0
      %3689 = vmatprep.subr.bf16.mxu0 0
      %3690 = vmatpush1.bf16.msra.mxu0 0
      %3691 = vmatprep.subr.bf16.mxu0 0
      %3692 = vmatpush1.bf16.msra.mxu0 0
      %3693 = vmatprep.mubr.bf16.mxu0 0
      %3694 = vmatmul.mubr.bf16.gmra.mrb[0].mxu0 %v3611
      %v3695 = vpop.f32.mrb[0].mxu0
      %v3696 = vadd.f32 0.0, %v3695
      %v3697 = vpop.f32.mrb[0].mxu0
      %v3698 = vpop.f32.mrb[0].mxu0
      %v3699 = vadd.f32 0.0, %v3698
      %v3700 = vpop.f32.mrb[0].mxu0
      %3701 = vmatprep.mubr.bf16.mxu0 0
      %3702 = vmatmul.mubr.bf16.gmra.mrb[0].mxu0 %v3614
      %v3703 = vpop.f32.mrb[0].mxu0
      %v3704 = vadd.f32 0.0, %v3703
      %v3705 = vpop.f32.mrb[0].mxu0
      %v3706 = vpop.f32.mrb[0].mxu0
      %v3707 = vadd.f32 0.0, %v3706
      %v3708 = vpop.f32.mrb[0].mxu0
      %3709 = vmatprep.mubr.bf16.mxu0 0
      %3710 = vmatmul.mubr.bf16.gmra.mrb[0].mxu0 %v3617
      %v3711 = vpop.f32.mrb[0].mxu0
      %v3712 = vadd.f32 0.0, %v3711
      %v3713 = vpop.f32.mrb[0].mxu0
      %v3714 = vpop.f32.mrb[0].mxu0
      %v3715 = vadd.f32 0.0, %v3714
      %v3716 = vpop.f32.mrb[0].mxu0
      %3717 = vmatprep.mubr.bf16.mxu0 0
      %3718 = vmatmul.mubr.bf16.gmra.mrb[0].mxu0 %v3620
      %v3719 = vpop.f32.mrb[0].mxu0
      %v3720 = vadd.f32 0.0, %v3719
      %v3721 = vpop.f32.mrb[0].mxu0
      %v3722 = vpop.f32.mrb[0].mxu0
      %v3723 = vadd.f32 0.0, %v3722
      %v3724 = vpop.f32.mrb[0].mxu0
      %3725 = vmatprep.mubr.bf16.mxu0 0
      %3726 = vmatmul.mubr.bf16.gmra.mrb[0].mxu0 %v3623
      %v3727 = vpop.f32.mrb[0].mxu0
      %v3728 = vadd.f32 0.0, %v3727
      %v3729 = vpop.f32.mrb[0].mxu0
      %v3730 = vpop.f32.mrb[0].mxu0
      %v3731 = vadd.f32 0.0, %v3730
      %v3732 = vpop.f32.mrb[0].mxu0
      %3733 = vmatprep.mubr.bf16.mxu0 0
      %3734 = vmatmul.mubr.bf16.gmra.mrb[0].mxu0 %v3626
      %v3735 = vpop.f32.mrb[0].mxu0
      %v3736 = vadd.f32 0.0, %v3735
      %v3737 = vpop.f32.mrb[0].mxu0
      %v3738 = vpop.f32.mrb[0].mxu0
      %v3739 = vadd.f32 0.0, %v3738
      %v3740 = vpop.f32.mrb[0].mxu0
      %3741 = vmatprep.mubr.bf16.mxu0 0
      %3742 = vmatmul.mubr.bf16.gmra.mrb[0].mxu0 %v3629
      %v3743 = vpop.f32.mrb[0].mxu0
      %v3744 = vadd.f32 0.0, %v3743
      %v3745 = vpop.f32.mrb[0].mxu0
      %v3746 = vpop.f32.mrb[0].mxu0
      %v3747 = vadd.f32 0.0, %v3746
      %v3748 = vpop.f32.mrb[0].mxu0
      %3749 = vmatprep.mubr.bf16.mxu0 0
      %3750 = vmatmul.mubr.bf16.gmra.mrb[0].mxu0 %v3632
      %v3751 = vpop.f32.mrb[0].mxu0
      %v3752 = vadd.f32 0.0, %v3751
      %v3753 = vpop.f32.mrb[0].mxu0
      %v3754 = vpop.f32.mrb[0].mxu0
      %v3755 = vadd.f32 0.0, %v3754
      %v3756 = vpop.f32.mrb[0].mxu0
      %3757 = vmatprep.mubr.bf16.mxu0 0
      %3758 = vmatmul.mubr.bf16.gmra.mrb[0].mxu0 %v3635
      %v3759 = vpop.f32.mrb[0].mxu0
      %v3760 = vadd.f32 0.0, %v3759
      %v3761 = vpop.f32.mrb[0].mxu0
      %v3762 = vpop.f32.mrb[0].mxu0
      %v3763 = vadd.f32 0.0, %v3762
      %v3764 = vpop.f32.mrb[0].mxu0
      %3765 = vmatprep.mubr.bf16.mxu0 0
      %3766 = vmatmul.mubr.bf16.gmra.mrb[0].mxu0 %v3638
      %v3767 = vpop.f32.mrb[0].mxu0
      %v3768 = vadd.f32 0.0, %v3767
      %v3769 = vpop.f32.mrb[0].mxu0
      %v3770 = vpop.f32.mrb[0].mxu0
      %v3771 = vadd.f32 0.0, %v3770
      %v3772 = vpop.f32.mrb[0].mxu0
      %3773 = vmatprep.mubr.bf16.mxu0 0
      %3774 = vmatmul.mubr.bf16.gmra.mrb[0].mxu0 %v3641
      %v3775 = vpop.f32.mrb[0].mxu0
      %v3776 = vadd.f32 0.0, %v3775
      %v3777 = vpop.f32.mrb[0].mxu0
      %v3778 = vpop.f32.mrb[0].mxu0
      %v3779 = vadd.f32 0.0, %v3778
      %v3780 = vpop.f32.mrb[0].mxu0
      %3781 = vmatprep.mubr.bf16.mxu0 0
      %3782 = vmatmul.mubr.bf16.gmra.mrb[0].mxu0 %v3644
      %v3783 = vpop.f32.mrb[0].mxu0
      %v3784 = vadd.f32 0.0, %v3783
      %v3785 = vpop.f32.mrb[0].mxu0
      %v3786 = vpop.f32.mrb[0].mxu0
      %v3787 = vadd.f32 0.0, %v3786
      %v3788 = vpop.f32.mrb[0].mxu0
      %3789 = vmatprep.mubr.bf16.mxu0 0
      %3790 = vmatmul.mubr.bf16.gmra.mrb[0].mxu0 %v3647
      %v3791 = vpop.f32.mrb[0].mxu0
      %v3792 = vadd.f32 0.0, %v3791
      %v3793 = vpop.f32.mrb[0].mxu0
      %v3794 = vpop.f32.mrb[0].mxu0
      %v3795 = vadd.f32 0.0, %v3794
      %v3796 = vpop.f32.mrb[0].mxu0
      %3797 = vmatprep.mubr.bf16.mxu0 0
      %3798 = vmatmul.mubr.bf16.gmra.mrb[0].mxu0 %v3650
      %v3799 = vpop.f32.mrb[0].mxu0
      %v3800 = vadd.f32 0.0, %v3799
      %v3801 = vpop.f32.mrb[0].mxu0
      %v3802 = vpop.f32.mrb[0].mxu0
      %v3803 = vadd.f32 0.0, %v3802
      %v3804 = vpop.f32.mrb[0].mxu0
      %3805 = vmatprep.mubr.bf16.mxu0 0
      %3806 = vmatmul.mubr.bf16.gmra.mrb[0].mxu0 %v3653
      %v3807 = vpop.f32.mrb[0].mxu0
      %v3808 = vadd.f32 0.0, %v3807
      %v3809 = vpop.f32.mrb[0].mxu0
      %v3810 = vpop.f32.mrb[0].mxu0
      %v3811 = vadd.f32 0.0, %v3810
      %v3812 = vpop.f32.mrb[0].mxu0
      %3813 = vmatprep.mubr.bf16.mxu0 0
      %3814 = vmatmul.mubr.bf16.gmra.mrb[0].mxu0 %v3656
      %v3815 = vpop.f32.mrb[0].mxu0
      %v3816 = vadd.f32 0.0, %v3815
      %v3817 = vpop.f32.mrb[0].mxu0
      %v3818 = vpop.f32.mrb[0].mxu0
      %v3819 = vadd.f32 0.0, %v3818
      %v3820 = vpop.f32.mrb[0].mxu0
      %3821 = vdwg.mxu0
      %v3822 = vadd.f32 %v3352, %v3696
      %v3823 = vadd.f32 %v3353, %v3699
      %v3824 = vadd.f32 %v3354, %v3704
      %v3825 = vadd.f32 %v3355, %v3707
      %v3826 = vadd.f32 %v3356, %v3712
      %v3827 = vadd.f32 %v3357, %v3715
      %v3828 = vadd.f32 %v3358, %v3720
      %v3829 = vadd.f32 %v3359, %v3723
      %v3830 = vadd.f32 %v3360, %v3728
      %v3831 = vadd.f32 %v3361, %v3731
      %v3832 = vadd.f32 %v3362, %v3736
      %v3833 = vadd.f32 %v3363, %v3739
      %v3834 = vadd.f32 %v3364, %v3744
      %v3835 = vadd.f32 %v3365, %v3747
      %v3836 = vadd.f32 %v3366, %v3752
      %v3837 = vadd.f32 %v3367, %v3755
      %v3838 = vadd.f32 %v3368, %v3760
      %v3839 = vadd.f32 %v3369, %v3763
      %v3840 = vadd.f32 %v3370, %v3768
      %v3841 = vadd.f32 %v3371, %v3771
      %v3842 = vadd.f32 %v3372, %v3776
      %v3843 = vadd.f32 %v3373, %v3779
      %v3844 = vadd.f32 %v3374, %v3784
      %v3845 = vadd.f32 %v3375, %v3787
      %v3846 = vadd.f32 %v3376, %v3792
      %v3847 = vadd.f32 %v3377, %v3795
      %v3848 = vadd.f32 %v3378, %v3800
      %v3849 = vadd.f32 %v3379, %v3803
      %v3850 = vadd.f32 %v3380, %v3808
      %v3851 = vadd.f32 %v3381, %v3811
      %v3852 = vadd.f32 %v3382, %v3816
      %v3853 = vadd.f32 %v3383, %v3819
      %s3854 = scalar_lea.vmem [#allocation2], 24
      %v3855 = vld [vmem:[%s3854] sm:$0xf]
      %v3856 = vld [vmem:[%s3854 + $0x4] sm:$0xf]
      %v3857 = vld [vmem:[%s3854 + $0xc] sm:$0xf]
      %v3858 = vld [vmem:[%s3854 + $0x10] sm:$0xf]
      %v3859 = vld [vmem:[%s3854 + $0x18] sm:$0xf]
      %v3860 = vld [vmem:[%s3854 + $0x1c] sm:$0xf]
      %v3861 = vld [vmem:[%s3854 + $0x24] sm:$0xf]
      %v3862 = vld [vmem:[%s3854 + $0x28] sm:$0xf]
      %v3863 = vld [vmem:[%s3854 + $0x30] sm:$0xf]
      %v3864 = vld [vmem:[%s3854 + $0x34] sm:$0xf]
      %v3865 = vld [vmem:[%s3854 + $0x3c] sm:$0xf]
      %v3866 = vld [vmem:[%s3854 + $0x40] sm:$0xf]
      %v3867 = vld [vmem:[%s3854 + $0x48] sm:$0xf]
      %v3868 = vld [vmem:[%s3854 + $0x4c] sm:$0xf]
      %v3869 = vld [vmem:[%s3854 + $0x54] sm:$0xf]
      %v3870 = vld [vmem:[%s3854 + $0x58] sm:$0xf]
      %v3871 = vld [vmem:[%s3854 + $0x60] sm:$0xf]
      %v3872 = vld [vmem:[%s3854 + $0x64] sm:$0xf]
      %v3873 = vld [vmem:[%s3854 + $0x6c] sm:$0xf]
      %v3874 = vld [vmem:[%s3854 + $0x70] sm:$0xf]
      %v3875 = vld [vmem:[%s3854 + $0x78] sm:$0xf]
      %v3876 = vld [vmem:[%s3854 + $0x7c] sm:$0xf]
      %v3877 = vld [vmem:[%s3854 + $0x84] sm:$0xf]
      %v3878 = vld [vmem:[%s3854 + $0x88] sm:$0xf]
      %v3879 = vld [vmem:[%s3854 + $0x90] sm:$0xf]
      %v3880 = vld [vmem:[%s3854 + $0x94] sm:$0xf]
      %v3881 = vld [vmem:[%s3854 + $0x9c] sm:$0xf]
      %v3882 = vld [vmem:[%s3854 + $0xa0] sm:$0xf]
      %v3883 = vld [vmem:[%s3854 + $0xa8] sm:$0xf]
      %v3884 = vld [vmem:[%s3854 + $0xac] sm:$0xf]
      %v3885 = vld [vmem:[%s3854 + $0xb4] sm:$0xf]
      %v3886 = vld [vmem:[%s3854 + $0xb8] sm:$0xf]
      %s3887 = scalar_lea.vmem %s1, 12
      %v3888 = vld [vmem:[%s3887] sm:$0x3]
      %v3921 = vunpack.c.l.b16 %v3855
      %v3922 = vunpack.c.l.b16 %v3856
      %v3923 = vunpack.c.l.b16 %v3857
      %v3924 = vunpack.c.l.b16 %v3858
      %v3925 = vunpack.c.l.b16 %v3859
      %v3926 = vunpack.c.l.b16 %v3860
      %v3927 = vunpack.c.l.b16 %v3861
      %v3928 = vunpack.c.l.b16 %v3862
      %v3929 = vunpack.c.l.b16 %v3863
      %v3930 = vunpack.c.l.b16 %v3864
      %v3931 = vunpack.c.l.b16 %v3865
      %v3932 = vunpack.c.l.b16 %v3866
      %v3933 = vunpack.c.l.b16 %v3867
      %v3934 = vunpack.c.l.b16 %v3868
      %v3935 = vunpack.c.l.b16 %v3869
      %v3936 = vunpack.c.l.b16 %v3870
      %v3937 = vunpack.c.l.b16 %v3871
      %v3938 = vunpack.c.l.b16 %v3872
      %v3939 = vunpack.c.l.b16 %v3873
      %v3940 = vunpack.c.l.b16 %v3874
      %v3941 = vunpack.c.l.b16 %v3875
      %v3942 = vunpack.c.l.b16 %v3876
      %v3943 = vunpack.c.l.b16 %v3877
      %v3944 = vunpack.c.l.b16 %v3878
      %v3945 = vunpack.c.l.b16 %v3879
      %v3946 = vunpack.c.l.b16 %v3880
      %v3947 = vunpack.c.l.b16 %v3881
      %v3948 = vunpack.c.l.b16 %v3882
      %v3949 = vunpack.c.l.b16 %v3883
      %v3950 = vunpack.c.l.b16 %v3884
      %v3951 = vunpack.c.l.b16 %v3885
      %v3952 = vunpack.c.l.b16 %v3886
      %v3953 = vpack.c.b16 %v3922, %v3921
      %v3954 = vpack.c.b16 %v3924, %v3923
      %v3955 = vpack.c.b16 %v3926, %v3925
      %v3956 = vpack.c.b16 %v3928, %v3927
      %v3957 = vpack.c.b16 %v3930, %v3929
      %v3958 = vpack.c.b16 %v3932, %v3931
      %v3959 = vpack.c.b16 %v3934, %v3933
      %v3960 = vpack.c.b16 %v3936, %v3935
      %v3961 = vpack.c.b16 %v3938, %v3937
      %v3962 = vpack.c.b16 %v3940, %v3939
      %v3963 = vpack.c.b16 %v3942, %v3941
      %v3964 = vpack.c.b16 %v3944, %v3943
      %v3965 = vpack.c.b16 %v3946, %v3945
      %v3966 = vpack.c.b16 %v3948, %v3947
      %v3967 = vpack.c.b16 %v3950, %v3949
      %v3968 = vpack.c.b16 %v3952, %v3951
      %v3970 = vsel %vm1337, %v3953, 0
      %v3973 = vsel %vm1337, %v3954, 0
      %v3976 = vsel %vm1337, %v3955, 0
      %v3979 = vsel %vm1337, %v3956, 0
      %v3982 = vsel %vm1337, %v3957, 0
      %v3985 = vsel %vm1337, %v3958, 0
      %v3988 = vsel %vm1337, %v3959, 0
      %v3991 = vsel %vm1337, %v3960, 0
      %v3994 = vsel %vm1337, %v3961, 0
      %v3997 = vsel %vm1337, %v3962, 0
      %v4000 = vsel %vm1337, %v3963, 0
      %v4003 = vsel %vm1337, %v3964, 0
      %v4006 = vsel %vm1337, %v3965, 0
      %v4009 = vsel %vm1337, %v3966, 0
      %v4012 = vsel %vm1337, %v3967, 0
      %v4015 = vsel %vm1337, %v3968, 0
      %v4018 = vsel %vm1386, %v3888, 0
      %4020 = vmatprep.subr.bf16.mxu0 0
      %4021 = vmatpush1.bf16.msra.mxu0 %v4018
      %4022 = vmatprep.subr.bf16.mxu0 0
      %4023 = vmatpush1.bf16.msra.mxu0 0
      %4024 = vmatprep.subr.bf16.mxu0 0
      %4025 = vmatpush1.bf16.msra.mxu0 0
      %4026 = vmatprep.subr.bf16.mxu0 0
      %4027 = vmatpush1.bf16.msra.mxu0 0
      %4028 = vmatprep.subr.bf16.mxu0 0
      %4029 = vmatpush1.bf16.msra.mxu0 0
      %4030 = vmatprep.subr.bf16.mxu0 0
      %4031 = vmatpush1.bf16.msra.mxu0 0
      %4032 = vmatprep.subr.bf16.mxu0 0
      %4033 = vmatpush1.bf16.msra.mxu0 0
      %4034 = vmatprep.subr.bf16.mxu0 0
      %4035 = vmatpush1.bf16.msra.mxu0 0
      %4036 = vmatprep.subr.bf16.mxu0 0
      %4037 = vmatpush1.bf16.msra.mxu0 0
      %4038 = vmatprep.subr.bf16.mxu0 0
      %4039 = vmatpush1.bf16.msra.mxu0 0
      %4040 = vmatprep.subr.bf16.mxu0 0
      %4041 = vmatpush1.bf16.msra.mxu0 0
      %4042 = vmatprep.subr.bf16.mxu0 0
      %4043 = vmatpush1.bf16.msra.mxu0 0
      %4044 = vmatprep.subr.bf16.mxu0 0
      %4045 = vmatpush1.bf16.msra.mxu0 0
      %4046 = vmatprep.subr.bf16.mxu0 0
      %4047 = vmatpush1.bf16.msra.mxu0 0
      %4048 = vmatprep.subr.bf16.mxu0 0
      %4049 = vmatpush1.bf16.msra.mxu0 0
      %4050 = vmatprep.subr.bf16.mxu0 0
      %4051 = vmatpush1.bf16.msra.mxu0 0
      %4052 = vmatprep.mubr.bf16.mxu0 0
      %4053 = vmatmul.mubr.bf16.gmra.mrb[0].mxu0 %v3970
      %v4054 = vpop.f32.mrb[0].mxu0
      %v4055 = vadd.f32 0.0, %v4054
      %v4056 = vpop.f32.mrb[0].mxu0
      %v4057 = vpop.f32.mrb[0].mxu0
      %v4058 = vadd.f32 0.0, %v4057
      %v4059 = vpop.f32.mrb[0].mxu0
      %4060 = vmatprep.mubr.bf16.mxu0 0
      %4061 = vmatmul.mubr.bf16.gmra.mrb[0].mxu0 %v3973
      %v4062 = vpop.f32.mrb[0].mxu0
      %v4063 = vadd.f32 0.0, %v4062
      %v4064 = vpop.f32.mrb[0].mxu0
      %v4065 = vpop.f32.mrb[0].mxu0
      %v4066 = vadd.f32 0.0, %v4065
      %v4067 = vpop.f32.mrb[0].mxu0
      %4068 = vmatprep.mubr.bf16.mxu0 0
      %4069 = vmatmul.mubr.bf16.gmra.mrb[0].mxu0 %v3976
      %v4070 = vpop.f32.mrb[0].mxu0
      %v4071 = vadd.f32 0.0, %v4070
      %v4072 = vpop.f32.mrb[0].mxu0
      %v4073 = vpop.f32.mrb[0].mxu0
      %v4074 = vadd.f32 0.0, %v4073
      %v4075 = vpop.f32.mrb[0].mxu0
      %4076 = vmatprep.mubr.bf16.mxu0 0
      %4077 = vmatmul.mubr.bf16.gmra.mrb[0].mxu0 %v3979
      %v4078 = vpop.f32.mrb[0].mxu0
      %v4079 = vadd.f32 0.0, %v4078
      %v4080 = vpop.f32.mrb[0].mxu0
      %v4081 = vpop.f32.mrb[0].mxu0
      %v4082 = vadd.f32 0.0, %v4081
      %v4083 = vpop.f32.mrb[0].mxu0
      %4084 = vmatprep.mubr.bf16.mxu0 0
      %4085 = vmatmul.mubr.bf16.gmra.mrb[0].mxu0 %v3982
      %v4086 = vpop.f32.mrb[0].mxu0
      %v4087 = vadd.f32 0.0, %v4086
      %v4088 = vpop.f32.mrb[0].mxu0
      %v4089 = vpop.f32.mrb[0].mxu0
      %v4090 = vadd.f32 0.0, %v4089
      %v4091 = vpop.f32.mrb[0].mxu0
      %4092 = vmatprep.mubr.bf16.mxu0 0
      %4093 = vmatmul.mubr.bf16.gmra.mrb[0].mxu0 %v3985
      %v4094 = vpop.f32.mrb[0].mxu0
      %v4095 = vadd.f32 0.0, %v4094
      %v4096 = vpop.f32.mrb[0].mxu0
      %v4097 = vpop.f32.mrb[0].mxu0
      %v4098 = vadd.f32 0.0, %v4097
      %v4099 = vpop.f32.mrb[0].mxu0
      %4100 = vmatprep.mubr.bf16.mxu0 0
      %4101 = vmatmul.mubr.bf16.gmra.mrb[0].mxu0 %v3988
      %v4102 = vpop.f32.mrb[0].mxu0
      %v4103 = vadd.f32 0.0, %v4102
      %v4104 = vpop.f32.mrb[0].mxu0
      %v4105 = vpop.f32.mrb[0].mxu0
      %v4106 = vadd.f32 0.0, %v4105
      %v4107 = vpop.f32.mrb[0].mxu0
      %4108 = vmatprep.mubr.bf16.mxu0 0
      %4109 = vmatmul.mubr.bf16.gmra.mrb[0].mxu0 %v3991
      %v4110 = vpop.f32.mrb[0].mxu0
      %v4111 = vadd.f32 0.0, %v4110
      %v4112 = vpop.f32.mrb[0].mxu0
      %v4113 = vpop.f32.mrb[0].mxu0
      %v4114 = vadd.f32 0.0, %v4113
      %v4115 = vpop.f32.mrb[0].mxu0
      %4116 = vmatprep.mubr.bf16.mxu0 0
      %4117 = vmatmul.mubr.bf16.gmra.mrb[0].mxu0 %v3994
      %v4118 = vpop.f32.mrb[0].mxu0
      %v4119 = vadd.f32 0.0, %v4118
      %v4120 = vpop.f32.mrb[0].mxu0
      %v4121 = vpop.f32.mrb[0].mxu0
      %v4122 = vadd.f32 0.0, %v4121
      %v4123 = vpop.f32.mrb[0].mxu0
      %4124 = vmatprep.mubr.bf16.mxu0 0
      %4125 = vmatmul.mubr.bf16.gmra.mrb[0].mxu0 %v3997
      %v4126 = vpop.f32.mrb[0].mxu0
      %v4127 = vadd.f32 0.0, %v4126
      %v4128 = vpop.f32.mrb[0].mxu0
      %v4129 = vpop.f32.mrb[0].mxu0
      %v4130 = vadd.f32 0.0, %v4129
      %v4131 = vpop.f32.mrb[0].mxu0
      %4132 = vmatprep.mubr.bf16.mxu0 0
      %4133 = vmatmul.mubr.bf16.gmra.mrb[0].mxu0 %v4000
      %v4134 = vpop.f32.mrb[0].mxu0
      %v4135 = vadd.f32 0.0, %v4134
      %v4136 = vpop.f32.mrb[0].mxu0
      %v4137 = vpop.f32.mrb[0].mxu0
      %v4138 = vadd.f32 0.0, %v4137
      %v4139 = vpop.f32.mrb[0].mxu0
      %4140 = vmatprep.mubr.bf16.mxu0 0
      %4141 = vmatmul.mubr.bf16.gmra.mrb[0].mxu0 %v4003
      %v4142 = vpop.f32.mrb[0].mxu0
      %v4143 = vadd.f32 0.0, %v4142
      %v4144 = vpop.f32.mrb[0].mxu0
      %v4145 = vpop.f32.mrb[0].mxu0
      %v4146 = vadd.f32 0.0, %v4145
      %v4147 = vpop.f32.mrb[0].mxu0
      %4148 = vmatprep.mubr.bf16.mxu0 0
      %4149 = vmatmul.mubr.bf16.gmra.mrb[0].mxu0 %v4006
      %v4150 = vpop.f32.mrb[0].mxu0
      %v4151 = vadd.f32 0.0, %v4150
      %v4152 = vpop.f32.mrb[0].mxu0
      %v4153 = vpop.f32.mrb[0].mxu0
      %v4154 = vadd.f32 0.0, %v4153
      %v4155 = vpop.f32.mrb[0].mxu0
      %4156 = vmatprep.mubr.bf16.mxu0 0
      %4157 = vmatmul.mubr.bf16.gmra.mrb[0].mxu0 %v4009
      %v4158 = vpop.f32.mrb[0].mxu0
      %v4159 = vadd.f32 0.0, %v4158
      %v4160 = vpop.f32.mrb[0].mxu0
      %v4161 = vpop.f32.mrb[0].mxu0
      %v4162 = vadd.f32 0.0, %v4161
      %v4163 = vpop.f32.mrb[0].mxu0
      %4164 = vmatprep.mubr.bf16.mxu0 0
      %4165 = vmatmul.mubr.bf16.gmra.mrb[0].mxu0 %v4012
      %v4166 = vpop.f32.mrb[0].mxu0
      %v4167 = vadd.f32 0.0, %v4166
      %v4168 = vpop.f32.mrb[0].mxu0
      %v4169 = vpop.f32.mrb[0].mxu0
      %v4170 = vadd.f32 0.0, %v4169
      %v4171 = vpop.f32.mrb[0].mxu0
      %4172 = vmatprep.mubr.bf16.mxu0 0
      %4173 = vmatmul.mubr.bf16.gmra.mrb[0].mxu0 %v4015
      %v4174 = vpop.f32.mrb[0].mxu0
      %v4175 = vadd.f32 0.0, %v4174
      %v4176 = vpop.f32.mrb[0].mxu0
      %v4177 = vpop.f32.mrb[0].mxu0
      %v4178 = vadd.f32 0.0, %v4177
      %v4179 = vpop.f32.mrb[0].mxu0
      %4180 = vdwg.mxu0
      %v4181 = vadd.f32 %v3822, %v4055
      %v4182 = vadd.f32 %v3823, %v4058
      %v4183 = vadd.f32 %v3824, %v4063
      %v4184 = vadd.f32 %v3825, %v4066
      %v4185 = vadd.f32 %v3826, %v4071
      %v4186 = vadd.f32 %v3827, %v4074
      %v4187 = vadd.f32 %v3828, %v4079
      %v4188 = vadd.f32 %v3829, %v4082
      %v4189 = vadd.f32 %v3830, %v4087
      %v4190 = vadd.f32 %v3831, %v4090
      %v4191 = vadd.f32 %v3832, %v4095
      %v4192 = vadd.f32 %v3833, %v4098
      %v4193 = vadd.f32 %v3834, %v4103
      %v4194 = vadd.f32 %v3835, %v4106
      %v4195 = vadd.f32 %v3836, %v4111
      %v4196 = vadd.f32 %v3837, %v4114
      %v4197 = vadd.f32 %v3838, %v4119
      %v4198 = vadd.f32 %v3839, %v4122
      %v4199 = vadd.f32 %v3840, %v4127
      %v4200 = vadd.f32 %v3841, %v4130
      %v4201 = vadd.f32 %v3842, %v4135
      %v4202 = vadd.f32 %v3843, %v4138
      %v4203 = vadd.f32 %v3844, %v4143
      %v4204 = vadd.f32 %v3845, %v4146
      %v4205 = vadd.f32 %v3846, %v4151
      %v4206 = vadd.f32 %v3847, %v4154
      %v4207 = vadd.f32 %v3848, %v4159
      %v4208 = vadd.f32 %v3849, %v4162
      %v4209 = vadd.f32 %v3850, %v4167
      %v4210 = vadd.f32 %v3851, %v4170
      %v4211 = vadd.f32 %v3852, %v4175
      %v4212 = vadd.f32 %v3853, %v4178
      %v4213 = vld [vmem:[%s3854] sm:$0xf]
      %v4214 = vld [vmem:[%s3854 + $0x4] sm:$0xf]
      %v4215 = vld [vmem:[%s3854 + $0x8] sm:$0x1]
      %v4216 = vld [vmem:[%s3854 + $0xc] sm:$0xf]
      %v4217 = vld [vmem:[%s3854 + $0x10] sm:$0xf]
      %v4218 = vld [vmem:[%s3854 + $0x14] sm:$0x1]
      %v4219 = vld [vmem:[%s3854 + $0x18] sm:$0xf]
      %v4220 = vld [vmem:[%s3854 + $0x1c] sm:$0xf]
      %v4221 = vld [vmem:[%s3854 + $0x20] sm:$0x1]
      %v4222 = vld [vmem:[%s3854 + $0x24] sm:$0xf]
      %v4223 = vld [vmem:[%s3854 + $0x28] sm:$0xf]
      %v4224 = vld [vmem:[%s3854 + $0x2c] sm:$0x1]
      %v4225 = vld [vmem:[%s3854 + $0x30] sm:$0xf]
      %v4226 = vld [vmem:[%s3854 + $0x34] sm:$0xf]
      %v4227 = vld [vmem:[%s3854 + $0x38] sm:$0x1]
      %v4228 = vld [vmem:[%s3854 + $0x3c] sm:$0xf]
      %v4229 = vld [vmem:[%s3854 + $0x40] sm:$0xf]
      %v4230 = vld [vmem:[%s3854 + $0x44] sm:$0x1]
      %v4231 = vld [vmem:[%s3854 + $0x48] sm:$0xf]
      %v4232 = vld [vmem:[%s3854 + $0x4c] sm:$0xf]
      %v4233 = vld [vmem:[%s3854 + $0x50] sm:$0x1]
      %v4234 = vld [vmem:[%s3854 + $0x54] sm:$0xf]
      %v4235 = vld [vmem:[%s3854 + $0x58] sm:$0xf]
      %v4236 = vld [vmem:[%s3854 + $0x5c] sm:$0x1]
      %v4237 = vld [vmem:[%s3854 + $0x60] sm:$0xf]
      %v4238 = vld [vmem:[%s3854 + $0x64] sm:$0xf]
      %v4239 = vld [vmem:[%s3854 + $0x68] sm:$0x1]
      %v4240 = vld [vmem:[%s3854 + $0x6c] sm:$0xf]
      %v4241 = vld [vmem:[%s3854 + $0x70] sm:$0xf]
      %v4242 = vld [vmem:[%s3854 + $0x74] sm:$0x1]
      %v4243 = vld [vmem:[%s3854 + $0x78] sm:$0xf]
      %v4244 = vld [vmem:[%s3854 + $0x7c] sm:$0xf]
      %v4245 = vld [vmem:[%s3854 + $0x80] sm:$0x1]
      %v4246 = vld [vmem:[%s3854 + $0x84] sm:$0xf]
      %v4247 = vld [vmem:[%s3854 + $0x88] sm:$0xf]
      %v4248 = vld [vmem:[%s3854 + $0x8c] sm:$0x1]
      %v4249 = vld [vmem:[%s3854 + $0x90] sm:$0xf]
      %v4250 = vld [vmem:[%s3854 + $0x94] sm:$0xf]
      %v4251 = vld [vmem:[%s3854 + $0x98] sm:$0x1]
      %v4252 = vld [vmem:[%s3854 + $0x9c] sm:$0xf]
      %v4253 = vld [vmem:[%s3854 + $0xa0] sm:$0xf]
      %v4254 = vld [vmem:[%s3854 + $0xa4] sm:$0x1]
      %v4255 = vld [vmem:[%s3854 + $0xa8] sm:$0xf]
      %v4256 = vld [vmem:[%s3854 + $0xac] sm:$0xf]
      %v4257 = vld [vmem:[%s3854 + $0xb0] sm:$0x1]
      %v4258 = vld [vmem:[%s3854 + $0xb4] sm:$0xf]
      %v4259 = vld [vmem:[%s3854 + $0xb8] sm:$0xf]
      %v4260 = vld [vmem:[%s3854 + $0xbc] sm:$0x1]
      %v4262 = vshrl.u32 %v4213, 16
      %v4264 = vrot.slane %v4262, 4
      %v4265 = vshll.u32 %v4213, 16
      %v4267 = vrot.slane %v4265, 5
      %v4268 = vor.u32 %v4264, %v4267
      %v4269 = vrot.slane %v4268, 4
      %v4271 = vshll.u32 %v4214, 16
      %v4273 = vrot.slane %v4271, 5
      %v4274 = vsel %vm902, %v4269, %v4273
      %v4275 = vshrl.u32 %v4214, 16
      %v4277 = vrot.slane %v4275, 4
      %v4278 = vor.u32 %v4277, %v4273
      %v4279 = vrot.slane %v4278, 4
      %v4281 = vshll.u32 %v4215, 16
      %v4283 = vrot.slane %v4281, 5
      %v4284 = vsel %vm902, %v4279, %v4283
      %v4286 = vshrl.u32 %v4216, 16
      %v4288 = vrot.slane %v4286, 4
      %v4289 = vshll.u32 %v4216, 16
      %v4291 = vrot.slane %v4289, 5
      %v4292 = vor.u32 %v4288, %v4291
      %v4293 = vrot.slane %v4292, 4
      %v4295 = vshll.u32 %v4217, 16
      %v4297 = vrot.slane %v4295, 5
      %v4298 = vsel %vm902, %v4293, %v4297
      %v4299 = vshrl.u32 %v4217, 16
      %v4301 = vrot.slane %v4299, 4
      %v4302 = vor.u32 %v4301, %v4297
      %v4303 = vrot.slane %v4302, 4
      %v4305 = vshll.u32 %v4218, 16
      %v4307 = vrot.slane %v4305, 5
      %v4308 = vsel %vm902, %v4303, %v4307
      %v4310 = vshrl.u32 %v4219, 16
      %v4312 = vrot.slane %v4310, 4
      %v4313 = vshll.u32 %v4219, 16
      %v4315 = vrot.slane %v4313, 5
      %v4316 = vor.u32 %v4312, %v4315
      %v4317 = vrot.slane %v4316, 4
      %v4319 = vshll.u32 %v4220, 16
      %v4321 = vrot.slane %v4319, 5
      %v4322 = vsel %vm902, %v4317, %v4321
      %v4323 = vshrl.u32 %v4220, 16
      %v4325 = vrot.slane %v4323, 4
      %v4326 = vor.u32 %v4325, %v4321
      %v4327 = vrot.slane %v4326, 4
      %v4329 = vshll.u32 %v4221, 16
      %v4331 = vrot.slane %v4329, 5
      %v4332 = vsel %vm902, %v4327, %v4331
      %v4334 = vshrl.u32 %v4222, 16
      %v4336 = vrot.slane %v4334, 4
      %v4337 = vshll.u32 %v4222, 16
      %v4339 = vrot.slane %v4337, 5
      %v4340 = vor.u32 %v4336, %v4339
      %v4341 = vrot.slane %v4340, 4
      %v4343 = vshll.u32 %v4223, 16
      %v4345 = vrot.slane %v4343, 5
      %v4346 = vsel %vm902, %v4341, %v4345
      %v4347 = vshrl.u32 %v4223, 16
      %v4349 = vrot.slane %v4347, 4
      %v4350 = vor.u32 %v4349, %v4345
      %v4351 = vrot.slane %v4350, 4
      %v4353 = vshll.u32 %v4224, 16
      %v4355 = vrot.slane %v4353, 5
      %v4356 = vsel %vm902, %v4351, %v4355
      %v4358 = vshrl.u32 %v4225, 16
      %v4360 = vrot.slane %v4358, 4
      %v4361 = vshll.u32 %v4225, 16
      %v4363 = vrot.slane %v4361, 5
      %v4364 = vor.u32 %v4360, %v4363
      %v4365 = vrot.slane %v4364, 4
      %v4367 = vshll.u32 %v4226, 16
      %v4369 = vrot.slane %v4367, 5
      %v4370 = vsel %vm902, %v4365, %v4369
      %v4371 = vshrl.u32 %v4226, 16
      %v4373 = vrot.slane %v4371, 4
      %v4374 = vor.u32 %v4373, %v4369
      %v4375 = vrot.slane %v4374, 4
      %v4377 = vshll.u32 %v4227, 16
      %v4379 = vrot.slane %v4377, 5
      %v4380 = vsel %vm902, %v4375, %v4379
      %v4382 = vshrl.u32 %v4228, 16
      %v4384 = vrot.slane %v4382, 4
      %v4385 = vshll.u32 %v4228, 16
      %v4387 = vrot.slane %v4385, 5
      %v4388 = vor.u32 %v4384, %v4387
      %v4389 = vrot.slane %v4388, 4
      %v4391 = vshll.u32 %v4229, 16
      %v4393 = vrot.slane %v4391, 5
      %v4394 = vsel %vm902, %v4389, %v4393
      %v4395 = vshrl.u32 %v4229, 16
      %v4397 = vrot.slane %v4395, 4
      %v4398 = vor.u32 %v4397, %v4393
      %v4399 = vrot.slane %v4398, 4
      %v4401 = vshll.u32 %v4230, 16
      %v4403 = vrot.slane %v4401, 5
      %v4404 = vsel %vm902, %v4399, %v4403
      %v4406 = vshrl.u32 %v4231, 16
      %v4408 = vrot.slane %v4406, 4
      %v4409 = vshll.u32 %v4231, 16
      %v4411 = vrot.slane %v4409, 5
      %v4412 = vor.u32 %v4408, %v4411
      %v4413 = vrot.slane %v4412, 4
      %v4415 = vshll.u32 %v4232, 16
      %v4417 = vrot.slane %v4415, 5
      %v4418 = vsel %vm902, %v4413, %v4417
      %v4419 = vshrl.u32 %v4232, 16
      %v4421 = vrot.slane %v4419, 4
      %v4422 = vor.u32 %v4421, %v4417
      %v4423 = vrot.slane %v4422, 4
      %v4425 = vshll.u32 %v4233, 16
      %v4427 = vrot.slane %v4425, 5
      %v4428 = vsel %vm902, %v4423, %v4427
      %v4430 = vshrl.u32 %v4234, 16
      %v4432 = vrot.slane %v4430, 4
      %v4433 = vshll.u32 %v4234, 16
      %v4435 = vrot.slane %v4433, 5
      %v4436 = vor.u32 %v4432, %v4435
      %v4437 = vrot.slane %v4436, 4
      %v4439 = vshll.u32 %v4235, 16
      %v4441 = vrot.slane %v4439, 5
      %v4442 = vsel %vm902, %v4437, %v4441
      %v4443 = vshrl.u32 %v4235, 16
      %v4445 = vrot.slane %v4443, 4
      %v4446 = vor.u32 %v4445, %v4441
      %v4447 = vrot.slane %v4446, 4
      %v4449 = vshll.u32 %v4236, 16
      %v4451 = vrot.slane %v4449, 5
      %v4452 = vsel %vm902, %v4447, %v4451
      %v4454 = vshrl.u32 %v4237, 16
      %v4456 = vrot.slane %v4454, 4
      %v4457 = vshll.u32 %v4237, 16
      %v4459 = vrot.slane %v4457, 5
      %v4460 = vor.u32 %v4456, %v4459
      %v4461 = vrot.slane %v4460, 4
      %v4463 = vshll.u32 %v4238, 16
      %v4465 = vrot.slane %v4463, 5
      %v4466 = vsel %vm902, %v4461, %v4465
      %v4467 = vshrl.u32 %v4238, 16
      %v4469 = vrot.slane %v4467, 4
      %v4470 = vor.u32 %v4469, %v4465
      %v4471 = vrot.slane %v4470, 4
      %v4473 = vshll.u32 %v4239, 16
      %v4475 = vrot.slane %v4473, 5
      %v4476 = vsel %vm902, %v4471, %v4475
      %v4478 = vshrl.u32 %v4240, 16
      %v4480 = vrot.slane %v4478, 4
      %v4481 = vshll.u32 %v4240, 16
      %v4483 = vrot.slane %v4481, 5
      %v4484 = vor.u32 %v4480, %v4483
      %v4485 = vrot.slane %v4484, 4
      %v4487 = vshll.u32 %v4241, 16
      %v4489 = vrot.slane %v4487, 5
      %v4490 = vsel %vm902, %v4485, %v4489
      %v4491 = vshrl.u32 %v4241, 16
      %v4493 = vrot.slane %v4491, 4
      %v4494 = vor.u32 %v4493, %v4489
      %v4495 = vrot.slane %v4494, 4
      %v4497 = vshll.u32 %v4242, 16
      %v4499 = vrot.slane %v4497, 5
      %v4500 = vsel %vm902, %v4495, %v4499
      %v4502 = vshrl.u32 %v4243, 16
      %v4504 = vrot.slane %v4502, 4
      %v4505 = vshll.u32 %v4243, 16
      %v4507 = vrot.slane %v4505, 5
      %v4508 = vor.u32 %v4504, %v4507
      %v4509 = vrot.slane %v4508, 4
      %v4511 = vshll.u32 %v4244, 16
      %v4513 = vrot.slane %v4511, 5
      %v4514 = vsel %vm902, %v4509, %v4513
      %v4515 = vshrl.u32 %v4244, 16
      %v4517 = vrot.slane %v4515, 4
      %v4518 = vor.u32 %v4517, %v4513
      %v4519 = vrot.slane %v4518, 4
      %v4521 = vshll.u32 %v4245, 16
      %v4523 = vrot.slane %v4521, 5
      %v4524 = vsel %vm902, %v4519, %v4523
      %v4526 = vshrl.u32 %v4246, 16
      %v4528 = vrot.slane %v4526, 4
      %v4529 = vshll.u32 %v4246, 16
      %v4531 = vrot.slane %v4529, 5
      %v4532 = vor.u32 %v4528, %v4531
      %v4533 = vrot.slane %v4532, 4
      %v4535 = vshll.u32 %v4247, 16
      %v4537 = vrot.slane %v4535, 5
      %v4538 = vsel %vm902, %v4533, %v4537
      %v4539 = vshrl.u32 %v4247, 16
      %v4541 = vrot.slane %v4539, 4
      %v4542 = vor.u32 %v4541, %v4537
      %v4543 = vrot.slane %v4542, 4
      %v4545 = vshll.u32 %v4248, 16
      %v4547 = vrot.slane %v4545, 5
      %v4548 = vsel %vm902, %v4543, %v4547
      %v4550 = vshrl.u32 %v4249, 16
      %v4552 = vrot.slane %v4550, 4
      %v4553 = vshll.u32 %v4249, 16
      %v4555 = vrot.slane %v4553, 5
      %v4556 = vor.u32 %v4552, %v4555
      %v4557 = vrot.slane %v4556, 4
      %v4559 = vshll.u32 %v4250, 16
      %v4561 = vrot.slane %v4559, 5
      %v4562 = vsel %vm902, %v4557, %v4561
      %v4563 = vshrl.u32 %v4250, 16
      %v4565 = vrot.slane %v4563, 4
      %v4566 = vor.u32 %v4565, %v4561
      %v4567 = vrot.slane %v4566, 4
      %v4569 = vshll.u32 %v4251, 16
      %v4571 = vrot.slane %v4569, 5
      %v4572 = vsel %vm902, %v4567, %v4571
      %v4574 = vshrl.u32 %v4252, 16
      %v4576 = vrot.slane %v4574, 4
      %v4577 = vshll.u32 %v4252, 16
      %v4579 = vrot.slane %v4577, 5
      %v4580 = vor.u32 %v4576, %v4579
      %v4581 = vrot.slane %v4580, 4
      %v4583 = vshll.u32 %v4253, 16
      %v4585 = vrot.slane %v4583, 5
      %v4586 = vsel %vm902, %v4581, %v4585
      %v4587 = vshrl.u32 %v4253, 16
      %v4589 = vrot.slane %v4587, 4
      %v4590 = vor.u32 %v4589, %v4585
      %v4591 = vrot.slane %v4590, 4
      %v4593 = vshll.u32 %v4254, 16
      %v4595 = vrot.slane %v4593, 5
      %v4596 = vsel %vm902, %v4591, %v4595
      %v4598 = vshrl.u32 %v4255, 16
      %v4600 = vrot.slane %v4598, 4
      %v4601 = vshll.u32 %v4255, 16
      %v4603 = vrot.slane %v4601, 5
      %v4604 = vor.u32 %v4600, %v4603
      %v4605 = vrot.slane %v4604, 4
      %v4607 = vshll.u32 %v4256, 16
      %v4609 = vrot.slane %v4607, 5
      %v4610 = vsel %vm902, %v4605, %v4609
      %v4611 = vshrl.u32 %v4256, 16
      %v4613 = vrot.slane %v4611, 4
      %v4614 = vor.u32 %v4613, %v4609
      %v4615 = vrot.slane %v4614, 4
      %v4617 = vshll.u32 %v4257, 16
      %v4619 = vrot.slane %v4617, 5
      %v4620 = vsel %vm902, %v4615, %v4619
      %v4622 = vshrl.u32 %v4258, 16
      %v4624 = vrot.slane %v4622, 4
      %v4625 = vshll.u32 %v4258, 16
      %v4627 = vrot.slane %v4625, 5
      %v4628 = vor.u32 %v4624, %v4627
      %v4629 = vrot.slane %v4628, 4
      %v4631 = vshll.u32 %v4259, 16
      %v4633 = vrot.slane %v4631, 5
      %v4634 = vsel %vm902, %v4629, %v4633
      %v4635 = vshrl.u32 %v4259, 16
      %v4637 = vrot.slane %v4635, 4
      %v4638 = vor.u32 %v4637, %v4633
      %v4639 = vrot.slane %v4638, 4
      %v4641 = vshll.u32 %v4260, 16
      %v4643 = vrot.slane %v4641, 5
      %v4644 = vsel %vm902, %v4639, %v4643
      %s4645 = scalar_lea.vmem %s1, 14
      %v4646 = vld [vmem:[%s4645] sm:$0x3]
      %v4647 = vunpack.c.l.b16 %v4274
      %v4648 = vunpack.c.l.b16 %v4284
      %v4649 = vunpack.c.l.b16 %v4298
      %v4650 = vunpack.c.l.b16 %v4308
      %v4651 = vunpack.c.l.b16 %v4322
      %v4652 = vunpack.c.l.b16 %v4332
      %v4653 = vunpack.c.l.b16 %v4346
      %v4654 = vunpack.c.l.b16 %v4356
      %v4655 = vunpack.c.l.b16 %v4370
      %v4656 = vunpack.c.l.b16 %v4380
      %v4657 = vunpack.c.l.b16 %v4394
      %v4658 = vunpack.c.l.b16 %v4404
      %v4659 = vunpack.c.l.b16 %v4418
      %v4660 = vunpack.c.l.b16 %v4428
      %v4661 = vunpack.c.l.b16 %v4442
      %v4662 = vunpack.c.l.b16 %v4452
      %v4663 = vunpack.c.l.b16 %v4466
      %v4664 = vunpack.c.l.b16 %v4476
      %v4665 = vunpack.c.l.b16 %v4490
      %v4666 = vunpack.c.l.b16 %v4500
      %v4667 = vunpack.c.l.b16 %v4514
      %v4668 = vunpack.c.l.b16 %v4524
      %v4669 = vunpack.c.l.b16 %v4538
      %v4670 = vunpack.c.l.b16 %v4548
      %v4671 = vunpack.c.l.b16 %v4562
      %v4672 = vunpack.c.l.b16 %v4572
      %v4673 = vunpack.c.l.b16 %v4586
      %v4674 = vunpack.c.l.b16 %v4596
      %v4675 = vunpack.c.l.b16 %v4610
      %v4676 = vunpack.c.l.b16 %v4620
      %v4677 = vunpack.c.l.b16 %v4634
      %v4678 = vunpack.c.l.b16 %v4644
      %v4679 = vpack.c.b16 %v4648, %v4647
      %v4680 = vpack.c.b16 %v4650, %v4649
      %v4681 = vpack.c.b16 %v4652, %v4651
      %v4682 = vpack.c.b16 %v4654, %v4653
      %v4683 = vpack.c.b16 %v4656, %v4655
      %v4684 = vpack.c.b16 %v4658, %v4657
      %v4685 = vpack.c.b16 %v4660, %v4659
      %v4686 = vpack.c.b16 %v4662, %v4661
      %v4687 = vpack.c.b16 %v4664, %v4663
      %v4688 = vpack.c.b16 %v4666, %v4665
      %v4689 = vpack.c.b16 %v4668, %v4667
      %v4690 = vpack.c.b16 %v4670, %v4669
      %v4691 = vpack.c.b16 %v4672, %v4671
      %v4692 = vpack.c.b16 %v4674, %v4673
      %v4693 = vpack.c.b16 %v4676, %v4675
      %v4694 = vpack.c.b16 %v4678, %v4677
      %v4696 = vsel %vm1337, %v4679, 0
      %v4699 = vsel %vm1337, %v4680, 0
      %v4702 = vsel %vm1337, %v4681, 0
      %v4705 = vsel %vm1337, %v4682, 0
      %v4708 = vsel %vm1337, %v4683, 0
      %v4711 = vsel %vm1337, %v4684, 0
      %v4714 = vsel %vm1337, %v4685, 0
      %v4717 = vsel %vm1337, %v4686, 0
      %v4720 = vsel %vm1337, %v4687, 0
      %v4723 = vsel %vm1337, %v4688, 0
      %v4726 = vsel %vm1337, %v4689, 0
      %v4729 = vsel %vm1337, %v4690, 0
      %v4732 = vsel %vm1337, %v4691, 0
      %v4735 = vsel %vm1337, %v4692, 0
      %v4738 = vsel %vm1337, %v4693, 0
      %v4741 = vsel %vm1337, %v4694, 0
      %v4744 = vsel %vm1386, %v4646, 0
      %4746 = vmatprep.subr.bf16.mxu0 0
      %4747 = vmatpush1.bf16.msra.mxu0 %v4744
      %4748 = vmatprep.subr.bf16.mxu0 0
      %4749 = vmatpush1.bf16.msra.mxu0 0
      %4750 = vmatprep.subr.bf16.mxu0 0
      %4751 = vmatpush1.bf16.msra.mxu0 0
      %4752 = vmatprep.subr.bf16.mxu0 0
      %4753 = vmatpush1.bf16.msra.mxu0 0
      %4754 = vmatprep.subr.bf16.mxu0 0
      %4755 = vmatpush1.bf16.msra.mxu0 0
      %4756 = vmatprep.subr.bf16.mxu0 0
      %4757 = vmatpush1.bf16.msra.mxu0 0
      %4758 = vmatprep.subr.bf16.mxu0 0
      %4759 = vmatpush1.bf16.msra.mxu0 0
      %4760 = vmatprep.subr.bf16.mxu0 0
      %4761 = vmatpush1.bf16.msra.mxu0 0
      %4762 = vmatprep.subr.bf16.mxu0 0
      %4763 = vmatpush1.bf16.msra.mxu0 0
      %4764 = vmatprep.subr.bf16.mxu0 0
      %4765 = vmatpush1.bf16.msra.mxu0 0
      %4766 = vmatprep.subr.bf16.mxu0 0
      %4767 = vmatpush1.bf16.msra.mxu0 0
      %4768 = vmatprep.subr.bf16.mxu0 0
      %4769 = vmatpush1.bf16.msra.mxu0 0
      %4770 = vmatprep.subr.bf16.mxu0 0
      %4771 = vmatpush1.bf16.msra.mxu0 0
      %4772 = vmatprep.subr.bf16.mxu0 0
      %4773 = vmatpush1.bf16.msra.mxu0 0
      %4774 = vmatprep.subr.bf16.mxu0 0
      %4775 = vmatpush1.bf16.msra.mxu0 0
      %4776 = vmatprep.subr.bf16.mxu0 0
      %4777 = vmatpush1.bf16.msra.mxu0 0
      %4778 = vmatprep.mubr.bf16.mxu0 0
      %4779 = vmatmul.mubr.bf16.gmra.mrb[0].mxu0 %v4696
      %v4780 = vpop.f32.mrb[0].mxu0
      %v4781 = vadd.f32 0.0, %v4780
      %v4782 = vpop.f32.mrb[0].mxu0
      %v4783 = vpop.f32.mrb[0].mxu0
      %v4784 = vadd.f32 0.0, %v4783
      %v4785 = vpop.f32.mrb[0].mxu0
      %4786 = vmatprep.mubr.bf16.mxu0 0
      %4787 = vmatmul.mubr.bf16.gmra.mrb[0].mxu0 %v4699
      %v4788 = vpop.f32.mrb[0].mxu0
      %v4789 = vadd.f32 0.0, %v4788
      %v4790 = vpop.f32.mrb[0].mxu0
      %v4791 = vpop.f32.mrb[0].mxu0
      %v4792 = vadd.f32 0.0, %v4791
      %v4793 = vpop.f32.mrb[0].mxu0
      %4794 = vmatprep.mubr.bf16.mxu0 0
      %4795 = vmatmul.mubr.bf16.gmra.mrb[0].mxu0 %v4702
      %v4796 = vpop.f32.mrb[0].mxu0
      %v4797 = vadd.f32 0.0, %v4796
      %v4798 = vpop.f32.mrb[0].mxu0
      %v4799 = vpop.f32.mrb[0].mxu0
      %v4800 = vadd.f32 0.0, %v4799
      %v4801 = vpop.f32.mrb[0].mxu0
      %4802 = vmatprep.mubr.bf16.mxu0 0
      %4803 = vmatmul.mubr.bf16.gmra.mrb[0].mxu0 %v4705
      %v4804 = vpop.f32.mrb[0].mxu0
      %v4805 = vadd.f32 0.0, %v4804
      %v4806 = vpop.f32.mrb[0].mxu0
      %v4807 = vpop.f32.mrb[0].mxu0
      %v4808 = vadd.f32 0.0, %v4807
      %v4809 = vpop.f32.mrb[0].mxu0
      %4810 = vmatprep.mubr.bf16.mxu0 0
      %4811 = vmatmul.mubr.bf16.gmra.mrb[0].mxu0 %v4708
      %v4812 = vpop.f32.mrb[0].mxu0
      %v4813 = vadd.f32 0.0, %v4812
      %v4814 = vpop.f32.mrb[0].mxu0
      %v4815 = vpop.f32.mrb[0].mxu0
      %v4816 = vadd.f32 0.0, %v4815
      %v4817 = vpop.f32.mrb[0].mxu0
      %4818 = vmatprep.mubr.bf16.mxu0 0
      %4819 = vmatmul.mubr.bf16.gmra.mrb[0].mxu0 %v4711
      %v4820 = vpop.f32.mrb[0].mxu0
      %v4821 = vadd.f32 0.0, %v4820
      %v4822 = vpop.f32.mrb[0].mxu0
      %v4823 = vpop.f32.mrb[0].mxu0
      %v4824 = vadd.f32 0.0, %v4823
      %v4825 = vpop.f32.mrb[0].mxu0
      %4826 = vmatprep.mubr.bf16.mxu0 0
      %4827 = vmatmul.mubr.bf16.gmra.mrb[0].mxu0 %v4714
      %v4828 = vpop.f32.mrb[0].mxu0
      %v4829 = vadd.f32 0.0, %v4828
      %v4830 = vpop.f32.mrb[0].mxu0
      %v4831 = vpop.f32.mrb[0].mxu0
      %v4832 = vadd.f32 0.0, %v4831
      %v4833 = vpop.f32.mrb[0].mxu0
      %4834 = vmatprep.mubr.bf16.mxu0 0
      %4835 = vmatmul.mubr.bf16.gmra.mrb[0].mxu0 %v4717
      %v4836 = vpop.f32.mrb[0].mxu0
      %v4837 = vadd.f32 0.0, %v4836
      %v4838 = vpop.f32.mrb[0].mxu0
      %v4839 = vpop.f32.mrb[0].mxu0
      %v4840 = vadd.f32 0.0, %v4839
      %v4841 = vpop.f32.mrb[0].mxu0
      %4842 = vmatprep.mubr.bf16.mxu0 0
      %4843 = vmatmul.mubr.bf16.gmra.mrb[0].mxu0 %v4720
      %v4844 = vpop.f32.mrb[0].mxu0
      %v4845 = vadd.f32 0.0, %v4844
      %v4846 = vpop.f32.mrb[0].mxu0
      %v4847 = vpop.f32.mrb[0].mxu0
      %v4848 = vadd.f32 0.0, %v4847
      %v4849 = vpop.f32.mrb[0].mxu0
      %4850 = vmatprep.mubr.bf16.mxu0 0
      %4851 = vmatmul.mubr.bf16.gmra.mrb[0].mxu0 %v4723
      %v4852 = vpop.f32.mrb[0].mxu0
      %v4853 = vadd.f32 0.0, %v4852
      %v4854 = vpop.f32.mrb[0].mxu0
      %v4855 = vpop.f32.mrb[0].mxu0
      %v4856 = vadd.f32 0.0, %v4855
      %v4857 = vpop.f32.mrb[0].mxu0
      %4858 = vmatprep.mubr.bf16.mxu0 0
      %4859 = vmatmul.mubr.bf16.gmra.mrb[0].mxu0 %v4726
      %v4860 = vpop.f32.mrb[0].mxu0
      %v4861 = vadd.f32 0.0, %v4860
      %v4862 = vpop.f32.mrb[0].mxu0
      %v4863 = vpop.f32.mrb[0].mxu0
      %v4864 = vadd.f32 0.0, %v4863
      %v4865 = vpop.f32.mrb[0].mxu0
      %4866 = vmatprep.mubr.bf16.mxu0 0
      %4867 = vmatmul.mubr.bf16.gmra.mrb[0].mxu0 %v4729
      %v4868 = vpop.f32.mrb[0].mxu0
      %v4869 = vadd.f32 0.0, %v4868
      %v4870 = vpop.f32.mrb[0].mxu0
      %v4871 = vpop.f32.mrb[0].mxu0
      %v4872 = vadd.f32 0.0, %v4871
      %v4873 = vpop.f32.mrb[0].mxu0
      %4874 = vmatprep.mubr.bf16.mxu0 0
      %4875 = vmatmul.mubr.bf16.gmra.mrb[0].mxu0 %v4732
      %v4876 = vpop.f32.mrb[0].mxu0
      %v4877 = vadd.f32 0.0, %v4876
      %v4878 = vpop.f32.mrb[0].mxu0
      %v4879 = vpop.f32.mrb[0].mxu0
      %v4880 = vadd.f32 0.0, %v4879
      %v4881 = vpop.f32.mrb[0].mxu0
      %4882 = vmatprep.mubr.bf16.mxu0 0
      %4883 = vmatmul.mubr.bf16.gmra.mrb[0].mxu0 %v4735
      %v4884 = vpop.f32.mrb[0].mxu0
      %v4885 = vadd.f32 0.0, %v4884
      %v4886 = vpop.f32.mrb[0].mxu0
      %v4887 = vpop.f32.mrb[0].mxu0
      %v4888 = vadd.f32 0.0, %v4887
      %v4889 = vpop.f32.mrb[0].mxu0
      %4890 = vmatprep.mubr.bf16.mxu0 0
      %4891 = vmatmul.mubr.bf16.gmra.mrb[0].mxu0 %v4738
      %v4892 = vpop.f32.mrb[0].mxu0
      %v4893 = vadd.f32 0.0, %v4892
      %v4894 = vpop.f32.mrb[0].mxu0
      %v4895 = vpop.f32.mrb[0].mxu0
      %v4896 = vadd.f32 0.0, %v4895
      %v4897 = vpop.f32.mrb[0].mxu0
      %4898 = vmatprep.mubr.bf16.mxu0 0
      %4899 = vmatmul.mubr.bf16.gmra.mrb[0].mxu0 %v4741
      %v4900 = vpop.f32.mrb[0].mxu0
      %v4901 = vadd.f32 0.0, %v4900
      %v4902 = vpop.f32.mrb[0].mxu0
      %v4903 = vpop.f32.mrb[0].mxu0
      %v4904 = vadd.f32 0.0, %v4903
      %v4905 = vpop.f32.mrb[0].mxu0
      %4906 = vdwg.mxu0
      %v4907 = vadd.f32 %v4181, %v4781
      %v4908 = vadd.f32 %v4182, %v4784
      %v4909 = vadd.f32 %v4183, %v4789
      %v4910 = vadd.f32 %v4184, %v4792
      %v4911 = vadd.f32 %v4185, %v4797
      %v4912 = vadd.f32 %v4186, %v4800
      %v4913 = vadd.f32 %v4187, %v4805
      %v4914 = vadd.f32 %v4188, %v4808
      %v4915 = vadd.f32 %v4189, %v4813
      %v4916 = vadd.f32 %v4190, %v4816
      %v4917 = vadd.f32 %v4191, %v4821
      %v4918 = vadd.f32 %v4192, %v4824
      %v4919 = vadd.f32 %v4193, %v4829
      %v4920 = vadd.f32 %v4194, %v4832
      %v4921 = vadd.f32 %v4195, %v4837
      %v4922 = vadd.f32 %v4196, %v4840
      %v4923 = vadd.f32 %v4197, %v4845
      %v4924 = vadd.f32 %v4198, %v4848
      %v4925 = vadd.f32 %v4199, %v4853
      %v4926 = vadd.f32 %v4200, %v4856
      %v4927 = vadd.f32 %v4201, %v4861
      %v4928 = vadd.f32 %v4202, %v4864
      %v4929 = vadd.f32 %v4203, %v4869
      %v4930 = vadd.f32 %v4204, %v4872
      %v4931 = vadd.f32 %v4205, %v4877
      %v4932 = vadd.f32 %v4206, %v4880
      %v4933 = vadd.f32 %v4207, %v4885
      %v4934 = vadd.f32 %v4208, %v4888
      %v4935 = vadd.f32 %v4209, %v4893
      %v4936 = vadd.f32 %v4210, %v4896
      %v4937 = vadd.f32 %v4211, %v4901
      %v4938 = vadd.f32 %v4212, %v4904
      %v4939 = vld [vmem:[%s3854] sm:$0xe]
      %v4940 = vld [vmem:[%s3854 + $0xc] sm:$0xe]
      %v4941 = vld [vmem:[%s3854 + $0x18] sm:$0xe]
      %v4942 = vld [vmem:[%s3854 + $0x24] sm:$0xe]
      %v4943 = vld [vmem:[%s3854 + $0x30] sm:$0xe]
      %v4944 = vld [vmem:[%s3854 + $0x3c] sm:$0xe]
      %v4945 = vld [vmem:[%s3854 + $0x48] sm:$0xe]
      %v4946 = vld [vmem:[%s3854 + $0x54] sm:$0xe]
      %v4947 = vld [vmem:[%s3854 + $0x60] sm:$0xe]
      %v4948 = vld [vmem:[%s3854 + $0x6c] sm:$0xe]
      %v4949 = vld [vmem:[%s3854 + $0x78] sm:$0xe]
      %v4950 = vld [vmem:[%s3854 + $0x84] sm:$0xe]
      %v4951 = vld [vmem:[%s3854 + $0x90] sm:$0xe]
      %v4952 = vld [vmem:[%s3854 + $0x9c] sm:$0xe]
      %v4953 = vld [vmem:[%s3854 + $0xa8] sm:$0xe]
      %v4954 = vld [vmem:[%s3854 + $0xb4] sm:$0xe]
      %v5003 = vrot.slane %v4939, 5
      %v5004 = vrot.slane %v5003, 4
      %v5005 = vrot.slane %v4214, 5
      %v5006 = vsel %vm1893, %v5004, %v5005
      %v5007 = vrot.slane %v5005, 4
      %v5008 = vrot.slane %v4215, 5
      %v5009 = vsel %vm1893, %v5007, %v5008
      %v5010 = vrot.slane %v4940, 5
      %v5011 = vrot.slane %v5010, 4
      %v5012 = vrot.slane %v4217, 5
      %v5013 = vsel %vm1893, %v5011, %v5012
      %v5014 = vrot.slane %v5012, 4
      %v5015 = vrot.slane %v4218, 5
      %v5016 = vsel %vm1893, %v5014, %v5015
      %v5017 = vrot.slane %v4941, 5
      %v5018 = vrot.slane %v5017, 4
      %v5019 = vrot.slane %v4220, 5
      %v5020 = vsel %vm1893, %v5018, %v5019
      %v5021 = vrot.slane %v5019, 4
      %v5022 = vrot.slane %v4221, 5
      %v5023 = vsel %vm1893, %v5021, %v5022
      %v5024 = vrot.slane %v4942, 5
      %v5025 = vrot.slane %v5024, 4
      %v5026 = vrot.slane %v4223, 5
      %v5027 = vsel %vm1893, %v5025, %v5026
      %v5028 = vrot.slane %v5026, 4
      %v5029 = vrot.slane %v4224, 5
      %v5030 = vsel %vm1893, %v5028, %v5029
      %v5031 = vrot.slane %v4943, 5
      %v5032 = vrot.slane %v5031, 4
      %v5033 = vrot.slane %v4226, 5
      %v5034 = vsel %vm1893, %v5032, %v5033
      %v5035 = vrot.slane %v5033, 4
      %v5036 = vrot.slane %v4227, 5
      %v5037 = vsel %vm1893, %v5035, %v5036
      %v5038 = vrot.slane %v4944, 5
      %v5039 = vrot.slane %v5038, 4
      %v5040 = vrot.slane %v4229, 5
      %v5041 = vsel %vm1893, %v5039, %v5040
      %v5042 = vrot.slane %v5040, 4
      %v5043 = vrot.slane %v4230, 5
      %v5044 = vsel %vm1893, %v5042, %v5043
      %v5045 = vrot.slane %v4945, 5
      %v5046 = vrot.slane %v5045, 4
      %v5047 = vrot.slane %v4232, 5
      %v5048 = vsel %vm1893, %v5046, %v5047
      %v5049 = vrot.slane %v5047, 4
      %v5050 = vrot.slane %v4233, 5
      %v5051 = vsel %vm1893, %v5049, %v5050
      %v5052 = vrot.slane %v4946, 5
      %v5053 = vrot.slane %v5052, 4
      %v5054 = vrot.slane %v4235, 5
      %v5055 = vsel %vm1893, %v5053, %v5054
      %v5056 = vrot.slane %v5054, 4
      %v5057 = vrot.slane %v4236, 5
      %v5058 = vsel %vm1893, %v5056, %v5057
      %v5059 = vrot.slane %v4947, 5
      %v5060 = vrot.slane %v5059, 4
      %v5061 = vrot.slane %v4238, 5
      %v5062 = vsel %vm1893, %v5060, %v5061
      %v5063 = vrot.slane %v5061, 4
      %v5064 = vrot.slane %v4239, 5
      %v5065 = vsel %vm1893, %v5063, %v5064
      %v5066 = vrot.slane %v4948, 5
      %v5067 = vrot.slane %v5066, 4
      %v5068 = vrot.slane %v4241, 5
      %v5069 = vsel %vm1893, %v5067, %v5068
      %v5070 = vrot.slane %v5068, 4
      %v5071 = vrot.slane %v4242, 5
      %v5072 = vsel %vm1893, %v5070, %v5071
      %v5073 = vrot.slane %v4949, 5
      %v5074 = vrot.slane %v5073, 4
      %v5075 = vrot.slane %v4244, 5
      %v5076 = vsel %vm1893, %v5074, %v5075
      %v5077 = vrot.slane %v5075, 4
      %v5078 = vrot.slane %v4245, 5
      %v5079 = vsel %vm1893, %v5077, %v5078
      %v5080 = vrot.slane %v4950, 5
      %v5081 = vrot.slane %v5080, 4
      %v5082 = vrot.slane %v4247, 5
      %v5083 = vsel %vm1893, %v5081, %v5082
      %v5084 = vrot.slane %v5082, 4
      %v5085 = vrot.slane %v4248, 5
      %v5086 = vsel %vm1893, %v5084, %v5085
      %v5087 = vrot.slane %v4951, 5
      %v5088 = vrot.slane %v5087, 4
      %v5089 = vrot.slane %v4250, 5
      %v5090 = vsel %vm1893, %v5088, %v5089
      %v5091 = vrot.slane %v5089, 4
      %v5092 = vrot.slane %v4251, 5
      %v5093 = vsel %vm1893, %v5091, %v5092
      %v5094 = vrot.slane %v4952, 5
      %v5095 = vrot.slane %v5094, 4
      %v5096 = vrot.slane %v4253, 5
      %v5097 = vsel %vm1893, %v5095, %v5096
      %v5098 = vrot.slane %v5096, 4
      %v5099 = vrot.slane %v4254, 5
      %v5100 = vsel %vm1893, %v5098, %v5099
      %v5101 = vrot.slane %v4953, 5
      %v5102 = vrot.slane %v5101, 4
      %v5103 = vrot.slane %v4256, 5
      %v5104 = vsel %vm1893, %v5102, %v5103
      %v5105 = vrot.slane %v5103, 4
      %v5106 = vrot.slane %v4257, 5
      %v5107 = vsel %vm1893, %v5105, %v5106
      %v5108 = vrot.slane %v4954, 5
      %v5109 = vrot.slane %v5108, 4
      %v5110 = vrot.slane %v4259, 5
      %v5111 = vsel %vm1893, %v5109, %v5110
      %v5112 = vrot.slane %v5110, 4
      %v5113 = vrot.slane %v4260, 5
      %v5114 = vsel %vm1893, %v5112, %v5113
      %s5115 = scalar_lea.vmem %s1, 16
      %v5116 = vld [vmem:[%s5115] sm:$0x3]
      %v5117 = vunpack.c.l.b16 %v5006
      %v5118 = vunpack.c.l.b16 %v5009
      %v5119 = vunpack.c.l.b16 %v5013
      %v5120 = vunpack.c.l.b16 %v5016
      %v5121 = vunpack.c.l.b16 %v5020
      %v5122 = vunpack.c.l.b16 %v5023
      %v5123 = vunpack.c.l.b16 %v5027
      %v5124 = vunpack.c.l.b16 %v5030
      %v5125 = vunpack.c.l.b16 %v5034
      %v5126 = vunpack.c.l.b16 %v5037
      %v5127 = vunpack.c.l.b16 %v5041
      %v5128 = vunpack.c.l.b16 %v5044
      %v5129 = vunpack.c.l.b16 %v5048
      %v5130 = vunpack.c.l.b16 %v5051
      %v5131 = vunpack.c.l.b16 %v5055
      %v5132 = vunpack.c.l.b16 %v5058
      %v5133 = vunpack.c.l.b16 %v5062
      %v5134 = vunpack.c.l.b16 %v5065
      %v5135 = vunpack.c.l.b16 %v5069
      %v5136 = vunpack.c.l.b16 %v5072
      %v5137 = vunpack.c.l.b16 %v5076
      %v5138 = vunpack.c.l.b16 %v5079
      %v5139 = vunpack.c.l.b16 %v5083
      %v5140 = vunpack.c.l.b16 %v5086
      %v5141 = vunpack.c.l.b16 %v5090
      %v5142 = vunpack.c.l.b16 %v5093
      %v5143 = vunpack.c.l.b16 %v5097
      %v5144 = vunpack.c.l.b16 %v5100
      %v5145 = vunpack.c.l.b16 %v5104
      %v5146 = vunpack.c.l.b16 %v5107
      %v5147 = vunpack.c.l.b16 %v5111
      %v5148 = vunpack.c.l.b16 %v5114
      %v5149 = vpack.c.b16 %v5118, %v5117
      %v5150 = vpack.c.b16 %v5120, %v5119
      %v5151 = vpack.c.b16 %v5122, %v5121
      %v5152 = vpack.c.b16 %v5124, %v5123
      %v5153 = vpack.c.b16 %v5126, %v5125
      %v5154 = vpack.c.b16 %v5128, %v5127
      %v5155 = vpack.c.b16 %v5130, %v5129
      %v5156 = vpack.c.b16 %v5132, %v5131
      %v5157 = vpack.c.b16 %v5134, %v5133
      %v5158 = vpack.c.b16 %v5136, %v5135
      %v5159 = vpack.c.b16 %v5138, %v5137
      %v5160 = vpack.c.b16 %v5140, %v5139
      %v5161 = vpack.c.b16 %v5142, %v5141
      %v5162 = vpack.c.b16 %v5144, %v5143
      %v5163 = vpack.c.b16 %v5146, %v5145
      %v5164 = vpack.c.b16 %v5148, %v5147
      %v5166 = vsel %vm1337, %v5149, 0
      %v5169 = vsel %vm1337, %v5150, 0
      %v5172 = vsel %vm1337, %v5151, 0
      %v5175 = vsel %vm1337, %v5152, 0
      %v5178 = vsel %vm1337, %v5153, 0
      %v5181 = vsel %vm1337, %v5154, 0
      %v5184 = vsel %vm1337, %v5155, 0
      %v5187 = vsel %vm1337, %v5156, 0
      %v5190 = vsel %vm1337, %v5157, 0
      %v5193 = vsel %vm1337, %v5158, 0
      %v5196 = vsel %vm1337, %v5159, 0
      %v5199 = vsel %vm1337, %v5160, 0
      %v5202 = vsel %vm1337, %v5161, 0
      %v5205 = vsel %vm1337, %v5162, 0
      %v5208 = vsel %vm1337, %v5163, 0
      %v5211 = vsel %vm1337, %v5164, 0
      %v5214 = vsel %vm1386, %v5116, 0
      %5216 = vmatprep.subr.bf16.mxu0 0
      %5217 = vmatpush1.bf16.msra.mxu0 %v5214
      %5218 = vmatprep.subr.bf16.mxu0 0
      %5219 = vmatpush1.bf16.msra.mxu0 0
      %5220 = vmatprep.subr.bf16.mxu0 0
      %5221 = vmatpush1.bf16.msra.mxu0 0
      %5222 = vmatprep.subr.bf16.mxu0 0
      %5223 = vmatpush1.bf16.msra.mxu0 0
      %5224 = vmatprep.subr.bf16.mxu0 0
      %5225 = vmatpush1.bf16.msra.mxu0 0
      %5226 = vmatprep.subr.bf16.mxu0 0
      %5227 = vmatpush1.bf16.msra.mxu0 0
      %5228 = vmatprep.subr.bf16.mxu0 0
      %5229 = vmatpush1.bf16.msra.mxu0 0
      %5230 = vmatprep.subr.bf16.mxu0 0
      %5231 = vmatpush1.bf16.msra.mxu0 0
      %5232 = vmatprep.subr.bf16.mxu0 0
      %5233 = vmatpush1.bf16.msra.mxu0 0
      %5234 = vmatprep.subr.bf16.mxu0 0
      %5235 = vmatpush1.bf16.msra.mxu0 0
      %5236 = vmatprep.subr.bf16.mxu0 0
      %5237 = vmatpush1.bf16.msra.mxu0 0
      %5238 = vmatprep.subr.bf16.mxu0 0
      %5239 = vmatpush1.bf16.msra.mxu0 0
      %5240 = vmatprep.subr.bf16.mxu0 0
      %5241 = vmatpush1.bf16.msra.mxu0 0
      %5242 = vmatprep.subr.bf16.mxu0 0
      %5243 = vmatpush1.bf16.msra.mxu0 0
      %5244 = vmatprep.subr.bf16.mxu0 0
      %5245 = vmatpush1.bf16.msra.mxu0 0
      %5246 = vmatprep.subr.bf16.mxu0 0
      %5247 = vmatpush1.bf16.msra.mxu0 0
      %5248 = vmatprep.mubr.bf16.mxu0 0
      %5249 = vmatmul.mubr.bf16.gmra.mrb[0].mxu0 %v5166
      %v5250 = vpop.f32.mrb[0].mxu0
      %v5251 = vadd.f32 0.0, %v5250
      %v5252 = vpop.f32.mrb[0].mxu0
      %v5253 = vpop.f32.mrb[0].mxu0
      %v5254 = vadd.f32 0.0, %v5253
      %v5255 = vpop.f32.mrb[0].mxu0
      %5256 = vmatprep.mubr.bf16.mxu0 0
      %5257 = vmatmul.mubr.bf16.gmra.mrb[0].mxu0 %v5169
      %v5258 = vpop.f32.mrb[0].mxu0
      %v5259 = vadd.f32 0.0, %v5258
      %v5260 = vpop.f32.mrb[0].mxu0
      %v5261 = vpop.f32.mrb[0].mxu0
      %v5262 = vadd.f32 0.0, %v5261
      %v5263 = vpop.f32.mrb[0].mxu0
      %5264 = vmatprep.mubr.bf16.mxu0 0
      %5265 = vmatmul.mubr.bf16.gmra.mrb[0].mxu0 %v5172
      %v5266 = vpop.f32.mrb[0].mxu0
      %v5267 = vadd.f32 0.0, %v5266
      %v5268 = vpop.f32.mrb[0].mxu0
      %v5269 = vpop.f32.mrb[0].mxu0
      %v5270 = vadd.f32 0.0, %v5269
      %v5271 = vpop.f32.mrb[0].mxu0
      %5272 = vmatprep.mubr.bf16.mxu0 0
      %5273 = vmatmul.mubr.bf16.gmra.mrb[0].mxu0 %v5175
      %v5274 = vpop.f32.mrb[0].mxu0
      %v5275 = vadd.f32 0.0, %v5274
      %v5276 = vpop.f32.mrb[0].mxu0
      %v5277 = vpop.f32.mrb[0].mxu0
      %v5278 = vadd.f32 0.0, %v5277
      %v5279 = vpop.f32.mrb[0].mxu0
      %5280 = vmatprep.mubr.bf16.mxu0 0
      %5281 = vmatmul.mubr.bf16.gmra.mrb[0].mxu0 %v5178
      %v5282 = vpop.f32.mrb[0].mxu0
      %v5283 = vadd.f32 0.0, %v5282
      %v5284 = vpop.f32.mrb[0].mxu0
      %v5285 = vpop.f32.mrb[0].mxu0
      %v5286 = vadd.f32 0.0, %v5285
      %v5287 = vpop.f32.mrb[0].mxu0
      %5288 = vmatprep.mubr.bf16.mxu0 0
      %5289 = vmatmul.mubr.bf16.gmra.mrb[0].mxu0 %v5181
      %v5290 = vpop.f32.mrb[0].mxu0
      %v5291 = vadd.f32 0.0, %v5290
      %v5292 = vpop.f32.mrb[0].mxu0
      %v5293 = vpop.f32.mrb[0].mxu0
      %v5294 = vadd.f32 0.0, %v5293
      %v5295 = vpop.f32.mrb[0].mxu0
      %5296 = vmatprep.mubr.bf16.mxu0 0
      %5297 = vmatmul.mubr.bf16.gmra.mrb[0].mxu0 %v5184
      %v5298 = vpop.f32.mrb[0].mxu0
      %v5299 = vadd.f32 0.0, %v5298
      %v5300 = vpop.f32.mrb[0].mxu0
      %v5301 = vpop.f32.mrb[0].mxu0
      %v5302 = vadd.f32 0.0, %v5301
      %v5303 = vpop.f32.mrb[0].mxu0
      %5304 = vmatprep.mubr.bf16.mxu0 0
      %5305 = vmatmul.mubr.bf16.gmra.mrb[0].mxu0 %v5187
      %v5306 = vpop.f32.mrb[0].mxu0
      %v5307 = vadd.f32 0.0, %v5306
      %v5308 = vpop.f32.mrb[0].mxu0
      %v5309 = vpop.f32.mrb[0].mxu0
      %v5310 = vadd.f32 0.0, %v5309
      %v5311 = vpop.f32.mrb[0].mxu0
      %5312 = vmatprep.mubr.bf16.mxu0 0
      %5313 = vmatmul.mubr.bf16.gmra.mrb[0].mxu0 %v5190
      %v5314 = vpop.f32.mrb[0].mxu0
      %v5315 = vadd.f32 0.0, %v5314
      %v5316 = vpop.f32.mrb[0].mxu0
      %v5317 = vpop.f32.mrb[0].mxu0
      %v5318 = vadd.f32 0.0, %v5317
      %v5319 = vpop.f32.mrb[0].mxu0
      %5320 = vmatprep.mubr.bf16.mxu0 0
      %5321 = vmatmul.mubr.bf16.gmra.mrb[0].mxu0 %v5193
      %v5322 = vpop.f32.mrb[0].mxu0
      %v5323 = vadd.f32 0.0, %v5322
      %v5324 = vpop.f32.mrb[0].mxu0
      %v5325 = vpop.f32.mrb[0].mxu0
      %v5326 = vadd.f32 0.0, %v5325
      %v5327 = vpop.f32.mrb[0].mxu0
      %5328 = vmatprep.mubr.bf16.mxu0 0
      %5329 = vmatmul.mubr.bf16.gmra.mrb[0].mxu0 %v5196
      %v5330 = vpop.f32.mrb[0].mxu0
      %v5331 = vadd.f32 0.0, %v5330
      %v5332 = vpop.f32.mrb[0].mxu0
      %v5333 = vpop.f32.mrb[0].mxu0
      %v5334 = vadd.f32 0.0, %v5333
      %v5335 = vpop.f32.mrb[0].mxu0
      %5336 = vmatprep.mubr.bf16.mxu0 0
      %5337 = vmatmul.mubr.bf16.gmra.mrb[0].mxu0 %v5199
      %v5338 = vpop.f32.mrb[0].mxu0
      %v5339 = vadd.f32 0.0, %v5338
      %v5340 = vpop.f32.mrb[0].mxu0
      %v5341 = vpop.f32.mrb[0].mxu0
      %v5342 = vadd.f32 0.0, %v5341
      %v5343 = vpop.f32.mrb[0].mxu0
      %5344 = vmatprep.mubr.bf16.mxu0 0
      %5345 = vmatmul.mubr.bf16.gmra.mrb[0].mxu0 %v5202
      %v5346 = vpop.f32.mrb[0].mxu0
      %v5347 = vadd.f32 0.0, %v5346
      %v5348 = vpop.f32.mrb[0].mxu0
      %v5349 = vpop.f32.mrb[0].mxu0
      %v5350 = vadd.f32 0.0, %v5349
      %v5351 = vpop.f32.mrb[0].mxu0
      %5352 = vmatprep.mubr.bf16.mxu0 0
      %5353 = vmatmul.mubr.bf16.gmra.mrb[0].mxu0 %v5205
      %v5354 = vpop.f32.mrb[0].mxu0
      %v5355 = vadd.f32 0.0, %v5354
      %v5356 = vpop.f32.mrb[0].mxu0
      %v5357 = vpop.f32.mrb[0].mxu0
      %v5358 = vadd.f32 0.0, %v5357
      %v5359 = vpop.f32.mrb[0].mxu0
      %5360 = vmatprep.mubr.bf16.mxu0 0
      %5361 = vmatmul.mubr.bf16.gmra.mrb[0].mxu0 %v5208
      %v5362 = vpop.f32.mrb[0].mxu0
      %v5363 = vadd.f32 0.0, %v5362
      %v5364 = vpop.f32.mrb[0].mxu0
      %v5365 = vpop.f32.mrb[0].mxu0
      %v5366 = vadd.f32 0.0, %v5365
      %v5367 = vpop.f32.mrb[0].mxu0
      %5368 = vmatprep.mubr.bf16.mxu0 0
      %5369 = vmatmul.mubr.bf16.gmra.mrb[0].mxu0 %v5211
      %v5370 = vpop.f32.mrb[0].mxu0
      %v5371 = vadd.f32 0.0, %v5370
      %v5372 = vpop.f32.mrb[0].mxu0
      %v5373 = vpop.f32.mrb[0].mxu0
      %v5374 = vadd.f32 0.0, %v5373
      %v5375 = vpop.f32.mrb[0].mxu0
      %5376 = vdwg.mxu0
      %v5377 = vadd.f32 %v4907, %v5251
      %v5378 = vadd.f32 %v4908, %v5254
      %v5379 = vadd.f32 %v4909, %v5259
      %v5380 = vadd.f32 %v4910, %v5262
      %v5381 = vadd.f32 %v4911, %v5267
      %v5382 = vadd.f32 %v4912, %v5270
      %v5383 = vadd.f32 %v4913, %v5275
      %v5384 = vadd.f32 %v4914, %v5278
      %v5385 = vadd.f32 %v4915, %v5283
      %v5386 = vadd.f32 %v4916, %v5286
      %v5387 = vadd.f32 %v4917, %v5291
      %v5388 = vadd.f32 %v4918, %v5294
      %v5389 = vadd.f32 %v4919, %v5299
      %v5390 = vadd.f32 %v4920, %v5302
      %v5391 = vadd.f32 %v4921, %v5307
      %v5392 = vadd.f32 %v4922, %v5310
      %v5393 = vadd.f32 %v4923, %v5315
      %v5394 = vadd.f32 %v4924, %v5318
      %v5395 = vadd.f32 %v4925, %v5323
      %v5396 = vadd.f32 %v4926, %v5326
      %v5397 = vadd.f32 %v4927, %v5331
      %v5398 = vadd.f32 %v4928, %v5334
      %v5399 = vadd.f32 %v4929, %v5339
      %v5400 = vadd.f32 %v4930, %v5342
      %v5401 = vadd.f32 %v4931, %v5347
      %v5402 = vadd.f32 %v4932, %v5350
      %v5403 = vadd.f32 %v4933, %v5355
      %v5404 = vadd.f32 %v4934, %v5358
      %v5405 = vadd.f32 %v4935, %v5363
      %v5406 = vadd.f32 %v4936, %v5366
      %v5407 = vadd.f32 %v4937, %v5371
      %v5408 = vadd.f32 %v4938, %v5374
      %v5409 = vld [vmem:[%s2] sm:$0x1]
      %v5411 = vlaneseq
      %v5412 = vshrl.u32 %v5411, 7
      %v5413 = vsub.s32 0, %v5412
      %v5414 = vrot.slane %v5409, %v5413
      %v5416 = vadd.f32 %v5377, %v5414
      %v5417 = vadd.f32 %v5378, %v5414
      %v5418 = vadd.f32 %v5379, %v5414
      %v5419 = vadd.f32 %v5380, %v5414
      %v5420 = vadd.f32 %v5381, %v5414
      %v5421 = vadd.f32 %v5382, %v5414
      %v5422 = vadd.f32 %v5383, %v5414
      %v5423 = vadd.f32 %v5384, %v5414
      %v5424 = vadd.f32 %v5385, %v5414
      %v5425 = vadd.f32 %v5386, %v5414
      %v5426 = vadd.f32 %v5387, %v5414
      %v5427 = vadd.f32 %v5388, %v5414
      %v5428 = vadd.f32 %v5389, %v5414
      %v5429 = vadd.f32 %v5390, %v5414
      %v5430 = vadd.f32 %v5391, %v5414
      %v5431 = vadd.f32 %v5392, %v5414
      %v5432 = vadd.f32 %v5393, %v5414
      %v5433 = vadd.f32 %v5394, %v5414
      %v5434 = vadd.f32 %v5395, %v5414
      %v5435 = vadd.f32 %v5396, %v5414
      %v5436 = vadd.f32 %v5397, %v5414
      %v5437 = vadd.f32 %v5398, %v5414
      %v5438 = vadd.f32 %v5399, %v5414
      %v5439 = vadd.f32 %v5400, %v5414
      %v5440 = vadd.f32 %v5401, %v5414
      %v5441 = vadd.f32 %v5402, %v5414
      %v5442 = vadd.f32 %v5403, %v5414
      %v5443 = vadd.f32 %v5404, %v5414
      %v5444 = vadd.f32 %v5405, %v5414
      %v5445 = vadd.f32 %v5406, %v5414
      %v5446 = vadd.f32 %v5407, %v5414
      %v5447 = vadd.f32 %v5408, %v5414
      %v5448 = vmax.f32 %v5416, 0.0
      %v5449 = vmax.f32 %v5417, 0.0
      %v5450 = vmax.f32 %v5418, 0.0
      %v5451 = vmax.f32 %v5419, 0.0
      %v5452 = vmax.f32 %v5420, 0.0
      %v5453 = vmax.f32 %v5421, 0.0
      %v5454 = vmax.f32 %v5422, 0.0
      %v5455 = vmax.f32 %v5423, 0.0
      %v5456 = vmax.f32 %v5424, 0.0
      %v5457 = vmax.f32 %v5425, 0.0
      %v5458 = vmax.f32 %v5426, 0.0
      %v5459 = vmax.f32 %v5427, 0.0
      %v5460 = vmax.f32 %v5428, 0.0
      %v5461 = vmax.f32 %v5429, 0.0
      %v5462 = vmax.f32 %v5430, 0.0
      %v5463 = vmax.f32 %v5431, 0.0
      %v5464 = vmax.f32 %v5432, 0.0
      %v5465 = vmax.f32 %v5433, 0.0
      %v5466 = vmax.f32 %v5434, 0.0
      %v5467 = vmax.f32 %v5435, 0.0
      %v5468 = vmax.f32 %v5436, 0.0
      %v5469 = vmax.f32 %v5437, 0.0
      %v5470 = vmax.f32 %v5438, 0.0
      %v5471 = vmax.f32 %v5439, 0.0
      %v5472 = vmax.f32 %v5440, 0.0
      %v5473 = vmax.f32 %v5441, 0.0
      %v5474 = vmax.f32 %v5442, 0.0
      %v5475 = vmax.f32 %v5443, 0.0
      %v5476 = vmax.f32 %v5444, 0.0
      %v5477 = vmax.f32 %v5445, 0.0
      %v5478 = vmax.f32 %v5446, 0.0
      %v5479 = vmax.f32 %v5447, 0.0
      %v5480 = vmax.f32 %v5448, %v5450
      %v5481 = vmax.f32 %v5449, %v5451
      %v5482 = vmax.f32 %v5452, %v5454
      %v5483 = vmax.f32 %v5453, %v5455
      %v5484 = vmax.f32 %v5456, %v5458
      %v5485 = vmax.f32 %v5457, %v5459
      %v5486 = vmax.f32 %v5460, %v5462
      %v5487 = vmax.f32 %v5461, %v5463
      %v5488 = vmax.f32 %v5464, %v5466
      %v5489 = vmax.f32 %v5465, %v5467
      %v5490 = vmax.f32 %v5468, %v5470
      %v5491 = vmax.f32 %v5469, %v5471
      %v5492 = vmax.f32 %v5472, %v5474
      %v5493 = vmax.f32 %v5473, %v5475
      %v5494 = vmax.f32 %v5476, %v5478
      %v5495 = vmax.f32 %v5477, %v5479
      %v5504 = vrot.slane %v5480, 1
      %v5505 = vrot.slane %v5482, 1
      %v5506 = vrot.slane %v5484, 1
      %v5507 = vrot.slane %v5486, 1
      %v5508 = vrot.slane %v5488, 1
      %v5509 = vrot.slane %v5490, 1
      %v5510 = vrot.slane %v5492, 1
      %v5511 = vrot.slane %v5494, 1
      %v5520 = vmax.f32 %v5480, %v5504
      %v5521 = vmax.f32 %v5482, %v5505
      %v5522 = vmax.f32 %v5484, %v5506
      %v5523 = vmax.f32 %v5486, %v5507
      %v5524 = vmax.f32 %v5488, %v5508
      %v5525 = vmax.f32 %v5490, %v5509
      %v5526 = vmax.f32 %v5492, %v5510
      %v5527 = vmax.f32 %v5494, %v5511
      %vm5528 = vcmask 57344
      %5529 = vst.msk [vmem:[#allocation3] sm:$0x1] %vm5528, %v5520
      %5530 = vst.msk [vmem:[#allocation3 + $0x8] sm:$0x1] %vm5528, %v5521
      %5531 = vst.msk [vmem:[#allocation3 + $0x10] sm:$0x1] %vm5528, %v5522
      %5532 = vst.msk [vmem:[#allocation3 + $0x18] sm:$0x1] %vm5528, %v5523
      %5533 = vst.msk [vmem:[#allocation3 + $0x20] sm:$0x1] %vm5528, %v5524
      %5534 = vst.msk [vmem:[#allocation3 + $0x28] sm:$0x1] %vm5528, %v5525
      %5535 = vst.msk [vmem:[#allocation3 + $0x30] sm:$0x1] %vm5528, %v5526
      %5536 = vst.msk [vmem:[#allocation3 + $0x38] sm:$0x1] %vm5528, %v5527
      %vm5537 = vcmask 59394
      %5538 = vst.msk [vmem:[#allocation3 - $0x1] sm:$0x4] %vm5537, %v5520
      %5539 = vst.msk [vmem:[#allocation3 + $0x7] sm:$0x4] %vm5537, %v5521
      %5540 = vst.msk [vmem:[#allocation3 + $0xf] sm:$0x4] %vm5537, %v5522
      %5541 = vst.msk [vmem:[#allocation3 + $0x17] sm:$0x4] %vm5537, %v5523
      %5542 = vst.msk [vmem:[#allocation3 + $0x1f] sm:$0x4] %vm5537, %v5524
      %5543 = vst.msk [vmem:[#allocation3 + $0x27] sm:$0x4] %vm5537, %v5525
      %5544 = vst.msk [vmem:[#allocation3 + $0x2f] sm:$0x4] %vm5537, %v5526
      %5545 = vst.msk [vmem:[#allocation3 + $0x37] sm:$0x4] %vm5537, %v5527
      %vm5546 = vcmask 61444
      %5547 = vst.msk [vmem:[#allocation3 - $0x2] sm:$0x10] %vm5546, %v5520
      %5548 = vst.msk [vmem:[#allocation3 + $0x6] sm:$0x10] %vm5546, %v5521
      %5549 = vst.msk [vmem:[#allocation3 + $0xe] sm:$0x10] %vm5546, %v5522
      %5550 = vst.msk [vmem:[#allocation3 + $0x16] sm:$0x10] %vm5546, %v5523
      %5551 = vst.msk [vmem:[#allocation3 + $0x1e] sm:$0x10] %vm5546, %v5524
      %5552 = vst.msk [vmem:[#allocation3 + $0x26] sm:$0x10] %vm5546, %v5525
      %5553 = vst.msk [vmem:[#allocation3 + $0x2e] sm:$0x10] %vm5546, %v5526
      %5554 = vst.msk [vmem:[#allocation3 + $0x36] sm:$0x10] %vm5546, %v5527
      %vm5555 = vcmask 63494
      %5556 = vst.msk [vmem:[#allocation3 - $0x3] sm:$0x40] %vm5555, %v5520
      %5557 = vst.msk [vmem:[#allocation3 + $0x5] sm:$0x40] %vm5555, %v5521
      %5558 = vst.msk [vmem:[#allocation3 + $0xd] sm:$0x40] %vm5555, %v5522
      %5559 = vst.msk [vmem:[#allocation3 + $0x15] sm:$0x40] %vm5555, %v5523
      %5560 = vst.msk [vmem:[#allocation3 + $0x1d] sm:$0x40] %vm5555, %v5524
      %5561 = vst.msk [vmem:[#allocation3 + $0x25] sm:$0x40] %vm5555, %v5525
      %5562 = vst.msk [vmem:[#allocation3 + $0x2d] sm:$0x40] %vm5555, %v5526
      %5563 = vst.msk [vmem:[#allocation3 + $0x35] sm:$0x40] %vm5555, %v5527
      %v5572 = vrot.slane %v5481, 1
      %v5573 = vrot.slane %v5483, 1
      %v5574 = vrot.slane %v5485, 1
      %v5575 = vrot.slane %v5487, 1
      %v5576 = vrot.slane %v5489, 1
      %v5577 = vrot.slane %v5491, 1
      %v5578 = vrot.slane %v5493, 1
      %v5579 = vrot.slane %v5495, 1
      %v5588 = vmax.f32 %v5481, %v5572
      %v5589 = vmax.f32 %v5483, %v5573
      %v5590 = vmax.f32 %v5485, %v5574
      %v5591 = vmax.f32 %v5487, %v5575
      %v5592 = vmax.f32 %v5489, %v5576
      %v5593 = vmax.f32 %v5491, %v5577
      %v5594 = vmax.f32 %v5493, %v5578
      %v5595 = vmax.f32 %v5495, %v5579
      %5596 = vst.msk [vmem:[#allocation3 + $0x4] sm:$0x1] %vm5528, %v5588
      %5597 = vst.msk [vmem:[#allocation3 + $0xc] sm:$0x1] %vm5528, %v5589
      %5598 = vst.msk [vmem:[#allocation3 + $0x14] sm:$0x1] %vm5528, %v5590
      %5599 = vst.msk [vmem:[#allocation3 + $0x1c] sm:$0x1] %vm5528, %v5591
      %5600 = vst.msk [vmem:[#allocation3 + $0x24] sm:$0x1] %vm5528, %v5592
      %5601 = vst.msk [vmem:[#allocation3 + $0x2c] sm:$0x1] %vm5528, %v5593
      %5602 = vst.msk [vmem:[#allocation3 + $0x34] sm:$0x1] %vm5528, %v5594
      %5603 = vst.msk [vmem:[#allocation3 + $0x3c] sm:$0x1] %vm5528, %v5595
      %5604 = vst.msk [vmem:[#allocation3 + $0x3] sm:$0x4] %vm5537, %v5588
      %5605 = vst.msk [vmem:[#allocation3 + $0xb] sm:$0x4] %vm5537, %v5589
      %5606 = vst.msk [vmem:[#allocation3 + $0x13] sm:$0x4] %vm5537, %v5590
      %5607 = vst.msk [vmem:[#allocation3 + $0x1b] sm:$0x4] %vm5537, %v5591
      %5608 = vst.msk [vmem:[#allocation3 + $0x23] sm:$0x4] %vm5537, %v5592
      %5609 = vst.msk [vmem:[#allocation3 + $0x2b] sm:$0x4] %vm5537, %v5593
      %5610 = vst.msk [vmem:[#allocation3 + $0x33] sm:$0x4] %vm5537, %v5594
      %5611 = vst.msk [vmem:[#allocation3 + $0x3b] sm:$0x4] %vm5537, %v5595
      %5612 = vst.msk [vmem:[#allocation3 + $0x2] sm:$0x10] %vm5546, %v5588
      %5613 = vst.msk [vmem:[#allocation3 + $0xa] sm:$0x10] %vm5546, %v5589
      %5614 = vst.msk [vmem:[#allocation3 + $0x12] sm:$0x10] %vm5546, %v5590
      %5615 = vst.msk [vmem:[#allocation3 + $0x1a] sm:$0x10] %vm5546, %v5591
      %5616 = vst.msk [vmem:[#allocation3 + $0x22] sm:$0x10] %vm5546, %v5592
      %5617 = vst.msk [vmem:[#allocation3 + $0x2a] sm:$0x10] %vm5546, %v5593
      %5618 = vst.msk [vmem:[#allocation3 + $0x32] sm:$0x10] %vm5546, %v5594
      %5619 = vst.msk [vmem:[#allocation3 + $0x3a] sm:$0x10] %vm5546, %v5595
      %5620 = vst.msk [vmem:[#allocation3 + $0x1] sm:$0x40] %vm5555, %v5588
      %5621 = vst.msk [vmem:[#allocation3 + $0x9] sm:$0x40] %vm5555, %v5589
      %5622 = vst.msk [vmem:[#allocation3 + $0x11] sm:$0x40] %vm5555, %v5590
      %5623 = vst.msk [vmem:[#allocation3 + $0x19] sm:$0x40] %vm5555, %v5591
      %5624 = vst.msk [vmem:[#allocation3 + $0x21] sm:$0x40] %vm5555, %v5592
      %5625 = vst.msk [vmem:[#allocation3 + $0x29] sm:$0x40] %vm5555, %v5593
      %5626 = vst.msk [vmem:[#allocation3 + $0x31] sm:$0x40] %vm5555, %v5594
      %5627 = vst.msk [vmem:[#allocation3 + $0x39] sm:$0x40] %vm5555, %v5595
      %v5628 = vld [vmem:[#allocation3] sm:$0xff]
      %v5629 = vld [vmem:[#allocation3 + $0x8] sm:$0xff]
      %v5630 = vld [vmem:[#allocation3 + $0x10] sm:$0xff]
      %v5631 = vld [vmem:[#allocation3 + $0x18] sm:$0xff]
      %v5632 = vld [vmem:[#allocation3 + $0x20] sm:$0xff]
      %v5633 = vld [vmem:[#allocation3 + $0x28] sm:$0xff]
      %v5634 = vld [vmem:[#allocation3 + $0x30] sm:$0xff]
      %v5635 = vld [vmem:[#allocation3 + $0x38] sm:$0xff]
      %vm5636 = vcmask 60416
      %5637 = vst.msk [vmem:[#allocation4] sm:$0xf] %vm5636, 0
      %5638 = vst.msk [vmem:[#allocation4 + $0x4] sm:$0x1] %vm5528, 0
      %5639 = vst.msk [vmem:[#allocation4 + $0x8] sm:$0xf] %vm5636, 0
      %5640 = vst.msk [vmem:[#allocation4 + $0xc] sm:$0x1] %vm5528, 0
      %5641 = vst.msk [vmem:[#allocation4 + $0x10] sm:$0xf] %vm5636, 0
      %5642 = vst.msk [vmem:[#allocation4 + $0x14] sm:$0x1] %vm5528, 0
      %5643 = vst.msk [vmem:[#allocation4 + $0x18] sm:$0xf] %vm5636, 0
      %5644 = vst.msk [vmem:[#allocation4 + $0x1c] sm:$0x1] %vm5528, 0
      %5645 = vst.msk [vmem:[#allocation4 + $0x20] sm:$0xf] %vm5636, 0
      %5646 = vst.msk [vmem:[#allocation4 + $0x24] sm:$0x1] %vm5528, 0
      %5647 = vst.msk [vmem:[#allocation4 + $0x28] sm:$0xf] %vm5636, 0
      %5648 = vst.msk [vmem:[#allocation4 + $0x2c] sm:$0x1] %vm5528, 0
      %5649 = vst.msk [vmem:[#allocation4 + $0x30] sm:$0xf] %vm5636, 0
      %5650 = vst.msk [vmem:[#allocation4 + $0x34] sm:$0x1] %vm5528, 0
      %5651 = vst.msk [vmem:[#allocation4 + $0x38] sm:$0xf] %vm5636, 0
      %5652 = vst.msk [vmem:[#allocation4 + $0x3c] sm:$0x1] %vm5528, 0
      %5653 = vst.msk [vmem:[#allocation4 + $0x40] sm:$0xf] %vm5636, 0
      %5654 = vst.msk [vmem:[#allocation4 + $0x44] sm:$0x1] %vm5528, 0
      %5655 = vst.msk [vmem:[#allocation4 + $0x48] sm:$0xf] %vm5636, 0
      %5656 = vst.msk [vmem:[#allocation4 + $0x4c] sm:$0x1] %vm5528, 0
      %v5657 = vpack.c.bf16 %v5628, %v5628
      %v5658 = vpack.c.bf16 %v5629, %v5629
      %v5659 = vpack.c.bf16 %v5630, %v5630
      %v5660 = vpack.c.bf16 %v5631, %v5631
      %v5661 = vpack.c.bf16 %v5632, %v5632
      %v5662 = vpack.c.bf16 %v5633, %v5633
      %v5663 = vpack.c.bf16 %v5634, %v5634
      %v5664 = vpack.c.bf16 %v5635, %v5635
      %v5673 = vunpack.c.l.b16 %v5657
      %v5674 = vunpack.c.l.b16 %v5658
      %v5675 = vunpack.c.l.b16 %v5659
      %v5676 = vunpack.c.l.b16 %v5660
      %v5677 = vunpack.c.l.b16 %v5661
      %v5678 = vunpack.c.l.b16 %v5662
      %v5679 = vunpack.c.l.b16 %v5663
      %v5680 = vunpack.c.l.b16 %v5664
      %v5681 = vpack.c.b16 %v5673, %v5673
      %v5682 = vpack.c.b16 %v5674, %v5674
      %v5683 = vpack.c.b16 %v5675, %v5675
      %v5684 = vpack.c.b16 %v5676, %v5676
      %v5685 = vpack.c.b16 %v5677, %v5677
      %v5686 = vpack.c.b16 %v5678, %v5678
      %v5687 = vpack.c.b16 %v5679, %v5679
      %v5688 = vpack.c.b16 %v5680, %v5680
      %v5690 = vshrl.u32 %v5681, 16
      %v5692 = vrot.slane %v5690, 7
      %v5693 = vshll.u32 %v5681, 16
      %v5695 = vor.u32 %v5692, %v5693
      %v5696 = vrot.slane %v5692, 4
      %v5698 = vshrl.u32 %v5682, 16
      %v5700 = vrot.slane %v5698, 7
      %v5701 = vshll.u32 %v5682, 16
      %v5703 = vor.u32 %v5700, %v5701
      %v5704 = vrot.slane %v5700, 4
      %v5706 = vshrl.u32 %v5683, 16
      %v5708 = vrot.slane %v5706, 7
      %v5709 = vshll.u32 %v5683, 16
      %v5711 = vor.u32 %v5708, %v5709
      %v5712 = vrot.slane %v5708, 4
      %v5714 = vshrl.u32 %v5684, 16
      %v5716 = vrot.slane %v5714, 7
      %v5717 = vshll.u32 %v5684, 16
      %v5719 = vor.u32 %v5716, %v5717
      %v5720 = vrot.slane %v5716, 4
      %v5722 = vshrl.u32 %v5685, 16
      %v5724 = vrot.slane %v5722, 7
      %v5725 = vshll.u32 %v5685, 16
      %v5727 = vor.u32 %v5724, %v5725
      %v5728 = vrot.slane %v5724, 4
      %v5730 = vshrl.u32 %v5686, 16
      %v5732 = vrot.slane %v5730, 7
      %v5733 = vshll.u32 %v5686, 16
      %v5735 = vor.u32 %v5732, %v5733
      %v5736 = vrot.slane %v5732, 4
      %v5738 = vshrl.u32 %v5687, 16
      %v5740 = vrot.slane %v5738, 7
      %v5741 = vshll.u32 %v5687, 16
      %v5743 = vor.u32 %v5740, %v5741
      %v5744 = vrot.slane %v5740, 4
      %v5746 = vshrl.u32 %v5688, 16
      %v5748 = vrot.slane %v5746, 7
      %v5749 = vshll.u32 %v5688, 16
      %v5751 = vor.u32 %v5748, %v5749
      %v5752 = vrot.slane %v5748, 4
      %s5769 = scalar_lea.vmem [#allocation4], 8
      %vm5770 = vcmask 60416
      %vm5771 = vmand %vm5770, %vm735
      %v5772 = vld [vmem:[%s5769] sm:$0xf]
      %v5773 = vsel %vm5771, %v5695, %v5772
      %5774 = vst [vmem:[%s5769] sm:$0xf] %v5773
      %vm5775 = vcmask 57344
      %vm5776 = vmand %vm5775, %vm410
      %v5777 = vld [vmem:[%s5769 + $0x4] sm:$0x1]
      %v5778 = vsel %vm5776, %v5696, %v5777
      %5779 = vst [vmem:[%s5769 + $0x4] sm:$0x1] %v5778
      %v5780 = vld [vmem:[%s5769 + $0x8] sm:$0xf]
      %v5781 = vsel %vm5771, %v5703, %v5780
      %5782 = vst [vmem:[%s5769 + $0x8] sm:$0xf] %v5781
      %v5783 = vld [vmem:[%s5769 + $0xc] sm:$0x1]
      %v5784 = vsel %vm5776, %v5704, %v5783
      %5785 = vst [vmem:[%s5769 + $0xc] sm:$0x1] %v5784
      %v5786 = vld [vmem:[%s5769 + $0x10] sm:$0xf]
      %v5787 = vsel %vm5771, %v5711, %v5786
      %5788 = vst [vmem:[%s5769 + $0x10] sm:$0xf] %v5787
      %v5789 = vld [vmem:[%s5769 + $0x14] sm:$0x1]
      %v5790 = vsel %vm5776, %v5712, %v5789
      %5791 = vst [vmem:[%s5769 + $0x14] sm:$0x1] %v5790
      %v5792 = vld [vmem:[%s5769 + $0x18] sm:$0xf]
      %v5793 = vsel %vm5771, %v5719, %v5792
      %5794 = vst [vmem:[%s5769 + $0x18] sm:$0xf] %v5793
      %v5795 = vld [vmem:[%s5769 + $0x1c] sm:$0x1]
      %v5796 = vsel %vm5776, %v5720, %v5795
      %5797 = vst [vmem:[%s5769 + $0x1c] sm:$0x1] %v5796
      %v5798 = vld [vmem:[%s5769 + $0x20] sm:$0xf]
      %v5799 = vsel %vm5771, %v5727, %v5798
      %5800 = vst [vmem:[%s5769 + $0x20] sm:$0xf] %v5799
      %v5801 = vld [vmem:[%s5769 + $0x24] sm:$0x1]
      %v5802 = vsel %vm5776, %v5728, %v5801
      %5803 = vst [vmem:[%s5769 + $0x24] sm:$0x1] %v5802
      %v5804 = vld [vmem:[%s5769 + $0x28] sm:$0xf]
      %v5805 = vsel %vm5771, %v5735, %v5804
      %5806 = vst [vmem:[%s5769 + $0x28] sm:$0xf] %v5805
      %v5807 = vld [vmem:[%s5769 + $0x2c] sm:$0x1]
      %v5808 = vsel %vm5776, %v5736, %v5807
      %5809 = vst [vmem:[%s5769 + $0x2c] sm:$0x1] %v5808
      %v5810 = vld [vmem:[%s5769 + $0x30] sm:$0xf]
      %v5811 = vsel %vm5771, %v5743, %v5810
      %5812 = vst [vmem:[%s5769 + $0x30] sm:$0xf] %v5811
      %v5813 = vld [vmem:[%s5769 + $0x34] sm:$0x1]
      %v5814 = vsel %vm5776, %v5744, %v5813
      %5815 = vst [vmem:[%s5769 + $0x34] sm:$0x1] %v5814
      %v5816 = vld [vmem:[%s5769 + $0x38] sm:$0xf]
      %v5817 = vsel %vm5771, %v5751, %v5816
      %5818 = vst [vmem:[%s5769 + $0x38] sm:$0xf] %v5817
      %v5819 = vld [vmem:[%s5769 + $0x3c] sm:$0x1]
      %v5820 = vsel %vm5776, %v5752, %v5819
      %5821 = vst [vmem:[%s5769 + $0x3c] sm:$0x1] %v5820
      %v5822 = vld [vmem:[#allocation4] sm:$0xf]
      %v5823 = vld [vmem:[#allocation4 + $0x8] sm:$0xf]
      %v5824 = vld [vmem:[#allocation4 + $0x10] sm:$0xf]
      %v5825 = vld [vmem:[#allocation4 + $0x18] sm:$0xf]
      %v5826 = vld [vmem:[#allocation4 + $0x20] sm:$0xf]
      %v5827 = vld [vmem:[#allocation4 + $0x28] sm:$0xf]
      %v5828 = vld [vmem:[#allocation4 + $0x30] sm:$0xf]
      %v5829 = vld [vmem:[#allocation4 + $0x38] sm:$0xf]
      %v5830 = vld [vmem:[%s3] sm:$0xf]
      %v5831 = vld [vmem:[#allocation4 + $0x4] sm:$0x1]
      %v5832 = vld [vmem:[#allocation4 + $0xc] sm:$0x1]
      %v5833 = vld [vmem:[#allocation4 + $0x14] sm:$0x1]
      %v5834 = vld [vmem:[#allocation4 + $0x1c] sm:$0x1]
      %v5835 = vld [vmem:[#allocation4 + $0x24] sm:$0x1]
      %v5836 = vld [vmem:[#allocation4 + $0x2c] sm:$0x1]
      %v5837 = vld [vmem:[#allocation4 + $0x34] sm:$0x1]
      %v5838 = vld [vmem:[#allocation4 + $0x3c] sm:$0x1]
      %v5840 = vshrl.u32 %v5822, 16
      %v5842 = vrot.slane %v5840, 4
      %v5843 = vshll.u32 %v5822, 16
      %v5845 = vrot.slane %v5843, 5
      %v5846 = vor.u32 %v5842, %v5845
      %v5847 = vrot.slane %v5846, 4
      %v5849 = vshll.u32 %v5831, 16
      %v5851 = vrot.slane %v5849, 5
      %v5852 = vsel %vm902, %v5847, %v5851
      %v5854 = vshrl.u32 %v5823, 16
      %v5856 = vrot.slane %v5854, 4
      %v5857 = vshll.u32 %v5823, 16
      %v5859 = vrot.slane %v5857, 5
      %v5860 = vor.u32 %v5856, %v5859
      %v5861 = vrot.slane %v5860, 4
      %v5863 = vshll.u32 %v5832, 16
      %v5865 = vrot.slane %v5863, 5
      %v5866 = vsel %vm902, %v5861, %v5865
      %v5868 = vshrl.u32 %v5824, 16
      %v5870 = vrot.slane %v5868, 4
      %v5871 = vshll.u32 %v5824, 16
      %v5873 = vrot.slane %v5871, 5
      %v5874 = vor.u32 %v5870, %v5873
      %v5875 = vrot.slane %v5874, 4
      %v5877 = vshll.u32 %v5833, 16
      %v5879 = vrot.slane %v5877, 5
      %v5880 = vsel %vm902, %v5875, %v5879
      %v5882 = vshrl.u32 %v5825, 16
      %v5884 = vrot.slane %v5882, 4
      %v5885 = vshll.u32 %v5825, 16
      %v5887 = vrot.slane %v5885, 5
      %v5888 = vor.u32 %v5884, %v5887
      %v5889 = vrot.slane %v5888, 4
      %v5891 = vshll.u32 %v5834, 16
      %v5893 = vrot.slane %v5891, 5
      %v5894 = vsel %vm902, %v5889, %v5893
      %v5896 = vshrl.u32 %v5826, 16
      %v5898 = vrot.slane %v5896, 4
      %v5899 = vshll.u32 %v5826, 16
      %v5901 = vrot.slane %v5899, 5
      %v5902 = vor.u32 %v5898, %v5901
      %v5903 = vrot.slane %v5902, 4
      %v5905 = vshll.u32 %v5835, 16
      %v5907 = vrot.slane %v5905, 5
      %v5908 = vsel %vm902, %v5903, %v5907
      %v5910 = vshrl.u32 %v5827, 16
      %v5912 = vrot.slane %v5910, 4
      %v5913 = vshll.u32 %v5827, 16
      %v5915 = vrot.slane %v5913, 5
      %v5916 = vor.u32 %v5912, %v5915
      %v5917 = vrot.slane %v5916, 4
      %v5919 = vshll.u32 %v5836, 16
      %v5921 = vrot.slane %v5919, 5
      %v5922 = vsel %vm902, %v5917, %v5921
      %v5924 = vshrl.u32 %v5828, 16
      %v5926 = vrot.slane %v5924, 4
      %v5927 = vshll.u32 %v5828, 16
      %v5929 = vrot.slane %v5927, 5
      %v5930 = vor.u32 %v5926, %v5929
      %v5931 = vrot.slane %v5930, 4
      %v5933 = vshll.u32 %v5837, 16
      %v5935 = vrot.slane %v5933, 5
      %v5936 = vsel %vm902, %v5931, %v5935
      %v5938 = vshrl.u32 %v5829, 16
      %v5940 = vrot.slane %v5938, 4
      %v5941 = vshll.u32 %v5829, 16
      %v5943 = vrot.slane %v5941, 5
      %v5944 = vor.u32 %v5940, %v5943
      %v5945 = vrot.slane %v5944, 4
      %v5947 = vshll.u32 %v5838, 16
      %v5949 = vrot.slane %v5947, 5
      %v5950 = vsel %vm902, %v5945, %v5949
      %s5951 = scalar_lea.vmem %s3, 4
      %v5952 = vld [vmem:[%s5951] sm:$0xf]
      %v5953 = vunpack.c.l.b16 %v5852
      %v5954 = vunpack.c.l.b16 %v5866
      %v5955 = vunpack.c.l.b16 %v5880
      %v5956 = vunpack.c.l.b16 %v5894
      %v5957 = vunpack.c.l.b16 %v5908
      %v5958 = vunpack.c.l.b16 %v5922
      %v5959 = vunpack.c.l.b16 %v5936
      %v5960 = vunpack.c.l.b16 %v5950
      %v5961 = vpack.c.b16 %v5954, %v5953
      %v5962 = vpack.c.b16 %v5956, %v5955
      %v5963 = vpack.c.b16 %v5958, %v5957
      %v5964 = vpack.c.b16 %v5960, %v5959
      %vm5965 = vcmask 64512
      %v5967 = vsel %vm5965, %v5961, 0
      %v5970 = vsel %vm5965, %v5962, 0
      %v5973 = vsel %vm5965, %v5963, 0
      %v5976 = vsel %vm5965, %v5964, 0
      %vm5978 = vcmask 1043456
      %v5980 = vsel %vm5978, %v5952, 0
      %5982 = vmatprep.subr.bf16.mxu0 0
      %5983 = vmatpush1.bf16.msra.mxu0 %v5980
      %5984 = vmatprep.subr.bf16.mxu0 0
      %5985 = vmatpush1.bf16.msra.mxu0 0
      %5986 = vmatprep.subr.bf16.mxu0 0
      %5987 = vmatpush1.bf16.msra.mxu0 0
      %5988 = vmatprep.subr.bf16.mxu0 0
      %5989 = vmatpush1.bf16.msra.mxu0 0
      %5990 = vmatprep.subr.bf16.mxu0 0
      %5991 = vmatpush1.bf16.msra.mxu0 0
      %5992 = vmatprep.subr.bf16.mxu0 0
      %5993 = vmatpush1.bf16.msra.mxu0 0
      %5994 = vmatprep.subr.bf16.mxu0 0
      %5995 = vmatpush1.bf16.msra.mxu0 0
      %5996 = vmatprep.subr.bf16.mxu0 0
      %5997 = vmatpush1.bf16.msra.mxu0 0
      %5998 = vmatprep.subr.bf16.mxu0 0
      %5999 = vmatpush1.bf16.msra.mxu0 0
      %6000 = vmatprep.subr.bf16.mxu0 0
      %6001 = vmatpush1.bf16.msra.mxu0 0
      %6002 = vmatprep.subr.bf16.mxu0 0
      %6003 = vmatpush1.bf16.msra.mxu0 0
      %6004 = vmatprep.subr.bf16.mxu0 0
      %6005 = vmatpush1.bf16.msra.mxu0 0
      %6006 = vmatprep.subr.bf16.mxu0 0
      %6007 = vmatpush1.bf16.msra.mxu0 0
      %6008 = vmatprep.subr.bf16.mxu0 0
      %6009 = vmatpush1.bf16.msra.mxu0 0
      %6010 = vmatprep.subr.bf16.mxu0 0
      %6011 = vmatpush1.bf16.msra.mxu0 0
      %6012 = vmatprep.subr.bf16.mxu0 0
      %6013 = vmatpush1.bf16.msra.mxu0 0
      %6014 = vmatprep.mubr.bf16.mxu0 0
      %6015 = vmatmul.mubr.bf16.gmra.mrb[0].mxu0 %v5967
      %v6016 = vpop.f32.mrb[0].mxu0
      %v6017 = vadd.f32 0.0, %v6016
      %v6018 = vpop.f32.mrb[0].mxu0
      %v6019 = vpop.f32.mrb[0].mxu0
      %v6020 = vadd.f32 0.0, %v6019
      %v6021 = vpop.f32.mrb[0].mxu0
      %6022 = vmatprep.mubr.bf16.mxu0 0
      %6023 = vmatmul.mubr.bf16.gmra.mrb[0].mxu0 %v5970
      %v6024 = vpop.f32.mrb[0].mxu0
      %v6025 = vadd.f32 0.0, %v6024
      %v6026 = vpop.f32.mrb[0].mxu0
      %v6027 = vpop.f32.mrb[0].mxu0
      %v6028 = vadd.f32 0.0, %v6027
      %v6029 = vpop.f32.mrb[0].mxu0
      %6030 = vmatprep.mubr.bf16.mxu0 0
      %6031 = vmatmul.mubr.bf16.gmra.mrb[0].mxu0 %v5973
      %v6032 = vpop.f32.mrb[0].mxu0
      %v6033 = vadd.f32 0.0, %v6032
      %v6034 = vpop.f32.mrb[0].mxu0
      %v6035 = vpop.f32.mrb[0].mxu0
      %v6036 = vadd.f32 0.0, %v6035
      %v6037 = vpop.f32.mrb[0].mxu0
      %6038 = vmatprep.mubr.bf16.mxu0 0
      %6039 = vmatmul.mubr.bf16.gmra.mrb[0].mxu0 %v5976
      %v6040 = vpop.f32.mrb[0].mxu0
      %v6041 = vadd.f32 0.0, %v6040
      %v6042 = vpop.f32.mrb[0].mxu0
      %v6043 = vpop.f32.mrb[0].mxu0
      %v6044 = vadd.f32 0.0, %v6043
      %v6045 = vpop.f32.mrb[0].mxu0
      %6046 = vdwg.mxu0
      %v6055 = vunpack.c.l.b16 %v5822
      %v6056 = vunpack.c.l.b16 %v5823
      %v6057 = vunpack.c.l.b16 %v5824
      %v6058 = vunpack.c.l.b16 %v5825
      %v6059 = vunpack.c.l.b16 %v5826
      %v6060 = vunpack.c.l.b16 %v5827
      %v6061 = vunpack.c.l.b16 %v5828
      %v6062 = vunpack.c.l.b16 %v5829
      %v6063 = vpack.c.b16 %v6056, %v6055
      %v6064 = vpack.c.b16 %v6058, %v6057
      %v6065 = vpack.c.b16 %v6060, %v6059
      %v6066 = vpack.c.b16 %v6062, %v6061
      %v6068 = vsel %vm5965, %v6063, 0
      %v6071 = vsel %vm5965, %v6064, 0
      %v6074 = vsel %vm5965, %v6065, 0
      %v6077 = vsel %vm5965, %v6066, 0
      %v6080 = vsel %vm5978, %v5830, 0
      %6082 = vmatprep.subr.bf16.mxu0 0
      %6083 = vmatpush1.bf16.msra.mxu0 %v6080
      %6084 = vmatprep.subr.bf16.mxu0 0
      %6085 = vmatpush1.bf16.msra.mxu0 0
      %6086 = vmatprep.subr.bf16.mxu0 0
      %6087 = vmatpush1.bf16.msra.mxu0 0
      %6088 = vmatprep.subr.bf16.mxu0 0
      %6089 = vmatpush1.bf16.msra.mxu0 0
      %6090 = vmatprep.subr.bf16.mxu0 0
      %6091 = vmatpush1.bf16.msra.mxu0 0
      %6092 = vmatprep.subr.bf16.mxu0 0
      %6093 = vmatpush1.bf16.msra.mxu0 0
      %6094 = vmatprep.subr.bf16.mxu0 0
      %6095 = vmatpush1.bf16.msra.mxu0 0
      %6096 = vmatprep.subr.bf16.mxu0 0
      %6097 = vmatpush1.bf16.msra.mxu0 0
      %6098 = vmatprep.subr.bf16.mxu0 0
      %6099 = vmatpush1.bf16.msra.mxu0 0
      %6100 = vmatprep.subr.bf16.mxu0 0
      %6101 = vmatpush1.bf16.msra.mxu0 0
      %6102 = vmatprep.subr.bf16.mxu0 0
      %6103 = vmatpush1.bf16.msra.mxu0 0
      %6104 = vmatprep.subr.bf16.mxu0 0
      %6105 = vmatpush1.bf16.msra.mxu0 0
      %6106 = vmatprep.subr.bf16.mxu0 0
      %6107 = vmatpush1.bf16.msra.mxu0 0
      %6108 = vmatprep.subr.bf16.mxu0 0
      %6109 = vmatpush1.bf16.msra.mxu0 0
      %6110 = vmatprep.subr.bf16.mxu0 0
      %6111 = vmatpush1.bf16.msra.mxu0 0
      %6112 = vmatprep.subr.bf16.mxu0 0
      %6113 = vmatpush1.bf16.msra.mxu0 0
      %6114 = vmatprep.mubr.bf16.mxu0 0
      %6115 = vmatmul.mubr.bf16.gmra.mrb[0].mxu0 %v6068
      %v6116 = vpop.f32.mrb[0].mxu0
      %v6117 = vadd.f32 %v6017, %v6116
      %v6118 = vpop.f32.mrb[0].mxu0
      %v6119 = vpop.f32.mrb[0].mxu0
      %v6120 = vadd.f32 %v6020, %v6119
      %v6121 = vpop.f32.mrb[0].mxu0
      %6122 = vmatprep.mubr.bf16.mxu0 0
      %6123 = vmatmul.mubr.bf16.gmra.mrb[0].mxu0 %v6071
      %v6124 = vpop.f32.mrb[0].mxu0
      %v6125 = vadd.f32 %v6025, %v6124
      %v6126 = vpop.f32.mrb[0].mxu0
      %v6127 = vpop.f32.mrb[0].mxu0
      %v6128 = vadd.f32 %v6028, %v6127
      %v6129 = vpop.f32.mrb[0].mxu0
      %6130 = vmatprep.mubr.bf16.mxu0 0
      %6131 = vmatmul.mubr.bf16.gmra.mrb[0].mxu0 %v6074
      %v6132 = vpop.f32.mrb[0].mxu0
      %v6133 = vadd.f32 %v6033, %v6132
      %v6134 = vpop.f32.mrb[0].mxu0
      %v6135 = vpop.f32.mrb[0].mxu0
      %v6136 = vadd.f32 %v6036, %v6135
      %v6137 = vpop.f32.mrb[0].mxu0
      %6138 = vmatprep.mubr.bf16.mxu0 0
      %6139 = vmatmul.mubr.bf16.gmra.mrb[0].mxu0 %v6077
      %v6140 = vpop.f32.mrb[0].mxu0
      %v6141 = vadd.f32 %v6041, %v6140
      %v6142 = vpop.f32.mrb[0].mxu0
      %v6143 = vpop.f32.mrb[0].mxu0
      %v6144 = vadd.f32 %v6044, %v6143
      %v6145 = vpop.f32.mrb[0].mxu0
      %6146 = vdwg.mxu0
      %v6147 = vld [vmem:[#allocation4] sm:$0xe]
      %v6148 = vld [vmem:[#allocation4 + $0x8] sm:$0xe]
      %v6149 = vld [vmem:[#allocation4 + $0x10] sm:$0xe]
      %v6150 = vld [vmem:[#allocation4 + $0x18] sm:$0xe]
      %v6151 = vld [vmem:[#allocation4 + $0x20] sm:$0xe]
      %v6152 = vld [vmem:[#allocation4 + $0x28] sm:$0xe]
      %v6153 = vld [vmem:[#allocation4 + $0x30] sm:$0xe]
      %v6154 = vld [vmem:[#allocation4 + $0x38] sm:$0xe]
      %v6171 = vrot.slane %v6147, 5
      %v6172 = vrot.slane %v6171, 4
      %v6173 = vrot.slane %v5831, 5
      %v6174 = vsel %vm1893, %v6172, %v6173
      %v6175 = vrot.slane %v6148, 5
      %v6176 = vrot.slane %v6175, 4
      %v6177 = vrot.slane %v5832, 5
      %v6178 = vsel %vm1893, %v6176, %v6177
      %v6179 = vrot.slane %v6149, 5
      %v6180 = vrot.slane %v6179, 4
      %v6181 = vrot.slane %v5833, 5
      %v6182 = vsel %vm1893, %v6180, %v6181
      %v6183 = vrot.slane %v6150, 5
      %v6184 = vrot.slane %v6183, 4
      %v6185 = vrot.slane %v5834, 5
      %v6186 = vsel %vm1893, %v6184, %v6185
      %v6187 = vrot.slane %v6151, 5
      %v6188 = vrot.slane %v6187, 4
      %v6189 = vrot.slane %v5835, 5
      %v6190 = vsel %vm1893, %v6188, %v6189
      %v6191 = vrot.slane %v6152, 5
      %v6192 = vrot.slane %v6191, 4
      %v6193 = vrot.slane %v5836, 5
      %v6194 = vsel %vm1893, %v6192, %v6193
      %v6195 = vrot.slane %v6153, 5
      %v6196 = vrot.slane %v6195, 4
      %v6197 = vrot.slane %v5837, 5
      %v6198 = vsel %vm1893, %v6196, %v6197
      %v6199 = vrot.slane %v6154, 5
      %v6200 = vrot.slane %v6199, 4
      %v6201 = vrot.slane %v5838, 5
      %v6202 = vsel %vm1893, %v6200, %v6201
      %s6203 = scalar_lea.vmem %s3, 8
      %v6204 = vld [vmem:[%s6203] sm:$0xf]
      %v6205 = vunpack.c.l.b16 %v6174
      %v6206 = vunpack.c.l.b16 %v6178
      %v6207 = vunpack.c.l.b16 %v6182
      %v6208 = vunpack.c.l.b16 %v6186
      %v6209 = vunpack.c.l.b16 %v6190
      %v6210 = vunpack.c.l.b16 %v6194
      %v6211 = vunpack.c.l.b16 %v6198
      %v6212 = vunpack.c.l.b16 %v6202
      %v6213 = vpack.c.b16 %v6206, %v6205
      %v6214 = vpack.c.b16 %v6208, %v6207
      %v6215 = vpack.c.b16 %v6210, %v6209
      %v6216 = vpack.c.b16 %v6212, %v6211
      %v6218 = vsel %vm5965, %v6213, 0
      %v6221 = vsel %vm5965, %v6214, 0
      %v6224 = vsel %vm5965, %v6215, 0
      %v6227 = vsel %vm5965, %v6216, 0
      %v6230 = vsel %vm5978, %v6204, 0
      %6232 = vmatprep.subr.bf16.mxu0 0
      %6233 = vmatpush1.bf16.msra.mxu0 %v6230
      %6234 = vmatprep.subr.bf16.mxu0 0
      %6235 = vmatpush1.bf16.msra.mxu0 0
      %6236 = vmatprep.subr.bf16.mxu0 0
      %6237 = vmatpush1.bf16.msra.mxu0 0
      %6238 = vmatprep.subr.bf16.mxu0 0
      %6239 = vmatpush1.bf16.msra.mxu0 0
      %6240 = vmatprep.subr.bf16.mxu0 0
      %6241 = vmatpush1.bf16.msra.mxu0 0
      %6242 = vmatprep.subr.bf16.mxu0 0
      %6243 = vmatpush1.bf16.msra.mxu0 0
      %6244 = vmatprep.subr.bf16.mxu0 0
      %6245 = vmatpush1.bf16.msra.mxu0 0
      %6246 = vmatprep.subr.bf16.mxu0 0
      %6247 = vmatpush1.bf16.msra.mxu0 0
      %6248 = vmatprep.subr.bf16.mxu0 0
      %6249 = vmatpush1.bf16.msra.mxu0 0
      %6250 = vmatprep.subr.bf16.mxu0 0
      %6251 = vmatpush1.bf16.msra.mxu0 0
      %6252 = vmatprep.subr.bf16.mxu0 0
      %6253 = vmatpush1.bf16.msra.mxu0 0
      %6254 = vmatprep.subr.bf16.mxu0 0
      %6255 = vmatpush1.bf16.msra.mxu0 0
      %6256 = vmatprep.subr.bf16.mxu0 0
      %6257 = vmatpush1.bf16.msra.mxu0 0
      %6258 = vmatprep.subr.bf16.mxu0 0
      %6259 = vmatpush1.bf16.msra.mxu0 0
      %6260 = vmatprep.subr.bf16.mxu0 0
      %6261 = vmatpush1.bf16.msra.mxu0 0
      %6262 = vmatprep.subr.bf16.mxu0 0
      %6263 = vmatpush1.bf16.msra.mxu0 0
      %6264 = vmatprep.mubr.bf16.mxu0 0
      %6265 = vmatmul.mubr.bf16.gmra.mrb[0].mxu0 %v6218
      %v6266 = vpop.f32.mrb[0].mxu0
      %v6267 = vadd.f32 0.0, %v6266
      %v6268 = vpop.f32.mrb[0].mxu0
      %v6269 = vpop.f32.mrb[0].mxu0
      %v6270 = vadd.f32 0.0, %v6269
      %v6271 = vpop.f32.mrb[0].mxu0
      %6272 = vmatprep.mubr.bf16.mxu0 0
      %6273 = vmatmul.mubr.bf16.gmra.mrb[0].mxu0 %v6221
      %v6274 = vpop.f32.mrb[0].mxu0
      %v6275 = vadd.f32 0.0, %v6274
      %v6276 = vpop.f32.mrb[0].mxu0
      %v6277 = vpop.f32.mrb[0].mxu0
      %v6278 = vadd.f32 0.0, %v6277
      %v6279 = vpop.f32.mrb[0].mxu0
      %6280 = vmatprep.mubr.bf16.mxu0 0
      %6281 = vmatmul.mubr.bf16.gmra.mrb[0].mxu0 %v6224
      %v6282 = vpop.f32.mrb[0].mxu0
      %v6283 = vadd.f32 0.0, %v6282
      %v6284 = vpop.f32.mrb[0].mxu0
      %v6285 = vpop.f32.mrb[0].mxu0
      %v6286 = vadd.f32 0.0, %v6285
      %v6287 = vpop.f32.mrb[0].mxu0
      %6288 = vmatprep.mubr.bf16.mxu0 0
      %6289 = vmatmul.mubr.bf16.gmra.mrb[0].mxu0 %v6227
      %v6290 = vpop.f32.mrb[0].mxu0
      %v6291 = vadd.f32 0.0, %v6290
      %v6292 = vpop.f32.mrb[0].mxu0
      %v6293 = vpop.f32.mrb[0].mxu0
      %v6294 = vadd.f32 0.0, %v6293
      %v6295 = vpop.f32.mrb[0].mxu0
      %6296 = vdwg.mxu0
      %v6297 = vadd.f32 %v6117, %v6267
      %v6298 = vadd.f32 %v6120, %v6270
      %v6299 = vadd.f32 %v6125, %v6275
      %v6300 = vadd.f32 %v6128, %v6278
      %v6301 = vadd.f32 %v6133, %v6283
      %v6302 = vadd.f32 %v6136, %v6286
      %v6303 = vadd.f32 %v6141, %v6291
      %v6304 = vadd.f32 %v6144, %v6294
      %v6305 = vld [vmem:[%s5769] sm:$0xf]
      %v6306 = vld [vmem:[%s5769 + $0x8] sm:$0xf]
      %v6307 = vld [vmem:[%s5769 + $0x10] sm:$0xf]
      %v6308 = vld [vmem:[%s5769 + $0x18] sm:$0xf]
      %v6309 = vld [vmem:[%s5769 + $0x20] sm:$0xf]
      %v6310 = vld [vmem:[%s5769 + $0x28] sm:$0xf]
      %v6311 = vld [vmem:[%s5769 + $0x30] sm:$0xf]
      %v6312 = vld [vmem:[%s5769 + $0x38] sm:$0xf]
      %s6313 = scalar_lea.vmem %s3, 12
      %v6314 = vld [vmem:[%s6313] sm:$0xf]
      %v6323 = vunpack.c.l.b16 %v6305
      %v6324 = vunpack.c.l.b16 %v6306
      %v6325 = vunpack.c.l.b16 %v6307
      %v6326 = vunpack.c.l.b16 %v6308
      %v6327 = vunpack.c.l.b16 %v6309
      %v6328 = vunpack.c.l.b16 %v6310
      %v6329 = vunpack.c.l.b16 %v6311
      %v6330 = vunpack.c.l.b16 %v6312
      %v6331 = vpack.c.b16 %v6324, %v6323
      %v6332 = vpack.c.b16 %v6326, %v6325
      %v6333 = vpack.c.b16 %v6328, %v6327
      %v6334 = vpack.c.b16 %v6330, %v6329
      %v6336 = vsel %vm5965, %v6331, 0
      %v6339 = vsel %vm5965, %v6332, 0
      %v6342 = vsel %vm5965, %v6333, 0
      %v6345 = vsel %vm5965, %v6334, 0
      %v6348 = vsel %vm5978, %v6314, 0
      %6350 = vmatprep.subr.bf16.mxu0 0
      %6351 = vmatpush1.bf16.msra.mxu0 %v6348
      %6352 = vmatprep.subr.bf16.mxu0 0
      %6353 = vmatpush1.bf16.msra.mxu0 0
      %6354 = vmatprep.subr.bf16.mxu0 0
      %6355 = vmatpush1.bf16.msra.mxu0 0
      %6356 = vmatprep.subr.bf16.mxu0 0
      %6357 = vmatpush1.bf16.msra.mxu0 0
      %6358 = vmatprep.subr.bf16.mxu0 0
      %6359 = vmatpush1.bf16.msra.mxu0 0
      %6360 = vmatprep.subr.bf16.mxu0 0
      %6361 = vmatpush1.bf16.msra.mxu0 0
      %6362 = vmatprep.subr.bf16.mxu0 0
      %6363 = vmatpush1.bf16.msra.mxu0 0
      %6364 = vmatprep.subr.bf16.mxu0 0
      %6365 = vmatpush1.bf16.msra.mxu0 0
      %6366 = vmatprep.subr.bf16.mxu0 0
      %6367 = vmatpush1.bf16.msra.mxu0 0
      %6368 = vmatprep.subr.bf16.mxu0 0
      %6369 = vmatpush1.bf16.msra.mxu0 0
      %6370 = vmatprep.subr.bf16.mxu0 0
      %6371 = vmatpush1.bf16.msra.mxu0 0
      %6372 = vmatprep.subr.bf16.mxu0 0
      %6373 = vmatpush1.bf16.msra.mxu0 0
      %6374 = vmatprep.subr.bf16.mxu0 0
      %6375 = vmatpush1.bf16.msra.mxu0 0
      %6376 = vmatprep.subr.bf16.mxu0 0
      %6377 = vmatpush1.bf16.msra.mxu0 0
      %6378 = vmatprep.subr.bf16.mxu0 0
      %6379 = vmatpush1.bf16.msra.mxu0 0
      %6380 = vmatprep.subr.bf16.mxu0 0
      %6381 = vmatpush1.bf16.msra.mxu0 0
      %6382 = vmatprep.mubr.bf16.mxu0 0
      %6383 = vmatmul.mubr.bf16.gmra.mrb[0].mxu0 %v6336
      %v6384 = vpop.f32.mrb[0].mxu0
      %v6385 = vadd.f32 0.0, %v6384
      %v6386 = vpop.f32.mrb[0].mxu0
      %v6387 = vpop.f32.mrb[0].mxu0
      %v6388 = vadd.f32 0.0, %v6387
      %v6389 = vpop.f32.mrb[0].mxu0
      %6390 = vmatprep.mubr.bf16.mxu0 0
      %6391 = vmatmul.mubr.bf16.gmra.mrb[0].mxu0 %v6339
      %v6392 = vpop.f32.mrb[0].mxu0
      %v6393 = vadd.f32 0.0, %v6392
      %v6394 = vpop.f32.mrb[0].mxu0
      %v6395 = vpop.f32.mrb[0].mxu0
      %v6396 = vadd.f32 0.0, %v6395
      %v6397 = vpop.f32.mrb[0].mxu0
      %6398 = vmatprep.mubr.bf16.mxu0 0
      %6399 = vmatmul.mubr.bf16.gmra.mrb[0].mxu0 %v6342
      %v6400 = vpop.f32.mrb[0].mxu0
      %v6401 = vadd.f32 0.0, %v6400
      %v6402 = vpop.f32.mrb[0].mxu0
      %v6403 = vpop.f32.mrb[0].mxu0
      %v6404 = vadd.f32 0.0, %v6403
      %v6405 = vpop.f32.mrb[0].mxu0
      %6406 = vmatprep.mubr.bf16.mxu0 0
      %6407 = vmatmul.mubr.bf16.gmra.mrb[0].mxu0 %v6345
      %v6408 = vpop.f32.mrb[0].mxu0
      %v6409 = vadd.f32 0.0, %v6408
      %v6410 = vpop.f32.mrb[0].mxu0
      %v6411 = vpop.f32.mrb[0].mxu0
      %v6412 = vadd.f32 0.0, %v6411
      %v6413 = vpop.f32.mrb[0].mxu0
      %6414 = vdwg.mxu0
      %v6415 = vadd.f32 %v6297, %v6385
      %v6416 = vadd.f32 %v6298, %v6388
      %v6417 = vadd.f32 %v6299, %v6393
      %v6418 = vadd.f32 %v6300, %v6396
      %v6419 = vadd.f32 %v6301, %v6401
      %v6420 = vadd.f32 %v6302, %v6404
      %v6421 = vadd.f32 %v6303, %v6409
      %v6422 = vadd.f32 %v6304, %v6412
      %v6423 = vld [vmem:[%s5769] sm:$0xf]
      %v6424 = vld [vmem:[%s5769 + $0x4] sm:$0x1]
      %v6425 = vld [vmem:[%s5769 + $0x8] sm:$0xf]
      %v6426 = vld [vmem:[%s5769 + $0xc] sm:$0x1]
      %v6427 = vld [vmem:[%s5769 + $0x10] sm:$0xf]
      %v6428 = vld [vmem:[%s5769 + $0x14] sm:$0x1]
      %v6429 = vld [vmem:[%s5769 + $0x18] sm:$0xf]
      %v6430 = vld [vmem:[%s5769 + $0x1c] sm:$0x1]
      %v6431 = vld [vmem:[%s5769 + $0x20] sm:$0xf]
      %v6432 = vld [vmem:[%s5769 + $0x24] sm:$0x1]
      %v6433 = vld [vmem:[%s5769 + $0x28] sm:$0xf]
      %v6434 = vld [vmem:[%s5769 + $0x2c] sm:$0x1]
      %v6435 = vld [vmem:[%s5769 + $0x30] sm:$0xf]
      %v6436 = vld [vmem:[%s5769 + $0x34] sm:$0x1]
      %v6437 = vld [vmem:[%s5769 + $0x38] sm:$0xf]
      %v6438 = vld [vmem:[%s5769 + $0x3c] sm:$0x1]
      %v6440 = vshrl.u32 %v6423, 16
      %v6442 = vrot.slane %v6440, 4
      %v6443 = vshll.u32 %v6423, 16
      %v6445 = vrot.slane %v6443, 5
      %v6446 = vor.u32 %v6442, %v6445
      %v6447 = vrot.slane %v6446, 4
      %v6449 = vshll.u32 %v6424, 16
      %v6451 = vrot.slane %v6449, 5
      %v6452 = vsel %vm902, %v6447, %v6451
      %v6454 = vshrl.u32 %v6425, 16
      %v6456 = vrot.slane %v6454, 4
      %v6457 = vshll.u32 %v6425, 16
      %v6459 = vrot.slane %v6457, 5
      %v6460 = vor.u32 %v6456, %v6459
      %v6461 = vrot.slane %v6460, 4
      %v6463 = vshll.u32 %v6426, 16
      %v6465 = vrot.slane %v6463, 5
      %v6466 = vsel %vm902, %v6461, %v6465
      %v6468 = vshrl.u32 %v6427, 16
      %v6470 = vrot.slane %v6468, 4
      %v6471 = vshll.u32 %v6427, 16
      %v6473 = vrot.slane %v6471, 5
      %v6474 = vor.u32 %v6470, %v6473
      %v6475 = vrot.slane %v6474, 4
      %v6477 = vshll.u32 %v6428, 16
      %v6479 = vrot.slane %v6477, 5
      %v6480 = vsel %vm902, %v6475, %v6479
      %v6482 = vshrl.u32 %v6429, 16
      %v6484 = vrot.slane %v6482, 4
      %v6485 = vshll.u32 %v6429, 16
      %v6487 = vrot.slane %v6485, 5
      %v6488 = vor.u32 %v6484, %v6487
      %v6489 = vrot.slane %v6488, 4
      %v6491 = vshll.u32 %v6430, 16
      %v6493 = vrot.slane %v6491, 5
      %v6494 = vsel %vm902, %v6489, %v6493
      %v6496 = vshrl.u32 %v6431, 16
      %v6498 = vrot.slane %v6496, 4
      %v6499 = vshll.u32 %v6431, 16
      %v6501 = vrot.slane %v6499, 5
      %v6502 = vor.u32 %v6498, %v6501
      %v6503 = vrot.slane %v6502, 4
      %v6505 = vshll.u32 %v6432, 16
      %v6507 = vrot.slane %v6505, 5
      %v6508 = vsel %vm902, %v6503, %v6507
      %v6510 = vshrl.u32 %v6433, 16
      %v6512 = vrot.slane %v6510, 4
      %v6513 = vshll.u32 %v6433, 16
      %v6515 = vrot.slane %v6513, 5
      %v6516 = vor.u32 %v6512, %v6515
      %v6517 = vrot.slane %v6516, 4
      %v6519 = vshll.u32 %v6434, 16
      %v6521 = vrot.slane %v6519, 5
      %v6522 = vsel %vm902, %v6517, %v6521
      %v6524 = vshrl.u32 %v6435, 16
      %v6526 = vrot.slane %v6524, 4
      %v6527 = vshll.u32 %v6435, 16
      %v6529 = vrot.slane %v6527, 5
      %v6530 = vor.u32 %v6526, %v6529
      %v6531 = vrot.slane %v6530, 4
      %v6533 = vshll.u32 %v6436, 16
      %v6535 = vrot.slane %v6533, 5
      %v6536 = vsel %vm902, %v6531, %v6535
      %v6538 = vshrl.u32 %v6437, 16
      %v6540 = vrot.slane %v6538, 4
      %v6541 = vshll.u32 %v6437, 16
      %v6543 = vrot.slane %v6541, 5
      %v6544 = vor.u32 %v6540, %v6543
      %v6545 = vrot.slane %v6544, 4
      %v6547 = vshll.u32 %v6438, 16
      %v6549 = vrot.slane %v6547, 5
      %v6550 = vsel %vm902, %v6545, %v6549
      %s6551 = scalar_lea.vmem %s3, 16
      %v6552 = vld [vmem:[%s6551] sm:$0xf]
      %v6553 = vunpack.c.l.b16 %v6452
      %v6554 = vunpack.c.l.b16 %v6466
      %v6555 = vunpack.c.l.b16 %v6480
      %v6556 = vunpack.c.l.b16 %v6494
      %v6557 = vunpack.c.l.b16 %v6508
      %v6558 = vunpack.c.l.b16 %v6522
      %v6559 = vunpack.c.l.b16 %v6536
      %v6560 = vunpack.c.l.b16 %v6550
      %v6561 = vpack.c.b16 %v6554, %v6553
      %v6562 = vpack.c.b16 %v6556, %v6555
      %v6563 = vpack.c.b16 %v6558, %v6557
      %v6564 = vpack.c.b16 %v6560, %v6559
      %v6566 = vsel %vm5965, %v6561, 0
      %v6569 = vsel %vm5965, %v6562, 0
      %v6572 = vsel %vm5965, %v6563, 0
      %v6575 = vsel %vm5965, %v6564, 0
      %v6578 = vsel %vm5978, %v6552, 0
      %6580 = vmatprep.subr.bf16.mxu0 0
      %6581 = vmatpush1.bf16.msra.mxu0 %v6578
      %6582 = vmatprep.subr.bf16.mxu0 0
      %6583 = vmatpush1.bf16.msra.mxu0 0
      %6584 = vmatprep.subr.bf16.mxu0 0
      %6585 = vmatpush1.bf16.msra.mxu0 0
      %6586 = vmatprep.subr.bf16.mxu0 0
      %6587 = vmatpush1.bf16.msra.mxu0 0
      %6588 = vmatprep.subr.bf16.mxu0 0
      %6589 = vmatpush1.bf16.msra.mxu0 0
      %6590 = vmatprep.subr.bf16.mxu0 0
      %6591 = vmatpush1.bf16.msra.mxu0 0
      %6592 = vmatprep.subr.bf16.mxu0 0
      %6593 = vmatpush1.bf16.msra.mxu0 0
      %6594 = vmatprep.subr.bf16.mxu0 0
      %6595 = vmatpush1.bf16.msra.mxu0 0
      %6596 = vmatprep.subr.bf16.mxu0 0
      %6597 = vmatpush1.bf16.msra.mxu0 0
      %6598 = vmatprep.subr.bf16.mxu0 0
      %6599 = vmatpush1.bf16.msra.mxu0 0
      %6600 = vmatprep.subr.bf16.mxu0 0
      %6601 = vmatpush1.bf16.msra.mxu0 0
      %6602 = vmatprep.subr.bf16.mxu0 0
      %6603 = vmatpush1.bf16.msra.mxu0 0
      %6604 = vmatprep.subr.bf16.mxu0 0
      %6605 = vmatpush1.bf16.msra.mxu0 0
      %6606 = vmatprep.subr.bf16.mxu0 0
      %6607 = vmatpush1.bf16.msra.mxu0 0
      %6608 = vmatprep.subr.bf16.mxu0 0
      %6609 = vmatpush1.bf16.msra.mxu0 0
      %6610 = vmatprep.subr.bf16.mxu0 0
      %6611 = vmatpush1.bf16.msra.mxu0 0
      %6612 = vmatprep.mubr.bf16.mxu0 0
      %6613 = vmatmul.mubr.bf16.gmra.mrb[0].mxu0 %v6566
      %v6614 = vpop.f32.mrb[0].mxu0
      %v6615 = vadd.f32 0.0, %v6614
      %v6616 = vpop.f32.mrb[0].mxu0
      %v6617 = vpop.f32.mrb[0].mxu0
      %v6618 = vadd.f32 0.0, %v6617
      %v6619 = vpop.f32.mrb[0].mxu0
      %6620 = vmatprep.mubr.bf16.mxu0 0
      %6621 = vmatmul.mubr.bf16.gmra.mrb[0].mxu0 %v6569
      %v6622 = vpop.f32.mrb[0].mxu0
      %v6623 = vadd.f32 0.0, %v6622
      %v6624 = vpop.f32.mrb[0].mxu0
      %v6625 = vpop.f32.mrb[0].mxu0
      %v6626 = vadd.f32 0.0, %v6625
      %v6627 = vpop.f32.mrb[0].mxu0
      %6628 = vmatprep.mubr.bf16.mxu0 0
      %6629 = vmatmul.mubr.bf16.gmra.mrb[0].mxu0 %v6572
      %v6630 = vpop.f32.mrb[0].mxu0
      %v6631 = vadd.f32 0.0, %v6630
      %v6632 = vpop.f32.mrb[0].mxu0
      %v6633 = vpop.f32.mrb[0].mxu0
      %v6634 = vadd.f32 0.0, %v6633
      %v6635 = vpop.f32.mrb[0].mxu0
      %6636 = vmatprep.mubr.bf16.mxu0 0
      %6637 = vmatmul.mubr.bf16.gmra.mrb[0].mxu0 %v6575
      %v6638 = vpop.f32.mrb[0].mxu0
      %v6639 = vadd.f32 0.0, %v6638
      %v6640 = vpop.f32.mrb[0].mxu0
      %v6641 = vpop.f32.mrb[0].mxu0
      %v6642 = vadd.f32 0.0, %v6641
      %v6643 = vpop.f32.mrb[0].mxu0
      %6644 = vdwg.mxu0
      %v6645 = vadd.f32 %v6415, %v6615
      %v6646 = vadd.f32 %v6416, %v6618
      %v6647 = vadd.f32 %v6417, %v6623
      %v6648 = vadd.f32 %v6418, %v6626
      %v6649 = vadd.f32 %v6419, %v6631
      %v6650 = vadd.f32 %v6420, %v6634
      %v6651 = vadd.f32 %v6421, %v6639
      %v6652 = vadd.f32 %v6422, %v6642
      %v6653 = vld [vmem:[%s5769] sm:$0xe]
      %v6654 = vld [vmem:[%s5769 + $0x8] sm:$0xe]
      %v6655 = vld [vmem:[%s5769 + $0x10] sm:$0xe]
      %v6656 = vld [vmem:[%s5769 + $0x18] sm:$0xe]
      %v6657 = vld [vmem:[%s5769 + $0x20] sm:$0xe]
      %v6658 = vld [vmem:[%s5769 + $0x28] sm:$0xe]
      %v6659 = vld [vmem:[%s5769 + $0x30] sm:$0xe]
      %v6660 = vld [vmem:[%s5769 + $0x38] sm:$0xe]
      %v6677 = vrot.slane %v6653, 5
      %v6678 = vrot.slane %v6677, 4
      %v6679 = vrot.slane %v6424, 5
      %v6680 = vsel %vm1893, %v6678, %v6679
      %v6681 = vrot.slane %v6654, 5
      %v6682 = vrot.slane %v6681, 4
      %v6683 = vrot.slane %v6426, 5
      %v6684 = vsel %vm1893, %v6682, %v6683
      %v6685 = vrot.slane %v6655, 5
      %v6686 = vrot.slane %v6685, 4
      %v6687 = vrot.slane %v6428, 5
      %v6688 = vsel %vm1893, %v6686, %v6687
      %v6689 = vrot.slane %v6656, 5
      %v6690 = vrot.slane %v6689, 4
      %v6691 = vrot.slane %v6430, 5
      %v6692 = vsel %vm1893, %v6690, %v6691
      %v6693 = vrot.slane %v6657, 5
      %v6694 = vrot.slane %v6693, 4
      %v6695 = vrot.slane %v6432, 5
      %v6696 = vsel %vm1893, %v6694, %v6695
      %v6697 = vrot.slane %v6658, 5
      %v6698 = vrot.slane %v6697, 4
      %v6699 = vrot.slane %v6434, 5
      %v6700 = vsel %vm1893, %v6698, %v6699
      %v6701 = vrot.slane %v6659, 5
      %v6702 = vrot.slane %v6701, 4
      %v6703 = vrot.slane %v6436, 5
      %v6704 = vsel %vm1893, %v6702, %v6703
      %v6705 = vrot.slane %v6660, 5
      %v6706 = vrot.slane %v6705, 4
      %v6707 = vrot.slane %v6438, 5
      %v6708 = vsel %vm1893, %v6706, %v6707
      %s6709 = scalar_lea.vmem %s3, 20
      %v6710 = vld [vmem:[%s6709] sm:$0xf]
      %v6711 = vunpack.c.l.b16 %v6680
      %v6712 = vunpack.c.l.b16 %v6684
      %v6713 = vunpack.c.l.b16 %v6688
      %v6714 = vunpack.c.l.b16 %v6692
      %v6715 = vunpack.c.l.b16 %v6696
      %v6716 = vunpack.c.l.b16 %v6700
      %v6717 = vunpack.c.l.b16 %v6704
      %v6718 = vunpack.c.l.b16 %v6708
      %v6719 = vpack.c.b16 %v6712, %v6711
      %v6720 = vpack.c.b16 %v6714, %v6713
      %v6721 = vpack.c.b16 %v6716, %v6715
      %v6722 = vpack.c.b16 %v6718, %v6717
      %v6724 = vsel %vm5965, %v6719, 0
      %v6727 = vsel %vm5965, %v6720, 0
      %v6730 = vsel %vm5965, %v6721, 0
      %v6733 = vsel %vm5965, %v6722, 0
      %v6736 = vsel %vm5978, %v6710, 0
      %6738 = vmatprep.subr.bf16.mxu0 0
      %6739 = vmatpush1.bf16.msra.mxu0 %v6736
      %6740 = vmatprep.subr.bf16.mxu0 0
      %6741 = vmatpush1.bf16.msra.mxu0 0
      %6742 = vmatprep.subr.bf16.mxu0 0
      %6743 = vmatpush1.bf16.msra.mxu0 0
      %6744 = vmatprep.subr.bf16.mxu0 0
      %6745 = vmatpush1.bf16.msra.mxu0 0
      %6746 = vmatprep.subr.bf16.mxu0 0
      %6747 = vmatpush1.bf16.msra.mxu0 0
      %6748 = vmatprep.subr.bf16.mxu0 0
      %6749 = vmatpush1.bf16.msra.mxu0 0
      %6750 = vmatprep.subr.bf16.mxu0 0
      %6751 = vmatpush1.bf16.msra.mxu0 0
      %6752 = vmatprep.subr.bf16.mxu0 0
      %6753 = vmatpush1.bf16.msra.mxu0 0
      %6754 = vmatprep.subr.bf16.mxu0 0
      %6755 = vmatpush1.bf16.msra.mxu0 0
      %6756 = vmatprep.subr.bf16.mxu0 0
      %6757 = vmatpush1.bf16.msra.mxu0 0
      %6758 = vmatprep.subr.bf16.mxu0 0
      %6759 = vmatpush1.bf16.msra.mxu0 0
      %6760 = vmatprep.subr.bf16.mxu0 0
      %6761 = vmatpush1.bf16.msra.mxu0 0
      %6762 = vmatprep.subr.bf16.mxu0 0
      %6763 = vmatpush1.bf16.msra.mxu0 0
      %6764 = vmatprep.subr.bf16.mxu0 0
      %6765 = vmatpush1.bf16.msra.mxu0 0
      %6766 = vmatprep.subr.bf16.mxu0 0
      %6767 = vmatpush1.bf16.msra.mxu0 0
      %6768 = vmatprep.subr.bf16.mxu0 0
      %6769 = vmatpush1.bf16.msra.mxu0 0
      %6770 = vmatprep.mubr.bf16.mxu0 0
      %6771 = vmatmul.mubr.bf16.gmra.mrb[0].mxu0 %v6724
      %v6772 = vpop.f32.mrb[0].mxu0
      %v6773 = vadd.f32 0.0, %v6772
      %v6774 = vpop.f32.mrb[0].mxu0
      %v6775 = vpop.f32.mrb[0].mxu0
      %v6776 = vadd.f32 0.0, %v6775
      %v6777 = vpop.f32.mrb[0].mxu0
      %6778 = vmatprep.mubr.bf16.mxu0 0
      %6779 = vmatmul.mubr.bf16.gmra.mrb[0].mxu0 %v6727
      %v6780 = vpop.f32.mrb[0].mxu0
      %v6781 = vadd.f32 0.0, %v6780
      %v6782 = vpop.f32.mrb[0].mxu0
      %v6783 = vpop.f32.mrb[0].mxu0
      %v6784 = vadd.f32 0.0, %v6783
      %v6785 = vpop.f32.mrb[0].mxu0
      %6786 = vmatprep.mubr.bf16.mxu0 0
      %6787 = vmatmul.mubr.bf16.gmra.mrb[0].mxu0 %v6730
      %v6788 = vpop.f32.mrb[0].mxu0
      %v6789 = vadd.f32 0.0, %v6788
      %v6790 = vpop.f32.mrb[0].mxu0
      %v6791 = vpop.f32.mrb[0].mxu0
      %v6792 = vadd.f32 0.0, %v6791
      %v6793 = vpop.f32.mrb[0].mxu0
      %6794 = vmatprep.mubr.bf16.mxu0 0
      %6795 = vmatmul.mubr.bf16.gmra.mrb[0].mxu0 %v6733
      %v6796 = vpop.f32.mrb[0].mxu0
      %v6797 = vadd.f32 0.0, %v6796
      %v6798 = vpop.f32.mrb[0].mxu0
      %v6799 = vpop.f32.mrb[0].mxu0
      %v6800 = vadd.f32 0.0, %v6799
      %v6801 = vpop.f32.mrb[0].mxu0
      %6802 = vdwg.mxu0
      %v6803 = vadd.f32 %v6645, %v6773
      %v6804 = vadd.f32 %v6646, %v6776
      %v6805 = vadd.f32 %v6647, %v6781
      %v6806 = vadd.f32 %v6648, %v6784
      %v6807 = vadd.f32 %v6649, %v6789
      %v6808 = vadd.f32 %v6650, %v6792
      %v6809 = vadd.f32 %v6651, %v6797
      %v6810 = vadd.f32 %v6652, %v6800
      %s6811 = scalar_lea.vmem [#allocation4], 16
      %v6812 = vld [vmem:[%s6811] sm:$0xf]
      %v6813 = vld [vmem:[%s6811 + $0x8] sm:$0xf]
      %v6814 = vld [vmem:[%s6811 + $0x10] sm:$0xf]
      %v6815 = vld [vmem:[%s6811 + $0x18] sm:$0xf]
      %v6816 = vld [vmem:[%s6811 + $0x20] sm:$0xf]
      %v6817 = vld [vmem:[%s6811 + $0x28] sm:$0xf]
      %v6818 = vld [vmem:[%s6811 + $0x30] sm:$0xf]
      %v6819 = vld [vmem:[%s6811 + $0x38] sm:$0xf]
      %s6820 = scalar_lea.vmem %s3, 24
      %v6821 = vld [vmem:[%s6820] sm:$0xf]
      %v6830 = vunpack.c.l.b16 %v6812
      %v6831 = vunpack.c.l.b16 %v6813
      %v6832 = vunpack.c.l.b16 %v6814
      %v6833 = vunpack.c.l.b16 %v6815
      %v6834 = vunpack.c.l.b16 %v6816
      %v6835 = vunpack.c.l.b16 %v6817
      %v6836 = vunpack.c.l.b16 %v6818
      %v6837 = vunpack.c.l.b16 %v6819
      %v6838 = vpack.c.b16 %v6831, %v6830
      %v6839 = vpack.c.b16 %v6833, %v6832
      %v6840 = vpack.c.b16 %v6835, %v6834
      %v6841 = vpack.c.b16 %v6837, %v6836
      %v6843 = vsel %vm5965, %v6838, 0
      %v6846 = vsel %vm5965, %v6839, 0
      %v6849 = vsel %vm5965, %v6840, 0
      %v6852 = vsel %vm5965, %v6841, 0
      %v6855 = vsel %vm5978, %v6821, 0
      %6857 = vmatprep.subr.bf16.mxu0 0
      %6858 = vmatpush1.bf16.msra.mxu0 %v6855
      %6859 = vmatprep.subr.bf16.mxu0 0
      %6860 = vmatpush1.bf16.msra.mxu0 0
      %6861 = vmatprep.subr.bf16.mxu0 0
      %6862 = vmatpush1.bf16.msra.mxu0 0
      %6863 = vmatprep.subr.bf16.mxu0 0
      %6864 = vmatpush1.bf16.msra.mxu0 0
      %6865 = vmatprep.subr.bf16.mxu0 0
      %6866 = vmatpush1.bf16.msra.mxu0 0
      %6867 = vmatprep.subr.bf16.mxu0 0
      %6868 = vmatpush1.bf16.msra.mxu0 0
      %6869 = vmatprep.subr.bf16.mxu0 0
      %6870 = vmatpush1.bf16.msra.mxu0 0
      %6871 = vmatprep.subr.bf16.mxu0 0
      %6872 = vmatpush1.bf16.msra.mxu0 0
      %6873 = vmatprep.subr.bf16.mxu0 0
      %6874 = vmatpush1.bf16.msra.mxu0 0
      %6875 = vmatprep.subr.bf16.mxu0 0
      %6876 = vmatpush1.bf16.msra.mxu0 0
      %6877 = vmatprep.subr.bf16.mxu0 0
      %6878 = vmatpush1.bf16.msra.mxu0 0
      %6879 = vmatprep.subr.bf16.mxu0 0
      %6880 = vmatpush1.bf16.msra.mxu0 0
      %6881 = vmatprep.subr.bf16.mxu0 0
      %6882 = vmatpush1.bf16.msra.mxu0 0
      %6883 = vmatprep.subr.bf16.mxu0 0
      %6884 = vmatpush1.bf16.msra.mxu0 0
      %6885 = vmatprep.subr.bf16.mxu0 0
      %6886 = vmatpush1.bf16.msra.mxu0 0
      %6887 = vmatprep.subr.bf16.mxu0 0
      %6888 = vmatpush1.bf16.msra.mxu0 0
      %6889 = vmatprep.mubr.bf16.mxu0 0
      %6890 = vmatmul.mubr.bf16.gmra.mrb[0].mxu0 %v6843
      %v6891 = vpop.f32.mrb[0].mxu0
      %v6892 = vadd.f32 0.0, %v6891
      %v6893 = vpop.f32.mrb[0].mxu0
      %v6894 = vpop.f32.mrb[0].mxu0
      %v6895 = vadd.f32 0.0, %v6894
      %v6896 = vpop.f32.mrb[0].mxu0
      %6897 = vmatprep.mubr.bf16.mxu0 0
      %6898 = vmatmul.mubr.bf16.gmra.mrb[0].mxu0 %v6846
      %v6899 = vpop.f32.mrb[0].mxu0
      %v6900 = vadd.f32 0.0, %v6899
      %v6901 = vpop.f32.mrb[0].mxu0
      %v6902 = vpop.f32.mrb[0].mxu0
      %v6903 = vadd.f32 0.0, %v6902
      %v6904 = vpop.f32.mrb[0].mxu0
      %6905 = vmatprep.mubr.bf16.mxu0 0
      %6906 = vmatmul.mubr.bf16.gmra.mrb[0].mxu0 %v6849
      %v6907 = vpop.f32.mrb[0].mxu0
      %v6908 = vadd.f32 0.0, %v6907
      %v6909 = vpop.f32.mrb[0].mxu0
      %v6910 = vpop.f32.mrb[0].mxu0
      %v6911 = vadd.f32 0.0, %v6910
      %v6912 = vpop.f32.mrb[0].mxu0
      %6913 = vmatprep.mubr.bf16.mxu0 0
      %6914 = vmatmul.mubr.bf16.gmra.mrb[0].mxu0 %v6852
      %v6915 = vpop.f32.mrb[0].mxu0
      %v6916 = vadd.f32 0.0, %v6915
      %v6917 = vpop.f32.mrb[0].mxu0
      %v6918 = vpop.f32.mrb[0].mxu0
      %v6919 = vadd.f32 0.0, %v6918
      %v6920 = vpop.f32.mrb[0].mxu0
      %6921 = vdwg.mxu0
      %v6922 = vadd.f32 %v6803, %v6892
      %v6923 = vadd.f32 %v6804, %v6895
      %v6924 = vadd.f32 %v6805, %v6900
      %v6925 = vadd.f32 %v6806, %v6903
      %v6926 = vadd.f32 %v6807, %v6908
      %v6927 = vadd.f32 %v6808, %v6911
      %v6928 = vadd.f32 %v6809, %v6916
      %v6929 = vadd.f32 %v6810, %v6919
      %v6930 = vld [vmem:[%s6811] sm:$0xf]
      %v6931 = vld [vmem:[%s6811 + $0x4] sm:$0x1]
      %v6932 = vld [vmem:[%s6811 + $0x8] sm:$0xf]
      %v6933 = vld [vmem:[%s6811 + $0xc] sm:$0x1]
      %v6934 = vld [vmem:[%s6811 + $0x10] sm:$0xf]
      %v6935 = vld [vmem:[%s6811 + $0x14] sm:$0x1]
      %v6936 = vld [vmem:[%s6811 + $0x18] sm:$0xf]
      %v6937 = vld [vmem:[%s6811 + $0x1c] sm:$0x1]
      %v6938 = vld [vmem:[%s6811 + $0x20] sm:$0xf]
      %v6939 = vld [vmem:[%s6811 + $0x24] sm:$0x1]
      %v6940 = vld [vmem:[%s6811 + $0x28] sm:$0xf]
      %v6941 = vld [vmem:[%s6811 + $0x2c] sm:$0x1]
      %v6942 = vld [vmem:[%s6811 + $0x30] sm:$0xf]
      %v6943 = vld [vmem:[%s6811 + $0x34] sm:$0x1]
      %v6944 = vld [vmem:[%s6811 + $0x38] sm:$0xf]
      %v6945 = vld [vmem:[%s6811 + $0x3c] sm:$0x1]
      %v6947 = vshrl.u32 %v6930, 16
      %v6949 = vrot.slane %v6947, 4
      %v6950 = vshll.u32 %v6930, 16
      %v6952 = vrot.slane %v6950, 5
      %v6953 = vor.u32 %v6949, %v6952
      %v6954 = vrot.slane %v6953, 4
      %v6956 = vshll.u32 %v6931, 16
      %v6958 = vrot.slane %v6956, 5
      %v6959 = vsel %vm902, %v6954, %v6958
      %v6961 = vshrl.u32 %v6932, 16
      %v6963 = vrot.slane %v6961, 4
      %v6964 = vshll.u32 %v6932, 16
      %v6966 = vrot.slane %v6964, 5
      %v6967 = vor.u32 %v6963, %v6966
      %v6968 = vrot.slane %v6967, 4
      %v6970 = vshll.u32 %v6933, 16
      %v6972 = vrot.slane %v6970, 5
      %v6973 = vsel %vm902, %v6968, %v6972
      %v6975 = vshrl.u32 %v6934, 16
      %v6977 = vrot.slane %v6975, 4
      %v6978 = vshll.u32 %v6934, 16
      %v6980 = vrot.slane %v6978, 5
      %v6981 = vor.u32 %v6977, %v6980
      %v6982 = vrot.slane %v6981, 4
      %v6984 = vshll.u32 %v6935, 16
      %v6986 = vrot.slane %v6984, 5
      %v6987 = vsel %vm902, %v6982, %v6986
      %v6989 = vshrl.u32 %v6936, 16
      %v6991 = vrot.slane %v6989, 4
      %v6992 = vshll.u32 %v6936, 16
      %v6994 = vrot.slane %v6992, 5
      %v6995 = vor.u32 %v6991, %v6994
      %v6996 = vrot.slane %v6995, 4
      %v6998 = vshll.u32 %v6937, 16
      %v7000 = vrot.slane %v6998, 5
      %v7001 = vsel %vm902, %v6996, %v7000
      %v7003 = vshrl.u32 %v6938, 16
      %v7005 = vrot.slane %v7003, 4
      %v7006 = vshll.u32 %v6938, 16
      %v7008 = vrot.slane %v7006, 5
      %v7009 = vor.u32 %v7005, %v7008
      %v7010 = vrot.slane %v7009, 4
      %v7012 = vshll.u32 %v6939, 16
      %v7014 = vrot.slane %v7012, 5
      %v7015 = vsel %vm902, %v7010, %v7014
      %v7017 = vshrl.u32 %v6940, 16
      %v7019 = vrot.slane %v7017, 4
      %v7020 = vshll.u32 %v6940, 16
      %v7022 = vrot.slane %v7020, 5
      %v7023 = vor.u32 %v7019, %v7022
      %v7024 = vrot.slane %v7023, 4
      %v7026 = vshll.u32 %v6941, 16
      %v7028 = vrot.slane %v7026, 5
      %v7029 = vsel %vm902, %v7024, %v7028
      %v7031 = vshrl.u32 %v6942, 16
      %v7033 = vrot.slane %v7031, 4
      %v7034 = vshll.u32 %v6942, 16
      %v7036 = vrot.slane %v7034, 5
      %v7037 = vor.u32 %v7033, %v7036
      %v7038 = vrot.slane %v7037, 4
      %v7040 = vshll.u32 %v6943, 16
      %v7042 = vrot.slane %v7040, 5
      %v7043 = vsel %vm902, %v7038, %v7042
      %v7045 = vshrl.u32 %v6944, 16
      %v7047 = vrot.slane %v7045, 4
      %v7048 = vshll.u32 %v6944, 16
      %v7050 = vrot.slane %v7048, 5
      %v7051 = vor.u32 %v7047, %v7050
      %v7052 = vrot.slane %v7051, 4
      %v7054 = vshll.u32 %v6945, 16
      %v7056 = vrot.slane %v7054, 5
      %v7057 = vsel %vm902, %v7052, %v7056
      %s7058 = scalar_lea.vmem %s3, 28
      %v7059 = vld [vmem:[%s7058] sm:$0xf]
      %v7060 = vunpack.c.l.b16 %v6959
      %v7061 = vunpack.c.l.b16 %v6973
      %v7062 = vunpack.c.l.b16 %v6987
      %v7063 = vunpack.c.l.b16 %v7001
      %v7064 = vunpack.c.l.b16 %v7015
      %v7065 = vunpack.c.l.b16 %v7029
      %v7066 = vunpack.c.l.b16 %v7043
      %v7067 = vunpack.c.l.b16 %v7057
      %v7068 = vpack.c.b16 %v7061, %v7060
      %v7069 = vpack.c.b16 %v7063, %v7062
      %v7070 = vpack.c.b16 %v7065, %v7064
      %v7071 = vpack.c.b16 %v7067, %v7066
      %v7073 = vsel %vm5965, %v7068, 0
      %v7076 = vsel %vm5965, %v7069, 0
      %v7079 = vsel %vm5965, %v7070, 0
      %v7082 = vsel %vm5965, %v7071, 0
      %v7085 = vsel %vm5978, %v7059, 0
      %7087 = vmatprep.subr.bf16.mxu0 0
      %7088 = vmatpush1.bf16.msra.mxu0 %v7085
      %7089 = vmatprep.subr.bf16.mxu0 0
      %7090 = vmatpush1.bf16.msra.mxu0 0
      %7091 = vmatprep.subr.bf16.mxu0 0
      %7092 = vmatpush1.bf16.msra.mxu0 0
      %7093 = vmatprep.subr.bf16.mxu0 0
      %7094 = vmatpush1.bf16.msra.mxu0 0
      %7095 = vmatprep.subr.bf16.mxu0 0
      %7096 = vmatpush1.bf16.msra.mxu0 0
      %7097 = vmatprep.subr.bf16.mxu0 0
      %7098 = vmatpush1.bf16.msra.mxu0 0
      %7099 = vmatprep.subr.bf16.mxu0 0
      %7100 = vmatpush1.bf16.msra.mxu0 0
      %7101 = vmatprep.subr.bf16.mxu0 0
      %7102 = vmatpush1.bf16.msra.mxu0 0
      %7103 = vmatprep.subr.bf16.mxu0 0
      %7104 = vmatpush1.bf16.msra.mxu0 0
      %7105 = vmatprep.subr.bf16.mxu0 0
      %7106 = vmatpush1.bf16.msra.mxu0 0
      %7107 = vmatprep.subr.bf16.mxu0 0
      %7108 = vmatpush1.bf16.msra.mxu0 0
      %7109 = vmatprep.subr.bf16.mxu0 0
      %7110 = vmatpush1.bf16.msra.mxu0 0
      %7111 = vmatprep.subr.bf16.mxu0 0
      %7112 = vmatpush1.bf16.msra.mxu0 0
      %7113 = vmatprep.subr.bf16.mxu0 0
      %7114 = vmatpush1.bf16.msra.mxu0 0
      %7115 = vmatprep.subr.bf16.mxu0 0
      %7116 = vmatpush1.bf16.msra.mxu0 0
      %7117 = vmatprep.subr.bf16.mxu0 0
      %7118 = vmatpush1.bf16.msra.mxu0 0
      %7119 = vmatprep.mubr.bf16.mxu0 0
      %7120 = vmatmul.mubr.bf16.gmra.mrb[0].mxu0 %v7073
      %v7121 = vpop.f32.mrb[0].mxu0
      %v7122 = vadd.f32 0.0, %v7121
      %v7123 = vpop.f32.mrb[0].mxu0
      %v7124 = vpop.f32.mrb[0].mxu0
      %v7125 = vadd.f32 0.0, %v7124
      %v7126 = vpop.f32.mrb[0].mxu0
      %7127 = vmatprep.mubr.bf16.mxu0 0
      %7128 = vmatmul.mubr.bf16.gmra.mrb[0].mxu0 %v7076
      %v7129 = vpop.f32.mrb[0].mxu0
      %v7130 = vadd.f32 0.0, %v7129
      %v7131 = vpop.f32.mrb[0].mxu0
      %v7132 = vpop.f32.mrb[0].mxu0
      %v7133 = vadd.f32 0.0, %v7132
      %v7134 = vpop.f32.mrb[0].mxu0
      %7135 = vmatprep.mubr.bf16.mxu0 0
      %7136 = vmatmul.mubr.bf16.gmra.mrb[0].mxu0 %v7079
      %v7137 = vpop.f32.mrb[0].mxu0
      %v7138 = vadd.f32 0.0, %v7137
      %v7139 = vpop.f32.mrb[0].mxu0
      %v7140 = vpop.f32.mrb[0].mxu0
      %v7141 = vadd.f32 0.0, %v7140
      %v7142 = vpop.f32.mrb[0].mxu0
      %7143 = vmatprep.mubr.bf16.mxu0 0
      %7144 = vmatmul.mubr.bf16.gmra.mrb[0].mxu0 %v7082
      %v7145 = vpop.f32.mrb[0].mxu0
      %v7146 = vadd.f32 0.0, %v7145
      %v7147 = vpop.f32.mrb[0].mxu0
      %v7148 = vpop.f32.mrb[0].mxu0
      %v7149 = vadd.f32 0.0, %v7148
      %v7150 = vpop.f32.mrb[0].mxu0
      %7151 = vdwg.mxu0
      %v7152 = vadd.f32 %v6922, %v7122
      %v7153 = vadd.f32 %v6923, %v7125
      %v7154 = vadd.f32 %v6924, %v7130
      %v7155 = vadd.f32 %v6925, %v7133
      %v7156 = vadd.f32 %v6926, %v7138
      %v7157 = vadd.f32 %v6927, %v7141
      %v7158 = vadd.f32 %v6928, %v7146
      %v7159 = vadd.f32 %v6929, %v7149
      %v7160 = vld [vmem:[%s6811] sm:$0xe]
      %v7161 = vld [vmem:[%s6811 + $0x8] sm:$0xe]
      %v7162 = vld [vmem:[%s6811 + $0x10] sm:$0xe]
      %v7163 = vld [vmem:[%s6811 + $0x18] sm:$0xe]
      %v7164 = vld [vmem:[%s6811 + $0x20] sm:$0xe]
      %v7165 = vld [vmem:[%s6811 + $0x28] sm:$0xe]
      %v7166 = vld [vmem:[%s6811 + $0x30] sm:$0xe]
      %v7167 = vld [vmem:[%s6811 + $0x38] sm:$0xe]
      %v7184 = vrot.slane %v7160, 5
      %v7185 = vrot.slane %v7184, 4
      %v7186 = vrot.slane %v6931, 5
      %v7187 = vsel %vm1893, %v7185, %v7186
      %v7188 = vrot.slane %v7161, 5
      %v7189 = vrot.slane %v7188, 4
      %v7190 = vrot.slane %v6933, 5
      %v7191 = vsel %vm1893, %v7189, %v7190
      %v7192 = vrot.slane %v7162, 5
      %v7193 = vrot.slane %v7192, 4
      %v7194 = vrot.slane %v6935, 5
      %v7195 = vsel %vm1893, %v7193, %v7194
      %v7196 = vrot.slane %v7163, 5
      %v7197 = vrot.slane %v7196, 4
      %v7198 = vrot.slane %v6937, 5
      %v7199 = vsel %vm1893, %v7197, %v7198
      %v7200 = vrot.slane %v7164, 5
      %v7201 = vrot.slane %v7200, 4
      %v7202 = vrot.slane %v6939, 5
      %v7203 = vsel %vm1893, %v7201, %v7202
      %v7204 = vrot.slane %v7165, 5
      %v7205 = vrot.slane %v7204, 4
      %v7206 = vrot.slane %v6941, 5
      %v7207 = vsel %vm1893, %v7205, %v7206
      %v7208 = vrot.slane %v7166, 5
      %v7209 = vrot.slane %v7208, 4
      %v7210 = vrot.slane %v6943, 5
      %v7211 = vsel %vm1893, %v7209, %v7210
      %v7212 = vrot.slane %v7167, 5
      %v7213 = vrot.slane %v7212, 4
      %v7214 = vrot.slane %v6945, 5
      %v7215 = vsel %vm1893, %v7213, %v7214
      %s7216 = scalar_lea.vmem %s3, 32
      %v7217 = vld [vmem:[%s7216] sm:$0xf]
      %v7218 = vunpack.c.l.b16 %v7187
      %v7219 = vunpack.c.l.b16 %v7191
      %v7220 = vunpack.c.l.b16 %v7195
      %v7221 = vunpack.c.l.b16 %v7199
      %v7222 = vunpack.c.l.b16 %v7203
      %v7223 = vunpack.c.l.b16 %v7207
      %v7224 = vunpack.c.l.b16 %v7211
      %v7225 = vunpack.c.l.b16 %v7215
      %v7226 = vpack.c.b16 %v7219, %v7218
      %v7227 = vpack.c.b16 %v7221, %v7220
      %v7228 = vpack.c.b16 %v7223, %v7222
      %v7229 = vpack.c.b16 %v7225, %v7224
      %v7231 = vsel %vm5965, %v7226, 0
      %v7234 = vsel %vm5965, %v7227, 0
      %v7237 = vsel %vm5965, %v7228, 0
      %v7240 = vsel %vm5965, %v7229, 0
      %v7243 = vsel %vm5978, %v7217, 0
      %7245 = vmatprep.subr.bf16.mxu0 0
      %7246 = vmatpush1.bf16.msra.mxu0 %v7243
      %7247 = vmatprep.subr.bf16.mxu0 0
      %7248 = vmatpush1.bf16.msra.mxu0 0
      %7249 = vmatprep.subr.bf16.mxu0 0
      %7250 = vmatpush1.bf16.msra.mxu0 0
      %7251 = vmatprep.subr.bf16.mxu0 0
      %7252 = vmatpush1.bf16.msra.mxu0 0
      %7253 = vmatprep.subr.bf16.mxu0 0
      %7254 = vmatpush1.bf16.msra.mxu0 0
      %7255 = vmatprep.subr.bf16.mxu0 0
      %7256 = vmatpush1.bf16.msra.mxu0 0
      %7257 = vmatprep.subr.bf16.mxu0 0
      %7258 = vmatpush1.bf16.msra.mxu0 0
      %7259 = vmatprep.subr.bf16.mxu0 0
      %7260 = vmatpush1.bf16.msra.mxu0 0
      %7261 = vmatprep.subr.bf16.mxu0 0
      %7262 = vmatpush1.bf16.msra.mxu0 0
      %7263 = vmatprep.subr.bf16.mxu0 0
      %7264 = vmatpush1.bf16.msra.mxu0 0
      %7265 = vmatprep.subr.bf16.mxu0 0
      %7266 = vmatpush1.bf16.msra.mxu0 0
      %7267 = vmatprep.subr.bf16.mxu0 0
      %7268 = vmatpush1.bf16.msra.mxu0 0
      %7269 = vmatprep.subr.bf16.mxu0 0
      %7270 = vmatpush1.bf16.msra.mxu0 0
      %7271 = vmatprep.subr.bf16.mxu0 0
      %7272 = vmatpush1.bf16.msra.mxu0 0
      %7273 = vmatprep.subr.bf16.mxu0 0
      %7274 = vmatpush1.bf16.msra.mxu0 0
      %7275 = vmatprep.subr.bf16.mxu0 0
      %7276 = vmatpush1.bf16.msra.mxu0 0
      %7277 = vmatprep.mubr.bf16.mxu0 0
      %7278 = vmatmul.mubr.bf16.gmra.mrb[0].mxu0 %v7231
      %v7279 = vpop.f32.mrb[0].mxu0
      %v7280 = vadd.f32 0.0, %v7279
      %v7281 = vpop.f32.mrb[0].mxu0
      %v7282 = vpop.f32.mrb[0].mxu0
      %v7283 = vadd.f32 0.0, %v7282
      %v7284 = vpop.f32.mrb[0].mxu0
      %7285 = vmatprep.mubr.bf16.mxu0 0
      %7286 = vmatmul.mubr.bf16.gmra.mrb[0].mxu0 %v7234
      %v7287 = vpop.f32.mrb[0].mxu0
      %v7288 = vadd.f32 0.0, %v7287
      %v7289 = vpop.f32.mrb[0].mxu0
      %v7290 = vpop.f32.mrb[0].mxu0
      %v7291 = vadd.f32 0.0, %v7290
      %v7292 = vpop.f32.mrb[0].mxu0
      %7293 = vmatprep.mubr.bf16.mxu0 0
      %7294 = vmatmul.mubr.bf16.gmra.mrb[0].mxu0 %v7237
      %v7295 = vpop.f32.mrb[0].mxu0
      %v7296 = vadd.f32 0.0, %v7295
      %v7297 = vpop.f32.mrb[0].mxu0
      %v7298 = vpop.f32.mrb[0].mxu0
      %v7299 = vadd.f32 0.0, %v7298
      %v7300 = vpop.f32.mrb[0].mxu0
      %7301 = vmatprep.mubr.bf16.mxu0 0
      %7302 = vmatmul.mubr.bf16.gmra.mrb[0].mxu0 %v7240
      %v7303 = vpop.f32.mrb[0].mxu0
      %v7304 = vadd.f32 0.0, %v7303
      %v7305 = vpop.f32.mrb[0].mxu0
      %v7306 = vpop.f32.mrb[0].mxu0
      %v7307 = vadd.f32 0.0, %v7306
      %v7308 = vpop.f32.mrb[0].mxu0
      %7309 = vdwg.mxu0
      %v7310 = vadd.f32 %v7152, %v7280
      %v7311 = vadd.f32 %v7153, %v7283
      %v7312 = vadd.f32 %v7154, %v7288
      %v7313 = vadd.f32 %v7155, %v7291
      %v7314 = vadd.f32 %v7156, %v7296
      %v7315 = vadd.f32 %v7157, %v7299
      %v7316 = vadd.f32 %v7158, %v7304
      %v7317 = vadd.f32 %v7159, %v7307
      %v7318 = vld [vmem:[%s4] sm:$0x1]
      %v7320 = vlaneseq
      %v7321 = vshrl.u32 %v7320, 7
      %v7322 = vsub.s32 0, %v7321
      %v7323 = vrot.slane %v7318, %v7322
      %v7325 = vadd.f32 %v7310, %v7323
      %v7326 = vadd.f32 %v7311, %v7323
      %v7327 = vadd.f32 %v7312, %v7323
      %v7328 = vadd.f32 %v7313, %v7323
      %v7329 = vadd.f32 %v7314, %v7323
      %v7330 = vadd.f32 %v7315, %v7323
      %v7331 = vadd.f32 %v7316, %v7323
      %v7332 = vadd.f32 %v7317, %v7323
      %v7333 = vmax.f32 %v7325, 0.0
      %v7334 = vmax.f32 %v7326, 0.0
      %v7335 = vmax.f32 %v7327, 0.0
      %v7336 = vmax.f32 %v7328, 0.0
      %v7337 = vmax.f32 %v7329, 0.0
      %v7338 = vmax.f32 %v7330, 0.0
      %v7339 = vmax.f32 %v7331, 0.0
      %v7340 = vmax.f32 %v7332, 0.0
      %vm7341 = vcmask 130048
      %7342 = vst.msk [vmem:[%s224] sm:$0xff] %vm7341, %v7333
      %7343 = vst.msk [vmem:[%s224 + $0x8] sm:$0xff] %vm7341, %v7334
      %7344 = vst.msk [vmem:[%s224 + $0x10] sm:$0xff] %vm7341, %v7335
      %7345 = vst.msk [vmem:[%s224 + $0x18] sm:$0xff] %vm7341, %v7336
      %7346 = vst.msk [vmem:[%s224 + $0x20] sm:$0xff] %vm7341, %v7337
      %7347 = vst.msk [vmem:[%s224 + $0x28] sm:$0xff] %vm7341, %v7338
      %7348 = vst.msk [vmem:[%s224 + $0x30] sm:$0xff] %vm7341, %v7339
      %7349 = vst.msk [vmem:[%s224 + $0x38] sm:$0xff] %vm7341, %v7340
      %p7350 = scmp.lt.s32.totalorder %s16, 1
      %s7351 = scalar_select %p7350, %s16, 1
      %s7352 = smul.addr %s7351, 8
      %s7353 = smul.addr %s7352, 8
      %s7354 = scalar_lea.vmem %s5, %s7353
      // Predicated region
      $region41: #{_lambda_.3} parent=39 // pred_check
        %p7355 = pneg %p144
      $region42: #{_lambda_.3} parent=39 // pred_check_branch
        %7357 = sbr.rel (%p7355) target = $region44
      $region43: #{_lambda_.3} parent=39 // pred_region
        _
      $region44: #{_lambda_.3} parent=39 // pred_fallthru
        _
    $region40: #{_lambda_.3} parent=5 // pred_fallthru
      _
    %p7358 = scmp.le.s32.totalorder 2, %s11
    // Predicated region
    $region45: #{_lambda_.3} parent=5 // pred_check
      %p7359 = pneg %p7358
    $region46: #{_lambda_.3} parent=5 // pred_check_branch
      %7361 = sbr.rel (%p7359) target = $region48
    $region47: #{_lambda_.3} parent=5 // pred_region
      %s7362 = ssub.s32 %s11, 2
      // Predicated region
      $region49: #{_lambda_.3} parent=47 // pred_check
        %p7363 = pneg %p150
      $region50: #{_lambda_.3} parent=47 // pred_check_branch
        %7365 = sbr.rel (%p7363) target = $region52
      $region51: #{_lambda_.3} parent=47 // pred_region
        %p7366 = scmp.lt.s32.totalorder %s17, 1
        %s7367 = scalar_select %p7366, %s17, 1
        %s7368 = smul.addr %s7367, 8
        %s7369 = smul.addr %s7368, 8
        %s7370 = scalar_lea.vmem %s5, %s7369
      $region52: #{_lambda_.3} parent=47 // pred_fallthru
        _
    $region48: #{_lambda_.3} parent=5 // pred_fallthru
      _
  $region6: #{_lambda_.3} parent=0 // loop_footer
    %s15 = sadd.s32 1, %s11
  $region7: #{_lambda_.3} parent=0 // loop_footer_branch
    %10 = sbr.rel target = $region3
  $region8: #{_lambda_.3} parent=0 // loop_exit
    _

</llo_original>
